<compile_context>
chip_gen: v6e
topology: v6e:2x2x1
jax: 0.10.0
libtpu: 0.0.40
codegen_flags: <defaults>
</compile_context>

<pallas_src>
import functools

import jax
import jax.numpy as jnp
from jax.experimental import pallas as pl
from jax.experimental.pallas import tpu as pltpu


# ----------------------------------------------------------------------------
# Pallas kernel: one (batch, query-tile, head) grid step
# ----------------------------------------------------------------------------
def _equiv_attn_edge_kernel(
    ci_ref, cj_ref, q_ref, k_ref, v_ref,
    wp1_ref, bp1_ref, wp2_ref, bp2_ref,
    we1_ref, be1_ref, we2_ref, be2_ref,
    wac1_ref, bac1_ref, wac2_ref, bc2_ref,
    out_ref, pe_ref,
):
    hi = pl.program_id(2)
    ti, dh = q_ref.shape          # (TILE_I, DIM_HEAD)
    n = k_ref.shape[0]            # full key length
    r = ti * n                    # edges in this tile
    pd = wp1_ref.shape[0]         # 2 * fourier_features + 1
    nf = (pd - 1) // 2            # fourier_features
    fm = wac1_ref.shape[1] // 2   # 4 * m_dim

    ci = ci_ref[...]              # (TI, 3) f32 query-row coordinates
    cj = cj_ref[...]              # (N,  3) f32 key coordinates

    # --- geometry + positional-embedding MLP: depends only on (batch, i-tile);
    #     computed once (head 0) and cached in VMEM scratch across the head axis.
    @pl.when(hi == 0)
    def _compute_pos_emb():
        rel = ci[:, None, :] - cj[None, :, :]                       # (TI, N, 3)
        dist = jnp.sqrt(jnp.sum(rel * rel, axis=-1))                # (TI, N)
        cols = [jnp.sin(dist * (0.5 ** s)) for s in range(nf)]
        cols += [jnp.cos(dist * (0.5 ** s)) for s in range(nf)]
        cols += [dist]
        pos = jnp.stack(cols, axis=-1).reshape(r, pd)               # (R, PD)
        ph = jax.nn.relu(
            jnp.dot(pos.astype(jnp.bfloat16), wp1_ref[...],
                    preferred_element_type=jnp.float32) + bp1_ref[...])
        pe = (jnp.dot(ph.astype(jnp.bfloat16), wp2_ref[...],
                      preferred_element_type=jnp.float32) + bp2_ref[...])
        pe_ref[...] = pe.astype(pe_ref.dtype)                       # (R, DH) bf16

    # --- per-edge MLPs: bf16 on the MXU, f32 accumulation ---------------------
    q = q_ref[...]                # (TI, DH) bf16
    k = k_ref[...]                # (N,  DH) bf16
    v = v_ref[...]                # (N,  DH) bf16

    # edge input = concat(q_i * k_j, pos_emb_ij) -> single K = 2*DH contraction
    qk = (q[:, None, :] * k[None, :, :]).reshape(r, dh)             # (R, DH) bf16
    edge_in = jnp.concatenate([qk, pe_ref[...]], axis=-1)           # (R, 2DH) bf16
    eh = jax.nn.relu(
        jnp.dot(edge_in, we1_ref[...],
                preferred_element_type=jnp.float32) + be1_ref[...]) # (R, 4DH)
    m_ij = jax.nn.relu(
        jnp.dot(eh.astype(jnp.bfloat16), we2_ref[...],
                preferred_element_type=jnp.float32) + be2_ref[...]) # (R, M)

    # fused attn-logit / coor-weight hidden layer: one lane-dense (M -> 8M) dot
    ach = jax.nn.relu(
        jnp.dot(m_ij.astype(jnp.bfloat16), wac1_ref[...],
                preferred_element_type=jnp.float32) + bac1_ref[...])
    wv = (ach * wac2_ref[...]).reshape(ti, n, 2 * fm)
    # final Linear(4M -> 1) heads as lane reductions; the attention bias ba2 is
    # dropped (softmax is shift invariant), the coordinate bias bc2 is in SMEM.
    sim = jnp.sum(wv[:, :, :fm], axis=-1)                           # (TI, N)
    coor_w = jnp.sum(wv[:, :, fm:], axis=-1) + bc2_ref[0]           # (TI, N)

    # --- softmax over keys (fp32), reciprocal on the EUP ----------------------
    p = jnp.exp(sim - jnp.max(sim, axis=-1, keepdims=True))
    attn = p * pl.reciprocal(jnp.sum(p, axis=-1, keepdims=True), approx=True)

    # --- out_i = sum_j attn_ij * (v_j + pos_emb_ij): MXU for V, VPU for pos_emb
    out = jnp.dot(attn.astype(jnp.bfloat16), v,
                  preferred_element_type=jnp.float32)               # (TI, DH)
    pe3 = pe_ref[...].astype(jnp.float32).reshape(ti, n, dh)
    out = out + jnp.sum(attn[:, :, None] * pe3, axis=1)

    # --- coors_i = sum_j w_ij*(c_i - c_j) = rowsum(w)*c_i - w @ C_keys (MXU) ---
    w_sum = jnp.sum(coor_w, axis=-1, keepdims=True)                 # (TI, 1)
    coors_agg = w_sum * ci - jnp.dot(coor_w, cj,
                                     preferred_element_type=jnp.float32)

    # --- single lane-dense packed store: [out(DH) | coors(3) | zero pad] ------
    parts = [out, coors_agg]
    pad = out_ref.shape[-1] - (dh + 3)
    if pad:
        parts.append(jnp.zeros((ti, pad), jnp.float32))
    out_ref[...] = jnp.concatenate(parts, axis=-1).astype(out_ref.dtype)


def _default_vmem_limit_bytes():
    # 3/4 of the physical VMEM (v7x: 48 MiB, v5e/v6e: 96 MiB), conservative fallback.
    try:
        cap = getattr(pltpu.get_tpu_info(), "vmem_capacity_bytes", None)
        if cap:
            return int(min(cap * 3 // 4, 100 * 1024 * 1024))
    except Exception:
        pass
    return 48 * 1024 * 1024


# ----------------------------------------------------------------------------
# Wrapper: qkv projection + pallas_call + output projections
# ----------------------------------------------------------------------------
@functools.partial(
    jax.jit,
    static_argnames=("heads", "dim_head", "m_dim", "fourier_features", "tile_i"),
)
def equivariant_attention_pallas(
    feats, coors, params, *, heads, dim_head, m_dim, fourier_features, tile_i=None
):
    b, n, d = feats.shape
    h, dh = heads, dim_head

    # qkv projection (plain XLA); per-head tensors go to the kernel in bf16.
    qkv = feats @ params["w_qkv"]                          # (b, n, 3*h*dh)
    q, k, v = jnp.split(qkv, 3, axis=-1)
    q, k, v = (
        t.reshape(b, n, h, dh).transpose(0, 2, 1, 3).astype(jnp.bfloat16)
        for t in (q, k, v)
    )                                                      # (b, h, n, dh)
    coors_f32 = coors.astype(jnp.float32)

    # query-row tile: full n when small, otherwise bounded so the (TILE_I*N, 4*DH)
    # fp32 edge intermediate stays a few MiB (v7x-safe). Overridable via tile_i.
    if tile_i is None:
        if n <= 64:
            tile_i = n
        else:
            tile_i = max(8, min(128, (8192 // n) // 8 * 8))
    grid = (b, pl.cdiv(n, tile_i), h)

    f32, bf16 = jnp.float32, jnp.bfloat16
    dense_weights = [
        params["wp1"].astype(bf16), params["bp1"].astype(f32),
        params["wp2"].astype(bf16), params["bp2"].astype(f32),
        params["we1"].astype(bf16), params["be1"].astype(f32),
        params["we2"].astype(bf16), params["be2"].astype(f32),
        # fused attn-logit / coor-weight first layers: (m, 8m) weight, (1, 8m) bias
        jnp.concatenate([params["wa1"], params["wc1"]], axis=-1).astype(bf16),
        jnp.concatenate([params["ba1"], params["bc1"]], axis=-1).astype(f32),
        # fused final-layer row weights (lane reduction): (1, 8m)
        jnp.concatenate([params["wa2"], params["wc2"]], axis=-1).astype(f32),
    ]
    bc2 = params["bc2"].reshape(-1).astype(f32)            # (1,) scalar -> SMEM

    p_out = ((dh + 3 + 127) // 128) * 128                  # lane-dense packed width

    def q_map(bi, ii, hi):
        return (bi, hi, ii, 0)

    def kv_map(bi, ii, hi):
        return (bi, hi, 0, 0)

    def ci_map(bi, ii, hi):
        return (bi, ii, 0)

    def cj_map(bi, ii, hi):
        return (bi, 0, 0)

    in_specs = [
        pl.BlockSpec((None, tile_i, 3), ci_map),           # query-row coordinates
        pl.BlockSpec((None, n, 3), cj_map),                # key coordinates
        pl.BlockSpec((None, None, tile_i, dh), q_map),     # q
        pl.BlockSpec((None, None, n, dh), kv_map),         # k
        pl.BlockSpec((None, None, n, dh), kv_map),         # v
    ] + [
        pl.BlockSpec(w.shape, lambda *_, nd=w.ndim: (0,) * nd) for w in dense_weights
    ] + [
        pl.BlockSpec(memory_space=pltpu.MemorySpace.SMEM),  # bc2 scalar
    ]

    packed = pl.pallas_call(
        _equiv_attn_edge_kernel,
        out_shape=jax.ShapeDtypeStruct((b, h, n, p_out), jnp.float32),
        grid_spec=pltpu.PrefetchScalarGridSpec(
            num_scalar_prefetch=0,
            grid=grid,
            in_specs=in_specs,
            out_specs=pl.BlockSpec((None, None, tile_i, p_out), q_map),
            scratch_shapes=[pltpu.VMEM((tile_i * n, dh), jnp.bfloat16)],
        ),
        compiler_params=pltpu.CompilerParams(
            dimension_semantics=("parallel", "parallel", "arbitrary"),
            vmem_limit_bytes=_default_vmem_limit_bytes(),
        ),
    )(coors_f32, coors_f32, q, k, v, *dense_weights, bc2)

    out_heads = packed[..., :dh]                           # (b, h, n, dh)
    coors_heads = packed[..., dh:dh + 3]                   # (b, h, n, 3)

    # final projections (plain XLA matmuls)
    out = out_heads.transpose(0, 2, 1, 3).reshape(b, n, h * dh)
    out = out @ params["w_out"] + params["b_out"]
    coors_out = jnp.einsum("bhic,h->bic", coors_heads, params["w_coors_out"])
    return out, coors_out


# ----------------------------------------------------------------------------
# Pure-JAX reference (mirrors the PyTorch forward for the default config)
# ----------------------------------------------------------------------------
def equivariant_attention_ref(
    feats, coors, params, *, heads, dim_head, m_dim, fourier_features
):
    b, n, d = feats.shape
    h, dh = heads, dim_head
    qkv = feats @ params["w_qkv"]
    q, k, v = jnp.split(qkv, 3, axis=-1)
    q, k, v = (t.reshape(b, n, h, dh).transpose(0, 2, 1, 3) for t in (q, k, v))
    rel_coors = coors[:, :, None, :] - coors[:, None, :, :]
    rel_dist = jnp.sqrt(jnp.sum(rel_coors ** 2, axis=-1))
    scales = 2.0 ** jnp.arange(fourier_features, dtype=jnp.float32)
    xs = rel_dist[..., None] / scales
    pos = jnp.concatenate([jnp.sin(xs), jnp.cos(xs), rel_dist[..., None]], axis=-1)
    ph = jax.nn.relu(pos @ params["wp1"] + params["bp1"])
    pos_emb = ph @ params["wp2"] + params["bp2"]                      # (b,n,n,dh)
    qk = q[:, :, :, None, :] * k[:, :, None, :, :]                    # (b,h,i,j,dh)
    pos_emb_h = jnp.broadcast_to(pos_emb[:, None], (b, h, n, n, dh))
    edge_in = jnp.concatenate([qk, pos_emb_h], axis=-1)
    eh = jax.nn.relu(edge_in @ params["we1"] + params["be1"])
    m_ij = jax.nn.relu(eh @ params["we2"] + params["be2"])            # (b,h,i,j,m)
    ah = jax.nn.relu(m_ij @ params["wa1"] + params["ba1"])
    sim = jnp.sum(ah * params["wa2"][0], axis=-1) + params["ba2"][0, 0]
    ch = jax.nn.relu(m_ij @ params["wc1"] + params["bc1"])
    coor_w = jnp.sum(ch * params["wc2"][0], axis=-1) + params["bc2"][0, 0]
    attn = jax.nn.softmax(sim, axis=-1)
    v_edge = v[:, :, None, :, :] + pos_emb_h
    out = jnp.einsum("bhij,bhijd->bhid", attn, v_edge)
    out = out.transpose(0, 2, 1, 3).reshape(b, n, h * dh) @ params["w_out"] + params["b_out"]
    coors_agg = jnp.einsum("bhij,bijc->bhic", coor_w, rel_coors)
    coors_out = jnp.einsum("bhic,h->bic", coors_agg, params["w_coors_out"])
    return out, coors_out


# ----------------------------------------------------------------------------
# Deterministic parameter init (nn.Linear weights ~ N(0, init_eps), default bias)
# ----------------------------------------------------------------------------
def init_params(key, *, dim, heads, dim_head, m_dim, fourier_features, init_eps=1e-3):
    pos_dim = 2 * fourier_features + 1
    inner = heads * dim_head
    edge_in = 2 * dim_head
    keys = jax.random.split(key, 20)

    def w(k, shape):
        return jax.random.normal(k, shape, jnp.float32) * init_eps

    def bias(k, shape, fan_in):
        bound = 1.0 / (fan_in ** 0.5)
        return jax.random.uniform(k, shape, jnp.float32, -bound, bound)

    return dict(
        w_qkv=w(keys[0], (dim, inner * 3)),
        w_out=w(keys[1], (inner, dim)),
        b_out=bias(keys[2], (dim,), inner),
        wp1=w(keys[3], (pos_dim, 2 * dim_head)),
        bp1=bias(keys[4], (1, 2 * dim_head), pos_dim),
        wp2=w(keys[5], (2 * dim_head, dim_head)),
        bp2=bias(keys[6], (1, dim_head), 2 * dim_head),
        we1=w(keys[7], (edge_in, edge_in * 2)),
        be1=bias(keys[8], (1, edge_in * 2), edge_in),
        we2=w(keys[9], (edge_in * 2, m_dim)),
        be2=bias(keys[10], (1, m_dim), edge_in * 2),
        wa1=w(keys[11], (m_dim, m_dim * 4)),
        ba1=bias(keys[12], (1, m_dim * 4), m_dim),
        wa2=w(keys[13], (1, m_dim * 4)),        # Linear(4m -> 1) weight as row
        ba2=bias(keys[14], (1, 1), m_dim * 4),
        wc1=w(keys[15], (m_dim, m_dim * 4)),
        bc1=bias(keys[16], (1, m_dim * 4), m_dim),
        wc2=w(keys[17], (1, m_dim * 4)),
        bc2=bias(keys[18], (1, 1), m_dim * 4),
        w_coors_out=w(keys[19], (heads,)),      # Linear(heads -> 1, no bias)
    )


# TODO(synk): optional branches of the PyTorch module (mask, edges, adj_mat,
# num_nearest_neighbors top-k gather, soft_edges, coor_attention, CoorsNorm,
# rel_coors_sign_gating) are not implemented; this covers the default-config path.

if __name__ == "__main__":
    key = jax.random.PRNGKey(0)
    k_feats, k_coors, k_params = jax.random.split(key, 3)

    batch, n, dim = 2, 8, 32
    heads, dim_head, m_dim, fourier_features = 4, 64, 16, 4

    feats = jax.random.normal(k_feats, (batch, n, dim), dtype=jnp.float32)
    coors = jax.random.normal(k_coors, (batch, n, 3), dtype=jnp.float32)
    params = init_params(
        k_params, dim=dim, heads=heads, dim_head=dim_head,
        m_dim=m_dim, fourier_features=fourier_features,
    )

    out, coors_out = equivariant_attention_pallas(
        feats, coors, params, heads=heads, dim_head=dim_head,
        m_dim=m_dim, fourier_features=fourier_features,
    )
    out = jax.block_until_ready(out)
    coors_out = jax.block_until_ready(coors_out)

    ref_out, ref_coors = equivariant_attention_ref(
        feats, coors, params, heads=heads, dim_head=dim_head,
        m_dim=m_dim, fourier_features=fourier_features,
    )

    assert out.shape == (batch, n, dim)
    assert coors_out.shape == (batch, n, 3)
    # bf16 MXU path with f32 accumulation: tolerances rechecked accordingly.
    assert jnp.allclose(out, ref_out, atol=1e-3, rtol=1e-2), float(
        jnp.max(jnp.abs(out - ref_out))
    )
    assert jnp.allclose(coors_out, ref_coors, atol=1e-4, rtol=1e-2), float(
        jnp.max(jnp.abs(coors_out - ref_coors))
    )

    print("KERNEL_OK")
</pallas_src>

<mosaic_0001>
module attributes {stable_mosaic.version = 11 : i64} {
  func.func @_equiv_attn_edge_kernel(%arg0: i32, %arg1: i32, %arg2: i32, %arg3: memref<1x8x3xf32, #tpu.memory_space<vmem>>, %arg4: memref<1x8x3xf32, #tpu.memory_space<vmem>>, %arg5: memref<1x1x8x64xbf16, #tpu.memory_space<vmem>>, %arg6: memref<1x1x8x64xbf16, #tpu.memory_space<vmem>>, %arg7: memref<1x1x8x64xbf16, #tpu.memory_space<vmem>>, %arg8: memref<9x128xbf16, #tpu.memory_space<vmem>>, %arg9: memref<1x128xf32, #tpu.memory_space<vmem>>, %arg10: memref<128x64xbf16, #tpu.memory_space<vmem>>, %arg11: memref<1x64xf32, #tpu.memory_space<vmem>>, %arg12: memref<128x256xbf16, #tpu.memory_space<vmem>>, %arg13: memref<1x256xf32, #tpu.memory_space<vmem>>, %arg14: memref<256x16xbf16, #tpu.memory_space<vmem>>, %arg15: memref<1x16xf32, #tpu.memory_space<vmem>>, %arg16: memref<16x128xbf16, #tpu.memory_space<vmem>>, %arg17: memref<1x128xf32, #tpu.memory_space<vmem>>, %arg18: memref<1x128xf32, #tpu.memory_space<vmem>>, %arg19: memref<1xf32, #tpu.memory_space<smem>>, %arg20: memref<1x1x8x128xf32, #tpu.memory_space<vmem>>, %arg21: memref<64x64xbf16, #tpu.memory_space<vmem>>) attributes {dimension_semantics = [#tpu.dimension_semantics<parallel>, #tpu.dimension_semantics<parallel>, #tpu.dimension_semantics<arbitrary>], iteration_bounds = array<i64: 2, 1, 4>, scalar_prefetch = 0 : i64, scratch_operands = 1 : i64, tpu.core_type = #tpu.core_type<tc>, window_params = [{transform_indices = @transform_0, window_bounds = array<i64: 1, 8, 3>}, {transform_indices = @transform_1, window_bounds = array<i64: 1, 8, 3>}, {transform_indices = @transform_2, window_bounds = array<i64: 1, 1, 8, 64>}, {transform_indices = @transform_3, window_bounds = array<i64: 1, 1, 8, 64>}, {transform_indices = @transform_4, window_bounds = array<i64: 1, 1, 8, 64>}, {pipeline_mode = #tpu.pipeline_mode<synchronous>, transform_indices = @transform_5, window_bounds = array<i64: 9, 128>}, {pipeline_mode = #tpu.pipeline_mode<synchronous>, transform_indices = @transform_6, window_bounds = array<i64: 1, 128>}, {pipeline_mode = #tpu.pipeline_mode<synchronous>, transform_indices = @transform_7, window_bounds = array<i64: 128, 64>}, {pipeline_mode = #tpu.pipeline_mode<synchronous>, transform_indices = @transform_8, window_bounds = array<i64: 1, 64>}, {pipeline_mode = #tpu.pipeline_mode<synchronous>, transform_indices = @transform_9, window_bounds = array<i64: 128, 256>}, {pipeline_mode = #tpu.pipeline_mode<synchronous>, transform_indices = @transform_10, window_bounds = array<i64: 1, 256>}, {pipeline_mode = #tpu.pipeline_mode<synchronous>, transform_indices = @transform_11, window_bounds = array<i64: 256, 16>}, {pipeline_mode = #tpu.pipeline_mode<synchronous>, transform_indices = @transform_12, window_bounds = array<i64: 1, 16>}, {pipeline_mode = #tpu.pipeline_mode<synchronous>, transform_indices = @transform_13, window_bounds = array<i64: 16, 128>}, {pipeline_mode = #tpu.pipeline_mode<synchronous>, transform_indices = @transform_14, window_bounds = array<i64: 1, 128>}, {pipeline_mode = #tpu.pipeline_mode<synchronous>, transform_indices = @transform_15, window_bounds = array<i64: 1, 128>}, {transform_indices = @transform_16, window_bounds = array<i64: 1>}, {transform_indices = @transform_17, window_bounds = array<i64: 1, 1, 8, 128>}]} {
    %c0 = arith.constant 0 : index
    %c0_0 = arith.constant 0 : index
    %c0_1 = arith.constant 0 : index
    %0 = vector.load %arg3[%c0, %c0_0, %c0_1] : memref<1x8x3xf32, #tpu.memory_space<vmem>>, vector<1x8x3xf32>
    %1 = vector.shape_cast %0 : vector<1x8x3xf32> to vector<8x3xf32>
    %c0_2 = arith.constant 0 : index
    %c0_3 = arith.constant 0 : index
    %c0_4 = arith.constant 0 : index
    %2 = vector.load %arg4[%c0_2, %c0_3, %c0_4] : memref<1x8x3xf32, #tpu.memory_space<vmem>>, vector<1x8x3xf32>
    %3 = vector.shape_cast %2 : vector<1x8x3xf32> to vector<8x3xf32>
    %c0_i32 = arith.constant 0 : i32
    %4 = arith.cmpi eq, %arg2, %c0_i32 : i32
    %5 = arith.extui %4 : i1 to i32
    %c0_i32_5 = arith.constant 0 : i32
    %6 = arith.cmpi ne, %5, %c0_i32_5 : i32
    scf.if %6 {
      %86 = vector.shape_cast %1 : vector<8x3xf32> to vector<8x1x3xf32>
      %87 = vector.shape_cast %3 : vector<8x3xf32> to vector<1x8x3xf32>
      %88 = vector.broadcast %86 : vector<8x1x3xf32> to vector<8x8x3xf32>
      %89 = vector.broadcast %87 : vector<1x8x3xf32> to vector<8x8x3xf32>
      %90 = arith.subf %88, %89 : vector<8x8x3xf32>
      %91 = arith.mulf %90, %90 : vector<8x8x3xf32>
      %cst_55 = arith.constant dense<0.000000e+00> : vector<8x8xf32>
      %92 = vector.multi_reduction <add>, %91, %cst_55 [2] : vector<8x8x3xf32> to vector<8x8xf32>
      %93 = math.sqrt %92 : vector<8x8xf32>
      %cst_56 = arith.constant 1.000000e+00 : f32
      %94 = vector.broadcast %cst_56 : f32 to vector<8x8xf32>
      %95 = arith.mulf %93, %94 : vector<8x8xf32>
      %96 = math.sin %95 : vector<8x8xf32>
      %cst_57 = arith.constant 5.000000e-01 : f32
      %97 = vector.broadcast %cst_57 : f32 to vector<8x8xf32>
      %98 = arith.mulf %93, %97 : vector<8x8xf32>
      %99 = math.sin %98 : vector<8x8xf32>
      %cst_58 = arith.constant 2.500000e-01 : f32
      %100 = vector.broadcast %cst_58 : f32 to vector<8x8xf32>
      %101 = arith.mulf %93, %100 : vector<8x8xf32>
      %102 = math.sin %101 : vector<8x8xf32>
      %cst_59 = arith.constant 1.250000e-01 : f32
      %103 = vector.broadcast %cst_59 : f32 to vector<8x8xf32>
      %104 = arith.mulf %93, %103 : vector<8x8xf32>
      %105 = math.sin %104 : vector<8x8xf32>
      %cst_60 = arith.constant 1.000000e+00 : f32
      %106 = vector.broadcast %cst_60 : f32 to vector<8x8xf32>
      %107 = arith.mulf %93, %106 : vector<8x8xf32>
      %108 = math.cos %107 : vector<8x8xf32>
      %cst_61 = arith.constant 5.000000e-01 : f32
      %109 = vector.broadcast %cst_61 : f32 to vector<8x8xf32>
      %110 = arith.mulf %93, %109 : vector<8x8xf32>
      %111 = math.cos %110 : vector<8x8xf32>
      %cst_62 = arith.constant 2.500000e-01 : f32
      %112 = vector.broadcast %cst_62 : f32 to vector<8x8xf32>
      %113 = arith.mulf %93, %112 : vector<8x8xf32>
      %114 = math.cos %113 : vector<8x8xf32>
      %cst_63 = arith.constant 1.250000e-01 : f32
      %115 = vector.broadcast %cst_63 : f32 to vector<8x8xf32>
      %116 = arith.mulf %93, %115 : vector<8x8xf32>
      %117 = math.cos %116 : vector<8x8xf32>
      %118 = vector.shape_cast %96 : vector<8x8xf32> to vector<8x8x1xf32>
      %119 = vector.shape_cast %99 : vector<8x8xf32> to vector<8x8x1xf32>
      %120 = vector.shape_cast %102 : vector<8x8xf32> to vector<8x8x1xf32>
      %121 = vector.shape_cast %105 : vector<8x8xf32> to vector<8x8x1xf32>
      %122 = vector.shape_cast %108 : vector<8x8xf32> to vector<8x8x1xf32>
      %123 = vector.shape_cast %111 : vector<8x8xf32> to vector<8x8x1xf32>
      %124 = vector.shape_cast %114 : vector<8x8xf32> to vector<8x8x1xf32>
      %125 = vector.shape_cast %117 : vector<8x8xf32> to vector<8x8x1xf32>
      %126 = vector.shape_cast %93 : vector<8x8xf32> to vector<8x8x1xf32>
      %127 = tpu.concatenate %118, %119, %120, %121, %122, %123, %124, %125, %126 in 2 : vector<8x8x1xf32>, vector<8x8x1xf32>, vector<8x8x1xf32>, vector<8x8x1xf32>, vector<8x8x1xf32>, vector<8x8x1xf32>, vector<8x8x1xf32>, vector<8x8x1xf32>, vector<8x8x1xf32> -> vector<8x8x9xf32>
      %128 = vector.shape_cast %127 : vector<8x8x9xf32> to vector<64x9xf32>
      %129 = arith.truncf %128 : vector<64x9xf32> to vector<64x9xbf16>
      %c0_64 = arith.constant 0 : index
      %c0_65 = arith.constant 0 : index
      %130 = vector.load %arg8[%c0_64, %c0_65] : memref<9x128xbf16, #tpu.memory_space<vmem>>, vector<9x128xbf16>
      %cst_66 = arith.constant dense<0.000000e+00> : vector<64x128xf32>
      %131 = tpu.matmul %129, %130, %cst_66 {dimension_numbers = #tpu.dot_dimension_numbers<[1], [0], [0], [1], [0, 0, 1, 1], [], []>} : vector<64x9xbf16>, vector<9x128xbf16>, vector<64x128xf32> -> vector<64x128xf32>
      %c0_67 = arith.constant 0 : index
      %c0_68 = arith.constant 0 : index
      %132 = vector.load %arg9[%c0_67, %c0_68] : memref<1x128xf32, #tpu.memory_space<vmem>>, vector<1x128xf32>
      %133 = vector.broadcast %132 : vector<1x128xf32> to vector<64x128xf32>
      %134 = arith.addf %131, %133 : vector<64x128xf32>
      %cst_69 = arith.constant 0.000000e+00 : f32
      %135 = vector.broadcast %cst_69 : f32 to vector<64x128xf32>
      %136 = arith.maximumf %134, %135 : vector<64x128xf32>
      %137 = arith.truncf %136 : vector<64x128xf32> to vector<64x128xbf16>
      %c0_70 = arith.constant 0 : index
      %c0_71 = arith.constant 0 : index
      %138 = vector.load %arg10[%c0_70, %c0_71] : memref<128x64xbf16, #tpu.memory_space<vmem>>, vector<128x64xbf16>
      %cst_72 = arith.constant dense<0.000000e+00> : vector<64x64xf32>
      %139 = tpu.matmul %137, %138, %cst_72 {dimension_numbers = #tpu.dot_dimension_numbers<[1], [0], [0], [1], [0, 0, 1, 1], [], []>} : vector<64x128xbf16>, vector<128x64xbf16>, vector<64x64xf32> -> vector<64x64xf32>
      %c0_73 = arith.constant 0 : index
      %c0_74 = arith.constant 0 : index
      %140 = vector.load %arg11[%c0_73, %c0_74] : memref<1x64xf32, #tpu.memory_space<vmem>>, vector<1x64xf32>
      %141 = vector.broadcast %140 : vector<1x64xf32> to vector<64x64xf32>
      %142 = arith.addf %139, %141 : vector<64x64xf32>
      %143 = arith.truncf %142 : vector<64x64xf32> to vector<64x64xbf16>
      %c0_75 = arith.constant 0 : index
      %c0_76 = arith.constant 0 : index
      %144 = vector.load %arg21[%c0_75, %c0_76] : memref<64x64xbf16, #tpu.memory_space<vmem>>, vector<64x64xbf16>
      tpu.vector_store %arg21[%c0_75, %c0_76], %143 {strides = array<i32>} : memref<64x64xbf16, #tpu.memory_space<vmem>>, vector<64x64xbf16>,
    } else {
    }
    %c0_6 = arith.constant 0 : index
    %c0_7 = arith.constant 0 : index
    %c0_8 = arith.constant 0 : index
    %c0_9 = arith.constant 0 : index
    %7 = vector.load %arg5[%c0_6, %c0_7, %c0_8, %c0_9] : memref<1x1x8x64xbf16, #tpu.memory_space<vmem>>, vector<1x1x8x64xbf16>
    %8 = vector.shape_cast %7 : vector<1x1x8x64xbf16> to vector<8x64xbf16>
    %c0_10 = arith.constant 0 : index
    %c0_11 = arith.constant 0 : index
    %c0_12 = arith.constant 0 : index
    %c0_13 = arith.constant 0 : index
    %9 = vector.load %arg6[%c0_10, %c0_11, %c0_12, %c0_13] : memref<1x1x8x64xbf16, #tpu.memory_space<vmem>>, vector<1x1x8x64xbf16>
    %10 = vector.shape_cast %9 : vector<1x1x8x64xbf16> to vector<8x64xbf16>
    %c0_14 = arith.constant 0 : index
    %c0_15 = arith.constant 0 : index
    %c0_16 = arith.constant 0 : index
    %c0_17 = arith.constant 0 : index
    %11 = vector.load %arg7[%c0_14, %c0_15, %c0_16, %c0_17] : memref<1x1x8x64xbf16, #tpu.memory_space<vmem>>, vector<1x1x8x64xbf16>
    %12 = vector.shape_cast %11 : vector<1x1x8x64xbf16> to vector<8x64xbf16>
    %13 = vector.shape_cast %8 : vector<8x64xbf16> to vector<8x1x64xbf16>
    %14 = vector.shape_cast %10 : vector<8x64xbf16> to vector<1x8x64xbf16>
    %15 = vector.broadcast %13 : vector<8x1x64xbf16> to vector<8x8x64xbf16>
    %16 = vector.broadcast %14 : vector<1x8x64xbf16> to vector<8x8x64xbf16>
    %17 = arith.mulf %15, %16 : vector<8x8x64xbf16>
    %18 = vector.shape_cast %17 : vector<8x8x64xbf16> to vector<64x64xbf16>
    %c0_18 = arith.constant 0 : index
    %c0_19 = arith.constant 0 : index
    %19 = vector.load %arg21[%c0_18, %c0_19] : memref<64x64xbf16, #tpu.memory_space<vmem>>, vector<64x64xbf16>
    %20 = tpu.concatenate %18, %19 in 1 : vector<64x64xbf16>, vector<64x64xbf16> -> vector<64x128xbf16>
    %c0_20 = arith.constant 0 : index
    %c0_21 = arith.constant 0 : index
    %21 = vector.load %arg12[%c0_20, %c0_21] : memref<128x256xbf16, #tpu.memory_space<vmem>>, vector<128x256xbf16>
    %cst = arith.constant dense<0.000000e+00> : vector<64x256xf32>
    %22 = tpu.matmul %20, %21, %cst {dimension_numbers = #tpu.dot_dimension_numbers<[1], [0], [0], [1], [0, 0, 1, 1], [], []>} : vector<64x128xbf16>, vector<128x256xbf16>, vector<64x256xf32> -> vector<64x256xf32>
    %c0_22 = arith.constant 0 : index
    %c0_23 = arith.constant 0 : index
    %23 = vector.load %arg13[%c0_22, %c0_23] : memref<1x256xf32, #tpu.memory_space<vmem>>, vector<1x256xf32>
    %24 = vector.broadcast %23 : vector<1x256xf32> to vector<64x256xf32>
    %25 = arith.addf %22, %24 : vector<64x256xf32>
    %cst_24 = arith.constant 0.000000e+00 : f32
    %26 = vector.broadcast %cst_24 : f32 to vector<64x256xf32>
    %27 = arith.maximumf %25, %26 : vector<64x256xf32>
    %28 = arith.truncf %27 : vector<64x256xf32> to vector<64x256xbf16>
    %c0_25 = arith.constant 0 : index
    %c0_26 = arith.constant 0 : index
    %29 = vector.load %arg14[%c0_25, %c0_26] : memref<256x16xbf16, #tpu.memory_space<vmem>>, vector<256x16xbf16>
    %cst_27 = arith.constant dense<0.000000e+00> : vector<64x16xf32>
    %30 = tpu.matmul %28, %29, %cst_27 {dimension_numbers = #tpu.dot_dimension_numbers<[1], [0], [0], [1], [0, 0, 1, 1], [], []>} : vector<64x256xbf16>, vector<256x16xbf16>, vector<64x16xf32> -> vector<64x16xf32>
    %c0_28 = arith.constant 0 : index
    %c0_29 = arith.constant 0 : index
    %31 = vector.load %arg15[%c0_28, %c0_29] : memref<1x16xf32, #tpu.memory_space<vmem>>, vector<1x16xf32>
    %32 = vector.broadcast %31 : vector<1x16xf32> to vector<64x16xf32>
    %33 = arith.addf %30, %32 : vector<64x16xf32>
    %cst_30 = arith.constant 0.000000e+00 : f32
    %34 = vector.broadcast %cst_30 : f32 to vector<64x16xf32>
    %35 = arith.maximumf %33, %34 : vector<64x16xf32>
    %36 = arith.truncf %35 : vector<64x16xf32> to vector<64x16xbf16>
    %c0_31 = arith.constant 0 : index
    %c0_32 = arith.constant 0 : index
    %37 = vector.load %arg16[%c0_31, %c0_32] : memref<16x128xbf16, #tpu.memory_space<vmem>>, vector<16x128xbf16>
    %cst_33 = arith.constant dense<0.000000e+00> : vector<64x128xf32>
    %38 = tpu.matmul %36, %37, %cst_33 {dimension_numbers = #tpu.dot_dimension_numbers<[1], [0], [0], [1], [0, 0, 1, 1], [], []>} : vector<64x16xbf16>, vector<16x128xbf16>, vector<64x128xf32> -> vector<64x128xf32>
    %c0_34 = arith.constant 0 : index
    %c0_35 = arith.constant 0 : index
    %39 = vector.load %arg17[%c0_34, %c0_35] : memref<1x128xf32, #tpu.memory_space<vmem>>, vector<1x128xf32>
    %40 = vector.broadcast %39 : vector<1x128xf32> to vector<64x128xf32>
    %41 = arith.addf %38, %40 : vector<64x128xf32>
    %cst_36 = arith.constant 0.000000e+00 : f32
    %42 = vector.broadcast %cst_36 : f32 to vector<64x128xf32>
    %43 = arith.maximumf %41, %42 : vector<64x128xf32>
    %c0_37 = arith.constant 0 : index
    %c0_38 = arith.constant 0 : index
    %44 = vector.load %arg18[%c0_37, %c0_38] : memref<1x128xf32, #tpu.memory_space<vmem>>, vector<1x128xf32>
    %45 = vector.broadcast %44 : vector<1x128xf32> to vector<64x128xf32>
    %46 = arith.mulf %43, %45 : vector<64x128xf32>
    %47 = vector.shape_cast %46 : vector<64x128xf32> to vector<8x8x128xf32>
    %48 = vector.extract_strided_slice %47 {offsets = [0, 0, 0], sizes = [8, 8, 64], strides = [1, 1, 1]} : vector<8x8x128xf32> to vector<8x8x64xf32>
    %cst_39 = arith.constant dense<0.000000e+00> : vector<8x8xf32>
    %49 = vector.multi_reduction <add>, %48, %cst_39 [2] : vector<8x8x64xf32> to vector<8x8xf32>
    %50 = vector.extract_strided_slice %47 {offsets = [0, 0, 64], sizes = [8, 8, 64], strides = [1, 1, 1]} : vector<8x8x128xf32> to vector<8x8x64xf32>
    %cst_40 = arith.constant dense<0.000000e+00> : vector<8x8xf32>
    %51 = vector.multi_reduction <add>, %50, %cst_40 [2] : vector<8x8x64xf32> to vector<8x8xf32>
    %c0_41 = arith.constant 0 : index
    %52 = memref.load %arg19[%c0_41] : memref<1xf32, #tpu.memory_space<smem>>
    %53 = vector.broadcast %52 : f32 to vector<8x8xf32>
    %54 = arith.addf %51, %53 : vector<8x8xf32>
    %cst_42 = arith.constant dense<0xFF800000> : vector<8xf32>
    %55 = vector.multi_reduction <maximumf>, %49, %cst_42 [1] : vector<8x8xf32> to vector<8xf32>
    %56 = vector.shape_cast %55 : vector<8xf32> to vector<8x1xf32>
    %57 = vector.broadcast %56 : vector<8x1xf32> to vector<8x8xf32>
    %58 = arith.subf %49, %57 : vector<8x8xf32>
    %59 = math.exp %58 : vector<8x8xf32>
    %cst_43 = arith.constant dense<0.000000e+00> : vector<8xf32>
    %60 = vector.multi_reduction <add>, %59, %cst_43 [1] : vector<8x8xf32> to vector<8xf32>
    %61 = vector.shape_cast %60 : vector<8xf32> to vector<8x1xf32>
    %62 = tpu.reciprocal %61 {approx = true} : vector<8x1xf32> -> vector<8x1xf32>
    %63 = vector.broadcast %62 : vector<8x1xf32> to vector<8x8xf32>
    %64 = arith.mulf %59, %63 : vector<8x8xf32>
    %65 = arith.truncf %64 : vector<8x8xf32> to vector<8x8xbf16>
    %cst_44 = arith.constant dense<0.000000e+00> : vector<8x64xf32>
    %66 = tpu.matmul %65, %12, %cst_44 {dimension_numbers = #tpu.dot_dimension_numbers<[1], [0], [0], [1], [0, 0, 1, 1], [], []>} : vector<8x8xbf16>, vector<8x64xbf16>, vector<8x64xf32> -> vector<8x64xf32>
    %c0_45 = arith.constant 0 : index
    %c0_46 = arith.constant 0 : index
    %67 = vector.load %arg21[%c0_45, %c0_46] : memref<64x64xbf16, #tpu.memory_space<vmem>>, vector<64x64xbf16>
    %68 = arith.extf %67 : vector<64x64xbf16> to vector<64x64xf32>
    %69 = vector.shape_cast %68 : vector<64x64xf32> to vector<8x8x64xf32>
    %70 = vector.shape_cast %64 : vector<8x8xf32> to vector<8x8x1xf32>
    %71 = vector.broadcast %70 : vector<8x8x1xf32> to vector<8x8x64xf32>
    %72 = arith.mulf %71, %69 : vector<8x8x64xf32>
    %cst_47 = arith.constant dense<0.000000e+00> : vector<8x64xf32>
    %73 = vector.multi_reduction <add>, %72, %cst_47 [1] : vector<8x8x64xf32> to vector<8x64xf32>
    %74 = arith.addf %66, %73 : vector<8x64xf32>
    %cst_48 = arith.constant dense<0.000000e+00> : vector<8xf32>
    %75 = vector.multi_reduction <add>, %54, %cst_48 [1] : vector<8x8xf32> to vector<8xf32>
    %76 = vector.shape_cast %75 : vector<8xf32> to vector<8x1xf32>
    %77 = vector.broadcast %76 : vector<8x1xf32> to vector<8x3xf32>
    %78 = arith.mulf %77, %1 : vector<8x3xf32>
    %cst_49 = arith.constant dense<0.000000e+00> : vector<8x3xf32>
    %79 = tpu.matmul %54, %3, %cst_49 {dimension_numbers = #tpu.dot_dimension_numbers<[1], [0], [0], [1], [0, 0, 1, 1], [], []>} : vector<8x8xf32>, vector<8x3xf32>, vector<8x3xf32> -> vector<8x3xf32>
    %80 = arith.subf %78, %79 : vector<8x3xf32>
    %cst_50 = arith.constant 0.000000e+00 : f32
    %81 = vector.broadcast %cst_50 : f32 to vector<8x61xf32>
    %82 = tpu.concatenate %74, %80, %81 in 1 : vector<8x64xf32>, vector<8x3xf32>, vector<8x61xf32> -> vector<8x128xf32>
    %c0_51 = arith.constant 0 : index
    %c0_52 = arith.constant 0 : index
    %c0_53 = arith.constant 0 : index
    %c0_54 = arith.constant 0 : index
    %83 = vector.load %arg20[%c0_51, %c0_52, %c0_53, %c0_54] : memref<1x1x8x128xf32, #tpu.memory_space<vmem>>, vector<1x1x8x128xf32>
    %84 = vector.shape_cast %83 : vector<1x1x8x128xf32> to vector<8x128xf32>
    %85 = vector.shape_cast %82 : vector<8x128xf32> to vector<1x1x8x128xf32>
    tpu.vector_store %arg20[%c0_51, %c0_52, %c0_53, %c0_54], %85 {strides = array<i32>} : memref<1x1x8x128xf32, #tpu.memory_space<vmem>>, vector<1x1x8x128xf32>,
    return
  }
  func.func @transform_0(%arg0: i32, %arg1: i32, %arg2: i32) -> (i32, i32, i32) {
    %c0_i32 = arith.constant 0 : i32
    %c0_i32_0 = arith.constant 0 : i32
    return %arg0, %arg1, %c0_i32 : i32, i32, i32
  }
  func.func @transform_1(%arg0: i32, %arg1: i32, %arg2: i32) -> (i32, i32, i32) {
    %c0_i32 = arith.constant 0 : i32
    %c0_i32_0 = arith.constant 0 : i32
    %c0_i32_1 = arith.constant 0 : i32
    return %arg0, %c0_i32, %c0_i32_0 : i32, i32, i32
  }
  func.func @transform_2(%arg0: i32, %arg1: i32, %arg2: i32) -> (i32, i32, i32, i32) {
    %c0_i32 = arith.constant 0 : i32
    %c0_i32_0 = arith.constant 0 : i32
    return %arg0, %arg2, %arg1, %c0_i32 : i32, i32, i32, i32
  }
  func.func @transform_3(%arg0: i32, %arg1: i32, %arg2: i32) -> (i32, i32, i32, i32) {
    %c0_i32 = arith.constant 0 : i32
    %c0_i32_0 = arith.constant 0 : i32
    %c0_i32_1 = arith.constant 0 : i32
    return %arg0, %arg2, %c0_i32, %c0_i32_0 : i32, i32, i32, i32
  }
  func.func @transform_4(%arg0: i32, %arg1: i32, %arg2: i32) -> (i32, i32, i32, i32) {
    %c0_i32 = arith.constant 0 : i32
    %c0_i32_0 = arith.constant 0 : i32
    %c0_i32_1 = arith.constant 0 : i32
    return %arg0, %arg2, %c0_i32, %c0_i32_0 : i32, i32, i32, i32
  }
  func.func @transform_5(%arg0: i32, %arg1: i32, %arg2: i32) -> (i32, i32) {
    %c0_i32 = arith.constant 0 : i32
    %c0_i32_0 = arith.constant 0 : i32
    %c0_i32_1 = arith.constant 0 : i32
    return %c0_i32, %c0_i32_0 : i32, i32
  }
  func.func @transform_6(%arg0: i32, %arg1: i32, %arg2: i32) -> (i32, i32) {
    %c0_i32 = arith.constant 0 : i32
    %c0_i32_0 = arith.constant 0 : i32
    %c0_i32_1 = arith.constant 0 : i32
    return %c0_i32, %c0_i32_0 : i32, i32
  }
  func.func @transform_7(%arg0: i32, %arg1: i32, %arg2: i32) -> (i32, i32) {
    %c0_i32 = arith.constant 0 : i32
    %c0_i32_0 = arith.constant 0 : i32
    %c0_i32_1 = arith.constant 0 : i32
    return %c0_i32, %c0_i32_0 : i32, i32
  }
  func.func @transform_8(%arg0: i32, %arg1: i32, %arg2: i32) -> (i32, i32) {
    %c0_i32 = arith.constant 0 : i32
    %c0_i32_0 = arith.constant 0 : i32
    %c0_i32_1 = arith.constant 0 : i32
    return %c0_i32, %c0_i32_0 : i32, i32
  }
  func.func @transform_9(%arg0: i32, %arg1: i32, %arg2: i32) -> (i32, i32) {
    %c0_i32 = arith.constant 0 : i32
    %c0_i32_0 = arith.constant 0 : i32
    %c0_i32_1 = arith.constant 0 : i32
    return %c0_i32, %c0_i32_0 : i32, i32
  }
  func.func @transform_10(%arg0: i32, %arg1: i32, %arg2: i32) -> (i32, i32) {
    %c0_i32 = arith.constant 0 : i32
    %c0_i32_0 = arith.constant 0 : i32
    %c0_i32_1 = arith.constant 0 : i32
    return %c0_i32, %c0_i32_0 : i32, i32
  }
  func.func @transform_11(%arg0: i32, %arg1: i32, %arg2: i32) -> (i32, i32) {
    %c0_i32 = arith.constant 0 : i32
    %c0_i32_0 = arith.constant 0 : i32
    %c0_i32_1 = arith.constant 0 : i32
    return %c0_i32, %c0_i32_0 : i32, i32
  }
  func.func @transform_12(%arg0: i32, %arg1: i32, %arg2: i32) -> (i32, i32) {
    %c0_i32 = arith.constant 0 : i32
    %c0_i32_0 = arith.constant 0 : i32
    %c0_i32_1 = arith.constant 0 : i32
    return %c0_i32, %c0_i32_0 : i32, i32
  }
  func.func @transform_13(%arg0: i32, %arg1: i32, %arg2: i32) -> (i32, i32) {
    %c0_i32 = arith.constant 0 : i32
    %c0_i32_0 = arith.constant 0 : i32
    %c0_i32_1 = arith.constant 0 : i32
    return %c0_i32, %c0_i32_0 : i32, i32
  }
  func.func @transform_14(%arg0: i32, %arg1: i32, %arg2: i32) -> (i32, i32) {
    %c0_i32 = arith.constant 0 : i32
    %c0_i32_0 = arith.constant 0 : i32
    %c0_i32_1 = arith.constant 0 : i32
    return %c0_i32, %c0_i32_0 : i32, i32
  }
  func.func @transform_15(%arg0: i32, %arg1: i32, %arg2: i32) -> (i32, i32) {
    %c0_i32 = arith.constant 0 : i32
    %c0_i32_0 = arith.constant 0 : i32
    %c0_i32_1 = arith.constant 0 : i32
    return %c0_i32, %c0_i32_0 : i32, i32
  }
  func.func @transform_16(%arg0: i32, %arg1: i32, %arg2: i32) -> i32 {
    %c0_i32 = arith.constant 0 : i32
    %c0_i32_0 = arith.constant 0 : i32
    return %c0_i32 : i32
  }
  func.func @transform_17(%arg0: i32, %arg1: i32, %arg2: i32) -> (i32, i32, i32, i32) {
    %c0_i32 = arith.constant 0 : i32
    %c0_i32_0 = arith.constant 0 : i32
    return %arg0, %arg2, %arg1, %c0_i32 : i32, i32, i32, i32
  }
}

</mosaic_0001>

<llo_original>
// kernel: equivariant_attention_pallas.1
$region0: #{equivariant_attention_pallas.1}
  #allocation0 [shape = 'u32[]', space=smem, size = 0x4, offset = 0x4, fixed_abs, tag = 'smem constant byte address 0x4 - core index']
  #allocation1 [shape = 'u32[144,128]{1,0:T(1,128)}', space=vmem, size = 0x12000, scoped, tag = 'internal scratch']
  #allocation2 [shape = 'bf16[64,64]{1,0:T(8,128)(2,1)}', space=vmem, size = 0x4000, scoped, tag = 'scratch operand']
  #allocation3 [shape = 'f32[1]{0:T(128)S(6)}', space=smem, size = 0x200, scoped, tag = 'scoped memory for equivariant_attention_pallas.1']
  %s0 = inlined_call_operand.vmem [shape: f32[2,8,3], index: 0, kind: input, shape index: {}, may-alias: {0,1}]
  %s1 = inlined_call_operand.vmem [shape: f32[2,8,3], index: 1, kind: input, shape index: {}, may-alias: {0,1}]
  %s2 = inlined_call_operand.vmem [shape: bf16[2,4,8,64], index: 2, kind: input, shape index: {}]
  %s3 = inlined_call_operand.vmem [shape: bf16[2,4,8,64], index: 3, kind: input, shape index: {}]
  %s4 = inlined_call_operand.vmem [shape: bf16[2,4,8,64], index: 4, kind: input, shape index: {}]
  %s5 = inlined_call_operand.vmem [shape: bf16[9,128], index: 5, kind: input, shape index: {}]
  %s6 = inlined_call_operand.vmem [shape: f32[1,128], index: 6, kind: input, shape index: {}]
  %s7 = inlined_call_operand.vmem [shape: bf16[128,64], index: 7, kind: input, shape index: {}]
  %s8 = inlined_call_operand.vmem [shape: f32[1,64], index: 8, kind: input, shape index: {}]
  %s9 = inlined_call_operand.vmem [shape: bf16[128,256], index: 9, kind: input, shape index: {}]
  %s10 = inlined_call_operand.vmem [shape: f32[1,256], index: 10, kind: input, shape index: {}]
  %s11 = inlined_call_operand.vmem [shape: bf16[256,16], index: 11, kind: input, shape index: {}]
  %s12 = inlined_call_operand.vmem [shape: f32[1,16], index: 12, kind: input, shape index: {}]
  %s13 = inlined_call_operand.vmem [shape: bf16[16,128], index: 13, kind: input, shape index: {}]
  %s14 = inlined_call_operand.vmem [shape: f32[1,128], index: 14, kind: input, shape index: {}]
  %s15 = inlined_call_operand.vmem [shape: f32[1,128], index: 15, kind: input, shape index: {}]
  %s16 = inlined_call_operand.<no memory space> [shape: f32[1], index: 16, kind: input, shape index: {}]
  %s17 = inlined_call_operand.vmem [shape: f32[2,4,8,128], index: 17, kind: output, shape index: {}]
  %s18 = sld [smem:[#allocation0]]
  $region105: #{equivariant_attention_pallas.1} parent=0
    _
  %s20 = ssub.s32 1, %s18
  %s21 = scalar_select 0, %s20, %s18
  %22 = sst [smem:[#allocation3]] %s16
  loop: start=0, step=1, limit=10
  $region2: #{equivariant_attention_pallas.1} parent=0 // loop_pre_header
    _
  $region3: #{equivariant_attention_pallas.1} parent=0 // loop_header
    %s24 = sphi 0, %s28
    %p25 = scmp.ge.s32.totalorder %s24, 10
    %s31 = sphi 0, %s50
    %s32 = sphi 0, %s46
    %s33 = sphi 0, %s42
    %s34 = sphi 0, %s31
    %s35 = sphi 0, %s32
    %s36 = sphi 0, %s33
    %s37 = sphi 0, %s34
    %s38 = sphi 0, %s35
    %s39 = sphi 0, %s36
    %s55 = sphi 0, %s57
    %s58 = sphi 0, %s55
    %s59 = sphi 0, %s58
    %s75 = sphi 0, %s59
    %s81 = sphi 0, %s83
    %s84 = sphi 0, %s81
    %s85 = sphi 0, %s84
    %s101 = sphi 0, %s85
    %s111 = sphi 0, %s113
    %s114 = sphi 0, %s111
    %s115 = sphi 0, %s114
    %s131 = sphi 0, %s115
    %s139 = sphi 0, %s141
    %s142 = sphi 0, %s139
    %s143 = sphi 0, %s142
    %s159 = sphi 0, %s143
    %s167 = sphi 0, %s169
    %s170 = sphi 0, %s167
    %s171 = sphi 0, %s170
    %s187 = sphi 0, %s171
    %s191 = sphi 0, %s191
    %s193 = sphi 0, %s191
    %s194 = sphi 0, %s193
    %s208 = sphi 0, %s194
    %s212 = sphi 0, %s212
    %s214 = sphi 0, %s212
    %s215 = sphi 0, %s214
    %s229 = sphi 0, %s215
    %s233 = sphi 0, %s233
    %s235 = sphi 0, %s233
    %s236 = sphi 0, %s235
    %s250 = sphi 0, %s236
    %s254 = sphi 0, %s254
    %s256 = sphi 0, %s254
    %s257 = sphi 0, %s256
    %s271 = sphi 0, %s257
    %s275 = sphi 0, %s275
    %s277 = sphi 0, %s275
    %s278 = sphi 0, %s277
    %s292 = sphi 0, %s278
    %s296 = sphi 0, %s296
    %s298 = sphi 0, %s296
    %s299 = sphi 0, %s298
    %s313 = sphi 0, %s299
    %s317 = sphi 0, %s317
    %s319 = sphi 0, %s317
    %s320 = sphi 0, %s319
    %s334 = sphi 0, %s320
    %s338 = sphi 0, %s338
    %s340 = sphi 0, %s338
    %s341 = sphi 0, %s340
    %s355 = sphi 0, %s341
    %s359 = sphi 0, %s359
    %s361 = sphi 0, %s359
    %s362 = sphi 0, %s361
    %s376 = sphi 0, %s362
    %s380 = sphi 0, %s380
    %s382 = sphi 0, %s380
    %s383 = sphi 0, %s382
    %s397 = sphi 0, %s383
    %s401 = sphi 0, %s401
    %s403 = sphi 0, %s401
    %s404 = sphi 0, %s403
    %s418 = sphi 0, %s404
    %s422 = sphi 0, %s422
    %s424 = sphi 0, %s422
    %s425 = sphi 0, %s424
    %s439 = sphi 0, %s425
    %s449 = sphi 0, %s451
    %s452 = sphi 0, %s449
    %s453 = sphi 0, %s452
    %s469 = sphi 0, %s453
  $region4: #{equivariant_attention_pallas.1} parent=0 // loop_header_branch
    %27 = sbr.rel (%p25) target = $region8
  $region5: #{equivariant_attention_pallas.1} parent=0 // loop_body
    %s29 = ssub.s32 %s24, 1
    %s30 = ssub.s32 %s24, 2
    %s40 = sadd.s32 1, %s33
    %p41 = scmp.ge.s32.totalorder %s40, 4
    %s42 = scalar_select %p41, 0, %s40
    %s43 = sadd.s32 1, %s32
    %s44 = scalar_select %p41, %s43, %s32
    %p45 = scmp.ge.s32.totalorder %s44, 1
    %s46 = scalar_select %p45, 0, %s44
    %s47 = sadd.s32 1, %s31
    %s48 = scalar_select %p45, %s47, %s31
    %p49 = scmp.ge.s32.totalorder %s48, 2
    %s50 = scalar_select %p49, 0, %s48
    %s51 = ssub.s32 %s31, %s50
    %s52 = ssub.s32 %s32, %s46
    %s53 = sor.u32 %s51, %s52
    %p54 = scmp.eq.s32.totalorder %s53, 0
    %s56 = sadd.s32 %s55, 1
    %s57 = scalar_select %p54, %s55, %s56
    %p60 = pneg %p54
    %p61 = scmp.eq.s32.totalorder %s24, 7
    %p62 = por %p60, %p61
    %p63 = scmp.ne.s32.totalorder %s55, %s58
    %p64 = scmp.eq.s32.totalorder %s24, 0
    %p65 = por %p63, %p64
    %p66 = scmp.ne.s32.totalorder %s55, %s58
    %p67 = scmp.eq.s32.totalorder %s29, 7
    %p68 = por %p66, %p67
    %p69 = scmp.ne.s32.totalorder %s58, %s59
    %p70 = scmp.eq.s32.totalorder %s29, 0
    %p71 = por %p69, %p70
    %p72 = scmp.ne.s32.totalorder %s58, %s59
    %p73 = scmp.eq.s32.totalorder %s30, 7
    %p74 = por %p72, %p73
    %p76 = scmp.ne.s32.totalorder %s59, %s75
    %p77 = scmp.eq.s32.totalorder %s30, 0
    %p78 = por %p76, %p77
    %s79 = ssub.s32 %s31, %s50
    %p80 = scmp.eq.s32.totalorder %s79, 0
    %s82 = sadd.s32 %s81, 1
    %s83 = scalar_select %p80, %s81, %s82
    %p86 = pneg %p80
    %p87 = scmp.eq.s32.totalorder %s24, 7
    %p88 = por %p86, %p87
    %p89 = scmp.ne.s32.totalorder %s81, %s84
    %p90 = scmp.eq.s32.totalorder %s24, 0
    %p91 = por %p89, %p90
    %p92 = scmp.ne.s32.totalorder %s81, %s84
    %p93 = scmp.eq.s32.totalorder %s29, 7
    %p94 = por %p92, %p93
    %p95 = scmp.ne.s32.totalorder %s84, %s85
    %p96 = scmp.eq.s32.totalorder %s29, 0
    %p97 = por %p95, %p96
    %p98 = scmp.ne.s32.totalorder %s84, %s85
    %p99 = scmp.eq.s32.totalorder %s30, 7
    %p100 = por %p98, %p99
    %p102 = scmp.ne.s32.totalorder %s85, %s101
    %p103 = scmp.eq.s32.totalorder %s30, 0
    %p104 = por %p102, %p103
    %s105 = ssub.s32 %s31, %s50
    %s106 = ssub.s32 %s33, %s42
    %s107 = sor.u32 %s105, %s106
    %s108 = ssub.s32 %s32, %s46
    %s109 = sor.u32 %s107, %s108
    %p110 = scmp.eq.s32.totalorder %s109, 0
    %s112 = sadd.s32 %s111, 1
    %s113 = scalar_select %p110, %s111, %s112
    %p116 = pneg %p110
    %p117 = scmp.eq.s32.totalorder %s24, 7
    %p118 = por %p116, %p117
    %p119 = scmp.ne.s32.totalorder %s111, %s114
    %p120 = scmp.eq.s32.totalorder %s24, 0
    %p121 = por %p119, %p120
    %p122 = scmp.ne.s32.totalorder %s111, %s114
    %p123 = scmp.eq.s32.totalorder %s29, 7
    %p124 = por %p122, %p123
    %p125 = scmp.ne.s32.totalorder %s114, %s115
    %p126 = scmp.eq.s32.totalorder %s29, 0
    %p127 = por %p125, %p126
    %p128 = scmp.ne.s32.totalorder %s114, %s115
    %p129 = scmp.eq.s32.totalorder %s30, 7
    %p130 = por %p128, %p129
    %p132 = scmp.ne.s32.totalorder %s115, %s131
    %p133 = scmp.eq.s32.totalorder %s30, 0
    %p134 = por %p132, %p133
    %s135 = ssub.s32 %s31, %s50
    %s136 = ssub.s32 %s33, %s42
    %s137 = sor.u32 %s135, %s136
    %p138 = scmp.eq.s32.totalorder %s137, 0
    %s140 = sadd.s32 %s139, 1
    %s141 = scalar_select %p138, %s139, %s140
    %p144 = pneg %p138
    %p145 = scmp.eq.s32.totalorder %s24, 7
    %p146 = por %p144, %p145
    %p147 = scmp.ne.s32.totalorder %s139, %s142
    %p148 = scmp.eq.s32.totalorder %s24, 0
    %p149 = por %p147, %p148
    %p150 = scmp.ne.s32.totalorder %s139, %s142
    %p151 = scmp.eq.s32.totalorder %s29, 7
    %p152 = por %p150, %p151
    %p153 = scmp.ne.s32.totalorder %s142, %s143
    %p154 = scmp.eq.s32.totalorder %s29, 0
    %p155 = por %p153, %p154
    %p156 = scmp.ne.s32.totalorder %s142, %s143
    %p157 = scmp.eq.s32.totalorder %s30, 7
    %p158 = por %p156, %p157
    %p160 = scmp.ne.s32.totalorder %s143, %s159
    %p161 = scmp.eq.s32.totalorder %s30, 0
    %p162 = por %p160, %p161
    %s163 = ssub.s32 %s31, %s50
    %s164 = ssub.s32 %s33, %s42
    %s165 = sor.u32 %s163, %s164
    %p166 = scmp.eq.s32.totalorder %s165, 0
    %s168 = sadd.s32 %s167, 1
    %s169 = scalar_select %p166, %s167, %s168
    %p172 = pneg %p166
    %p173 = scmp.eq.s32.totalorder %s24, 7
    %p174 = por %p172, %p173
    %p175 = scmp.ne.s32.totalorder %s167, %s170
    %p176 = scmp.eq.s32.totalorder %s24, 0
    %p177 = por %p175, %p176
    %p178 = scmp.ne.s32.totalorder %s167, %s170
    %p179 = scmp.eq.s32.totalorder %s29, 7
    %p180 = por %p178, %p179
    %p181 = scmp.ne.s32.totalorder %s170, %s171
    %p182 = scmp.eq.s32.totalorder %s29, 0
    %p183 = por %p181, %p182
    %p184 = scmp.ne.s32.totalorder %s170, %s171
    %p185 = scmp.eq.s32.totalorder %s30, 7
    %p186 = por %p184, %p185
    %p188 = scmp.ne.s32.totalorder %s171, %s187
    %p189 = scmp.eq.s32.totalorder %s30, 0
    %p190 = por %p188, %p189
    %s192 = sadd.s32 %s191, 1
    %p195 = scmp.eq.s32.totalorder %s24, 7
    %p196 = scmp.ne.s32.totalorder %s191, %s193
    %p197 = scmp.eq.s32.totalorder %s24, 0
    %p198 = por %p196, %p197
    %p199 = scmp.ne.s32.totalorder %s191, %s193
    %p200 = scmp.eq.s32.totalorder %s29, 7
    %p201 = por %p199, %p200
    %p202 = scmp.ne.s32.totalorder %s193, %s194
    %p203 = scmp.eq.s32.totalorder %s29, 0
    %p204 = por %p202, %p203
    %p205 = scmp.ne.s32.totalorder %s193, %s194
    %p206 = scmp.eq.s32.totalorder %s30, 7
    %p207 = por %p205, %p206
    %p209 = scmp.ne.s32.totalorder %s194, %s208
    %p210 = scmp.eq.s32.totalorder %s30, 0
    %p211 = por %p209, %p210
    %s213 = sadd.s32 %s212, 1
    %p216 = scmp.eq.s32.totalorder %s24, 7
    %p217 = scmp.ne.s32.totalorder %s212, %s214
    %p218 = scmp.eq.s32.totalorder %s24, 0
    %p219 = por %p217, %p218
    %p220 = scmp.ne.s32.totalorder %s212, %s214
    %p221 = scmp.eq.s32.totalorder %s29, 7
    %p222 = por %p220, %p221
    %p223 = scmp.ne.s32.totalorder %s214, %s215
    %p224 = scmp.eq.s32.totalorder %s29, 0
    %p225 = por %p223, %p224
    %p226 = scmp.ne.s32.totalorder %s214, %s215
    %p227 = scmp.eq.s32.totalorder %s30, 7
    %p228 = por %p226, %p227
    %p230 = scmp.ne.s32.totalorder %s215, %s229
    %p231 = scmp.eq.s32.totalorder %s30, 0
    %p232 = por %p230, %p231
    %s234 = sadd.s32 %s233, 1
    %p237 = scmp.eq.s32.totalorder %s24, 7
    %p238 = scmp.ne.s32.totalorder %s233, %s235
    %p239 = scmp.eq.s32.totalorder %s24, 0
    %p240 = por %p238, %p239
    %p241 = scmp.ne.s32.totalorder %s233, %s235
    %p242 = scmp.eq.s32.totalorder %s29, 7
    %p243 = por %p241, %p242
    %p244 = scmp.ne.s32.totalorder %s235, %s236
    %p245 = scmp.eq.s32.totalorder %s29, 0
    %p246 = por %p244, %p245
    %p247 = scmp.ne.s32.totalorder %s235, %s236
    %p248 = scmp.eq.s32.totalorder %s30, 7
    %p249 = por %p247, %p248
    %p251 = scmp.ne.s32.totalorder %s236, %s250
    %p252 = scmp.eq.s32.totalorder %s30, 0
    %p253 = por %p251, %p252
    %s255 = sadd.s32 %s254, 1
    %p258 = scmp.eq.s32.totalorder %s24, 7
    %p259 = scmp.ne.s32.totalorder %s254, %s256
    %p260 = scmp.eq.s32.totalorder %s24, 0
    %p261 = por %p259, %p260
    %p262 = scmp.ne.s32.totalorder %s254, %s256
    %p263 = scmp.eq.s32.totalorder %s29, 7
    %p264 = por %p262, %p263
    %p265 = scmp.ne.s32.totalorder %s256, %s257
    %p266 = scmp.eq.s32.totalorder %s29, 0
    %p267 = por %p265, %p266
    %p268 = scmp.ne.s32.totalorder %s256, %s257
    %p269 = scmp.eq.s32.totalorder %s30, 7
    %p270 = por %p268, %p269
    %p272 = scmp.ne.s32.totalorder %s257, %s271
    %p273 = scmp.eq.s32.totalorder %s30, 0
    %p274 = por %p272, %p273
    %s276 = sadd.s32 %s275, 1
    %p279 = scmp.eq.s32.totalorder %s24, 7
    %p280 = scmp.ne.s32.totalorder %s275, %s277
    %p281 = scmp.eq.s32.totalorder %s24, 0
    %p282 = por %p280, %p281
    %p283 = scmp.ne.s32.totalorder %s275, %s277
    %p284 = scmp.eq.s32.totalorder %s29, 7
    %p285 = por %p283, %p284
    %p286 = scmp.ne.s32.totalorder %s277, %s278
    %p287 = scmp.eq.s32.totalorder %s29, 0
    %p288 = por %p286, %p287
    %p289 = scmp.ne.s32.totalorder %s277, %s278
    %p290 = scmp.eq.s32.totalorder %s30, 7
    %p291 = por %p289, %p290
    %p293 = scmp.ne.s32.totalorder %s278, %s292
    %p294 = scmp.eq.s32.totalorder %s30, 0
    %p295 = por %p293, %p294
    %s297 = sadd.s32 %s296, 1
    %p300 = scmp.eq.s32.totalorder %s24, 7
    %p301 = scmp.ne.s32.totalorder %s296, %s298
    %p302 = scmp.eq.s32.totalorder %s24, 0
    %p303 = por %p301, %p302
    %p304 = scmp.ne.s32.totalorder %s296, %s298
    %p305 = scmp.eq.s32.totalorder %s29, 7
    %p306 = por %p304, %p305
    %p307 = scmp.ne.s32.totalorder %s298, %s299
    %p308 = scmp.eq.s32.totalorder %s29, 0
    %p309 = por %p307, %p308
    %p310 = scmp.ne.s32.totalorder %s298, %s299
    %p311 = scmp.eq.s32.totalorder %s30, 7
    %p312 = por %p310, %p311
    %p314 = scmp.ne.s32.totalorder %s299, %s313
    %p315 = scmp.eq.s32.totalorder %s30, 0
    %p316 = por %p314, %p315
    %s318 = sadd.s32 %s317, 1
    %p321 = scmp.eq.s32.totalorder %s24, 7
    %p322 = scmp.ne.s32.totalorder %s317, %s319
    %p323 = scmp.eq.s32.totalorder %s24, 0
    %p324 = por %p322, %p323
    %p325 = scmp.ne.s32.totalorder %s317, %s319
    %p326 = scmp.eq.s32.totalorder %s29, 7
    %p327 = por %p325, %p326
    %p328 = scmp.ne.s32.totalorder %s319, %s320
    %p329 = scmp.eq.s32.totalorder %s29, 0
    %p330 = por %p328, %p329
    %p331 = scmp.ne.s32.totalorder %s319, %s320
    %p332 = scmp.eq.s32.totalorder %s30, 7
    %p333 = por %p331, %p332
    %p335 = scmp.ne.s32.totalorder %s320, %s334
    %p336 = scmp.eq.s32.totalorder %s30, 0
    %p337 = por %p335, %p336
    %s339 = sadd.s32 %s338, 1
    %p342 = scmp.eq.s32.totalorder %s24, 7
    %p343 = scmp.ne.s32.totalorder %s338, %s340
    %p344 = scmp.eq.s32.totalorder %s24, 0
    %p345 = por %p343, %p344
    %p346 = scmp.ne.s32.totalorder %s338, %s340
    %p347 = scmp.eq.s32.totalorder %s29, 7
    %p348 = por %p346, %p347
    %p349 = scmp.ne.s32.totalorder %s340, %s341
    %p350 = scmp.eq.s32.totalorder %s29, 0
    %p351 = por %p349, %p350
    %p352 = scmp.ne.s32.totalorder %s340, %s341
    %p353 = scmp.eq.s32.totalorder %s30, 7
    %p354 = por %p352, %p353
    %p356 = scmp.ne.s32.totalorder %s341, %s355
    %p357 = scmp.eq.s32.totalorder %s30, 0
    %p358 = por %p356, %p357
    %s360 = sadd.s32 %s359, 1
    %p363 = scmp.eq.s32.totalorder %s24, 7
    %p364 = scmp.ne.s32.totalorder %s359, %s361
    %p365 = scmp.eq.s32.totalorder %s24, 0
    %p366 = por %p364, %p365
    %p367 = scmp.ne.s32.totalorder %s359, %s361
    %p368 = scmp.eq.s32.totalorder %s29, 7
    %p369 = por %p367, %p368
    %p370 = scmp.ne.s32.totalorder %s361, %s362
    %p371 = scmp.eq.s32.totalorder %s29, 0
    %p372 = por %p370, %p371
    %p373 = scmp.ne.s32.totalorder %s361, %s362
    %p374 = scmp.eq.s32.totalorder %s30, 7
    %p375 = por %p373, %p374
    %p377 = scmp.ne.s32.totalorder %s362, %s376
    %p378 = scmp.eq.s32.totalorder %s30, 0
    %p379 = por %p377, %p378
    %s381 = sadd.s32 %s380, 1
    %p384 = scmp.eq.s32.totalorder %s24, 7
    %p385 = scmp.ne.s32.totalorder %s380, %s382
    %p386 = scmp.eq.s32.totalorder %s24, 0
    %p387 = por %p385, %p386
    %p388 = scmp.ne.s32.totalorder %s380, %s382
    %p389 = scmp.eq.s32.totalorder %s29, 7
    %p390 = por %p388, %p389
    %p391 = scmp.ne.s32.totalorder %s382, %s383
    %p392 = scmp.eq.s32.totalorder %s29, 0
    %p393 = por %p391, %p392
    %p394 = scmp.ne.s32.totalorder %s382, %s383
    %p395 = scmp.eq.s32.totalorder %s30, 7
    %p396 = por %p394, %p395
    %p398 = scmp.ne.s32.totalorder %s383, %s397
    %p399 = scmp.eq.s32.totalorder %s30, 0
    %p400 = por %p398, %p399
    %s402 = sadd.s32 %s401, 1
    %p405 = scmp.eq.s32.totalorder %s24, 7
    %p406 = scmp.ne.s32.totalorder %s401, %s403
    %p407 = scmp.eq.s32.totalorder %s24, 0
    %p408 = por %p406, %p407
    %p409 = scmp.ne.s32.totalorder %s401, %s403
    %p410 = scmp.eq.s32.totalorder %s29, 7
    %p411 = por %p409, %p410
    %p412 = scmp.ne.s32.totalorder %s403, %s404
    %p413 = scmp.eq.s32.totalorder %s29, 0
    %p414 = por %p412, %p413
    %p415 = scmp.ne.s32.totalorder %s403, %s404
    %p416 = scmp.eq.s32.totalorder %s30, 7
    %p417 = por %p415, %p416
    %p419 = scmp.ne.s32.totalorder %s404, %s418
    %p420 = scmp.eq.s32.totalorder %s30, 0
    %p421 = por %p419, %p420
    %s423 = sadd.s32 %s422, 1
    %p426 = scmp.eq.s32.totalorder %s24, 7
    %p427 = scmp.ne.s32.totalorder %s422, %s424
    %p428 = scmp.eq.s32.totalorder %s24, 0
    %p429 = por %p427, %p428
    %p430 = scmp.ne.s32.totalorder %s422, %s424
    %p431 = scmp.eq.s32.totalorder %s29, 7
    %p432 = por %p430, %p431
    %p433 = scmp.ne.s32.totalorder %s424, %s425
    %p434 = scmp.eq.s32.totalorder %s29, 0
    %p435 = por %p433, %p434
    %p436 = scmp.ne.s32.totalorder %s424, %s425
    %p437 = scmp.eq.s32.totalorder %s30, 7
    %p438 = por %p436, %p437
    %p440 = scmp.ne.s32.totalorder %s425, %s439
    %p441 = scmp.eq.s32.totalorder %s30, 0
    %p442 = por %p440, %p441
    %s443 = ssub.s32 %s31, %s50
    %s444 = ssub.s32 %s33, %s42
    %s445 = sor.u32 %s443, %s444
    %s446 = ssub.s32 %s32, %s46
    %s447 = sor.u32 %s445, %s446
    %p448 = scmp.eq.s32.totalorder %s447, 0
    %s450 = sadd.s32 %s449, 1
    %s451 = scalar_select %p448, %s449, %s450
    %p454 = pneg %p448
    %p455 = scmp.eq.s32.totalorder %s24, 7
    %p456 = por %p454, %p455
    %p457 = scmp.ne.s32.totalorder %s449, %s452
    %p458 = scmp.eq.s32.totalorder %s24, 0
    %p459 = por %p457, %p458
    %p460 = scmp.ne.s32.totalorder %s449, %s452
    %p461 = scmp.eq.s32.totalorder %s29, 7
    %p462 = por %p460, %p461
    %p463 = scmp.ne.s32.totalorder %s452, %s453
    %p464 = scmp.eq.s32.totalorder %s29, 0
    %p465 = por %p463, %p464
    %p466 = scmp.ne.s32.totalorder %s452, %s453
    %p467 = scmp.eq.s32.totalorder %s30, 7
    %p468 = por %p466, %p467
    %p470 = scmp.ne.s32.totalorder %s453, %s469
    %p471 = scmp.eq.s32.totalorder %s30, 0
    %p472 = por %p470, %p471
    %p473 = scmp.le.s32.totalorder 1, %s24
    %p474 = scmp.lt.s32.totalorder %s24, 9
    %p475 = pnand %p473, %p474
    %p476 = pneg %p475
    // Predicated region
    $region9: #{equivariant_attention_pallas.1} parent=5 // pred_check
      _
    $region10: #{equivariant_attention_pallas.1} parent=5 // pred_check_branch
      %478 = sbr.rel (%p475) target = $region12
    $region11: #{equivariant_attention_pallas.1} parent=5 // pred_region
      %s479 = ssub.s32 %s24, 1
      // Predicated region
      $region13: #{equivariant_attention_pallas.1} parent=11 // pred_check
        %p480 = pneg %p204
      $region14: #{equivariant_attention_pallas.1} parent=11 // pred_check_branch
        %482 = sbr.rel (%p480) target = $region16
      $region15: #{equivariant_attention_pallas.1} parent=11 // pred_region
        _
      $region16: #{equivariant_attention_pallas.1} parent=11 // pred_fallthru
        _
      // Predicated region
      $region17: #{equivariant_attention_pallas.1} parent=11 // pred_check
        %p483 = pneg %p225
      $region18: #{equivariant_attention_pallas.1} parent=11 // pred_check_branch
        %485 = sbr.rel (%p483) target = $region20
      $region19: #{equivariant_attention_pallas.1} parent=11 // pred_region
        _
      $region20: #{equivariant_attention_pallas.1} parent=11 // pred_fallthru
        _
      // Predicated region
      $region21: #{equivariant_attention_pallas.1} parent=11 // pred_check
        %p486 = pneg %p246
      $region22: #{equivariant_attention_pallas.1} parent=11 // pred_check_branch
        %488 = sbr.rel (%p486) target = $region24
      $region23: #{equivariant_attention_pallas.1} parent=11 // pred_region
        _
      $region24: #{equivariant_attention_pallas.1} parent=11 // pred_fallthru
        _
      // Predicated region
      $region25: #{equivariant_attention_pallas.1} parent=11 // pred_check
        %p489 = pneg %p267
      $region26: #{equivariant_attention_pallas.1} parent=11 // pred_check_branch
        %491 = sbr.rel (%p489) target = $region28
      $region27: #{equivariant_attention_pallas.1} parent=11 // pred_region
        _
      $region28: #{equivariant_attention_pallas.1} parent=11 // pred_fallthru
        _
      // Predicated region
      $region29: #{equivariant_attention_pallas.1} parent=11 // pred_check
        %p492 = pneg %p288
      $region30: #{equivariant_attention_pallas.1} parent=11 // pred_check_branch
        %494 = sbr.rel (%p492) target = $region32
      $region31: #{equivariant_attention_pallas.1} parent=11 // pred_region
        _
      $region32: #{equivariant_attention_pallas.1} parent=11 // pred_fallthru
        _
      // Predicated region
      $region33: #{equivariant_attention_pallas.1} parent=11 // pred_check
        %p495 = pneg %p309
      $region34: #{equivariant_attention_pallas.1} parent=11 // pred_check_branch
        %497 = sbr.rel (%p495) target = $region36
      $region35: #{equivariant_attention_pallas.1} parent=11 // pred_region
        _
      $region36: #{equivariant_attention_pallas.1} parent=11 // pred_fallthru
        _
      // Predicated region
      $region37: #{equivariant_attention_pallas.1} parent=11 // pred_check
        %p498 = pneg %p330
      $region38: #{equivariant_attention_pallas.1} parent=11 // pred_check_branch
        %500 = sbr.rel (%p498) target = $region40
      $region39: #{equivariant_attention_pallas.1} parent=11 // pred_region
        _
      $region40: #{equivariant_attention_pallas.1} parent=11 // pred_fallthru
        _
      // Predicated region
      $region41: #{equivariant_attention_pallas.1} parent=11 // pred_check
        %p501 = pneg %p351
      $region42: #{equivariant_attention_pallas.1} parent=11 // pred_check_branch
        %503 = sbr.rel (%p501) target = $region44
      $region43: #{equivariant_attention_pallas.1} parent=11 // pred_region
        _
      $region44: #{equivariant_attention_pallas.1} parent=11 // pred_fallthru
        _
      // Predicated region
      $region45: #{equivariant_attention_pallas.1} parent=11 // pred_check
        %p504 = pneg %p372
      $region46: #{equivariant_attention_pallas.1} parent=11 // pred_check_branch
        %506 = sbr.rel (%p504) target = $region48
      $region47: #{equivariant_attention_pallas.1} parent=11 // pred_region
        _
      $region48: #{equivariant_attention_pallas.1} parent=11 // pred_fallthru
        _
      // Predicated region
      $region49: #{equivariant_attention_pallas.1} parent=11 // pred_check
        %p507 = pneg %p393
      $region50: #{equivariant_attention_pallas.1} parent=11 // pred_check_branch
        %509 = sbr.rel (%p507) target = $region52
      $region51: #{equivariant_attention_pallas.1} parent=11 // pred_region
        _
      $region52: #{equivariant_attention_pallas.1} parent=11 // pred_fallthru
        _
      // Predicated region
      $region53: #{equivariant_attention_pallas.1} parent=11 // pred_check
        %p510 = pneg %p414
      $region54: #{equivariant_attention_pallas.1} parent=11 // pred_check_branch
        %512 = sbr.rel (%p510) target = $region56
      $region55: #{equivariant_attention_pallas.1} parent=11 // pred_region
        _
      $region56: #{equivariant_attention_pallas.1} parent=11 // pred_fallthru
        _
      // Predicated region
      $region57: #{equivariant_attention_pallas.1} parent=11 // pred_check
        %p513 = pneg %p435
      $region58: #{equivariant_attention_pallas.1} parent=11 // pred_check_branch
        %515 = sbr.rel (%p513) target = $region60
      $region59: #{equivariant_attention_pallas.1} parent=11 // pred_region
        _
      $region60: #{equivariant_attention_pallas.1} parent=11 // pred_fallthru
        _
    $region12: #{equivariant_attention_pallas.1} parent=5 // pred_fallthru
      _
    %p516 = scmp.lt.s32.totalorder %s24, 8
    // Predicated region
    $region61: #{equivariant_attention_pallas.1} parent=5 // pred_check
      %p517 = pneg %p516
    $region62: #{equivariant_attention_pallas.1} parent=5 // pred_check_branch
      %519 = sbr.rel (%p517) target = $region64
    $region63: #{equivariant_attention_pallas.1} parent=5 // pred_region
      // Predicated region
      $region65: #{equivariant_attention_pallas.1} parent=63 // pred_check
        %p520 = pneg %p65
      $region66: #{equivariant_attention_pallas.1} parent=63 // pred_check_branch
        %522 = sbr.rel (%p520) target = $region68
      $region67: #{equivariant_attention_pallas.1} parent=63 // pred_region
        %p523 = scmp.lt.s32.totalorder %s31, 1
        %s524 = scalar_select %p523, %s31, 1
        %p525 = scmp.lt.s32.totalorder %s32, 0
        %s526 = scalar_select %p525, %s32, 0
        %s527 = sadd.s32 %s526, %s524
        %s528 = smul.addr %s527, 8
        %s529 = scalar_lea.vmem %s0, %s528
      $region68: #{equivariant_attention_pallas.1} parent=63 // pred_fallthru
        _
      // Predicated region
      $region69: #{equivariant_attention_pallas.1} parent=63 // pred_check
        %p530 = pneg %p91
      $region70: #{equivariant_attention_pallas.1} parent=63 // pred_check_branch
        %532 = sbr.rel (%p530) target = $region72
      $region71: #{equivariant_attention_pallas.1} parent=63 // pred_region
        %p533 = scmp.lt.s32.totalorder %s31, 1
        %s534 = scalar_select %p533, %s31, 1
        %s535 = smul.addr %s534, 8
        %s536 = scalar_lea.vmem %s1, %s535
      $region72: #{equivariant_attention_pallas.1} parent=63 // pred_fallthru
        _
      // Predicated region
      $region73: #{equivariant_attention_pallas.1} parent=63 // pred_check
        %p537 = pneg %p121
      $region74: #{equivariant_attention_pallas.1} parent=63 // pred_check_branch
        %539 = sbr.rel (%p537) target = $region76
      $region75: #{equivariant_attention_pallas.1} parent=63 // pred_region
        %p540 = scmp.lt.s32.totalorder %s31, 1
        %s541 = scalar_select %p540, %s31, 1
        %p542 = scmp.lt.s32.totalorder %s33, 3
        %s543 = scalar_select %p542, %s33, 3
        %p544 = scmp.lt.s32.totalorder %s32, 0
        %s545 = scalar_select %p544, %s32, 0
        %s546 = sadd.s32 %s545, %s543
        %s547 = smul.addr %s541, 4
        %s548 = sadd.s32 %s546, %s547
        %s549 = smul.addr %s548, 4
        %s550 = scalar_lea.vmem %s2, %s549
      $region76: #{equivariant_attention_pallas.1} parent=63 // pred_fallthru
        _
      // Predicated region
      $region77: #{equivariant_attention_pallas.1} parent=63 // pred_check
        %p551 = pneg %p149
      $region78: #{equivariant_attention_pallas.1} parent=63 // pred_check_branch
        %553 = sbr.rel (%p551) target = $region80
      $region79: #{equivariant_attention_pallas.1} parent=63 // pred_region
        %p554 = scmp.lt.s32.totalorder %s31, 1
        %s555 = scalar_select %p554, %s31, 1
        %p556 = scmp.lt.s32.totalorder %s33, 3
        %s557 = scalar_select %p556, %s33, 3
        %s558 = smul.addr %s555, 4
        %s559 = sadd.s32 %s557, %s558
        %s560 = smul.addr %s559, 4
        %s561 = scalar_lea.vmem %s3, %s560
      $region80: #{equivariant_attention_pallas.1} parent=63 // pred_fallthru
        _
      // Predicated region
      $region81: #{equivariant_attention_pallas.1} parent=63 // pred_check
        %p562 = pneg %p177
      $region82: #{equivariant_attention_pallas.1} parent=63 // pred_check_branch
        %564 = sbr.rel (%p562) target = $region84
      $region83: #{equivariant_attention_pallas.1} parent=63 // pred_region
        %p565 = scmp.lt.s32.totalorder %s31, 1
        %s566 = scalar_select %p565, %s31, 1
        %p567 = scmp.lt.s32.totalorder %s33, 3
        %s568 = scalar_select %p567, %s33, 3
        %s569 = smul.addr %s566, 4
        %s570 = sadd.s32 %s568, %s569
        %s571 = smul.addr %s570, 4
        %s572 = scalar_lea.vmem %s4, %s571
      $region84: #{equivariant_attention_pallas.1} parent=63 // pred_fallthru
        _
    $region64: #{equivariant_attention_pallas.1} parent=5 // pred_fallthru
      _
    %p573 = scmp.le.s32.totalorder 1, %s24
    %p574 = scmp.lt.s32.totalorder %s24, 9
    %p575 = pnand %p573, %p574
    %p576 = pneg %p575
    // Predicated region
    $region85: #{equivariant_attention_pallas.1} parent=5 // pred_check
      _
    $region86: #{equivariant_attention_pallas.1} parent=5 // pred_check_branch
      %578 = sbr.rel (%p575) target = $region88
    $region87: #{equivariant_attention_pallas.1} parent=5 // pred_region
      %s579 = ssub.s32 %s24, 1
      %p580 = scmp.lt.s32.totalorder %s34, 1
      %s581 = scalar_select %p580, %s34, 1
      %p582 = scmp.lt.s32.totalorder %s35, 0
      %s583 = scalar_select %p582, %s35, 0
      %s584 = sadd.s32 %s583, %s581
      %s585 = smul.addr %s584, 8
      %s586 = scalar_lea.vmem %s0, %s585
      %p587 = pneg %p71
      %p588 = pneg %p68
      %p589 = scmp.lt.s32.totalorder %s34, 1
      %s590 = scalar_select %p589, %s34, 1
      %s591 = smul.addr %s590, 8
      %s592 = scalar_lea.vmem %s1, %s591
      %p593 = pneg %p97
      %p594 = pneg %p94
      %p595 = scmp.lt.s32.totalorder %s34, 1
      %s596 = scalar_select %p595, %s34, 1
      %p597 = scmp.lt.s32.totalorder %s36, 3
      %s598 = scalar_select %p597, %s36, 3
      %p599 = scmp.lt.s32.totalorder %s35, 0
      %s600 = scalar_select %p599, %s35, 0
      %s601 = sadd.s32 %s600, %s598
      %s602 = smul.addr %s596, 4
      %s603 = sadd.s32 %s601, %s602
      %s604 = smul.addr %s603, 4
      %s605 = scalar_lea.vmem %s2, %s604
      %p606 = pneg %p127
      %p607 = pneg %p124
      %p608 = scmp.lt.s32.totalorder %s34, 1
      %s609 = scalar_select %p608, %s34, 1
      %p610 = scmp.lt.s32.totalorder %s36, 3
      %s611 = scalar_select %p610, %s36, 3
      %s612 = smul.addr %s609, 4
      %s613 = sadd.s32 %s611, %s612
      %s614 = smul.addr %s613, 4
      %s615 = scalar_lea.vmem %s3, %s614
      %p616 = pneg %p155
      %p617 = pneg %p152
      %p618 = scmp.lt.s32.totalorder %s34, 1
      %s619 = scalar_select %p618, %s34, 1
      %p620 = scmp.lt.s32.totalorder %s36, 3
      %s621 = scalar_select %p620, %s36, 3
      %s622 = smul.addr %s619, 4
      %s623 = sadd.s32 %s621, %s622
      %s624 = smul.addr %s623, 4
      %s625 = scalar_lea.vmem %s4, %s624
      %p626 = pneg %p183
      %p627 = pneg %p180
      %p628 = pneg %p204
      %p629 = pneg %p201
      %p630 = pneg %p225
      %p631 = pneg %p222
      %p632 = pneg %p246
      %p633 = pneg %p243
      %p634 = pneg %p267
      %p635 = pneg %p264
      %p636 = pneg %p288
      %p637 = pneg %p285
      %p638 = pneg %p309
      %p639 = pneg %p306
      %p640 = pneg %p330
      %p641 = pneg %p327
      %p642 = pneg %p351
      %p643 = pneg %p348
      %p644 = pneg %p372
      %p645 = pneg %p369
      %p646 = pneg %p393
      %p647 = pneg %p390
      %p648 = pneg %p414
      %p649 = pneg %p411
      %p650 = pneg %p435
      %p651 = pneg %p432
      %p652 = pneg %p465
      %p653 = pneg %p462
      %p654 = scmp.lt.s32.totalorder %s34, 1
      %s655 = scalar_select %p654, %s34, 1
      %p656 = scmp.lt.s32.totalorder %s36, 3
      %s657 = scalar_select %p656, %s36, 3
      %p658 = scmp.lt.s32.totalorder %s35, 0
      %s659 = scalar_select %p658, %s35, 0
      %s660 = sadd.s32 %s659, %s657
      %s661 = smul.addr %s655, 4
      %s662 = sadd.s32 %s660, %s661
      %s663 = smul.addr %s662, 8
      %s664 = scalar_lea.vmem %s17, %s663
      %p665 = scmp.lt.s32.totalorder %s34, 1
      %s666 = scalar_select %p665, %s34, 1
      %p667 = scmp.lt.s32.totalorder %s35, 0
      %s668 = scalar_select %p667, %s35, 0
      %s669 = sadd.s32 %s668, %s666
      %s670 = smul.addr %s669, 8
      %s671 = scalar_lea.vmem %s0, %s670
      %p672 = scmp.lt.s32.totalorder %s34, 1
      %s673 = scalar_select %p672, %s34, 1
      %s674 = smul.addr %s673, 8
      %s675 = scalar_lea.vmem %s1, %s674
      %p676 = scmp.lt.s32.totalorder %s34, 1
      %s677 = scalar_select %p676, %s34, 1
      %p678 = scmp.lt.s32.totalorder %s36, 3
      %s679 = scalar_select %p678, %s36, 3
      %p680 = scmp.lt.s32.totalorder %s35, 0
      %s681 = scalar_select %p680, %s35, 0
      %s682 = sadd.s32 %s681, %s679
      %s683 = smul.addr %s677, 4
      %s684 = sadd.s32 %s682, %s683
      %s685 = smul.addr %s684, 4
      %s686 = scalar_lea.vmem %s2, %s685
      %p687 = scmp.lt.s32.totalorder %s34, 1
      %s688 = scalar_select %p687, %s34, 1
      %p689 = scmp.lt.s32.totalorder %s36, 3
      %s690 = scalar_select %p689, %s36, 3
      %s691 = smul.addr %s688, 4
      %s692 = sadd.s32 %s690, %s691
      %s693 = smul.addr %s692, 4
      %s694 = scalar_lea.vmem %s3, %s693
      %p695 = scmp.lt.s32.totalorder %s34, 1
      %s696 = scalar_select %p695, %s34, 1
      %p697 = scmp.lt.s32.totalorder %s36, 3
      %s698 = scalar_select %p697, %s36, 3
      %s699 = smul.addr %s696, 4
      %s700 = sadd.s32 %s698, %s699
      %s701 = smul.addr %s700, 4
      %s702 = scalar_lea.vmem %s4, %s701
      %p703 = scmp.lt.s32.totalorder %s34, 1
      %s704 = scalar_select %p703, %s34, 1
      %p705 = scmp.lt.s32.totalorder %s36, 3
      %s706 = scalar_select %p705, %s36, 3
      %p707 = scmp.lt.s32.totalorder %s35, 0
      %s708 = scalar_select %p707, %s35, 0
      %s709 = sadd.s32 %s708, %s706
      %s710 = smul.addr %s704, 4
      %s711 = sadd.s32 %s709, %s710
      %s712 = smul.addr %s711, 8
      %s713 = scalar_lea.vmem %s17, %s712
      %v715 = vld [vmem:[%s671] sm:$0xff]
      %v716 = vld [vmem:[%s675] sm:$0xff]
      %p717 = scmp.eq.s32.totalorder %s36, 0
      // Predicated region
      $region89: #{equivariant_attention_pallas.1} parent=87 // pred_check
        %p718 = pneg %p717
      $region90: #{equivariant_attention_pallas.1} parent=87 // pred_check_branch
        %720 = sbr.rel (%p718) target = $region92
      $region91: #{equivariant_attention_pallas.1} parent=87 // pred_region
        %v722 = vcombine.high %v715, %v715
        %v724 = vunpack.c.l.s4 1966171168
        %v725 = vunpack.c.0.s8 %v724
        %v726 = vlaneseq
        %v727 = vshrl.u32 %v726, 7
        %v728 = vsub.s32 %v725, %v727
        %v729 = vrot.slane %v715, %v728
        %v731 = vunpack.c.l.s4 1966171168
        %v732 = vunpack.c.0.s8 %v731
        %v733 = vlaneseq
        %v734 = vshrl.u32 %v733, 7
        %v735 = vsub.s32 %v732, %v734
        %v736 = vrot.slane %v722, %v735
        %v737 = vcombine.high %v729, %v729
        %v738 = vcombine.high %v736, %v736
        %v740 = vunpack.c.l.s4 1966171168
        %v741 = vunpack.c.0.s8 %v740
        %v742 = vlaneseq
        %v743 = vshrl.u32 %v742, 7
        %v744 = vsub.s32 %v741, %v743
        %v745 = vrot.slane %v729, %v744
        %v747 = vunpack.c.l.s4 1966171168
        %v748 = vunpack.c.0.s8 %v747
        %v749 = vlaneseq
        %v750 = vshrl.u32 %v749, 7
        %v751 = vsub.s32 %v748, %v750
        %v752 = vrot.slane %v736, %v751
        %v754 = vunpack.c.l.s4 1966171168
        %v755 = vunpack.c.0.s8 %v754
        %v756 = vlaneseq
        %v757 = vshrl.u32 %v756, 7
        %v758 = vsub.s32 %v755, %v757
        %v759 = vrot.slane %v737, %v758
        %v761 = vunpack.c.l.s4 1966171168
        %v762 = vunpack.c.0.s8 %v761
        %v763 = vlaneseq
        %v764 = vshrl.u32 %v763, 7
        %v765 = vsub.s32 %v762, %v764
        %v766 = vrot.slane %v738, %v765
        %v767 = vcombine.high %v745, %v745
        %v768 = vcombine.high %v752, %v752
        %v769 = vcombine.high %v759, %v759
        %v770 = vcombine.high %v766, %v766
        %v771 = vlaneseq
        %v772 = vshrl.u32 %v771, 7
        %v773 = vsub.s32 0, %v772
        %v774 = vrot.slane %v745, %v773
        %v775 = vlaneseq
        %v776 = vshrl.u32 %v775, 7
        %v777 = vsub.s32 0, %v776
        %v778 = vrot.slane %v759, %v777
        %v779 = vlaneseq
        %v780 = vshrl.u32 %v779, 7
        %v781 = vsub.s32 0, %v780
        %v782 = vrot.slane %v767, %v781
        %v783 = vlaneseq
        %v784 = vshrl.u32 %v783, 7
        %v785 = vsub.s32 0, %v784
        %v786 = vrot.slane %v769, %v785
        %v787 = vlaneseq
        %v788 = vshrl.u32 %v787, 7
        %v789 = vsub.s32 0, %v788
        %v790 = vrot.slane %v752, %v789
        %v791 = vlaneseq
        %v792 = vshrl.u32 %v791, 7
        %v793 = vsub.s32 0, %v792
        %v794 = vrot.slane %v766, %v793
        %v795 = vlaneseq
        %v796 = vshrl.u32 %v795, 7
        %v797 = vsub.s32 0, %v796
        %v798 = vrot.slane %v768, %v797
        %v799 = vlaneseq
        %v800 = vshrl.u32 %v799, 7
        %v801 = vsub.s32 0, %v800
        %v802 = vrot.slane %v770, %v801
        %v811 = vsub.f32 %v774, %v716
        %v812 = vsub.f32 %v778, %v716
        %v813 = vsub.f32 %v782, %v716
        %v814 = vsub.f32 %v786, %v716
        %v815 = vsub.f32 %v790, %v716
        %v816 = vsub.f32 %v794, %v716
        %v817 = vsub.f32 %v798, %v716
        %v818 = vsub.f32 %v802, %v716
        %v819 = vmul.f32 %v811, %v811
        %v820 = vmul.f32 %v812, %v812
        %v821 = vmul.f32 %v813, %v813
        %v822 = vmul.f32 %v814, %v814
        %v823 = vmul.f32 %v815, %v815
        %v824 = vmul.f32 %v816, %v816
        %v825 = vmul.f32 %v817, %v817
        %v826 = vmul.f32 %v818, %v818
        %vm827 = vcmask 23552
        %v828 = vsel %vm827, %v819, 0.0
        %829 = vadd.xlane.f32.xlu0 %v828
        %v830 = vpop.xlane.xlu0 %829
        %v831 = vsel %vm827, %v820, 0.0
        %832 = vadd.xlane.f32.xlu0 %v831
        %v833 = vpop.xlane.xlu0 %832
        %v834 = vsel %vm827, %v821, 0.0
        %835 = vadd.xlane.f32.xlu0 %v834
        %v836 = vpop.xlane.xlu0 %835
        %v837 = vsel %vm827, %v822, 0.0
        %838 = vadd.xlane.f32.xlu0 %v837
        %v839 = vpop.xlane.xlu0 %838
        %v840 = vsel %vm827, %v823, 0.0
        %841 = vadd.xlane.f32.xlu0 %v840
        %v842 = vpop.xlane.xlu0 %841
        %v843 = vsel %vm827, %v824, 0.0
        %844 = vadd.xlane.f32.xlu0 %v843
        %v845 = vpop.xlane.xlu0 %844
        %v846 = vsel %vm827, %v825, 0.0
        %847 = vadd.xlane.f32.xlu0 %v846
        %v848 = vpop.xlane.xlu0 %847
        %v849 = vsel %vm827, %v826, 0.0
        %850 = vadd.xlane.f32.xlu0 %v849
        %v851 = vpop.xlane.xlu0 %850
        %v852 = vrsqrt.pop %v830
        %v853 = vmul.f32 %v830, %v852
        %vm854 = vcmp.eq.f32.partialorder %v830, inf
        %v855 = vsel %vm854, %v830, %v853
        %vm856 = vcmp.eq.f32.partialorder %v830, 0.0
        %v857 = vand.u32 %v830, 2147483648
        %v858 = vsel %vm856, %v857, %v855
        %v859 = vrsqrt.pop %v833
        %v860 = vmul.f32 %v833, %v859
        %vm861 = vcmp.eq.f32.partialorder %v833, inf
        %v862 = vsel %vm861, %v833, %v860
        %vm863 = vcmp.eq.f32.partialorder %v833, 0.0
        %v864 = vand.u32 %v833, 2147483648
        %v865 = vsel %vm863, %v864, %v862
        %v866 = vrsqrt.pop %v836
        %v867 = vmul.f32 %v836, %v866
        %vm868 = vcmp.eq.f32.partialorder %v836, inf
        %v869 = vsel %vm868, %v836, %v867
        %vm870 = vcmp.eq.f32.partialorder %v836, 0.0
        %v871 = vand.u32 %v836, 2147483648
        %v872 = vsel %vm870, %v871, %v869
        %v873 = vrsqrt.pop %v839
        %v874 = vmul.f32 %v839, %v873
        %vm875 = vcmp.eq.f32.partialorder %v839, inf
        %v876 = vsel %vm875, %v839, %v874
        %vm877 = vcmp.eq.f32.partialorder %v839, 0.0
        %v878 = vand.u32 %v839, 2147483648
        %v879 = vsel %vm877, %v878, %v876
        %v880 = vrsqrt.pop %v842
        %v881 = vmul.f32 %v842, %v880
        %vm882 = vcmp.eq.f32.partialorder %v842, inf
        %v883 = vsel %vm882, %v842, %v881
        %vm884 = vcmp.eq.f32.partialorder %v842, 0.0
        %v885 = vand.u32 %v842, 2147483648
        %v886 = vsel %vm884, %v885, %v883
        %v887 = vrsqrt.pop %v845
        %v888 = vmul.f32 %v845, %v887
        %vm889 = vcmp.eq.f32.partialorder %v845, inf
        %v890 = vsel %vm889, %v845, %v888
        %vm891 = vcmp.eq.f32.partialorder %v845, 0.0
        %v892 = vand.u32 %v845, 2147483648
        %v893 = vsel %vm891, %v892, %v890
        %v894 = vrsqrt.pop %v848
        %v895 = vmul.f32 %v848, %v894
        %vm896 = vcmp.eq.f32.partialorder %v848, inf
        %v897 = vsel %vm896, %v848, %v895
        %vm898 = vcmp.eq.f32.partialorder %v848, 0.0
        %v899 = vand.u32 %v848, 2147483648
        %v900 = vsel %vm898, %v899, %v897
        %v901 = vrsqrt.pop %v851
        %v902 = vmul.f32 %v851, %v901
        %vm903 = vcmp.eq.f32.partialorder %v851, inf
        %v904 = vsel %vm903, %v851, %v902
        %vm905 = vcmp.eq.f32.partialorder %v851, 0.0
        %v906 = vand.u32 %v851, 2147483648
        %v907 = vsel %vm905, %v906, %v904
        %v908 = vand.u32 2147483647, %v858
        %vm909 = vcmp.le.f32.partialorder %v908, 0.7853982
        %vm910 = vcmp.lt.s32.totalorder %v858, 0
        %v911 = vand.u32 %v858, 2139095040
        %v912 = vshrl.u32 %v911, 23
        %v913 = vsub.s32 %v912, 127
        %v914 = vand.u32 2147483647, %v858
        %v915 = vand.u32 %v914, 8388607
        %v916 = vor.u32 %v915, 8388608
        %v917 = vsub.s32 0, %v916
        %v918 = vadd.s32 %v913, 1
        %vm919 = vcmp.gt.s32.totalorder %v918, 0
        %v920 = vsel %vm919, %v918, 0
        %v921 = vshrl.u32 %v920, 5
        %v922 = vand.u32 %v920, 31
        %v923 = vsub.s32 32, %v922
        %v924 = vshrl.u32 683565275, %v923
        %v925 = vshll.u32 683565275, %v922
        %v926 = vshrl.u32 2475754826, %v923
        %v927 = vor.u32 %v925, %v926
        %v928 = vshll.u32 2475754826, %v922
        %v929 = vshrl.u32 2131351028, %v923
        %v930 = vor.u32 %v928, %v929
        %v931 = vshll.u32 2131351028, %v922
        %v932 = vshrl.u32 2102212464, %v923
        %v933 = vor.u32 %v931, %v932
        %v934 = vshll.u32 2102212464, %v922
        %v935 = vshrl.u32 920167782, %v923
        %v936 = vor.u32 %v934, %v935
        %v937 = vshll.u32 920167782, %v922
        %v938 = vshrl.u32 1326507024, %v923
        %v939 = vor.u32 %v937, %v938
        %vm940 = vcmp.lt.s32.totalorder %v921, 1
        %vm941 = vcmp.lt.s32.totalorder %v921, 2
        %vm942 = vcmp.lt.s32.totalorder %v921, 3
        %vm943 = vcmp.lt.s32.totalorder %v921, 4
        %v944 = vsel %vm940, %v924, %v927
        %v945 = vsel %vm943, %v933, 2102212464
        %v946 = vsel %vm942, %v930, %v945
        %v947 = vsel %vm941, %v944, %v946
        %v948 = vsel %vm940, %v927, %v930
        %v949 = vsel %vm943, %v936, 920167782
        %v950 = vsel %vm942, %v933, %v949
        %v951 = vsel %vm941, %v948, %v950
        %v952 = vsel %vm940, %v930, %v933
        %v953 = vsel %vm943, %v939, 1326507024
        %v954 = vsel %vm942, %v936, %v953
        %v955 = vsel %vm941, %v952, %v954
        %v956 = vshll.u32 %v916, 8
        %v957 = vmul.u32.u64.compose %v956, %v955
        %v958 = vextract.low.u32 %v957
        %v959 = vextract.high.u32 %v957
        %v960 = vmul.u32.u64.compose %v956, %v951
        %v961 = vextract.low.u32 %v960
        %v962 = vextract.high.u32 %v960
        %v963 = vmul.u32 %v956, %v947
        %v964 = vadd.s32 %v959, %v961
        %vm965 = vc.u32 %v959, %v961
        %v966 = vadd.s32 %v962, 1
        %v967 = vsel %vm965, %v966, %v962
        %v968 = vadd.s32 %v963, %v967
        %v969 = vadd.s32 %v968, 536870912
        %v970 = vshrl.u32 %v969, 30
        %v971 = vshll.u32 %v970, 30
        %v972 = vsub.s32 %v968, %v971
        %vm973 = vcmp.lt.s32.totalorder %v972, 0
        %v974 = vsub.s32 0, %v972
        %v975 = vsel %vm973, %v974, %v972
        %v976 = vclz %v975
        %v977 = vsub.s32 %v976, 2
        %vm978 = vcmp.gt.s32.totalorder 0, %v977
        %v979 = vsel %vm978, 0, %v977
        %v980 = vsub.s32 32, %v979
        %v981 = vshll.u32 %v972, %v979
        %v982 = vshrl.u32 %v964, %v980
        %v983 = vor.u32 %v981, %v982
        %v984 = vsub.s32 4294967266, %v979
        %v985 = vadd.s32 %v984, 127
        %v986 = vshll.u32 %v985, 23
        %v987 = vor.u32 4788187, %v986
        %v988 = vand.u32 2147483647, %v987
        %v990 = vcvt.s32.f32 %v983
        %v991 = vmul.f32 %v990, %v988
        %v992 = vxor.u32 %v991, 2147483648
        %v993 = vsel %vm910, %v992, %v991
        %v994 = vsub.s32 4, %v970
        %v995 = vsel %vm910, %v994, %v970
        %v996 = vsel %vm909, %v858, %v993
        %v997 = vsel %vm909, 0, %v995
        %v998 = vcosq.f32.pop %v996
        %v999 = vsinq.f32.pop %v996
        %vm1000 = vweird.f32 %v858
        %v1001 = vadd.s32 %v997, 3
        %v1002 = vand.u32 %v1001, 3
        %vm1003 = vcmp.lt.s32.totalorder %v1002, 2
        %vm1004 = vcmp.eq.s32.totalorder %v1002, 0
        %v1005 = vxor.u32 %v999, 2147483648
        %v1006 = vsel %vm1004, %v998, %v1005
        %vm1007 = vcmp.eq.s32.totalorder %v1002, 2
        %v1008 = vxor.u32 %v998, 2147483648
        %v1009 = vsel %vm1007, %v1008, %v999
        %v1010 = vsel %vm1003, %v1006, %v1009
        %v1011 = vsel %vm1000, nan, %v1010
        %v1012 = vand.u32 2147483647, %v865
        %vm1013 = vcmp.le.f32.partialorder %v1012, 0.7853982
        %vm1014 = vcmp.lt.s32.totalorder %v865, 0
        %v1015 = vand.u32 %v865, 2139095040
        %v1016 = vshrl.u32 %v1015, 23
        %v1017 = vsub.s32 %v1016, 127
        %v1018 = vand.u32 2147483647, %v865
        %v1019 = vand.u32 %v1018, 8388607
        %v1020 = vor.u32 %v1019, 8388608
        %v1021 = vsub.s32 0, %v1020
        %v1022 = vadd.s32 %v1017, 1
        %vm1023 = vcmp.gt.s32.totalorder %v1022, 0
        %v1024 = vsel %vm1023, %v1022, 0
        %v1025 = vshrl.u32 %v1024, 5
        %v1026 = vand.u32 %v1024, 31
        %v1027 = vsub.s32 32, %v1026
        %v1028 = vshrl.u32 683565275, %v1027
        %v1029 = vshll.u32 683565275, %v1026
        %v1030 = vshrl.u32 2475754826, %v1027
        %v1031 = vor.u32 %v1029, %v1030
        %v1032 = vshll.u32 2475754826, %v1026
        %v1033 = vshrl.u32 2131351028, %v1027
        %v1034 = vor.u32 %v1032, %v1033
        %v1035 = vshll.u32 2131351028, %v1026
        %v1036 = vshrl.u32 2102212464, %v1027
        %v1037 = vor.u32 %v1035, %v1036
        %v1038 = vshll.u32 2102212464, %v1026
        %v1039 = vshrl.u32 920167782, %v1027
        %v1040 = vor.u32 %v1038, %v1039
        %v1041 = vshll.u32 920167782, %v1026
        %v1042 = vshrl.u32 1326507024, %v1027
        %v1043 = vor.u32 %v1041, %v1042
        %vm1044 = vcmp.lt.s32.totalorder %v1025, 1
        %vm1045 = vcmp.lt.s32.totalorder %v1025, 2
        %vm1046 = vcmp.lt.s32.totalorder %v1025, 3
        %vm1047 = vcmp.lt.s32.totalorder %v1025, 4
        %v1048 = vsel %vm1044, %v1028, %v1031
        %v1049 = vsel %vm1047, %v1037, 2102212464
        %v1050 = vsel %vm1046, %v1034, %v1049
        %v1051 = vsel %vm1045, %v1048, %v1050
        %v1052 = vsel %vm1044, %v1031, %v1034
        %v1053 = vsel %vm1047, %v1040, 920167782
        %v1054 = vsel %vm1046, %v1037, %v1053
        %v1055 = vsel %vm1045, %v1052, %v1054
        %v1056 = vsel %vm1044, %v1034, %v1037
        %v1057 = vsel %vm1047, %v1043, 1326507024
        %v1058 = vsel %vm1046, %v1040, %v1057
        %v1059 = vsel %vm1045, %v1056, %v1058
        %v1060 = vshll.u32 %v1020, 8
        %v1061 = vmul.u32.u64.compose %v1060, %v1059
        %v1062 = vextract.low.u32 %v1061
        %v1063 = vextract.high.u32 %v1061
        %v1064 = vmul.u32.u64.compose %v1060, %v1055
        %v1065 = vextract.low.u32 %v1064
        %v1066 = vextract.high.u32 %v1064
        %v1067 = vmul.u32 %v1060, %v1051
        %v1068 = vadd.s32 %v1063, %v1065
        %vm1069 = vc.u32 %v1063, %v1065
        %v1070 = vadd.s32 %v1066, 1
        %v1071 = vsel %vm1069, %v1070, %v1066
        %v1072 = vadd.s32 %v1067, %v1071
        %v1073 = vadd.s32 %v1072, 536870912
        %v1074 = vshrl.u32 %v1073, 30
        %v1075 = vshll.u32 %v1074, 30
        %v1076 = vsub.s32 %v1072, %v1075
        %vm1077 = vcmp.lt.s32.totalorder %v1076, 0
        %v1078 = vsub.s32 0, %v1076
        %v1079 = vsel %vm1077, %v1078, %v1076
        %v1080 = vclz %v1079
        %v1081 = vsub.s32 %v1080, 2
        %vm1082 = vcmp.gt.s32.totalorder 0, %v1081
        %v1083 = vsel %vm1082, 0, %v1081
        %v1084 = vsub.s32 32, %v1083
        %v1085 = vshll.u32 %v1076, %v1083
        %v1086 = vshrl.u32 %v1068, %v1084
        %v1087 = vor.u32 %v1085, %v1086
        %v1088 = vsub.s32 4294967266, %v1083
        %v1089 = vadd.s32 %v1088, 127
        %v1090 = vshll.u32 %v1089, 23
        %v1091 = vor.u32 4788187, %v1090
        %v1092 = vand.u32 2147483647, %v1091
        %v1094 = vcvt.s32.f32 %v1087
        %v1095 = vmul.f32 %v1094, %v1092
        %v1096 = vxor.u32 %v1095, 2147483648
        %v1097 = vsel %vm1014, %v1096, %v1095
        %v1098 = vsub.s32 4, %v1074
        %v1099 = vsel %vm1014, %v1098, %v1074
        %v1100 = vsel %vm1013, %v865, %v1097
        %v1101 = vsel %vm1013, 0, %v1099
        %v1102 = vcosq.f32.pop %v1100
        %v1103 = vsinq.f32.pop %v1100
        %vm1104 = vweird.f32 %v865
        %v1105 = vadd.s32 %v1101, 3
        %v1106 = vand.u32 %v1105, 3
        %vm1107 = vcmp.lt.s32.totalorder %v1106, 2
        %vm1108 = vcmp.eq.s32.totalorder %v1106, 0
        %v1109 = vxor.u32 %v1103, 2147483648
        %v1110 = vsel %vm1108, %v1102, %v1109
        %vm1111 = vcmp.eq.s32.totalorder %v1106, 2
        %v1112 = vxor.u32 %v1102, 2147483648
        %v1113 = vsel %vm1111, %v1112, %v1103
        %v1114 = vsel %vm1107, %v1110, %v1113
        %v1115 = vsel %vm1104, nan, %v1114
        %v1116 = vand.u32 2147483647, %v872
        %vm1117 = vcmp.le.f32.partialorder %v1116, 0.7853982
        %vm1118 = vcmp.lt.s32.totalorder %v872, 0
        %v1119 = vand.u32 %v872, 2139095040
        %v1120 = vshrl.u32 %v1119, 23
        %v1121 = vsub.s32 %v1120, 127
        %v1122 = vand.u32 2147483647, %v872
        %v1123 = vand.u32 %v1122, 8388607
        %v1124 = vor.u32 %v1123, 8388608
        %v1125 = vsub.s32 0, %v1124
        %v1126 = vadd.s32 %v1121, 1
        %vm1127 = vcmp.gt.s32.totalorder %v1126, 0
        %v1128 = vsel %vm1127, %v1126, 0
        %v1129 = vshrl.u32 %v1128, 5
        %v1130 = vand.u32 %v1128, 31
        %v1131 = vsub.s32 32, %v1130
        %v1132 = vshrl.u32 683565275, %v1131
        %v1133 = vshll.u32 683565275, %v1130
        %v1134 = vshrl.u32 2475754826, %v1131
        %v1135 = vor.u32 %v1133, %v1134
        %v1136 = vshll.u32 2475754826, %v1130
        %v1137 = vshrl.u32 2131351028, %v1131
        %v1138 = vor.u32 %v1136, %v1137
        %v1139 = vshll.u32 2131351028, %v1130
        %v1140 = vshrl.u32 2102212464, %v1131
        %v1141 = vor.u32 %v1139, %v1140
        %v1142 = vshll.u32 2102212464, %v1130
        %v1143 = vshrl.u32 920167782, %v1131
        %v1144 = vor.u32 %v1142, %v1143
        %v1145 = vshll.u32 920167782, %v1130
        %v1146 = vshrl.u32 1326507024, %v1131
        %v1147 = vor.u32 %v1145, %v1146
        %vm1148 = vcmp.lt.s32.totalorder %v1129, 1
        %vm1149 = vcmp.lt.s32.totalorder %v1129, 2
        %vm1150 = vcmp.lt.s32.totalorder %v1129, 3
        %vm1151 = vcmp.lt.s32.totalorder %v1129, 4
        %v1152 = vsel %vm1148, %v1132, %v1135
        %v1153 = vsel %vm1151, %v1141, 2102212464
        %v1154 = vsel %vm1150, %v1138, %v1153
        %v1155 = vsel %vm1149, %v1152, %v1154
        %v1156 = vsel %vm1148, %v1135, %v1138
        %v1157 = vsel %vm1151, %v1144, 920167782
        %v1158 = vsel %vm1150, %v1141, %v1157
        %v1159 = vsel %vm1149, %v1156, %v1158
        %v1160 = vsel %vm1148, %v1138, %v1141
        %v1161 = vsel %vm1151, %v1147, 1326507024
        %v1162 = vsel %vm1150, %v1144, %v1161
        %v1163 = vsel %vm1149, %v1160, %v1162
        %v1164 = vshll.u32 %v1124, 8
        %v1165 = vmul.u32.u64.compose %v1164, %v1163
        %v1166 = vextract.low.u32 %v1165
        %v1167 = vextract.high.u32 %v1165
        %v1168 = vmul.u32.u64.compose %v1164, %v1159
        %v1169 = vextract.low.u32 %v1168
        %v1170 = vextract.high.u32 %v1168
        %v1171 = vmul.u32 %v1164, %v1155
        %v1172 = vadd.s32 %v1167, %v1169
        %vm1173 = vc.u32 %v1167, %v1169
        %v1174 = vadd.s32 %v1170, 1
        %v1175 = vsel %vm1173, %v1174, %v1170
        %v1176 = vadd.s32 %v1171, %v1175
        %v1177 = vadd.s32 %v1176, 536870912
        %v1178 = vshrl.u32 %v1177, 30
        %v1179 = vshll.u32 %v1178, 30
        %v1180 = vsub.s32 %v1176, %v1179
        %vm1181 = vcmp.lt.s32.totalorder %v1180, 0
        %v1182 = vsub.s32 0, %v1180
        %v1183 = vsel %vm1181, %v1182, %v1180
        %v1184 = vclz %v1183
        %v1185 = vsub.s32 %v1184, 2
        %vm1186 = vcmp.gt.s32.totalorder 0, %v1185
        %v1187 = vsel %vm1186, 0, %v1185
        %v1188 = vsub.s32 32, %v1187
        %v1189 = vshll.u32 %v1180, %v1187
        %v1190 = vshrl.u32 %v1172, %v1188
        %v1191 = vor.u32 %v1189, %v1190
        %v1192 = vsub.s32 4294967266, %v1187
        %v1193 = vadd.s32 %v1192, 127
        %v1194 = vshll.u32 %v1193, 23
        %v1195 = vor.u32 4788187, %v1194
        %v1196 = vand.u32 2147483647, %v1195
        %v1198 = vcvt.s32.f32 %v1191
        %v1199 = vmul.f32 %v1198, %v1196
        %v1200 = vxor.u32 %v1199, 2147483648
        %v1201 = vsel %vm1118, %v1200, %v1199
        %v1202 = vsub.s32 4, %v1178
        %v1203 = vsel %vm1118, %v1202, %v1178
        %v1204 = vsel %vm1117, %v872, %v1201
        %v1205 = vsel %vm1117, 0, %v1203
        %v1206 = vcosq.f32.pop %v1204
        %v1207 = vsinq.f32.pop %v1204
        %vm1208 = vweird.f32 %v872
        %v1209 = vadd.s32 %v1205, 3
        %v1210 = vand.u32 %v1209, 3
        %vm1211 = vcmp.lt.s32.totalorder %v1210, 2
        %vm1212 = vcmp.eq.s32.totalorder %v1210, 0
        %v1213 = vxor.u32 %v1207, 2147483648
        %v1214 = vsel %vm1212, %v1206, %v1213
        %vm1215 = vcmp.eq.s32.totalorder %v1210, 2
        %v1216 = vxor.u32 %v1206, 2147483648
        %v1217 = vsel %vm1215, %v1216, %v1207
        %v1218 = vsel %vm1211, %v1214, %v1217
        %v1219 = vsel %vm1208, nan, %v1218
        %v1220 = vand.u32 2147483647, %v879
        %vm1221 = vcmp.le.f32.partialorder %v1220, 0.7853982
        %vm1222 = vcmp.lt.s32.totalorder %v879, 0
        %v1223 = vand.u32 %v879, 2139095040
        %v1224 = vshrl.u32 %v1223, 23
        %v1225 = vsub.s32 %v1224, 127
        %v1226 = vand.u32 2147483647, %v879
        %v1227 = vand.u32 %v1226, 8388607
        %v1228 = vor.u32 %v1227, 8388608
        %v1229 = vsub.s32 0, %v1228
        %v1230 = vadd.s32 %v1225, 1
        %vm1231 = vcmp.gt.s32.totalorder %v1230, 0
        %v1232 = vsel %vm1231, %v1230, 0
        %v1233 = vshrl.u32 %v1232, 5
        %v1234 = vand.u32 %v1232, 31
        %v1235 = vsub.s32 32, %v1234
        %v1236 = vshrl.u32 683565275, %v1235
        %v1237 = vshll.u32 683565275, %v1234
        %v1238 = vshrl.u32 2475754826, %v1235
        %v1239 = vor.u32 %v1237, %v1238
        %v1240 = vshll.u32 2475754826, %v1234
        %v1241 = vshrl.u32 2131351028, %v1235
        %v1242 = vor.u32 %v1240, %v1241
        %v1243 = vshll.u32 2131351028, %v1234
        %v1244 = vshrl.u32 2102212464, %v1235
        %v1245 = vor.u32 %v1243, %v1244
        %v1246 = vshll.u32 2102212464, %v1234
        %v1247 = vshrl.u32 920167782, %v1235
        %v1248 = vor.u32 %v1246, %v1247
        %v1249 = vshll.u32 920167782, %v1234
        %v1250 = vshrl.u32 1326507024, %v1235
        %v1251 = vor.u32 %v1249, %v1250
        %vm1252 = vcmp.lt.s32.totalorder %v1233, 1
        %vm1253 = vcmp.lt.s32.totalorder %v1233, 2
        %vm1254 = vcmp.lt.s32.totalorder %v1233, 3
        %vm1255 = vcmp.lt.s32.totalorder %v1233, 4
        %v1256 = vsel %vm1252, %v1236, %v1239
        %v1257 = vsel %vm1255, %v1245, 2102212464
        %v1258 = vsel %vm1254, %v1242, %v1257
        %v1259 = vsel %vm1253, %v1256, %v1258
        %v1260 = vsel %vm1252, %v1239, %v1242
        %v1261 = vsel %vm1255, %v1248, 920167782
        %v1262 = vsel %vm1254, %v1245, %v1261
        %v1263 = vsel %vm1253, %v1260, %v1262
        %v1264 = vsel %vm1252, %v1242, %v1245
        %v1265 = vsel %vm1255, %v1251, 1326507024
        %v1266 = vsel %vm1254, %v1248, %v1265
        %v1267 = vsel %vm1253, %v1264, %v1266
        %v1268 = vshll.u32 %v1228, 8
        %v1269 = vmul.u32.u64.compose %v1268, %v1267
        %v1270 = vextract.low.u32 %v1269
        %v1271 = vextract.high.u32 %v1269
        %v1272 = vmul.u32.u64.compose %v1268, %v1263
        %v1273 = vextract.low.u32 %v1272
        %v1274 = vextract.high.u32 %v1272
        %v1275 = vmul.u32 %v1268, %v1259
        %v1276 = vadd.s32 %v1271, %v1273
        %vm1277 = vc.u32 %v1271, %v1273
        %v1278 = vadd.s32 %v1274, 1
        %v1279 = vsel %vm1277, %v1278, %v1274
        %v1280 = vadd.s32 %v1275, %v1279
        %v1281 = vadd.s32 %v1280, 536870912
        %v1282 = vshrl.u32 %v1281, 30
        %v1283 = vshll.u32 %v1282, 30
        %v1284 = vsub.s32 %v1280, %v1283
        %vm1285 = vcmp.lt.s32.totalorder %v1284, 0
        %v1286 = vsub.s32 0, %v1284
        %v1287 = vsel %vm1285, %v1286, %v1284
        %v1288 = vclz %v1287
        %v1289 = vsub.s32 %v1288, 2
        %vm1290 = vcmp.gt.s32.totalorder 0, %v1289
        %v1291 = vsel %vm1290, 0, %v1289
        %v1292 = vsub.s32 32, %v1291
        %v1293 = vshll.u32 %v1284, %v1291
        %v1294 = vshrl.u32 %v1276, %v1292
        %v1295 = vor.u32 %v1293, %v1294
        %v1296 = vsub.s32 4294967266, %v1291
        %v1297 = vadd.s32 %v1296, 127
        %v1298 = vshll.u32 %v1297, 23
        %v1299 = vor.u32 4788187, %v1298
        %v1300 = vand.u32 2147483647, %v1299
        %v1302 = vcvt.s32.f32 %v1295
        %v1303 = vmul.f32 %v1302, %v1300
        %v1304 = vxor.u32 %v1303, 2147483648
        %v1305 = vsel %vm1222, %v1304, %v1303
        %v1306 = vsub.s32 4, %v1282
        %v1307 = vsel %vm1222, %v1306, %v1282
        %v1308 = vsel %vm1221, %v879, %v1305
        %v1309 = vsel %vm1221, 0, %v1307
        %v1310 = vcosq.f32.pop %v1308
        %v1311 = vsinq.f32.pop %v1308
        %vm1312 = vweird.f32 %v879
        %v1313 = vadd.s32 %v1309, 3
        %v1314 = vand.u32 %v1313, 3
        %vm1315 = vcmp.lt.s32.totalorder %v1314, 2
        %vm1316 = vcmp.eq.s32.totalorder %v1314, 0
        %v1317 = vxor.u32 %v1311, 2147483648
        %v1318 = vsel %vm1316, %v1310, %v1317
        %vm1319 = vcmp.eq.s32.totalorder %v1314, 2
        %v1320 = vxor.u32 %v1310, 2147483648
        %v1321 = vsel %vm1319, %v1320, %v1311
        %v1322 = vsel %vm1315, %v1318, %v1321
        %v1323 = vsel %vm1312, nan, %v1322
        %v1324 = vand.u32 2147483647, %v886
        %vm1325 = vcmp.le.f32.partialorder %v1324, 0.7853982
        %vm1326 = vcmp.lt.s32.totalorder %v886, 0
        %v1327 = vand.u32 %v886, 2139095040
        %v1328 = vshrl.u32 %v1327, 23
        %v1329 = vsub.s32 %v1328, 127
        %v1330 = vand.u32 2147483647, %v886
        %v1331 = vand.u32 %v1330, 8388607
        %v1332 = vor.u32 %v1331, 8388608
        %v1333 = vsub.s32 0, %v1332
        %v1334 = vadd.s32 %v1329, 1
        %vm1335 = vcmp.gt.s32.totalorder %v1334, 0
        %v1336 = vsel %vm1335, %v1334, 0
        %v1337 = vshrl.u32 %v1336, 5
        %v1338 = vand.u32 %v1336, 31
        %v1339 = vsub.s32 32, %v1338
        %v1340 = vshrl.u32 683565275, %v1339
        %v1341 = vshll.u32 683565275, %v1338
        %v1342 = vshrl.u32 2475754826, %v1339
        %v1343 = vor.u32 %v1341, %v1342
        %v1344 = vshll.u32 2475754826, %v1338
        %v1345 = vshrl.u32 2131351028, %v1339
        %v1346 = vor.u32 %v1344, %v1345
        %v1347 = vshll.u32 2131351028, %v1338
        %v1348 = vshrl.u32 2102212464, %v1339
        %v1349 = vor.u32 %v1347, %v1348
        %v1350 = vshll.u32 2102212464, %v1338
        %v1351 = vshrl.u32 920167782, %v1339
        %v1352 = vor.u32 %v1350, %v1351
        %v1353 = vshll.u32 920167782, %v1338
        %v1354 = vshrl.u32 1326507024, %v1339
        %v1355 = vor.u32 %v1353, %v1354
        %vm1356 = vcmp.lt.s32.totalorder %v1337, 1
        %vm1357 = vcmp.lt.s32.totalorder %v1337, 2
        %vm1358 = vcmp.lt.s32.totalorder %v1337, 3
        %vm1359 = vcmp.lt.s32.totalorder %v1337, 4
        %v1360 = vsel %vm1356, %v1340, %v1343
        %v1361 = vsel %vm1359, %v1349, 2102212464
        %v1362 = vsel %vm1358, %v1346, %v1361
        %v1363 = vsel %vm1357, %v1360, %v1362
        %v1364 = vsel %vm1356, %v1343, %v1346
        %v1365 = vsel %vm1359, %v1352, 920167782
        %v1366 = vsel %vm1358, %v1349, %v1365
        %v1367 = vsel %vm1357, %v1364, %v1366
        %v1368 = vsel %vm1356, %v1346, %v1349
        %v1369 = vsel %vm1359, %v1355, 1326507024
        %v1370 = vsel %vm1358, %v1352, %v1369
        %v1371 = vsel %vm1357, %v1368, %v1370
        %v1372 = vshll.u32 %v1332, 8
        %v1373 = vmul.u32.u64.compose %v1372, %v1371
        %v1374 = vextract.low.u32 %v1373
        %v1375 = vextract.high.u32 %v1373
        %v1376 = vmul.u32.u64.compose %v1372, %v1367
        %v1377 = vextract.low.u32 %v1376
        %v1378 = vextract.high.u32 %v1376
        %v1379 = vmul.u32 %v1372, %v1363
        %v1380 = vadd.s32 %v1375, %v1377
        %vm1381 = vc.u32 %v1375, %v1377
        %v1382 = vadd.s32 %v1378, 1
        %v1383 = vsel %vm1381, %v1382, %v1378
        %v1384 = vadd.s32 %v1379, %v1383
        %v1385 = vadd.s32 %v1384, 536870912
        %v1386 = vshrl.u32 %v1385, 30
        %v1387 = vshll.u32 %v1386, 30
        %v1388 = vsub.s32 %v1384, %v1387
        %vm1389 = vcmp.lt.s32.totalorder %v1388, 0
        %v1390 = vsub.s32 0, %v1388
        %v1391 = vsel %vm1389, %v1390, %v1388
        %v1392 = vclz %v1391
        %v1393 = vsub.s32 %v1392, 2
        %vm1394 = vcmp.gt.s32.totalorder 0, %v1393
        %v1395 = vsel %vm1394, 0, %v1393
        %v1396 = vsub.s32 32, %v1395
        %v1397 = vshll.u32 %v1388, %v1395
        %v1398 = vshrl.u32 %v1380, %v1396
        %v1399 = vor.u32 %v1397, %v1398
        %v1400 = vsub.s32 4294967266, %v1395
        %v1401 = vadd.s32 %v1400, 127
        %v1402 = vshll.u32 %v1401, 23
        %v1403 = vor.u32 4788187, %v1402
        %v1404 = vand.u32 2147483647, %v1403
        %v1406 = vcvt.s32.f32 %v1399
        %v1407 = vmul.f32 %v1406, %v1404
        %v1408 = vxor.u32 %v1407, 2147483648
        %v1409 = vsel %vm1326, %v1408, %v1407
        %v1410 = vsub.s32 4, %v1386
        %v1411 = vsel %vm1326, %v1410, %v1386
        %v1412 = vsel %vm1325, %v886, %v1409
        %v1413 = vsel %vm1325, 0, %v1411
        %v1414 = vcosq.f32.pop %v1412
        %v1415 = vsinq.f32.pop %v1412
        %vm1416 = vweird.f32 %v886
        %v1417 = vadd.s32 %v1413, 3
        %v1418 = vand.u32 %v1417, 3
        %vm1419 = vcmp.lt.s32.totalorder %v1418, 2
        %vm1420 = vcmp.eq.s32.totalorder %v1418, 0
        %v1421 = vxor.u32 %v1415, 2147483648
        %v1422 = vsel %vm1420, %v1414, %v1421
        %vm1423 = vcmp.eq.s32.totalorder %v1418, 2
        %v1424 = vxor.u32 %v1414, 2147483648
        %v1425 = vsel %vm1423, %v1424, %v1415
        %v1426 = vsel %vm1419, %v1422, %v1425
        %v1427 = vsel %vm1416, nan, %v1426
        %v1428 = vand.u32 2147483647, %v893
        %vm1429 = vcmp.le.f32.partialorder %v1428, 0.7853982
        %vm1430 = vcmp.lt.s32.totalorder %v893, 0
        %v1431 = vand.u32 %v893, 2139095040
        %v1432 = vshrl.u32 %v1431, 23
        %v1433 = vsub.s32 %v1432, 127
        %v1434 = vand.u32 2147483647, %v893
        %v1435 = vand.u32 %v1434, 8388607
        %v1436 = vor.u32 %v1435, 8388608
        %v1437 = vsub.s32 0, %v1436
        %v1438 = vadd.s32 %v1433, 1
        %vm1439 = vcmp.gt.s32.totalorder %v1438, 0
        %v1440 = vsel %vm1439, %v1438, 0
        %v1441 = vshrl.u32 %v1440, 5
        %v1442 = vand.u32 %v1440, 31
        %v1443 = vsub.s32 32, %v1442
        %v1444 = vshrl.u32 683565275, %v1443
        %v1445 = vshll.u32 683565275, %v1442
        %v1446 = vshrl.u32 2475754826, %v1443
        %v1447 = vor.u32 %v1445, %v1446
        %v1448 = vshll.u32 2475754826, %v1442
        %v1449 = vshrl.u32 2131351028, %v1443
        %v1450 = vor.u32 %v1448, %v1449
        %v1451 = vshll.u32 2131351028, %v1442
        %v1452 = vshrl.u32 2102212464, %v1443
        %v1453 = vor.u32 %v1451, %v1452
        %v1454 = vshll.u32 2102212464, %v1442
        %v1455 = vshrl.u32 920167782, %v1443
        %v1456 = vor.u32 %v1454, %v1455
        %v1457 = vshll.u32 920167782, %v1442
        %v1458 = vshrl.u32 1326507024, %v1443
        %v1459 = vor.u32 %v1457, %v1458
        %vm1460 = vcmp.lt.s32.totalorder %v1441, 1
        %vm1461 = vcmp.lt.s32.totalorder %v1441, 2
        %vm1462 = vcmp.lt.s32.totalorder %v1441, 3
        %vm1463 = vcmp.lt.s32.totalorder %v1441, 4
        %v1464 = vsel %vm1460, %v1444, %v1447
        %v1465 = vsel %vm1463, %v1453, 2102212464
        %v1466 = vsel %vm1462, %v1450, %v1465
        %v1467 = vsel %vm1461, %v1464, %v1466
        %v1468 = vsel %vm1460, %v1447, %v1450
        %v1469 = vsel %vm1463, %v1456, 920167782
        %v1470 = vsel %vm1462, %v1453, %v1469
        %v1471 = vsel %vm1461, %v1468, %v1470
        %v1472 = vsel %vm1460, %v1450, %v1453
        %v1473 = vsel %vm1463, %v1459, 1326507024
        %v1474 = vsel %vm1462, %v1456, %v1473
        %v1475 = vsel %vm1461, %v1472, %v1474
        %v1476 = vshll.u32 %v1436, 8
        %v1477 = vmul.u32.u64.compose %v1476, %v1475
        %v1478 = vextract.low.u32 %v1477
        %v1479 = vextract.high.u32 %v1477
        %v1480 = vmul.u32.u64.compose %v1476, %v1471
        %v1481 = vextract.low.u32 %v1480
        %v1482 = vextract.high.u32 %v1480
        %v1483 = vmul.u32 %v1476, %v1467
        %v1484 = vadd.s32 %v1479, %v1481
        %vm1485 = vc.u32 %v1479, %v1481
        %v1486 = vadd.s32 %v1482, 1
        %v1487 = vsel %vm1485, %v1486, %v1482
        %v1488 = vadd.s32 %v1483, %v1487
        %v1489 = vadd.s32 %v1488, 536870912
        %v1490 = vshrl.u32 %v1489, 30
        %v1491 = vshll.u32 %v1490, 30
        %v1492 = vsub.s32 %v1488, %v1491
        %vm1493 = vcmp.lt.s32.totalorder %v1492, 0
        %v1494 = vsub.s32 0, %v1492
        %v1495 = vsel %vm1493, %v1494, %v1492
        %v1496 = vclz %v1495
        %v1497 = vsub.s32 %v1496, 2
        %vm1498 = vcmp.gt.s32.totalorder 0, %v1497
        %v1499 = vsel %vm1498, 0, %v1497
        %v1500 = vsub.s32 32, %v1499
        %v1501 = vshll.u32 %v1492, %v1499
        %v1502 = vshrl.u32 %v1484, %v1500
        %v1503 = vor.u32 %v1501, %v1502
        %v1504 = vsub.s32 4294967266, %v1499
        %v1505 = vadd.s32 %v1504, 127
        %v1506 = vshll.u32 %v1505, 23
        %v1507 = vor.u32 4788187, %v1506
        %v1508 = vand.u32 2147483647, %v1507
        %v1510 = vcvt.s32.f32 %v1503
        %v1511 = vmul.f32 %v1510, %v1508
        %v1512 = vxor.u32 %v1511, 2147483648
        %v1513 = vsel %vm1430, %v1512, %v1511
        %v1514 = vsub.s32 4, %v1490
        %v1515 = vsel %vm1430, %v1514, %v1490
        %v1516 = vsel %vm1429, %v893, %v1513
        %v1517 = vsel %vm1429, 0, %v1515
        %v1518 = vcosq.f32.pop %v1516
        %v1519 = vsinq.f32.pop %v1516
        %vm1520 = vweird.f32 %v893
        %v1521 = vadd.s32 %v1517, 3
        %v1522 = vand.u32 %v1521, 3
        %vm1523 = vcmp.lt.s32.totalorder %v1522, 2
        %vm1524 = vcmp.eq.s32.totalorder %v1522, 0
        %v1525 = vxor.u32 %v1519, 2147483648
        %v1526 = vsel %vm1524, %v1518, %v1525
        %vm1527 = vcmp.eq.s32.totalorder %v1522, 2
        %v1528 = vxor.u32 %v1518, 2147483648
        %v1529 = vsel %vm1527, %v1528, %v1519
        %v1530 = vsel %vm1523, %v1526, %v1529
        %v1531 = vsel %vm1520, nan, %v1530
        %v1532 = vand.u32 2147483647, %v900
        %vm1533 = vcmp.le.f32.partialorder %v1532, 0.7853982
        %vm1534 = vcmp.lt.s32.totalorder %v900, 0
        %v1535 = vand.u32 %v900, 2139095040
        %v1536 = vshrl.u32 %v1535, 23
        %v1537 = vsub.s32 %v1536, 127
        %v1538 = vand.u32 2147483647, %v900
        %v1539 = vand.u32 %v1538, 8388607
        %v1540 = vor.u32 %v1539, 8388608
        %v1541 = vsub.s32 0, %v1540
        %v1542 = vadd.s32 %v1537, 1
        %vm1543 = vcmp.gt.s32.totalorder %v1542, 0
        %v1544 = vsel %vm1543, %v1542, 0
        %v1545 = vshrl.u32 %v1544, 5
        %v1546 = vand.u32 %v1544, 31
        %v1547 = vsub.s32 32, %v1546
        %v1548 = vshrl.u32 683565275, %v1547
        %v1549 = vshll.u32 683565275, %v1546
        %v1550 = vshrl.u32 2475754826, %v1547
        %v1551 = vor.u32 %v1549, %v1550
        %v1552 = vshll.u32 2475754826, %v1546
        %v1553 = vshrl.u32 2131351028, %v1547
        %v1554 = vor.u32 %v1552, %v1553
        %v1555 = vshll.u32 2131351028, %v1546
        %v1556 = vshrl.u32 2102212464, %v1547
        %v1557 = vor.u32 %v1555, %v1556
        %v1558 = vshll.u32 2102212464, %v1546
        %v1559 = vshrl.u32 920167782, %v1547
        %v1560 = vor.u32 %v1558, %v1559
        %v1561 = vshll.u32 920167782, %v1546
        %v1562 = vshrl.u32 1326507024, %v1547
        %v1563 = vor.u32 %v1561, %v1562
        %vm1564 = vcmp.lt.s32.totalorder %v1545, 1
        %vm1565 = vcmp.lt.s32.totalorder %v1545, 2
        %vm1566 = vcmp.lt.s32.totalorder %v1545, 3
        %vm1567 = vcmp.lt.s32.totalorder %v1545, 4
        %v1568 = vsel %vm1564, %v1548, %v1551
        %v1569 = vsel %vm1567, %v1557, 2102212464
        %v1570 = vsel %vm1566, %v1554, %v1569
        %v1571 = vsel %vm1565, %v1568, %v1570
        %v1572 = vsel %vm1564, %v1551, %v1554
        %v1573 = vsel %vm1567, %v1560, 920167782
        %v1574 = vsel %vm1566, %v1557, %v1573
        %v1575 = vsel %vm1565, %v1572, %v1574
        %v1576 = vsel %vm1564, %v1554, %v1557
        %v1577 = vsel %vm1567, %v1563, 1326507024
        %v1578 = vsel %vm1566, %v1560, %v1577
        %v1579 = vsel %vm1565, %v1576, %v1578
        %v1580 = vshll.u32 %v1540, 8
        %v1581 = vmul.u32.u64.compose %v1580, %v1579
        %v1582 = vextract.low.u32 %v1581
        %v1583 = vextract.high.u32 %v1581
        %v1584 = vmul.u32.u64.compose %v1580, %v1575
        %v1585 = vextract.low.u32 %v1584
        %v1586 = vextract.high.u32 %v1584
        %v1587 = vmul.u32 %v1580, %v1571
        %v1588 = vadd.s32 %v1583, %v1585
        %vm1589 = vc.u32 %v1583, %v1585
        %v1590 = vadd.s32 %v1586, 1
        %v1591 = vsel %vm1589, %v1590, %v1586
        %v1592 = vadd.s32 %v1587, %v1591
        %v1593 = vadd.s32 %v1592, 536870912
        %v1594 = vshrl.u32 %v1593, 30
        %v1595 = vshll.u32 %v1594, 30
        %v1596 = vsub.s32 %v1592, %v1595
        %vm1597 = vcmp.lt.s32.totalorder %v1596, 0
        %v1598 = vsub.s32 0, %v1596
        %v1599 = vsel %vm1597, %v1598, %v1596
        %v1600 = vclz %v1599
        %v1601 = vsub.s32 %v1600, 2
        %vm1602 = vcmp.gt.s32.totalorder 0, %v1601
        %v1603 = vsel %vm1602, 0, %v1601
        %v1604 = vsub.s32 32, %v1603
        %v1605 = vshll.u32 %v1596, %v1603
        %v1606 = vshrl.u32 %v1588, %v1604
        %v1607 = vor.u32 %v1605, %v1606
        %v1608 = vsub.s32 4294967266, %v1603
        %v1609 = vadd.s32 %v1608, 127
        %v1610 = vshll.u32 %v1609, 23
        %v1611 = vor.u32 4788187, %v1610
        %v1612 = vand.u32 2147483647, %v1611
        %v1614 = vcvt.s32.f32 %v1607
        %v1615 = vmul.f32 %v1614, %v1612
        %v1616 = vxor.u32 %v1615, 2147483648
        %v1617 = vsel %vm1534, %v1616, %v1615
        %v1618 = vsub.s32 4, %v1594
        %v1619 = vsel %vm1534, %v1618, %v1594
        %v1620 = vsel %vm1533, %v900, %v1617
        %v1621 = vsel %vm1533, 0, %v1619
        %v1622 = vcosq.f32.pop %v1620
        %v1623 = vsinq.f32.pop %v1620
        %vm1624 = vweird.f32 %v900
        %v1625 = vadd.s32 %v1621, 3
        %v1626 = vand.u32 %v1625, 3
        %vm1627 = vcmp.lt.s32.totalorder %v1626, 2
        %vm1628 = vcmp.eq.s32.totalorder %v1626, 0
        %v1629 = vxor.u32 %v1623, 2147483648
        %v1630 = vsel %vm1628, %v1622, %v1629
        %vm1631 = vcmp.eq.s32.totalorder %v1626, 2
        %v1632 = vxor.u32 %v1622, 2147483648
        %v1633 = vsel %vm1631, %v1632, %v1623
        %v1634 = vsel %vm1627, %v1630, %v1633
        %v1635 = vsel %vm1624, nan, %v1634
        %v1636 = vand.u32 2147483647, %v907
        %vm1637 = vcmp.le.f32.partialorder %v1636, 0.7853982
        %vm1638 = vcmp.lt.s32.totalorder %v907, 0
        %v1639 = vand.u32 %v907, 2139095040
        %v1640 = vshrl.u32 %v1639, 23
        %v1641 = vsub.s32 %v1640, 127
        %v1642 = vand.u32 2147483647, %v907
        %v1643 = vand.u32 %v1642, 8388607
        %v1644 = vor.u32 %v1643, 8388608
        %v1645 = vsub.s32 0, %v1644
        %v1646 = vadd.s32 %v1641, 1
        %vm1647 = vcmp.gt.s32.totalorder %v1646, 0
        %v1648 = vsel %vm1647, %v1646, 0
        %v1649 = vshrl.u32 %v1648, 5
        %v1650 = vand.u32 %v1648, 31
        %v1651 = vsub.s32 32, %v1650
        %v1652 = vshrl.u32 683565275, %v1651
        %v1653 = vshll.u32 683565275, %v1650
        %v1654 = vshrl.u32 2475754826, %v1651
        %v1655 = vor.u32 %v1653, %v1654
        %v1656 = vshll.u32 2475754826, %v1650
        %v1657 = vshrl.u32 2131351028, %v1651
        %v1658 = vor.u32 %v1656, %v1657
        %v1659 = vshll.u32 2131351028, %v1650
        %v1660 = vshrl.u32 2102212464, %v1651
        %v1661 = vor.u32 %v1659, %v1660
        %v1662 = vshll.u32 2102212464, %v1650
        %v1663 = vshrl.u32 920167782, %v1651
        %v1664 = vor.u32 %v1662, %v1663
        %v1665 = vshll.u32 920167782, %v1650
        %v1666 = vshrl.u32 1326507024, %v1651
        %v1667 = vor.u32 %v1665, %v1666
        %vm1668 = vcmp.lt.s32.totalorder %v1649, 1
        %vm1669 = vcmp.lt.s32.totalorder %v1649, 2
        %vm1670 = vcmp.lt.s32.totalorder %v1649, 3
        %vm1671 = vcmp.lt.s32.totalorder %v1649, 4
        %v1672 = vsel %vm1668, %v1652, %v1655
        %v1673 = vsel %vm1671, %v1661, 2102212464
        %v1674 = vsel %vm1670, %v1658, %v1673
        %v1675 = vsel %vm1669, %v1672, %v1674
        %v1676 = vsel %vm1668, %v1655, %v1658
        %v1677 = vsel %vm1671, %v1664, 920167782
        %v1678 = vsel %vm1670, %v1661, %v1677
        %v1679 = vsel %vm1669, %v1676, %v1678
        %v1680 = vsel %vm1668, %v1658, %v1661
        %v1681 = vsel %vm1671, %v1667, 1326507024
        %v1682 = vsel %vm1670, %v1664, %v1681
        %v1683 = vsel %vm1669, %v1680, %v1682
        %v1684 = vshll.u32 %v1644, 8
        %v1685 = vmul.u32.u64.compose %v1684, %v1683
        %v1686 = vextract.low.u32 %v1685
        %v1687 = vextract.high.u32 %v1685
        %v1688 = vmul.u32.u64.compose %v1684, %v1679
        %v1689 = vextract.low.u32 %v1688
        %v1690 = vextract.high.u32 %v1688
        %v1691 = vmul.u32 %v1684, %v1675
        %v1692 = vadd.s32 %v1687, %v1689
        %vm1693 = vc.u32 %v1687, %v1689
        %v1694 = vadd.s32 %v1690, 1
        %v1695 = vsel %vm1693, %v1694, %v1690
        %v1696 = vadd.s32 %v1691, %v1695
        %v1697 = vadd.s32 %v1696, 536870912
        %v1698 = vshrl.u32 %v1697, 30
        %v1699 = vshll.u32 %v1698, 30
        %v1700 = vsub.s32 %v1696, %v1699
        %vm1701 = vcmp.lt.s32.totalorder %v1700, 0
        %v1702 = vsub.s32 0, %v1700
        %v1703 = vsel %vm1701, %v1702, %v1700
        %v1704 = vclz %v1703
        %v1705 = vsub.s32 %v1704, 2
        %vm1706 = vcmp.gt.s32.totalorder 0, %v1705
        %v1707 = vsel %vm1706, 0, %v1705
        %v1708 = vsub.s32 32, %v1707
        %v1709 = vshll.u32 %v1700, %v1707
        %v1710 = vshrl.u32 %v1692, %v1708
        %v1711 = vor.u32 %v1709, %v1710
        %v1712 = vsub.s32 4294967266, %v1707
        %v1713 = vadd.s32 %v1712, 127
        %v1714 = vshll.u32 %v1713, 23
        %v1715 = vor.u32 4788187, %v1714
        %v1716 = vand.u32 2147483647, %v1715
        %v1718 = vcvt.s32.f32 %v1711
        %v1719 = vmul.f32 %v1718, %v1716
        %v1720 = vxor.u32 %v1719, 2147483648
        %v1721 = vsel %vm1638, %v1720, %v1719
        %v1722 = vsub.s32 4, %v1698
        %v1723 = vsel %vm1638, %v1722, %v1698
        %v1724 = vsel %vm1637, %v907, %v1721
        %v1725 = vsel %vm1637, 0, %v1723
        %v1726 = vcosq.f32.pop %v1724
        %v1727 = vsinq.f32.pop %v1724
        %vm1728 = vweird.f32 %v907
        %v1729 = vadd.s32 %v1725, 3
        %v1730 = vand.u32 %v1729, 3
        %vm1731 = vcmp.lt.s32.totalorder %v1730, 2
        %vm1732 = vcmp.eq.s32.totalorder %v1730, 0
        %v1733 = vxor.u32 %v1727, 2147483648
        %v1734 = vsel %vm1732, %v1726, %v1733
        %vm1735 = vcmp.eq.s32.totalorder %v1730, 2
        %v1736 = vxor.u32 %v1726, 2147483648
        %v1737 = vsel %vm1735, %v1736, %v1727
        %v1738 = vsel %vm1731, %v1734, %v1737
        %v1739 = vsel %vm1728, nan, %v1738
        %v1740 = vmul.f32 %v858, 0.5
        %v1741 = vmul.f32 %v865, 0.5
        %v1742 = vmul.f32 %v872, 0.5
        %v1743 = vmul.f32 %v879, 0.5
        %v1744 = vmul.f32 %v886, 0.5
        %v1745 = vmul.f32 %v893, 0.5
        %v1746 = vmul.f32 %v900, 0.5
        %v1747 = vmul.f32 %v907, 0.5
        %v1748 = vand.u32 2147483647, %v1740
        %vm1749 = vcmp.le.f32.partialorder %v1748, 0.7853982
        %vm1750 = vcmp.lt.s32.totalorder %v1740, 0
        %v1751 = vand.u32 %v1740, 2139095040
        %v1752 = vshrl.u32 %v1751, 23
        %v1753 = vsub.s32 %v1752, 127
        %v1754 = vand.u32 2147483647, %v1740
        %v1755 = vand.u32 %v1754, 8388607
        %v1756 = vor.u32 %v1755, 8388608
        %v1757 = vsub.s32 0, %v1756
        %v1758 = vadd.s32 %v1753, 1
        %vm1759 = vcmp.gt.s32.totalorder %v1758, 0
        %v1760 = vsel %vm1759, %v1758, 0
        %v1761 = vshrl.u32 %v1760, 5
        %v1762 = vand.u32 %v1760, 31
        %v1763 = vsub.s32 32, %v1762
        %v1764 = vshrl.u32 683565275, %v1763
        %v1765 = vshll.u32 683565275, %v1762
        %v1766 = vshrl.u32 2475754826, %v1763
        %v1767 = vor.u32 %v1765, %v1766
        %v1768 = vshll.u32 2475754826, %v1762
        %v1769 = vshrl.u32 2131351028, %v1763
        %v1770 = vor.u32 %v1768, %v1769
        %v1771 = vshll.u32 2131351028, %v1762
        %v1772 = vshrl.u32 2102212464, %v1763
        %v1773 = vor.u32 %v1771, %v1772
        %v1774 = vshll.u32 2102212464, %v1762
        %v1775 = vshrl.u32 920167782, %v1763
        %v1776 = vor.u32 %v1774, %v1775
        %v1777 = vshll.u32 920167782, %v1762
        %v1778 = vshrl.u32 1326507024, %v1763
        %v1779 = vor.u32 %v1777, %v1778
        %vm1780 = vcmp.lt.s32.totalorder %v1761, 1
        %vm1781 = vcmp.lt.s32.totalorder %v1761, 2
        %vm1782 = vcmp.lt.s32.totalorder %v1761, 3
        %vm1783 = vcmp.lt.s32.totalorder %v1761, 4
        %v1784 = vsel %vm1780, %v1764, %v1767
        %v1785 = vsel %vm1783, %v1773, 2102212464
        %v1786 = vsel %vm1782, %v1770, %v1785
        %v1787 = vsel %vm1781, %v1784, %v1786
        %v1788 = vsel %vm1780, %v1767, %v1770
        %v1789 = vsel %vm1783, %v1776, 920167782
        %v1790 = vsel %vm1782, %v1773, %v1789
        %v1791 = vsel %vm1781, %v1788, %v1790
        %v1792 = vsel %vm1780, %v1770, %v1773
        %v1793 = vsel %vm1783, %v1779, 1326507024
        %v1794 = vsel %vm1782, %v1776, %v1793
        %v1795 = vsel %vm1781, %v1792, %v1794
        %v1796 = vshll.u32 %v1756, 8
        %v1797 = vmul.u32.u64.compose %v1796, %v1795
        %v1798 = vextract.low.u32 %v1797
        %v1799 = vextract.high.u32 %v1797
        %v1800 = vmul.u32.u64.compose %v1796, %v1791
        %v1801 = vextract.low.u32 %v1800
        %v1802 = vextract.high.u32 %v1800
        %v1803 = vmul.u32 %v1796, %v1787
        %v1804 = vadd.s32 %v1799, %v1801
        %vm1805 = vc.u32 %v1799, %v1801
        %v1806 = vadd.s32 %v1802, 1
        %v1807 = vsel %vm1805, %v1806, %v1802
        %v1808 = vadd.s32 %v1803, %v1807
        %v1809 = vadd.s32 %v1808, 536870912
        %v1810 = vshrl.u32 %v1809, 30
        %v1811 = vshll.u32 %v1810, 30
        %v1812 = vsub.s32 %v1808, %v1811
        %vm1813 = vcmp.lt.s32.totalorder %v1812, 0
        %v1814 = vsub.s32 0, %v1812
        %v1815 = vsel %vm1813, %v1814, %v1812
        %v1816 = vclz %v1815
        %v1817 = vsub.s32 %v1816, 2
        %vm1818 = vcmp.gt.s32.totalorder 0, %v1817
        %v1819 = vsel %vm1818, 0, %v1817
        %v1820 = vsub.s32 32, %v1819
        %v1821 = vshll.u32 %v1812, %v1819
        %v1822 = vshrl.u32 %v1804, %v1820
        %v1823 = vor.u32 %v1821, %v1822
        %v1824 = vsub.s32 4294967266, %v1819
        %v1825 = vadd.s32 %v1824, 127
        %v1826 = vshll.u32 %v1825, 23
        %v1827 = vor.u32 4788187, %v1826
        %v1828 = vand.u32 2147483647, %v1827
        %v1830 = vcvt.s32.f32 %v1823
        %v1831 = vmul.f32 %v1830, %v1828
        %v1832 = vxor.u32 %v1831, 2147483648
        %v1833 = vsel %vm1750, %v1832, %v1831
        %v1834 = vsub.s32 4, %v1810
        %v1835 = vsel %vm1750, %v1834, %v1810
        %v1836 = vsel %vm1749, %v1740, %v1833
        %v1837 = vsel %vm1749, 0, %v1835
        %v1838 = vcosq.f32.pop %v1836
        %v1839 = vsinq.f32.pop %v1836
        %vm1840 = vweird.f32 %v1740
        %v1841 = vadd.s32 %v1837, 3
        %v1842 = vand.u32 %v1841, 3
        %vm1843 = vcmp.lt.s32.totalorder %v1842, 2
        %vm1844 = vcmp.eq.s32.totalorder %v1842, 0
        %v1845 = vxor.u32 %v1839, 2147483648
        %v1846 = vsel %vm1844, %v1838, %v1845
        %vm1847 = vcmp.eq.s32.totalorder %v1842, 2
        %v1848 = vxor.u32 %v1838, 2147483648
        %v1849 = vsel %vm1847, %v1848, %v1839
        %v1850 = vsel %vm1843, %v1846, %v1849
        %v1851 = vsel %vm1840, nan, %v1850
        %v1852 = vand.u32 2147483647, %v1741
        %vm1853 = vcmp.le.f32.partialorder %v1852, 0.7853982
        %vm1854 = vcmp.lt.s32.totalorder %v1741, 0
        %v1855 = vand.u32 %v1741, 2139095040
        %v1856 = vshrl.u32 %v1855, 23
        %v1857 = vsub.s32 %v1856, 127
        %v1858 = vand.u32 2147483647, %v1741
        %v1859 = vand.u32 %v1858, 8388607
        %v1860 = vor.u32 %v1859, 8388608
        %v1861 = vsub.s32 0, %v1860
        %v1862 = vadd.s32 %v1857, 1
        %vm1863 = vcmp.gt.s32.totalorder %v1862, 0
        %v1864 = vsel %vm1863, %v1862, 0
        %v1865 = vshrl.u32 %v1864, 5
        %v1866 = vand.u32 %v1864, 31
        %v1867 = vsub.s32 32, %v1866
        %v1868 = vshrl.u32 683565275, %v1867
        %v1869 = vshll.u32 683565275, %v1866
        %v1870 = vshrl.u32 2475754826, %v1867
        %v1871 = vor.u32 %v1869, %v1870
        %v1872 = vshll.u32 2475754826, %v1866
        %v1873 = vshrl.u32 2131351028, %v1867
        %v1874 = vor.u32 %v1872, %v1873
        %v1875 = vshll.u32 2131351028, %v1866
        %v1876 = vshrl.u32 2102212464, %v1867
        %v1877 = vor.u32 %v1875, %v1876
        %v1878 = vshll.u32 2102212464, %v1866
        %v1879 = vshrl.u32 920167782, %v1867
        %v1880 = vor.u32 %v1878, %v1879
        %v1881 = vshll.u32 920167782, %v1866
        %v1882 = vshrl.u32 1326507024, %v1867
        %v1883 = vor.u32 %v1881, %v1882
        %vm1884 = vcmp.lt.s32.totalorder %v1865, 1
        %vm1885 = vcmp.lt.s32.totalorder %v1865, 2
        %vm1886 = vcmp.lt.s32.totalorder %v1865, 3
        %vm1887 = vcmp.lt.s32.totalorder %v1865, 4
        %v1888 = vsel %vm1884, %v1868, %v1871
        %v1889 = vsel %vm1887, %v1877, 2102212464
        %v1890 = vsel %vm1886, %v1874, %v1889
        %v1891 = vsel %vm1885, %v1888, %v1890
        %v1892 = vsel %vm1884, %v1871, %v1874
        %v1893 = vsel %vm1887, %v1880, 920167782
        %v1894 = vsel %vm1886, %v1877, %v1893
        %v1895 = vsel %vm1885, %v1892, %v1894
        %v1896 = vsel %vm1884, %v1874, %v1877
        %v1897 = vsel %vm1887, %v1883, 1326507024
        %v1898 = vsel %vm1886, %v1880, %v1897
        %v1899 = vsel %vm1885, %v1896, %v1898
        %v1900 = vshll.u32 %v1860, 8
        %v1901 = vmul.u32.u64.compose %v1900, %v1899
        %v1902 = vextract.low.u32 %v1901
        %v1903 = vextract.high.u32 %v1901
        %v1904 = vmul.u32.u64.compose %v1900, %v1895
        %v1905 = vextract.low.u32 %v1904
        %v1906 = vextract.high.u32 %v1904
        %v1907 = vmul.u32 %v1900, %v1891
        %v1908 = vadd.s32 %v1903, %v1905
        %vm1909 = vc.u32 %v1903, %v1905
        %v1910 = vadd.s32 %v1906, 1
        %v1911 = vsel %vm1909, %v1910, %v1906
        %v1912 = vadd.s32 %v1907, %v1911
        %v1913 = vadd.s32 %v1912, 536870912
        %v1914 = vshrl.u32 %v1913, 30
        %v1915 = vshll.u32 %v1914, 30
        %v1916 = vsub.s32 %v1912, %v1915
        %vm1917 = vcmp.lt.s32.totalorder %v1916, 0
        %v1918 = vsub.s32 0, %v1916
        %v1919 = vsel %vm1917, %v1918, %v1916
        %v1920 = vclz %v1919
        %v1921 = vsub.s32 %v1920, 2
        %vm1922 = vcmp.gt.s32.totalorder 0, %v1921
        %v1923 = vsel %vm1922, 0, %v1921
        %v1924 = vsub.s32 32, %v1923
        %v1925 = vshll.u32 %v1916, %v1923
        %v1926 = vshrl.u32 %v1908, %v1924
        %v1927 = vor.u32 %v1925, %v1926
        %v1928 = vsub.s32 4294967266, %v1923
        %v1929 = vadd.s32 %v1928, 127
        %v1930 = vshll.u32 %v1929, 23
        %v1931 = vor.u32 4788187, %v1930
        %v1932 = vand.u32 2147483647, %v1931
        %v1934 = vcvt.s32.f32 %v1927
        %v1935 = vmul.f32 %v1934, %v1932
        %v1936 = vxor.u32 %v1935, 2147483648
        %v1937 = vsel %vm1854, %v1936, %v1935
        %v1938 = vsub.s32 4, %v1914
        %v1939 = vsel %vm1854, %v1938, %v1914
        %v1940 = vsel %vm1853, %v1741, %v1937
        %v1941 = vsel %vm1853, 0, %v1939
        %v1942 = vcosq.f32.pop %v1940
        %v1943 = vsinq.f32.pop %v1940
        %vm1944 = vweird.f32 %v1741
        %v1945 = vadd.s32 %v1941, 3
        %v1946 = vand.u32 %v1945, 3
        %vm1947 = vcmp.lt.s32.totalorder %v1946, 2
        %vm1948 = vcmp.eq.s32.totalorder %v1946, 0
        %v1949 = vxor.u32 %v1943, 2147483648
        %v1950 = vsel %vm1948, %v1942, %v1949
        %vm1951 = vcmp.eq.s32.totalorder %v1946, 2
        %v1952 = vxor.u32 %v1942, 2147483648
        %v1953 = vsel %vm1951, %v1952, %v1943
        %v1954 = vsel %vm1947, %v1950, %v1953
        %v1955 = vsel %vm1944, nan, %v1954
        %v1956 = vand.u32 2147483647, %v1742
        %vm1957 = vcmp.le.f32.partialorder %v1956, 0.7853982
        %vm1958 = vcmp.lt.s32.totalorder %v1742, 0
        %v1959 = vand.u32 %v1742, 2139095040
        %v1960 = vshrl.u32 %v1959, 23
        %v1961 = vsub.s32 %v1960, 127
        %v1962 = vand.u32 2147483647, %v1742
        %v1963 = vand.u32 %v1962, 8388607
        %v1964 = vor.u32 %v1963, 8388608
        %v1965 = vsub.s32 0, %v1964
        %v1966 = vadd.s32 %v1961, 1
        %vm1967 = vcmp.gt.s32.totalorder %v1966, 0
        %v1968 = vsel %vm1967, %v1966, 0
        %v1969 = vshrl.u32 %v1968, 5
        %v1970 = vand.u32 %v1968, 31
        %v1971 = vsub.s32 32, %v1970
        %v1972 = vshrl.u32 683565275, %v1971
        %v1973 = vshll.u32 683565275, %v1970
        %v1974 = vshrl.u32 2475754826, %v1971
        %v1975 = vor.u32 %v1973, %v1974
        %v1976 = vshll.u32 2475754826, %v1970
        %v1977 = vshrl.u32 2131351028, %v1971
        %v1978 = vor.u32 %v1976, %v1977
        %v1979 = vshll.u32 2131351028, %v1970
        %v1980 = vshrl.u32 2102212464, %v1971
        %v1981 = vor.u32 %v1979, %v1980
        %v1982 = vshll.u32 2102212464, %v1970
        %v1983 = vshrl.u32 920167782, %v1971
        %v1984 = vor.u32 %v1982, %v1983
        %v1985 = vshll.u32 920167782, %v1970
        %v1986 = vshrl.u32 1326507024, %v1971
        %v1987 = vor.u32 %v1985, %v1986
        %vm1988 = vcmp.lt.s32.totalorder %v1969, 1
        %vm1989 = vcmp.lt.s32.totalorder %v1969, 2
        %vm1990 = vcmp.lt.s32.totalorder %v1969, 3
        %vm1991 = vcmp.lt.s32.totalorder %v1969, 4
        %v1992 = vsel %vm1988, %v1972, %v1975
        %v1993 = vsel %vm1991, %v1981, 2102212464
        %v1994 = vsel %vm1990, %v1978, %v1993
        %v1995 = vsel %vm1989, %v1992, %v1994
        %v1996 = vsel %vm1988, %v1975, %v1978
        %v1997 = vsel %vm1991, %v1984, 920167782
        %v1998 = vsel %vm1990, %v1981, %v1997
        %v1999 = vsel %vm1989, %v1996, %v1998
        %v2000 = vsel %vm1988, %v1978, %v1981
        %v2001 = vsel %vm1991, %v1987, 1326507024
        %v2002 = vsel %vm1990, %v1984, %v2001
        %v2003 = vsel %vm1989, %v2000, %v2002
        %v2004 = vshll.u32 %v1964, 8
        %v2005 = vmul.u32.u64.compose %v2004, %v2003
        %v2006 = vextract.low.u32 %v2005
        %v2007 = vextract.high.u32 %v2005
        %v2008 = vmul.u32.u64.compose %v2004, %v1999
        %v2009 = vextract.low.u32 %v2008
        %v2010 = vextract.high.u32 %v2008
        %v2011 = vmul.u32 %v2004, %v1995
        %v2012 = vadd.s32 %v2007, %v2009
        %vm2013 = vc.u32 %v2007, %v2009
        %v2014 = vadd.s32 %v2010, 1
        %v2015 = vsel %vm2013, %v2014, %v2010
        %v2016 = vadd.s32 %v2011, %v2015
        %v2017 = vadd.s32 %v2016, 536870912
        %v2018 = vshrl.u32 %v2017, 30
        %v2019 = vshll.u32 %v2018, 30
        %v2020 = vsub.s32 %v2016, %v2019
        %vm2021 = vcmp.lt.s32.totalorder %v2020, 0
        %v2022 = vsub.s32 0, %v2020
        %v2023 = vsel %vm2021, %v2022, %v2020
        %v2024 = vclz %v2023
        %v2025 = vsub.s32 %v2024, 2
        %vm2026 = vcmp.gt.s32.totalorder 0, %v2025
        %v2027 = vsel %vm2026, 0, %v2025
        %v2028 = vsub.s32 32, %v2027
        %v2029 = vshll.u32 %v2020, %v2027
        %v2030 = vshrl.u32 %v2012, %v2028
        %v2031 = vor.u32 %v2029, %v2030
        %v2032 = vsub.s32 4294967266, %v2027
        %v2033 = vadd.s32 %v2032, 127
        %v2034 = vshll.u32 %v2033, 23
        %v2035 = vor.u32 4788187, %v2034
        %v2036 = vand.u32 2147483647, %v2035
        %v2038 = vcvt.s32.f32 %v2031
        %v2039 = vmul.f32 %v2038, %v2036
        %v2040 = vxor.u32 %v2039, 2147483648
        %v2041 = vsel %vm1958, %v2040, %v2039
        %v2042 = vsub.s32 4, %v2018
        %v2043 = vsel %vm1958, %v2042, %v2018
        %v2044 = vsel %vm1957, %v1742, %v2041
        %v2045 = vsel %vm1957, 0, %v2043
        %v2046 = vcosq.f32.pop %v2044
        %v2047 = vsinq.f32.pop %v2044
        %vm2048 = vweird.f32 %v1742
        %v2049 = vadd.s32 %v2045, 3
        %v2050 = vand.u32 %v2049, 3
        %vm2051 = vcmp.lt.s32.totalorder %v2050, 2
        %vm2052 = vcmp.eq.s32.totalorder %v2050, 0
        %v2053 = vxor.u32 %v2047, 2147483648
        %v2054 = vsel %vm2052, %v2046, %v2053
        %vm2055 = vcmp.eq.s32.totalorder %v2050, 2
        %v2056 = vxor.u32 %v2046, 2147483648
        %v2057 = vsel %vm2055, %v2056, %v2047
        %v2058 = vsel %vm2051, %v2054, %v2057
        %v2059 = vsel %vm2048, nan, %v2058
        %v2060 = vand.u32 2147483647, %v1743
        %vm2061 = vcmp.le.f32.partialorder %v2060, 0.7853982
        %vm2062 = vcmp.lt.s32.totalorder %v1743, 0
        %v2063 = vand.u32 %v1743, 2139095040
        %v2064 = vshrl.u32 %v2063, 23
        %v2065 = vsub.s32 %v2064, 127
        %v2066 = vand.u32 2147483647, %v1743
        %v2067 = vand.u32 %v2066, 8388607
        %v2068 = vor.u32 %v2067, 8388608
        %v2069 = vsub.s32 0, %v2068
        %v2070 = vadd.s32 %v2065, 1
        %vm2071 = vcmp.gt.s32.totalorder %v2070, 0
        %v2072 = vsel %vm2071, %v2070, 0
        %v2073 = vshrl.u32 %v2072, 5
        %v2074 = vand.u32 %v2072, 31
        %v2075 = vsub.s32 32, %v2074
        %v2076 = vshrl.u32 683565275, %v2075
        %v2077 = vshll.u32 683565275, %v2074
        %v2078 = vshrl.u32 2475754826, %v2075
        %v2079 = vor.u32 %v2077, %v2078
        %v2080 = vshll.u32 2475754826, %v2074
        %v2081 = vshrl.u32 2131351028, %v2075
        %v2082 = vor.u32 %v2080, %v2081
        %v2083 = vshll.u32 2131351028, %v2074
        %v2084 = vshrl.u32 2102212464, %v2075
        %v2085 = vor.u32 %v2083, %v2084
        %v2086 = vshll.u32 2102212464, %v2074
        %v2087 = vshrl.u32 920167782, %v2075
        %v2088 = vor.u32 %v2086, %v2087
        %v2089 = vshll.u32 920167782, %v2074
        %v2090 = vshrl.u32 1326507024, %v2075
        %v2091 = vor.u32 %v2089, %v2090
        %vm2092 = vcmp.lt.s32.totalorder %v2073, 1
        %vm2093 = vcmp.lt.s32.totalorder %v2073, 2
        %vm2094 = vcmp.lt.s32.totalorder %v2073, 3
        %vm2095 = vcmp.lt.s32.totalorder %v2073, 4
        %v2096 = vsel %vm2092, %v2076, %v2079
        %v2097 = vsel %vm2095, %v2085, 2102212464
        %v2098 = vsel %vm2094, %v2082, %v2097
        %v2099 = vsel %vm2093, %v2096, %v2098
        %v2100 = vsel %vm2092, %v2079, %v2082
        %v2101 = vsel %vm2095, %v2088, 920167782
        %v2102 = vsel %vm2094, %v2085, %v2101
        %v2103 = vsel %vm2093, %v2100, %v2102
        %v2104 = vsel %vm2092, %v2082, %v2085
        %v2105 = vsel %vm2095, %v2091, 1326507024
        %v2106 = vsel %vm2094, %v2088, %v2105
        %v2107 = vsel %vm2093, %v2104, %v2106
        %v2108 = vshll.u32 %v2068, 8
        %v2109 = vmul.u32.u64.compose %v2108, %v2107
        %v2110 = vextract.low.u32 %v2109
        %v2111 = vextract.high.u32 %v2109
        %v2112 = vmul.u32.u64.compose %v2108, %v2103
        %v2113 = vextract.low.u32 %v2112
        %v2114 = vextract.high.u32 %v2112
        %v2115 = vmul.u32 %v2108, %v2099
        %v2116 = vadd.s32 %v2111, %v2113
        %vm2117 = vc.u32 %v2111, %v2113
        %v2118 = vadd.s32 %v2114, 1
        %v2119 = vsel %vm2117, %v2118, %v2114
        %v2120 = vadd.s32 %v2115, %v2119
        %v2121 = vadd.s32 %v2120, 536870912
        %v2122 = vshrl.u32 %v2121, 30
        %v2123 = vshll.u32 %v2122, 30
        %v2124 = vsub.s32 %v2120, %v2123
        %vm2125 = vcmp.lt.s32.totalorder %v2124, 0
        %v2126 = vsub.s32 0, %v2124
        %v2127 = vsel %vm2125, %v2126, %v2124
        %v2128 = vclz %v2127
        %v2129 = vsub.s32 %v2128, 2
        %vm2130 = vcmp.gt.s32.totalorder 0, %v2129
        %v2131 = vsel %vm2130, 0, %v2129
        %v2132 = vsub.s32 32, %v2131
        %v2133 = vshll.u32 %v2124, %v2131
        %v2134 = vshrl.u32 %v2116, %v2132
        %v2135 = vor.u32 %v2133, %v2134
        %v2136 = vsub.s32 4294967266, %v2131
        %v2137 = vadd.s32 %v2136, 127
        %v2138 = vshll.u32 %v2137, 23
        %v2139 = vor.u32 4788187, %v2138
        %v2140 = vand.u32 2147483647, %v2139
        %v2142 = vcvt.s32.f32 %v2135
        %v2143 = vmul.f32 %v2142, %v2140
        %v2144 = vxor.u32 %v2143, 2147483648
        %v2145 = vsel %vm2062, %v2144, %v2143
        %v2146 = vsub.s32 4, %v2122
        %v2147 = vsel %vm2062, %v2146, %v2122
        %v2148 = vsel %vm2061, %v1743, %v2145
        %v2149 = vsel %vm2061, 0, %v2147
        %v2150 = vcosq.f32.pop %v2148
        %v2151 = vsinq.f32.pop %v2148
        %vm2152 = vweird.f32 %v1743
        %v2153 = vadd.s32 %v2149, 3
        %v2154 = vand.u32 %v2153, 3
        %vm2155 = vcmp.lt.s32.totalorder %v2154, 2
        %vm2156 = vcmp.eq.s32.totalorder %v2154, 0
        %v2157 = vxor.u32 %v2151, 2147483648
        %v2158 = vsel %vm2156, %v2150, %v2157
        %vm2159 = vcmp.eq.s32.totalorder %v2154, 2
        %v2160 = vxor.u32 %v2150, 2147483648
        %v2161 = vsel %vm2159, %v2160, %v2151
        %v2162 = vsel %vm2155, %v2158, %v2161
        %v2163 = vsel %vm2152, nan, %v2162
        %v2164 = vand.u32 2147483647, %v1744
        %vm2165 = vcmp.le.f32.partialorder %v2164, 0.7853982
        %vm2166 = vcmp.lt.s32.totalorder %v1744, 0
        %v2167 = vand.u32 %v1744, 2139095040
        %v2168 = vshrl.u32 %v2167, 23
        %v2169 = vsub.s32 %v2168, 127
        %v2170 = vand.u32 2147483647, %v1744
        %v2171 = vand.u32 %v2170, 8388607
        %v2172 = vor.u32 %v2171, 8388608
        %v2173 = vsub.s32 0, %v2172
        %v2174 = vadd.s32 %v2169, 1
        %vm2175 = vcmp.gt.s32.totalorder %v2174, 0
        %v2176 = vsel %vm2175, %v2174, 0
        %v2177 = vshrl.u32 %v2176, 5
        %v2178 = vand.u32 %v2176, 31
        %v2179 = vsub.s32 32, %v2178
        %v2180 = vshrl.u32 683565275, %v2179
        %v2181 = vshll.u32 683565275, %v2178
        %v2182 = vshrl.u32 2475754826, %v2179
        %v2183 = vor.u32 %v2181, %v2182
        %v2184 = vshll.u32 2475754826, %v2178
        %v2185 = vshrl.u32 2131351028, %v2179
        %v2186 = vor.u32 %v2184, %v2185
        %v2187 = vshll.u32 2131351028, %v2178
        %v2188 = vshrl.u32 2102212464, %v2179
        %v2189 = vor.u32 %v2187, %v2188
        %v2190 = vshll.u32 2102212464, %v2178
        %v2191 = vshrl.u32 920167782, %v2179
        %v2192 = vor.u32 %v2190, %v2191
        %v2193 = vshll.u32 920167782, %v2178
        %v2194 = vshrl.u32 1326507024, %v2179
        %v2195 = vor.u32 %v2193, %v2194
        %vm2196 = vcmp.lt.s32.totalorder %v2177, 1
        %vm2197 = vcmp.lt.s32.totalorder %v2177, 2
        %vm2198 = vcmp.lt.s32.totalorder %v2177, 3
        %vm2199 = vcmp.lt.s32.totalorder %v2177, 4
        %v2200 = vsel %vm2196, %v2180, %v2183
        %v2201 = vsel %vm2199, %v2189, 2102212464
        %v2202 = vsel %vm2198, %v2186, %v2201
        %v2203 = vsel %vm2197, %v2200, %v2202
        %v2204 = vsel %vm2196, %v2183, %v2186
        %v2205 = vsel %vm2199, %v2192, 920167782
        %v2206 = vsel %vm2198, %v2189, %v2205
        %v2207 = vsel %vm2197, %v2204, %v2206
        %v2208 = vsel %vm2196, %v2186, %v2189
        %v2209 = vsel %vm2199, %v2195, 1326507024
        %v2210 = vsel %vm2198, %v2192, %v2209
        %v2211 = vsel %vm2197, %v2208, %v2210
        %v2212 = vshll.u32 %v2172, 8
        %v2213 = vmul.u32.u64.compose %v2212, %v2211
        %v2214 = vextract.low.u32 %v2213
        %v2215 = vextract.high.u32 %v2213
        %v2216 = vmul.u32.u64.compose %v2212, %v2207
        %v2217 = vextract.low.u32 %v2216
        %v2218 = vextract.high.u32 %v2216
        %v2219 = vmul.u32 %v2212, %v2203
        %v2220 = vadd.s32 %v2215, %v2217
        %vm2221 = vc.u32 %v2215, %v2217
        %v2222 = vadd.s32 %v2218, 1
        %v2223 = vsel %vm2221, %v2222, %v2218
        %v2224 = vadd.s32 %v2219, %v2223
        %v2225 = vadd.s32 %v2224, 536870912
        %v2226 = vshrl.u32 %v2225, 30
        %v2227 = vshll.u32 %v2226, 30
        %v2228 = vsub.s32 %v2224, %v2227
        %vm2229 = vcmp.lt.s32.totalorder %v2228, 0
        %v2230 = vsub.s32 0, %v2228
        %v2231 = vsel %vm2229, %v2230, %v2228
        %v2232 = vclz %v2231
        %v2233 = vsub.s32 %v2232, 2
        %vm2234 = vcmp.gt.s32.totalorder 0, %v2233
        %v2235 = vsel %vm2234, 0, %v2233
        %v2236 = vsub.s32 32, %v2235
        %v2237 = vshll.u32 %v2228, %v2235
        %v2238 = vshrl.u32 %v2220, %v2236
        %v2239 = vor.u32 %v2237, %v2238
        %v2240 = vsub.s32 4294967266, %v2235
        %v2241 = vadd.s32 %v2240, 127
        %v2242 = vshll.u32 %v2241, 23
        %v2243 = vor.u32 4788187, %v2242
        %v2244 = vand.u32 2147483647, %v2243
        %v2246 = vcvt.s32.f32 %v2239
        %v2247 = vmul.f32 %v2246, %v2244
        %v2248 = vxor.u32 %v2247, 2147483648
        %v2249 = vsel %vm2166, %v2248, %v2247
        %v2250 = vsub.s32 4, %v2226
        %v2251 = vsel %vm2166, %v2250, %v2226
        %v2252 = vsel %vm2165, %v1744, %v2249
        %v2253 = vsel %vm2165, 0, %v2251
        %v2254 = vcosq.f32.pop %v2252
        %v2255 = vsinq.f32.pop %v2252
        %vm2256 = vweird.f32 %v1744
        %v2257 = vadd.s32 %v2253, 3
        %v2258 = vand.u32 %v2257, 3
        %vm2259 = vcmp.lt.s32.totalorder %v2258, 2
        %vm2260 = vcmp.eq.s32.totalorder %v2258, 0
        %v2261 = vxor.u32 %v2255, 2147483648
        %v2262 = vsel %vm2260, %v2254, %v2261
        %vm2263 = vcmp.eq.s32.totalorder %v2258, 2
        %v2264 = vxor.u32 %v2254, 2147483648
        %v2265 = vsel %vm2263, %v2264, %v2255
        %v2266 = vsel %vm2259, %v2262, %v2265
        %v2267 = vsel %vm2256, nan, %v2266
        %v2268 = vand.u32 2147483647, %v1745
        %vm2269 = vcmp.le.f32.partialorder %v2268, 0.7853982
        %vm2270 = vcmp.lt.s32.totalorder %v1745, 0
        %v2271 = vand.u32 %v1745, 2139095040
        %v2272 = vshrl.u32 %v2271, 23
        %v2273 = vsub.s32 %v2272, 127
        %v2274 = vand.u32 2147483647, %v1745
        %v2275 = vand.u32 %v2274, 8388607
        %v2276 = vor.u32 %v2275, 8388608
        %v2277 = vsub.s32 0, %v2276
        %v2278 = vadd.s32 %v2273, 1
        %vm2279 = vcmp.gt.s32.totalorder %v2278, 0
        %v2280 = vsel %vm2279, %v2278, 0
        %v2281 = vshrl.u32 %v2280, 5
        %v2282 = vand.u32 %v2280, 31
        %v2283 = vsub.s32 32, %v2282
        %v2284 = vshrl.u32 683565275, %v2283
        %v2285 = vshll.u32 683565275, %v2282
        %v2286 = vshrl.u32 2475754826, %v2283
        %v2287 = vor.u32 %v2285, %v2286
        %v2288 = vshll.u32 2475754826, %v2282
        %v2289 = vshrl.u32 2131351028, %v2283
        %v2290 = vor.u32 %v2288, %v2289
        %v2291 = vshll.u32 2131351028, %v2282
        %v2292 = vshrl.u32 2102212464, %v2283
        %v2293 = vor.u32 %v2291, %v2292
        %v2294 = vshll.u32 2102212464, %v2282
        %v2295 = vshrl.u32 920167782, %v2283
        %v2296 = vor.u32 %v2294, %v2295
        %v2297 = vshll.u32 920167782, %v2282
        %v2298 = vshrl.u32 1326507024, %v2283
        %v2299 = vor.u32 %v2297, %v2298
        %vm2300 = vcmp.lt.s32.totalorder %v2281, 1
        %vm2301 = vcmp.lt.s32.totalorder %v2281, 2
        %vm2302 = vcmp.lt.s32.totalorder %v2281, 3
        %vm2303 = vcmp.lt.s32.totalorder %v2281, 4
        %v2304 = vsel %vm2300, %v2284, %v2287
        %v2305 = vsel %vm2303, %v2293, 2102212464
        %v2306 = vsel %vm2302, %v2290, %v2305
        %v2307 = vsel %vm2301, %v2304, %v2306
        %v2308 = vsel %vm2300, %v2287, %v2290
        %v2309 = vsel %vm2303, %v2296, 920167782
        %v2310 = vsel %vm2302, %v2293, %v2309
        %v2311 = vsel %vm2301, %v2308, %v2310
        %v2312 = vsel %vm2300, %v2290, %v2293
        %v2313 = vsel %vm2303, %v2299, 1326507024
        %v2314 = vsel %vm2302, %v2296, %v2313
        %v2315 = vsel %vm2301, %v2312, %v2314
        %v2316 = vshll.u32 %v2276, 8
        %v2317 = vmul.u32.u64.compose %v2316, %v2315
        %v2318 = vextract.low.u32 %v2317
        %v2319 = vextract.high.u32 %v2317
        %v2320 = vmul.u32.u64.compose %v2316, %v2311
        %v2321 = vextract.low.u32 %v2320
        %v2322 = vextract.high.u32 %v2320
        %v2323 = vmul.u32 %v2316, %v2307
        %v2324 = vadd.s32 %v2319, %v2321
        %vm2325 = vc.u32 %v2319, %v2321
        %v2326 = vadd.s32 %v2322, 1
        %v2327 = vsel %vm2325, %v2326, %v2322
        %v2328 = vadd.s32 %v2323, %v2327
        %v2329 = vadd.s32 %v2328, 536870912
        %v2330 = vshrl.u32 %v2329, 30
        %v2331 = vshll.u32 %v2330, 30
        %v2332 = vsub.s32 %v2328, %v2331
        %vm2333 = vcmp.lt.s32.totalorder %v2332, 0
        %v2334 = vsub.s32 0, %v2332
        %v2335 = vsel %vm2333, %v2334, %v2332
        %v2336 = vclz %v2335
        %v2337 = vsub.s32 %v2336, 2
        %vm2338 = vcmp.gt.s32.totalorder 0, %v2337
        %v2339 = vsel %vm2338, 0, %v2337
        %v2340 = vsub.s32 32, %v2339
        %v2341 = vshll.u32 %v2332, %v2339
        %v2342 = vshrl.u32 %v2324, %v2340
        %v2343 = vor.u32 %v2341, %v2342
        %v2344 = vsub.s32 4294967266, %v2339
        %v2345 = vadd.s32 %v2344, 127
        %v2346 = vshll.u32 %v2345, 23
        %v2347 = vor.u32 4788187, %v2346
        %v2348 = vand.u32 2147483647, %v2347
        %v2350 = vcvt.s32.f32 %v2343
        %v2351 = vmul.f32 %v2350, %v2348
        %v2352 = vxor.u32 %v2351, 2147483648
        %v2353 = vsel %vm2270, %v2352, %v2351
        %v2354 = vsub.s32 4, %v2330
        %v2355 = vsel %vm2270, %v2354, %v2330
        %v2356 = vsel %vm2269, %v1745, %v2353
        %v2357 = vsel %vm2269, 0, %v2355
        %v2358 = vcosq.f32.pop %v2356
        %v2359 = vsinq.f32.pop %v2356
        %vm2360 = vweird.f32 %v1745
        %v2361 = vadd.s32 %v2357, 3
        %v2362 = vand.u32 %v2361, 3
        %vm2363 = vcmp.lt.s32.totalorder %v2362, 2
        %vm2364 = vcmp.eq.s32.totalorder %v2362, 0
        %v2365 = vxor.u32 %v2359, 2147483648
        %v2366 = vsel %vm2364, %v2358, %v2365
        %vm2367 = vcmp.eq.s32.totalorder %v2362, 2
        %v2368 = vxor.u32 %v2358, 2147483648
        %v2369 = vsel %vm2367, %v2368, %v2359
        %v2370 = vsel %vm2363, %v2366, %v2369
        %v2371 = vsel %vm2360, nan, %v2370
        %v2372 = vand.u32 2147483647, %v1746
        %vm2373 = vcmp.le.f32.partialorder %v2372, 0.7853982
        %vm2374 = vcmp.lt.s32.totalorder %v1746, 0
        %v2375 = vand.u32 %v1746, 2139095040
        %v2376 = vshrl.u32 %v2375, 23
        %v2377 = vsub.s32 %v2376, 127
        %v2378 = vand.u32 2147483647, %v1746
        %v2379 = vand.u32 %v2378, 8388607
        %v2380 = vor.u32 %v2379, 8388608
        %v2381 = vsub.s32 0, %v2380
        %v2382 = vadd.s32 %v2377, 1
        %vm2383 = vcmp.gt.s32.totalorder %v2382, 0
        %v2384 = vsel %vm2383, %v2382, 0
        %v2385 = vshrl.u32 %v2384, 5
        %v2386 = vand.u32 %v2384, 31
        %v2387 = vsub.s32 32, %v2386
        %v2388 = vshrl.u32 683565275, %v2387
        %v2389 = vshll.u32 683565275, %v2386
        %v2390 = vshrl.u32 2475754826, %v2387
        %v2391 = vor.u32 %v2389, %v2390
        %v2392 = vshll.u32 2475754826, %v2386
        %v2393 = vshrl.u32 2131351028, %v2387
        %v2394 = vor.u32 %v2392, %v2393
        %v2395 = vshll.u32 2131351028, %v2386
        %v2396 = vshrl.u32 2102212464, %v2387
        %v2397 = vor.u32 %v2395, %v2396
        %v2398 = vshll.u32 2102212464, %v2386
        %v2399 = vshrl.u32 920167782, %v2387
        %v2400 = vor.u32 %v2398, %v2399
        %v2401 = vshll.u32 920167782, %v2386
        %v2402 = vshrl.u32 1326507024, %v2387
        %v2403 = vor.u32 %v2401, %v2402
        %vm2404 = vcmp.lt.s32.totalorder %v2385, 1
        %vm2405 = vcmp.lt.s32.totalorder %v2385, 2
        %vm2406 = vcmp.lt.s32.totalorder %v2385, 3
        %vm2407 = vcmp.lt.s32.totalorder %v2385, 4
        %v2408 = vsel %vm2404, %v2388, %v2391
        %v2409 = vsel %vm2407, %v2397, 2102212464
        %v2410 = vsel %vm2406, %v2394, %v2409
        %v2411 = vsel %vm2405, %v2408, %v2410
        %v2412 = vsel %vm2404, %v2391, %v2394
        %v2413 = vsel %vm2407, %v2400, 920167782
        %v2414 = vsel %vm2406, %v2397, %v2413
        %v2415 = vsel %vm2405, %v2412, %v2414
        %v2416 = vsel %vm2404, %v2394, %v2397
        %v2417 = vsel %vm2407, %v2403, 1326507024
        %v2418 = vsel %vm2406, %v2400, %v2417
        %v2419 = vsel %vm2405, %v2416, %v2418
        %v2420 = vshll.u32 %v2380, 8
        %v2421 = vmul.u32.u64.compose %v2420, %v2419
        %v2422 = vextract.low.u32 %v2421
        %v2423 = vextract.high.u32 %v2421
        %v2424 = vmul.u32.u64.compose %v2420, %v2415
        %v2425 = vextract.low.u32 %v2424
        %v2426 = vextract.high.u32 %v2424
        %v2427 = vmul.u32 %v2420, %v2411
        %v2428 = vadd.s32 %v2423, %v2425
        %vm2429 = vc.u32 %v2423, %v2425
        %v2430 = vadd.s32 %v2426, 1
        %v2431 = vsel %vm2429, %v2430, %v2426
        %v2432 = vadd.s32 %v2427, %v2431
        %v2433 = vadd.s32 %v2432, 536870912
        %v2434 = vshrl.u32 %v2433, 30
        %v2435 = vshll.u32 %v2434, 30
        %v2436 = vsub.s32 %v2432, %v2435
        %vm2437 = vcmp.lt.s32.totalorder %v2436, 0
        %v2438 = vsub.s32 0, %v2436
        %v2439 = vsel %vm2437, %v2438, %v2436
        %v2440 = vclz %v2439
        %v2441 = vsub.s32 %v2440, 2
        %vm2442 = vcmp.gt.s32.totalorder 0, %v2441
        %v2443 = vsel %vm2442, 0, %v2441
        %v2444 = vsub.s32 32, %v2443
        %v2445 = vshll.u32 %v2436, %v2443
        %v2446 = vshrl.u32 %v2428, %v2444
        %v2447 = vor.u32 %v2445, %v2446
        %v2448 = vsub.s32 4294967266, %v2443
        %v2449 = vadd.s32 %v2448, 127
        %v2450 = vshll.u32 %v2449, 23
        %v2451 = vor.u32 4788187, %v2450
        %v2452 = vand.u32 2147483647, %v2451
        %v2454 = vcvt.s32.f32 %v2447
        %v2455 = vmul.f32 %v2454, %v2452
        %v2456 = vxor.u32 %v2455, 2147483648
        %v2457 = vsel %vm2374, %v2456, %v2455
        %v2458 = vsub.s32 4, %v2434
        %v2459 = vsel %vm2374, %v2458, %v2434
        %v2460 = vsel %vm2373, %v1746, %v2457
        %v2461 = vsel %vm2373, 0, %v2459
        %v2462 = vcosq.f32.pop %v2460
        %v2463 = vsinq.f32.pop %v2460
        %vm2464 = vweird.f32 %v1746
        %v2465 = vadd.s32 %v2461, 3
        %v2466 = vand.u32 %v2465, 3
        %vm2467 = vcmp.lt.s32.totalorder %v2466, 2
        %vm2468 = vcmp.eq.s32.totalorder %v2466, 0
        %v2469 = vxor.u32 %v2463, 2147483648
        %v2470 = vsel %vm2468, %v2462, %v2469
        %vm2471 = vcmp.eq.s32.totalorder %v2466, 2
        %v2472 = vxor.u32 %v2462, 2147483648
        %v2473 = vsel %vm2471, %v2472, %v2463
        %v2474 = vsel %vm2467, %v2470, %v2473
        %v2475 = vsel %vm2464, nan, %v2474
        %v2476 = vand.u32 2147483647, %v1747
        %vm2477 = vcmp.le.f32.partialorder %v2476, 0.7853982
        %vm2478 = vcmp.lt.s32.totalorder %v1747, 0
        %v2479 = vand.u32 %v1747, 2139095040
        %v2480 = vshrl.u32 %v2479, 23
        %v2481 = vsub.s32 %v2480, 127
        %v2482 = vand.u32 2147483647, %v1747
        %v2483 = vand.u32 %v2482, 8388607
        %v2484 = vor.u32 %v2483, 8388608
        %v2485 = vsub.s32 0, %v2484
        %v2486 = vadd.s32 %v2481, 1
        %vm2487 = vcmp.gt.s32.totalorder %v2486, 0
        %v2488 = vsel %vm2487, %v2486, 0
        %v2489 = vshrl.u32 %v2488, 5
        %v2490 = vand.u32 %v2488, 31
        %v2491 = vsub.s32 32, %v2490
        %v2492 = vshrl.u32 683565275, %v2491
        %v2493 = vshll.u32 683565275, %v2490
        %v2494 = vshrl.u32 2475754826, %v2491
        %v2495 = vor.u32 %v2493, %v2494
        %v2496 = vshll.u32 2475754826, %v2490
        %v2497 = vshrl.u32 2131351028, %v2491
        %v2498 = vor.u32 %v2496, %v2497
        %v2499 = vshll.u32 2131351028, %v2490
        %v2500 = vshrl.u32 2102212464, %v2491
        %v2501 = vor.u32 %v2499, %v2500
        %v2502 = vshll.u32 2102212464, %v2490
        %v2503 = vshrl.u32 920167782, %v2491
        %v2504 = vor.u32 %v2502, %v2503
        %v2505 = vshll.u32 920167782, %v2490
        %v2506 = vshrl.u32 1326507024, %v2491
        %v2507 = vor.u32 %v2505, %v2506
        %vm2508 = vcmp.lt.s32.totalorder %v2489, 1
        %vm2509 = vcmp.lt.s32.totalorder %v2489, 2
        %vm2510 = vcmp.lt.s32.totalorder %v2489, 3
        %vm2511 = vcmp.lt.s32.totalorder %v2489, 4
        %v2512 = vsel %vm2508, %v2492, %v2495
        %v2513 = vsel %vm2511, %v2501, 2102212464
        %v2514 = vsel %vm2510, %v2498, %v2513
        %v2515 = vsel %vm2509, %v2512, %v2514
        %v2516 = vsel %vm2508, %v2495, %v2498
        %v2517 = vsel %vm2511, %v2504, 920167782
        %v2518 = vsel %vm2510, %v2501, %v2517
        %v2519 = vsel %vm2509, %v2516, %v2518
        %v2520 = vsel %vm2508, %v2498, %v2501
        %v2521 = vsel %vm2511, %v2507, 1326507024
        %v2522 = vsel %vm2510, %v2504, %v2521
        %v2523 = vsel %vm2509, %v2520, %v2522
        %v2524 = vshll.u32 %v2484, 8
        %v2525 = vmul.u32.u64.compose %v2524, %v2523
        %v2526 = vextract.low.u32 %v2525
        %v2527 = vextract.high.u32 %v2525
        %v2528 = vmul.u32.u64.compose %v2524, %v2519
        %v2529 = vextract.low.u32 %v2528
        %v2530 = vextract.high.u32 %v2528
        %v2531 = vmul.u32 %v2524, %v2515
        %v2532 = vadd.s32 %v2527, %v2529
        %vm2533 = vc.u32 %v2527, %v2529
        %v2534 = vadd.s32 %v2530, 1
        %v2535 = vsel %vm2533, %v2534, %v2530
        %v2536 = vadd.s32 %v2531, %v2535
        %v2537 = vadd.s32 %v2536, 536870912
        %v2538 = vshrl.u32 %v2537, 30
        %v2539 = vshll.u32 %v2538, 30
        %v2540 = vsub.s32 %v2536, %v2539
        %vm2541 = vcmp.lt.s32.totalorder %v2540, 0
        %v2542 = vsub.s32 0, %v2540
        %v2543 = vsel %vm2541, %v2542, %v2540
        %v2544 = vclz %v2543
        %v2545 = vsub.s32 %v2544, 2
        %vm2546 = vcmp.gt.s32.totalorder 0, %v2545
        %v2547 = vsel %vm2546, 0, %v2545
        %v2548 = vsub.s32 32, %v2547
        %v2549 = vshll.u32 %v2540, %v2547
        %v2550 = vshrl.u32 %v2532, %v2548
        %v2551 = vor.u32 %v2549, %v2550
        %v2552 = vsub.s32 4294967266, %v2547
        %v2553 = vadd.s32 %v2552, 127
        %v2554 = vshll.u32 %v2553, 23
        %v2555 = vor.u32 4788187, %v2554
        %v2556 = vand.u32 2147483647, %v2555
        %v2558 = vcvt.s32.f32 %v2551
        %v2559 = vmul.f32 %v2558, %v2556
        %v2560 = vxor.u32 %v2559, 2147483648
        %v2561 = vsel %vm2478, %v2560, %v2559
        %v2562 = vsub.s32 4, %v2538
        %v2563 = vsel %vm2478, %v2562, %v2538
        %v2564 = vsel %vm2477, %v1747, %v2561
        %v2565 = vsel %vm2477, 0, %v2563
        %v2566 = vcosq.f32.pop %v2564
        %v2567 = vsinq.f32.pop %v2564
        %vm2568 = vweird.f32 %v1747
        %v2569 = vadd.s32 %v2565, 3
        %v2570 = vand.u32 %v2569, 3
        %vm2571 = vcmp.lt.s32.totalorder %v2570, 2
        %vm2572 = vcmp.eq.s32.totalorder %v2570, 0
        %v2573 = vxor.u32 %v2567, 2147483648
        %v2574 = vsel %vm2572, %v2566, %v2573
        %vm2575 = vcmp.eq.s32.totalorder %v2570, 2
        %v2576 = vxor.u32 %v2566, 2147483648
        %v2577 = vsel %vm2575, %v2576, %v2567
        %v2578 = vsel %vm2571, %v2574, %v2577
        %v2579 = vsel %vm2568, nan, %v2578
        %v2580 = vmul.f32 %v858, 0.25
        %v2581 = vmul.f32 %v865, 0.25
        %v2582 = vmul.f32 %v872, 0.25
        %v2583 = vmul.f32 %v879, 0.25
        %v2584 = vmul.f32 %v886, 0.25
        %v2585 = vmul.f32 %v893, 0.25
        %v2586 = vmul.f32 %v900, 0.25
        %v2587 = vmul.f32 %v907, 0.25
        %v2588 = vand.u32 2147483647, %v2580
        %vm2589 = vcmp.le.f32.partialorder %v2588, 0.7853982
        %vm2590 = vcmp.lt.s32.totalorder %v2580, 0
        %v2591 = vand.u32 %v2580, 2139095040
        %v2592 = vshrl.u32 %v2591, 23
        %v2593 = vsub.s32 %v2592, 127
        %v2594 = vand.u32 2147483647, %v2580
        %v2595 = vand.u32 %v2594, 8388607
        %v2596 = vor.u32 %v2595, 8388608
        %v2597 = vsub.s32 0, %v2596
        %v2598 = vadd.s32 %v2593, 1
        %vm2599 = vcmp.gt.s32.totalorder %v2598, 0
        %v2600 = vsel %vm2599, %v2598, 0
        %v2601 = vshrl.u32 %v2600, 5
        %v2602 = vand.u32 %v2600, 31
        %v2603 = vsub.s32 32, %v2602
        %v2604 = vshrl.u32 683565275, %v2603
        %v2605 = vshll.u32 683565275, %v2602
        %v2606 = vshrl.u32 2475754826, %v2603
        %v2607 = vor.u32 %v2605, %v2606
        %v2608 = vshll.u32 2475754826, %v2602
        %v2609 = vshrl.u32 2131351028, %v2603
        %v2610 = vor.u32 %v2608, %v2609
        %v2611 = vshll.u32 2131351028, %v2602
        %v2612 = vshrl.u32 2102212464, %v2603
        %v2613 = vor.u32 %v2611, %v2612
        %v2614 = vshll.u32 2102212464, %v2602
        %v2615 = vshrl.u32 920167782, %v2603
        %v2616 = vor.u32 %v2614, %v2615
        %v2617 = vshll.u32 920167782, %v2602
        %v2618 = vshrl.u32 1326507024, %v2603
        %v2619 = vor.u32 %v2617, %v2618
        %vm2620 = vcmp.lt.s32.totalorder %v2601, 1
        %vm2621 = vcmp.lt.s32.totalorder %v2601, 2
        %vm2622 = vcmp.lt.s32.totalorder %v2601, 3
        %vm2623 = vcmp.lt.s32.totalorder %v2601, 4
        %v2624 = vsel %vm2620, %v2604, %v2607
        %v2625 = vsel %vm2623, %v2613, 2102212464
        %v2626 = vsel %vm2622, %v2610, %v2625
        %v2627 = vsel %vm2621, %v2624, %v2626
        %v2628 = vsel %vm2620, %v2607, %v2610
        %v2629 = vsel %vm2623, %v2616, 920167782
        %v2630 = vsel %vm2622, %v2613, %v2629
        %v2631 = vsel %vm2621, %v2628, %v2630
        %v2632 = vsel %vm2620, %v2610, %v2613
        %v2633 = vsel %vm2623, %v2619, 1326507024
        %v2634 = vsel %vm2622, %v2616, %v2633
        %v2635 = vsel %vm2621, %v2632, %v2634
        %v2636 = vshll.u32 %v2596, 8
        %v2637 = vmul.u32.u64.compose %v2636, %v2635
        %v2638 = vextract.low.u32 %v2637
        %v2639 = vextract.high.u32 %v2637
        %v2640 = vmul.u32.u64.compose %v2636, %v2631
        %v2641 = vextract.low.u32 %v2640
        %v2642 = vextract.high.u32 %v2640
        %v2643 = vmul.u32 %v2636, %v2627
        %v2644 = vadd.s32 %v2639, %v2641
        %vm2645 = vc.u32 %v2639, %v2641
        %v2646 = vadd.s32 %v2642, 1
        %v2647 = vsel %vm2645, %v2646, %v2642
        %v2648 = vadd.s32 %v2643, %v2647
        %v2649 = vadd.s32 %v2648, 536870912
        %v2650 = vshrl.u32 %v2649, 30
        %v2651 = vshll.u32 %v2650, 30
        %v2652 = vsub.s32 %v2648, %v2651
        %vm2653 = vcmp.lt.s32.totalorder %v2652, 0
        %v2654 = vsub.s32 0, %v2652
        %v2655 = vsel %vm2653, %v2654, %v2652
        %v2656 = vclz %v2655
        %v2657 = vsub.s32 %v2656, 2
        %vm2658 = vcmp.gt.s32.totalorder 0, %v2657
        %v2659 = vsel %vm2658, 0, %v2657
        %v2660 = vsub.s32 32, %v2659
        %v2661 = vshll.u32 %v2652, %v2659
        %v2662 = vshrl.u32 %v2644, %v2660
        %v2663 = vor.u32 %v2661, %v2662
        %v2664 = vsub.s32 4294967266, %v2659
        %v2665 = vadd.s32 %v2664, 127
        %v2666 = vshll.u32 %v2665, 23
        %v2667 = vor.u32 4788187, %v2666
        %v2668 = vand.u32 2147483647, %v2667
        %v2670 = vcvt.s32.f32 %v2663
        %v2671 = vmul.f32 %v2670, %v2668
        %v2672 = vxor.u32 %v2671, 2147483648
        %v2673 = vsel %vm2590, %v2672, %v2671
        %v2674 = vsub.s32 4, %v2650
        %v2675 = vsel %vm2590, %v2674, %v2650
        %v2676 = vsel %vm2589, %v2580, %v2673
        %v2677 = vsel %vm2589, 0, %v2675
        %v2678 = vcosq.f32.pop %v2676
        %v2679 = vsinq.f32.pop %v2676
        %vm2680 = vweird.f32 %v2580
        %v2681 = vadd.s32 %v2677, 3
        %v2682 = vand.u32 %v2681, 3
        %vm2683 = vcmp.lt.s32.totalorder %v2682, 2
        %vm2684 = vcmp.eq.s32.totalorder %v2682, 0
        %v2685 = vxor.u32 %v2679, 2147483648
        %v2686 = vsel %vm2684, %v2678, %v2685
        %vm2687 = vcmp.eq.s32.totalorder %v2682, 2
        %v2688 = vxor.u32 %v2678, 2147483648
        %v2689 = vsel %vm2687, %v2688, %v2679
        %v2690 = vsel %vm2683, %v2686, %v2689
        %v2691 = vsel %vm2680, nan, %v2690
        %v2692 = vand.u32 2147483647, %v2581
        %vm2693 = vcmp.le.f32.partialorder %v2692, 0.7853982
        %vm2694 = vcmp.lt.s32.totalorder %v2581, 0
        %v2695 = vand.u32 %v2581, 2139095040
        %v2696 = vshrl.u32 %v2695, 23
        %v2697 = vsub.s32 %v2696, 127
        %v2698 = vand.u32 2147483647, %v2581
        %v2699 = vand.u32 %v2698, 8388607
        %v2700 = vor.u32 %v2699, 8388608
        %v2701 = vsub.s32 0, %v2700
        %v2702 = vadd.s32 %v2697, 1
        %vm2703 = vcmp.gt.s32.totalorder %v2702, 0
        %v2704 = vsel %vm2703, %v2702, 0
        %v2705 = vshrl.u32 %v2704, 5
        %v2706 = vand.u32 %v2704, 31
        %v2707 = vsub.s32 32, %v2706
        %v2708 = vshrl.u32 683565275, %v2707
        %v2709 = vshll.u32 683565275, %v2706
        %v2710 = vshrl.u32 2475754826, %v2707
        %v2711 = vor.u32 %v2709, %v2710
        %v2712 = vshll.u32 2475754826, %v2706
        %v2713 = vshrl.u32 2131351028, %v2707
        %v2714 = vor.u32 %v2712, %v2713
        %v2715 = vshll.u32 2131351028, %v2706
        %v2716 = vshrl.u32 2102212464, %v2707
        %v2717 = vor.u32 %v2715, %v2716
        %v2718 = vshll.u32 2102212464, %v2706
        %v2719 = vshrl.u32 920167782, %v2707
        %v2720 = vor.u32 %v2718, %v2719
        %v2721 = vshll.u32 920167782, %v2706
        %v2722 = vshrl.u32 1326507024, %v2707
        %v2723 = vor.u32 %v2721, %v2722
        %vm2724 = vcmp.lt.s32.totalorder %v2705, 1
        %vm2725 = vcmp.lt.s32.totalorder %v2705, 2
        %vm2726 = vcmp.lt.s32.totalorder %v2705, 3
        %vm2727 = vcmp.lt.s32.totalorder %v2705, 4
        %v2728 = vsel %vm2724, %v2708, %v2711
        %v2729 = vsel %vm2727, %v2717, 2102212464
        %v2730 = vsel %vm2726, %v2714, %v2729
        %v2731 = vsel %vm2725, %v2728, %v2730
        %v2732 = vsel %vm2724, %v2711, %v2714
        %v2733 = vsel %vm2727, %v2720, 920167782
        %v2734 = vsel %vm2726, %v2717, %v2733
        %v2735 = vsel %vm2725, %v2732, %v2734
        %v2736 = vsel %vm2724, %v2714, %v2717
        %v2737 = vsel %vm2727, %v2723, 1326507024
        %v2738 = vsel %vm2726, %v2720, %v2737
        %v2739 = vsel %vm2725, %v2736, %v2738
        %v2740 = vshll.u32 %v2700, 8
        %v2741 = vmul.u32.u64.compose %v2740, %v2739
        %v2742 = vextract.low.u32 %v2741
        %v2743 = vextract.high.u32 %v2741
        %v2744 = vmul.u32.u64.compose %v2740, %v2735
        %v2745 = vextract.low.u32 %v2744
        %v2746 = vextract.high.u32 %v2744
        %v2747 = vmul.u32 %v2740, %v2731
        %v2748 = vadd.s32 %v2743, %v2745
        %vm2749 = vc.u32 %v2743, %v2745
        %v2750 = vadd.s32 %v2746, 1
        %v2751 = vsel %vm2749, %v2750, %v2746
        %v2752 = vadd.s32 %v2747, %v2751
        %v2753 = vadd.s32 %v2752, 536870912
        %v2754 = vshrl.u32 %v2753, 30
        %v2755 = vshll.u32 %v2754, 30
        %v2756 = vsub.s32 %v2752, %v2755
        %vm2757 = vcmp.lt.s32.totalorder %v2756, 0
        %v2758 = vsub.s32 0, %v2756
        %v2759 = vsel %vm2757, %v2758, %v2756
        %v2760 = vclz %v2759
        %v2761 = vsub.s32 %v2760, 2
        %vm2762 = vcmp.gt.s32.totalorder 0, %v2761
        %v2763 = vsel %vm2762, 0, %v2761
        %v2764 = vsub.s32 32, %v2763
        %v2765 = vshll.u32 %v2756, %v2763
        %v2766 = vshrl.u32 %v2748, %v2764
        %v2767 = vor.u32 %v2765, %v2766
        %v2768 = vsub.s32 4294967266, %v2763
        %v2769 = vadd.s32 %v2768, 127
        %v2770 = vshll.u32 %v2769, 23
        %v2771 = vor.u32 4788187, %v2770
        %v2772 = vand.u32 2147483647, %v2771
        %v2774 = vcvt.s32.f32 %v2767
        %v2775 = vmul.f32 %v2774, %v2772
        %v2776 = vxor.u32 %v2775, 2147483648
        %v2777 = vsel %vm2694, %v2776, %v2775
        %v2778 = vsub.s32 4, %v2754
        %v2779 = vsel %vm2694, %v2778, %v2754
        %v2780 = vsel %vm2693, %v2581, %v2777
        %v2781 = vsel %vm2693, 0, %v2779
        %v2782 = vcosq.f32.pop %v2780
        %v2783 = vsinq.f32.pop %v2780
        %vm2784 = vweird.f32 %v2581
        %v2785 = vadd.s32 %v2781, 3
        %v2786 = vand.u32 %v2785, 3
        %vm2787 = vcmp.lt.s32.totalorder %v2786, 2
        %vm2788 = vcmp.eq.s32.totalorder %v2786, 0
        %v2789 = vxor.u32 %v2783, 2147483648
        %v2790 = vsel %vm2788, %v2782, %v2789
        %vm2791 = vcmp.eq.s32.totalorder %v2786, 2
        %v2792 = vxor.u32 %v2782, 2147483648
        %v2793 = vsel %vm2791, %v2792, %v2783
        %v2794 = vsel %vm2787, %v2790, %v2793
        %v2795 = vsel %vm2784, nan, %v2794
        %v2796 = vand.u32 2147483647, %v2582
        %vm2797 = vcmp.le.f32.partialorder %v2796, 0.7853982
        %vm2798 = vcmp.lt.s32.totalorder %v2582, 0
        %v2799 = vand.u32 %v2582, 2139095040
        %v2800 = vshrl.u32 %v2799, 23
        %v2801 = vsub.s32 %v2800, 127
        %v2802 = vand.u32 2147483647, %v2582
        %v2803 = vand.u32 %v2802, 8388607
        %v2804 = vor.u32 %v2803, 8388608
        %v2805 = vsub.s32 0, %v2804
        %v2806 = vadd.s32 %v2801, 1
        %vm2807 = vcmp.gt.s32.totalorder %v2806, 0
        %v2808 = vsel %vm2807, %v2806, 0
        %v2809 = vshrl.u32 %v2808, 5
        %v2810 = vand.u32 %v2808, 31
        %v2811 = vsub.s32 32, %v2810
        %v2812 = vshrl.u32 683565275, %v2811
        %v2813 = vshll.u32 683565275, %v2810
        %v2814 = vshrl.u32 2475754826, %v2811
        %v2815 = vor.u32 %v2813, %v2814
        %v2816 = vshll.u32 2475754826, %v2810
        %v2817 = vshrl.u32 2131351028, %v2811
        %v2818 = vor.u32 %v2816, %v2817
        %v2819 = vshll.u32 2131351028, %v2810
        %v2820 = vshrl.u32 2102212464, %v2811
        %v2821 = vor.u32 %v2819, %v2820
        %v2822 = vshll.u32 2102212464, %v2810
        %v2823 = vshrl.u32 920167782, %v2811
        %v2824 = vor.u32 %v2822, %v2823
        %v2825 = vshll.u32 920167782, %v2810
        %v2826 = vshrl.u32 1326507024, %v2811
        %v2827 = vor.u32 %v2825, %v2826
        %vm2828 = vcmp.lt.s32.totalorder %v2809, 1
        %vm2829 = vcmp.lt.s32.totalorder %v2809, 2
        %vm2830 = vcmp.lt.s32.totalorder %v2809, 3
        %vm2831 = vcmp.lt.s32.totalorder %v2809, 4
        %v2832 = vsel %vm2828, %v2812, %v2815
        %v2833 = vsel %vm2831, %v2821, 2102212464
        %v2834 = vsel %vm2830, %v2818, %v2833
        %v2835 = vsel %vm2829, %v2832, %v2834
        %v2836 = vsel %vm2828, %v2815, %v2818
        %v2837 = vsel %vm2831, %v2824, 920167782
        %v2838 = vsel %vm2830, %v2821, %v2837
        %v2839 = vsel %vm2829, %v2836, %v2838
        %v2840 = vsel %vm2828, %v2818, %v2821
        %v2841 = vsel %vm2831, %v2827, 1326507024
        %v2842 = vsel %vm2830, %v2824, %v2841
        %v2843 = vsel %vm2829, %v2840, %v2842
        %v2844 = vshll.u32 %v2804, 8
        %v2845 = vmul.u32.u64.compose %v2844, %v2843
        %v2846 = vextract.low.u32 %v2845
        %v2847 = vextract.high.u32 %v2845
        %v2848 = vmul.u32.u64.compose %v2844, %v2839
        %v2849 = vextract.low.u32 %v2848
        %v2850 = vextract.high.u32 %v2848
        %v2851 = vmul.u32 %v2844, %v2835
        %v2852 = vadd.s32 %v2847, %v2849
        %vm2853 = vc.u32 %v2847, %v2849
        %v2854 = vadd.s32 %v2850, 1
        %v2855 = vsel %vm2853, %v2854, %v2850
        %v2856 = vadd.s32 %v2851, %v2855
        %v2857 = vadd.s32 %v2856, 536870912
        %v2858 = vshrl.u32 %v2857, 30
        %v2859 = vshll.u32 %v2858, 30
        %v2860 = vsub.s32 %v2856, %v2859
        %vm2861 = vcmp.lt.s32.totalorder %v2860, 0
        %v2862 = vsub.s32 0, %v2860
        %v2863 = vsel %vm2861, %v2862, %v2860
        %v2864 = vclz %v2863
        %v2865 = vsub.s32 %v2864, 2
        %vm2866 = vcmp.gt.s32.totalorder 0, %v2865
        %v2867 = vsel %vm2866, 0, %v2865
        %v2868 = vsub.s32 32, %v2867
        %v2869 = vshll.u32 %v2860, %v2867
        %v2870 = vshrl.u32 %v2852, %v2868
        %v2871 = vor.u32 %v2869, %v2870
        %v2872 = vsub.s32 4294967266, %v2867
        %v2873 = vadd.s32 %v2872, 127
        %v2874 = vshll.u32 %v2873, 23
        %v2875 = vor.u32 4788187, %v2874
        %v2876 = vand.u32 2147483647, %v2875
        %v2878 = vcvt.s32.f32 %v2871
        %v2879 = vmul.f32 %v2878, %v2876
        %v2880 = vxor.u32 %v2879, 2147483648
        %v2881 = vsel %vm2798, %v2880, %v2879
        %v2882 = vsub.s32 4, %v2858
        %v2883 = vsel %vm2798, %v2882, %v2858
        %v2884 = vsel %vm2797, %v2582, %v2881
        %v2885 = vsel %vm2797, 0, %v2883
        %v2886 = vcosq.f32.pop %v2884
        %v2887 = vsinq.f32.pop %v2884
        %vm2888 = vweird.f32 %v2582
        %v2889 = vadd.s32 %v2885, 3
        %v2890 = vand.u32 %v2889, 3
        %vm2891 = vcmp.lt.s32.totalorder %v2890, 2
        %vm2892 = vcmp.eq.s32.totalorder %v2890, 0
        %v2893 = vxor.u32 %v2887, 2147483648
        %v2894 = vsel %vm2892, %v2886, %v2893
        %vm2895 = vcmp.eq.s32.totalorder %v2890, 2
        %v2896 = vxor.u32 %v2886, 2147483648
        %v2897 = vsel %vm2895, %v2896, %v2887
        %v2898 = vsel %vm2891, %v2894, %v2897
        %v2899 = vsel %vm2888, nan, %v2898
        %v2900 = vand.u32 2147483647, %v2583
        %vm2901 = vcmp.le.f32.partialorder %v2900, 0.7853982
        %vm2902 = vcmp.lt.s32.totalorder %v2583, 0
        %v2903 = vand.u32 %v2583, 2139095040
        %v2904 = vshrl.u32 %v2903, 23
        %v2905 = vsub.s32 %v2904, 127
        %v2906 = vand.u32 2147483647, %v2583
        %v2907 = vand.u32 %v2906, 8388607
        %v2908 = vor.u32 %v2907, 8388608
        %v2909 = vsub.s32 0, %v2908
        %v2910 = vadd.s32 %v2905, 1
        %vm2911 = vcmp.gt.s32.totalorder %v2910, 0
        %v2912 = vsel %vm2911, %v2910, 0
        %v2913 = vshrl.u32 %v2912, 5
        %v2914 = vand.u32 %v2912, 31
        %v2915 = vsub.s32 32, %v2914
        %v2916 = vshrl.u32 683565275, %v2915
        %v2917 = vshll.u32 683565275, %v2914
        %v2918 = vshrl.u32 2475754826, %v2915
        %v2919 = vor.u32 %v2917, %v2918
        %v2920 = vshll.u32 2475754826, %v2914
        %v2921 = vshrl.u32 2131351028, %v2915
        %v2922 = vor.u32 %v2920, %v2921
        %v2923 = vshll.u32 2131351028, %v2914
        %v2924 = vshrl.u32 2102212464, %v2915
        %v2925 = vor.u32 %v2923, %v2924
        %v2926 = vshll.u32 2102212464, %v2914
        %v2927 = vshrl.u32 920167782, %v2915
        %v2928 = vor.u32 %v2926, %v2927
        %v2929 = vshll.u32 920167782, %v2914
        %v2930 = vshrl.u32 1326507024, %v2915
        %v2931 = vor.u32 %v2929, %v2930
        %vm2932 = vcmp.lt.s32.totalorder %v2913, 1
        %vm2933 = vcmp.lt.s32.totalorder %v2913, 2
        %vm2934 = vcmp.lt.s32.totalorder %v2913, 3
        %vm2935 = vcmp.lt.s32.totalorder %v2913, 4
        %v2936 = vsel %vm2932, %v2916, %v2919
        %v2937 = vsel %vm2935, %v2925, 2102212464
        %v2938 = vsel %vm2934, %v2922, %v2937
        %v2939 = vsel %vm2933, %v2936, %v2938
        %v2940 = vsel %vm2932, %v2919, %v2922
        %v2941 = vsel %vm2935, %v2928, 920167782
        %v2942 = vsel %vm2934, %v2925, %v2941
        %v2943 = vsel %vm2933, %v2940, %v2942
        %v2944 = vsel %vm2932, %v2922, %v2925
        %v2945 = vsel %vm2935, %v2931, 1326507024
        %v2946 = vsel %vm2934, %v2928, %v2945
        %v2947 = vsel %vm2933, %v2944, %v2946
        %v2948 = vshll.u32 %v2908, 8
        %v2949 = vmul.u32.u64.compose %v2948, %v2947
        %v2950 = vextract.low.u32 %v2949
        %v2951 = vextract.high.u32 %v2949
        %v2952 = vmul.u32.u64.compose %v2948, %v2943
        %v2953 = vextract.low.u32 %v2952
        %v2954 = vextract.high.u32 %v2952
        %v2955 = vmul.u32 %v2948, %v2939
        %v2956 = vadd.s32 %v2951, %v2953
        %vm2957 = vc.u32 %v2951, %v2953
        %v2958 = vadd.s32 %v2954, 1
        %v2959 = vsel %vm2957, %v2958, %v2954
        %v2960 = vadd.s32 %v2955, %v2959
        %v2961 = vadd.s32 %v2960, 536870912
        %v2962 = vshrl.u32 %v2961, 30
        %v2963 = vshll.u32 %v2962, 30
        %v2964 = vsub.s32 %v2960, %v2963
        %vm2965 = vcmp.lt.s32.totalorder %v2964, 0
        %v2966 = vsub.s32 0, %v2964
        %v2967 = vsel %vm2965, %v2966, %v2964
        %v2968 = vclz %v2967
        %v2969 = vsub.s32 %v2968, 2
        %vm2970 = vcmp.gt.s32.totalorder 0, %v2969
        %v2971 = vsel %vm2970, 0, %v2969
        %v2972 = vsub.s32 32, %v2971
        %v2973 = vshll.u32 %v2964, %v2971
        %v2974 = vshrl.u32 %v2956, %v2972
        %v2975 = vor.u32 %v2973, %v2974
        %v2976 = vsub.s32 4294967266, %v2971
        %v2977 = vadd.s32 %v2976, 127
        %v2978 = vshll.u32 %v2977, 23
        %v2979 = vor.u32 4788187, %v2978
        %v2980 = vand.u32 2147483647, %v2979
        %v2982 = vcvt.s32.f32 %v2975
        %v2983 = vmul.f32 %v2982, %v2980
        %v2984 = vxor.u32 %v2983, 2147483648
        %v2985 = vsel %vm2902, %v2984, %v2983
        %v2986 = vsub.s32 4, %v2962
        %v2987 = vsel %vm2902, %v2986, %v2962
        %v2988 = vsel %vm2901, %v2583, %v2985
        %v2989 = vsel %vm2901, 0, %v2987
        %v2990 = vcosq.f32.pop %v2988
        %v2991 = vsinq.f32.pop %v2988
        %vm2992 = vweird.f32 %v2583
        %v2993 = vadd.s32 %v2989, 3
        %v2994 = vand.u32 %v2993, 3
        %vm2995 = vcmp.lt.s32.totalorder %v2994, 2
        %vm2996 = vcmp.eq.s32.totalorder %v2994, 0
        %v2997 = vxor.u32 %v2991, 2147483648
        %v2998 = vsel %vm2996, %v2990, %v2997
        %vm2999 = vcmp.eq.s32.totalorder %v2994, 2
        %v3000 = vxor.u32 %v2990, 2147483648
        %v3001 = vsel %vm2999, %v3000, %v2991
        %v3002 = vsel %vm2995, %v2998, %v3001
        %v3003 = vsel %vm2992, nan, %v3002
        %v3004 = vand.u32 2147483647, %v2584
        %vm3005 = vcmp.le.f32.partialorder %v3004, 0.7853982
        %vm3006 = vcmp.lt.s32.totalorder %v2584, 0
        %v3007 = vand.u32 %v2584, 2139095040
        %v3008 = vshrl.u32 %v3007, 23
        %v3009 = vsub.s32 %v3008, 127
        %v3010 = vand.u32 2147483647, %v2584
        %v3011 = vand.u32 %v3010, 8388607
        %v3012 = vor.u32 %v3011, 8388608
        %v3013 = vsub.s32 0, %v3012
        %v3014 = vadd.s32 %v3009, 1
        %vm3015 = vcmp.gt.s32.totalorder %v3014, 0
        %v3016 = vsel %vm3015, %v3014, 0
        %v3017 = vshrl.u32 %v3016, 5
        %v3018 = vand.u32 %v3016, 31
        %v3019 = vsub.s32 32, %v3018
        %v3020 = vshrl.u32 683565275, %v3019
        %v3021 = vshll.u32 683565275, %v3018
        %v3022 = vshrl.u32 2475754826, %v3019
        %v3023 = vor.u32 %v3021, %v3022
        %v3024 = vshll.u32 2475754826, %v3018
        %v3025 = vshrl.u32 2131351028, %v3019
        %v3026 = vor.u32 %v3024, %v3025
        %v3027 = vshll.u32 2131351028, %v3018
        %v3028 = vshrl.u32 2102212464, %v3019
        %v3029 = vor.u32 %v3027, %v3028
        %v3030 = vshll.u32 2102212464, %v3018
        %v3031 = vshrl.u32 920167782, %v3019
        %v3032 = vor.u32 %v3030, %v3031
        %v3033 = vshll.u32 920167782, %v3018
        %v3034 = vshrl.u32 1326507024, %v3019
        %v3035 = vor.u32 %v3033, %v3034
        %vm3036 = vcmp.lt.s32.totalorder %v3017, 1
        %vm3037 = vcmp.lt.s32.totalorder %v3017, 2
        %vm3038 = vcmp.lt.s32.totalorder %v3017, 3
        %vm3039 = vcmp.lt.s32.totalorder %v3017, 4
        %v3040 = vsel %vm3036, %v3020, %v3023
        %v3041 = vsel %vm3039, %v3029, 2102212464
        %v3042 = vsel %vm3038, %v3026, %v3041
        %v3043 = vsel %vm3037, %v3040, %v3042
        %v3044 = vsel %vm3036, %v3023, %v3026
        %v3045 = vsel %vm3039, %v3032, 920167782
        %v3046 = vsel %vm3038, %v3029, %v3045
        %v3047 = vsel %vm3037, %v3044, %v3046
        %v3048 = vsel %vm3036, %v3026, %v3029
        %v3049 = vsel %vm3039, %v3035, 1326507024
        %v3050 = vsel %vm3038, %v3032, %v3049
        %v3051 = vsel %vm3037, %v3048, %v3050
        %v3052 = vshll.u32 %v3012, 8
        %v3053 = vmul.u32.u64.compose %v3052, %v3051
        %v3054 = vextract.low.u32 %v3053
        %v3055 = vextract.high.u32 %v3053
        %v3056 = vmul.u32.u64.compose %v3052, %v3047
        %v3057 = vextract.low.u32 %v3056
        %v3058 = vextract.high.u32 %v3056
        %v3059 = vmul.u32 %v3052, %v3043
        %v3060 = vadd.s32 %v3055, %v3057
        %vm3061 = vc.u32 %v3055, %v3057
        %v3062 = vadd.s32 %v3058, 1
        %v3063 = vsel %vm3061, %v3062, %v3058
        %v3064 = vadd.s32 %v3059, %v3063
        %v3065 = vadd.s32 %v3064, 536870912
        %v3066 = vshrl.u32 %v3065, 30
        %v3067 = vshll.u32 %v3066, 30
        %v3068 = vsub.s32 %v3064, %v3067
        %vm3069 = vcmp.lt.s32.totalorder %v3068, 0
        %v3070 = vsub.s32 0, %v3068
        %v3071 = vsel %vm3069, %v3070, %v3068
        %v3072 = vclz %v3071
        %v3073 = vsub.s32 %v3072, 2
        %vm3074 = vcmp.gt.s32.totalorder 0, %v3073
        %v3075 = vsel %vm3074, 0, %v3073
        %v3076 = vsub.s32 32, %v3075
        %v3077 = vshll.u32 %v3068, %v3075
        %v3078 = vshrl.u32 %v3060, %v3076
        %v3079 = vor.u32 %v3077, %v3078
        %v3080 = vsub.s32 4294967266, %v3075
        %v3081 = vadd.s32 %v3080, 127
        %v3082 = vshll.u32 %v3081, 23
        %v3083 = vor.u32 4788187, %v3082
        %v3084 = vand.u32 2147483647, %v3083
        %v3086 = vcvt.s32.f32 %v3079
        %v3087 = vmul.f32 %v3086, %v3084
        %v3088 = vxor.u32 %v3087, 2147483648
        %v3089 = vsel %vm3006, %v3088, %v3087
        %v3090 = vsub.s32 4, %v3066
        %v3091 = vsel %vm3006, %v3090, %v3066
        %v3092 = vsel %vm3005, %v2584, %v3089
        %v3093 = vsel %vm3005, 0, %v3091
        %v3094 = vcosq.f32.pop %v3092
        %v3095 = vsinq.f32.pop %v3092
        %vm3096 = vweird.f32 %v2584
        %v3097 = vadd.s32 %v3093, 3
        %v3098 = vand.u32 %v3097, 3
        %vm3099 = vcmp.lt.s32.totalorder %v3098, 2
        %vm3100 = vcmp.eq.s32.totalorder %v3098, 0
        %v3101 = vxor.u32 %v3095, 2147483648
        %v3102 = vsel %vm3100, %v3094, %v3101
        %vm3103 = vcmp.eq.s32.totalorder %v3098, 2
        %v3104 = vxor.u32 %v3094, 2147483648
        %v3105 = vsel %vm3103, %v3104, %v3095
        %v3106 = vsel %vm3099, %v3102, %v3105
        %v3107 = vsel %vm3096, nan, %v3106
        %v3108 = vand.u32 2147483647, %v2585
        %vm3109 = vcmp.le.f32.partialorder %v3108, 0.7853982
        %vm3110 = vcmp.lt.s32.totalorder %v2585, 0
        %v3111 = vand.u32 %v2585, 2139095040
        %v3112 = vshrl.u32 %v3111, 23
        %v3113 = vsub.s32 %v3112, 127
        %v3114 = vand.u32 2147483647, %v2585
        %v3115 = vand.u32 %v3114, 8388607
        %v3116 = vor.u32 %v3115, 8388608
        %v3117 = vsub.s32 0, %v3116
        %v3118 = vadd.s32 %v3113, 1
        %vm3119 = vcmp.gt.s32.totalorder %v3118, 0
        %v3120 = vsel %vm3119, %v3118, 0
        %v3121 = vshrl.u32 %v3120, 5
        %v3122 = vand.u32 %v3120, 31
        %v3123 = vsub.s32 32, %v3122
        %v3124 = vshrl.u32 683565275, %v3123
        %v3125 = vshll.u32 683565275, %v3122
        %v3126 = vshrl.u32 2475754826, %v3123
        %v3127 = vor.u32 %v3125, %v3126
        %v3128 = vshll.u32 2475754826, %v3122
        %v3129 = vshrl.u32 2131351028, %v3123
        %v3130 = vor.u32 %v3128, %v3129
        %v3131 = vshll.u32 2131351028, %v3122
        %v3132 = vshrl.u32 2102212464, %v3123
        %v3133 = vor.u32 %v3131, %v3132
        %v3134 = vshll.u32 2102212464, %v3122
        %v3135 = vshrl.u32 920167782, %v3123
        %v3136 = vor.u32 %v3134, %v3135
        %v3137 = vshll.u32 920167782, %v3122
        %v3138 = vshrl.u32 1326507024, %v3123
        %v3139 = vor.u32 %v3137, %v3138
        %vm3140 = vcmp.lt.s32.totalorder %v3121, 1
        %vm3141 = vcmp.lt.s32.totalorder %v3121, 2
        %vm3142 = vcmp.lt.s32.totalorder %v3121, 3
        %vm3143 = vcmp.lt.s32.totalorder %v3121, 4
        %v3144 = vsel %vm3140, %v3124, %v3127
        %v3145 = vsel %vm3143, %v3133, 2102212464
        %v3146 = vsel %vm3142, %v3130, %v3145
        %v3147 = vsel %vm3141, %v3144, %v3146
        %v3148 = vsel %vm3140, %v3127, %v3130
        %v3149 = vsel %vm3143, %v3136, 920167782
        %v3150 = vsel %vm3142, %v3133, %v3149
        %v3151 = vsel %vm3141, %v3148, %v3150
        %v3152 = vsel %vm3140, %v3130, %v3133
        %v3153 = vsel %vm3143, %v3139, 1326507024
        %v3154 = vsel %vm3142, %v3136, %v3153
        %v3155 = vsel %vm3141, %v3152, %v3154
        %v3156 = vshll.u32 %v3116, 8
        %v3157 = vmul.u32.u64.compose %v3156, %v3155
        %v3158 = vextract.low.u32 %v3157
        %v3159 = vextract.high.u32 %v3157
        %v3160 = vmul.u32.u64.compose %v3156, %v3151
        %v3161 = vextract.low.u32 %v3160
        %v3162 = vextract.high.u32 %v3160
        %v3163 = vmul.u32 %v3156, %v3147
        %v3164 = vadd.s32 %v3159, %v3161
        %vm3165 = vc.u32 %v3159, %v3161
        %v3166 = vadd.s32 %v3162, 1
        %v3167 = vsel %vm3165, %v3166, %v3162
        %v3168 = vadd.s32 %v3163, %v3167
        %v3169 = vadd.s32 %v3168, 536870912
        %v3170 = vshrl.u32 %v3169, 30
        %v3171 = vshll.u32 %v3170, 30
        %v3172 = vsub.s32 %v3168, %v3171
        %vm3173 = vcmp.lt.s32.totalorder %v3172, 0
        %v3174 = vsub.s32 0, %v3172
        %v3175 = vsel %vm3173, %v3174, %v3172
        %v3176 = vclz %v3175
        %v3177 = vsub.s32 %v3176, 2
        %vm3178 = vcmp.gt.s32.totalorder 0, %v3177
        %v3179 = vsel %vm3178, 0, %v3177
        %v3180 = vsub.s32 32, %v3179
        %v3181 = vshll.u32 %v3172, %v3179
        %v3182 = vshrl.u32 %v3164, %v3180
        %v3183 = vor.u32 %v3181, %v3182
        %v3184 = vsub.s32 4294967266, %v3179
        %v3185 = vadd.s32 %v3184, 127
        %v3186 = vshll.u32 %v3185, 23
        %v3187 = vor.u32 4788187, %v3186
        %v3188 = vand.u32 2147483647, %v3187
        %v3190 = vcvt.s32.f32 %v3183
        %v3191 = vmul.f32 %v3190, %v3188
        %v3192 = vxor.u32 %v3191, 2147483648
        %v3193 = vsel %vm3110, %v3192, %v3191
        %v3194 = vsub.s32 4, %v3170
        %v3195 = vsel %vm3110, %v3194, %v3170
        %v3196 = vsel %vm3109, %v2585, %v3193
        %v3197 = vsel %vm3109, 0, %v3195
        %v3198 = vcosq.f32.pop %v3196
        %v3199 = vsinq.f32.pop %v3196
        %vm3200 = vweird.f32 %v2585
        %v3201 = vadd.s32 %v3197, 3
        %v3202 = vand.u32 %v3201, 3
        %vm3203 = vcmp.lt.s32.totalorder %v3202, 2
        %vm3204 = vcmp.eq.s32.totalorder %v3202, 0
        %v3205 = vxor.u32 %v3199, 2147483648
        %v3206 = vsel %vm3204, %v3198, %v3205
        %vm3207 = vcmp.eq.s32.totalorder %v3202, 2
        %v3208 = vxor.u32 %v3198, 2147483648
        %v3209 = vsel %vm3207, %v3208, %v3199
        %v3210 = vsel %vm3203, %v3206, %v3209
        %v3211 = vsel %vm3200, nan, %v3210
        %v3212 = vand.u32 2147483647, %v2586
        %vm3213 = vcmp.le.f32.partialorder %v3212, 0.7853982
        %vm3214 = vcmp.lt.s32.totalorder %v2586, 0
        %v3215 = vand.u32 %v2586, 2139095040
        %v3216 = vshrl.u32 %v3215, 23
        %v3217 = vsub.s32 %v3216, 127
        %v3218 = vand.u32 2147483647, %v2586
        %v3219 = vand.u32 %v3218, 8388607
        %v3220 = vor.u32 %v3219, 8388608
        %v3221 = vsub.s32 0, %v3220
        %v3222 = vadd.s32 %v3217, 1
        %vm3223 = vcmp.gt.s32.totalorder %v3222, 0
        %v3224 = vsel %vm3223, %v3222, 0
        %v3225 = vshrl.u32 %v3224, 5
        %v3226 = vand.u32 %v3224, 31
        %v3227 = vsub.s32 32, %v3226
        %v3228 = vshrl.u32 683565275, %v3227
        %v3229 = vshll.u32 683565275, %v3226
        %v3230 = vshrl.u32 2475754826, %v3227
        %v3231 = vor.u32 %v3229, %v3230
        %v3232 = vshll.u32 2475754826, %v3226
        %v3233 = vshrl.u32 2131351028, %v3227
        %v3234 = vor.u32 %v3232, %v3233
        %v3235 = vshll.u32 2131351028, %v3226
        %v3236 = vshrl.u32 2102212464, %v3227
        %v3237 = vor.u32 %v3235, %v3236
        %v3238 = vshll.u32 2102212464, %v3226
        %v3239 = vshrl.u32 920167782, %v3227
        %v3240 = vor.u32 %v3238, %v3239
        %v3241 = vshll.u32 920167782, %v3226
        %v3242 = vshrl.u32 1326507024, %v3227
        %v3243 = vor.u32 %v3241, %v3242
        %vm3244 = vcmp.lt.s32.totalorder %v3225, 1
        %vm3245 = vcmp.lt.s32.totalorder %v3225, 2
        %vm3246 = vcmp.lt.s32.totalorder %v3225, 3
        %vm3247 = vcmp.lt.s32.totalorder %v3225, 4
        %v3248 = vsel %vm3244, %v3228, %v3231
        %v3249 = vsel %vm3247, %v3237, 2102212464
        %v3250 = vsel %vm3246, %v3234, %v3249
        %v3251 = vsel %vm3245, %v3248, %v3250
        %v3252 = vsel %vm3244, %v3231, %v3234
        %v3253 = vsel %vm3247, %v3240, 920167782
        %v3254 = vsel %vm3246, %v3237, %v3253
        %v3255 = vsel %vm3245, %v3252, %v3254
        %v3256 = vsel %vm3244, %v3234, %v3237
        %v3257 = vsel %vm3247, %v3243, 1326507024
        %v3258 = vsel %vm3246, %v3240, %v3257
        %v3259 = vsel %vm3245, %v3256, %v3258
        %v3260 = vshll.u32 %v3220, 8
        %v3261 = vmul.u32.u64.compose %v3260, %v3259
        %v3262 = vextract.low.u32 %v3261
        %v3263 = vextract.high.u32 %v3261
        %v3264 = vmul.u32.u64.compose %v3260, %v3255
        %v3265 = vextract.low.u32 %v3264
        %v3266 = vextract.high.u32 %v3264
        %v3267 = vmul.u32 %v3260, %v3251
        %v3268 = vadd.s32 %v3263, %v3265
        %vm3269 = vc.u32 %v3263, %v3265
        %v3270 = vadd.s32 %v3266, 1
        %v3271 = vsel %vm3269, %v3270, %v3266
        %v3272 = vadd.s32 %v3267, %v3271
        %v3273 = vadd.s32 %v3272, 536870912
        %v3274 = vshrl.u32 %v3273, 30
        %v3275 = vshll.u32 %v3274, 30
        %v3276 = vsub.s32 %v3272, %v3275
        %vm3277 = vcmp.lt.s32.totalorder %v3276, 0
        %v3278 = vsub.s32 0, %v3276
        %v3279 = vsel %vm3277, %v3278, %v3276
        %v3280 = vclz %v3279
        %v3281 = vsub.s32 %v3280, 2
        %vm3282 = vcmp.gt.s32.totalorder 0, %v3281
        %v3283 = vsel %vm3282, 0, %v3281
        %v3284 = vsub.s32 32, %v3283
        %v3285 = vshll.u32 %v3276, %v3283
        %v3286 = vshrl.u32 %v3268, %v3284
        %v3287 = vor.u32 %v3285, %v3286
        %v3288 = vsub.s32 4294967266, %v3283
        %v3289 = vadd.s32 %v3288, 127
        %v3290 = vshll.u32 %v3289, 23
        %v3291 = vor.u32 4788187, %v3290
        %v3292 = vand.u32 2147483647, %v3291
        %v3294 = vcvt.s32.f32 %v3287
        %v3295 = vmul.f32 %v3294, %v3292
        %v3296 = vxor.u32 %v3295, 2147483648
        %v3297 = vsel %vm3214, %v3296, %v3295
        %v3298 = vsub.s32 4, %v3274
        %v3299 = vsel %vm3214, %v3298, %v3274
        %v3300 = vsel %vm3213, %v2586, %v3297
        %v3301 = vsel %vm3213, 0, %v3299
        %v3302 = vcosq.f32.pop %v3300
        %v3303 = vsinq.f32.pop %v3300
        %vm3304 = vweird.f32 %v2586
        %v3305 = vadd.s32 %v3301, 3
        %v3306 = vand.u32 %v3305, 3
        %vm3307 = vcmp.lt.s32.totalorder %v3306, 2
        %vm3308 = vcmp.eq.s32.totalorder %v3306, 0
        %v3309 = vxor.u32 %v3303, 2147483648
        %v3310 = vsel %vm3308, %v3302, %v3309
        %vm3311 = vcmp.eq.s32.totalorder %v3306, 2
        %v3312 = vxor.u32 %v3302, 2147483648
        %v3313 = vsel %vm3311, %v3312, %v3303
        %v3314 = vsel %vm3307, %v3310, %v3313
        %v3315 = vsel %vm3304, nan, %v3314
        %v3316 = vand.u32 2147483647, %v2587
        %vm3317 = vcmp.le.f32.partialorder %v3316, 0.7853982
        %vm3318 = vcmp.lt.s32.totalorder %v2587, 0
        %v3319 = vand.u32 %v2587, 2139095040
        %v3320 = vshrl.u32 %v3319, 23
        %v3321 = vsub.s32 %v3320, 127
        %v3322 = vand.u32 2147483647, %v2587
        %v3323 = vand.u32 %v3322, 8388607
        %v3324 = vor.u32 %v3323, 8388608
        %v3325 = vsub.s32 0, %v3324
        %v3326 = vadd.s32 %v3321, 1
        %vm3327 = vcmp.gt.s32.totalorder %v3326, 0
        %v3328 = vsel %vm3327, %v3326, 0
        %v3329 = vshrl.u32 %v3328, 5
        %v3330 = vand.u32 %v3328, 31
        %v3331 = vsub.s32 32, %v3330
        %v3332 = vshrl.u32 683565275, %v3331
        %v3333 = vshll.u32 683565275, %v3330
        %v3334 = vshrl.u32 2475754826, %v3331
        %v3335 = vor.u32 %v3333, %v3334
        %v3336 = vshll.u32 2475754826, %v3330
        %v3337 = vshrl.u32 2131351028, %v3331
        %v3338 = vor.u32 %v3336, %v3337
        %v3339 = vshll.u32 2131351028, %v3330
        %v3340 = vshrl.u32 2102212464, %v3331
        %v3341 = vor.u32 %v3339, %v3340
        %v3342 = vshll.u32 2102212464, %v3330
        %v3343 = vshrl.u32 920167782, %v3331
        %v3344 = vor.u32 %v3342, %v3343
        %v3345 = vshll.u32 920167782, %v3330
        %v3346 = vshrl.u32 1326507024, %v3331
        %v3347 = vor.u32 %v3345, %v3346
        %vm3348 = vcmp.lt.s32.totalorder %v3329, 1
        %vm3349 = vcmp.lt.s32.totalorder %v3329, 2
        %vm3350 = vcmp.lt.s32.totalorder %v3329, 3
        %vm3351 = vcmp.lt.s32.totalorder %v3329, 4
        %v3352 = vsel %vm3348, %v3332, %v3335
        %v3353 = vsel %vm3351, %v3341, 2102212464
        %v3354 = vsel %vm3350, %v3338, %v3353
        %v3355 = vsel %vm3349, %v3352, %v3354
        %v3356 = vsel %vm3348, %v3335, %v3338
        %v3357 = vsel %vm3351, %v3344, 920167782
        %v3358 = vsel %vm3350, %v3341, %v3357
        %v3359 = vsel %vm3349, %v3356, %v3358
        %v3360 = vsel %vm3348, %v3338, %v3341
        %v3361 = vsel %vm3351, %v3347, 1326507024
        %v3362 = vsel %vm3350, %v3344, %v3361
        %v3363 = vsel %vm3349, %v3360, %v3362
        %v3364 = vshll.u32 %v3324, 8
        %v3365 = vmul.u32.u64.compose %v3364, %v3363
        %v3366 = vextract.low.u32 %v3365
        %v3367 = vextract.high.u32 %v3365
        %v3368 = vmul.u32.u64.compose %v3364, %v3359
        %v3369 = vextract.low.u32 %v3368
        %v3370 = vextract.high.u32 %v3368
        %v3371 = vmul.u32 %v3364, %v3355
        %v3372 = vadd.s32 %v3367, %v3369
        %vm3373 = vc.u32 %v3367, %v3369
        %v3374 = vadd.s32 %v3370, 1
        %v3375 = vsel %vm3373, %v3374, %v3370
        %v3376 = vadd.s32 %v3371, %v3375
        %v3377 = vadd.s32 %v3376, 536870912
        %v3378 = vshrl.u32 %v3377, 30
        %v3379 = vshll.u32 %v3378, 30
        %v3380 = vsub.s32 %v3376, %v3379
        %vm3381 = vcmp.lt.s32.totalorder %v3380, 0
        %v3382 = vsub.s32 0, %v3380
        %v3383 = vsel %vm3381, %v3382, %v3380
        %v3384 = vclz %v3383
        %v3385 = vsub.s32 %v3384, 2
        %vm3386 = vcmp.gt.s32.totalorder 0, %v3385
        %v3387 = vsel %vm3386, 0, %v3385
        %v3388 = vsub.s32 32, %v3387
        %v3389 = vshll.u32 %v3380, %v3387
        %v3390 = vshrl.u32 %v3372, %v3388
        %v3391 = vor.u32 %v3389, %v3390
        %v3392 = vsub.s32 4294967266, %v3387
        %v3393 = vadd.s32 %v3392, 127
        %v3394 = vshll.u32 %v3393, 23
        %v3395 = vor.u32 4788187, %v3394
        %v3396 = vand.u32 2147483647, %v3395
        %v3398 = vcvt.s32.f32 %v3391
        %v3399 = vmul.f32 %v3398, %v3396
        %v3400 = vxor.u32 %v3399, 2147483648
        %v3401 = vsel %vm3318, %v3400, %v3399
        %v3402 = vsub.s32 4, %v3378
        %v3403 = vsel %vm3318, %v3402, %v3378
        %v3404 = vsel %vm3317, %v2587, %v3401
        %v3405 = vsel %vm3317, 0, %v3403
        %v3406 = vcosq.f32.pop %v3404
        %v3407 = vsinq.f32.pop %v3404
        %vm3408 = vweird.f32 %v2587
        %v3409 = vadd.s32 %v3405, 3
        %v3410 = vand.u32 %v3409, 3
        %vm3411 = vcmp.lt.s32.totalorder %v3410, 2
        %vm3412 = vcmp.eq.s32.totalorder %v3410, 0
        %v3413 = vxor.u32 %v3407, 2147483648
        %v3414 = vsel %vm3412, %v3406, %v3413
        %vm3415 = vcmp.eq.s32.totalorder %v3410, 2
        %v3416 = vxor.u32 %v3406, 2147483648
        %v3417 = vsel %vm3415, %v3416, %v3407
        %v3418 = vsel %vm3411, %v3414, %v3417
        %v3419 = vsel %vm3408, nan, %v3418
        %v3420 = vmul.f32 %v858, 0.125
        %v3421 = vmul.f32 %v865, 0.125
        %v3422 = vmul.f32 %v872, 0.125
        %v3423 = vmul.f32 %v879, 0.125
        %v3424 = vmul.f32 %v886, 0.125
        %v3425 = vmul.f32 %v893, 0.125
        %v3426 = vmul.f32 %v900, 0.125
        %v3427 = vmul.f32 %v907, 0.125
        %v3428 = vand.u32 2147483647, %v3420
        %vm3429 = vcmp.le.f32.partialorder %v3428, 0.7853982
        %vm3430 = vcmp.lt.s32.totalorder %v3420, 0
        %v3431 = vand.u32 %v3420, 2139095040
        %v3432 = vshrl.u32 %v3431, 23
        %v3433 = vsub.s32 %v3432, 127
        %v3434 = vand.u32 2147483647, %v3420
        %v3435 = vand.u32 %v3434, 8388607
        %v3436 = vor.u32 %v3435, 8388608
        %v3437 = vsub.s32 0, %v3436
        %v3438 = vadd.s32 %v3433, 1
        %vm3439 = vcmp.gt.s32.totalorder %v3438, 0
        %v3440 = vsel %vm3439, %v3438, 0
        %v3441 = vshrl.u32 %v3440, 5
        %v3442 = vand.u32 %v3440, 31
        %v3443 = vsub.s32 32, %v3442
        %v3444 = vshrl.u32 683565275, %v3443
        %v3445 = vshll.u32 683565275, %v3442
        %v3446 = vshrl.u32 2475754826, %v3443
        %v3447 = vor.u32 %v3445, %v3446
        %v3448 = vshll.u32 2475754826, %v3442
        %v3449 = vshrl.u32 2131351028, %v3443
        %v3450 = vor.u32 %v3448, %v3449
        %v3451 = vshll.u32 2131351028, %v3442
        %v3452 = vshrl.u32 2102212464, %v3443
        %v3453 = vor.u32 %v3451, %v3452
        %v3454 = vshll.u32 2102212464, %v3442
        %v3455 = vshrl.u32 920167782, %v3443
        %v3456 = vor.u32 %v3454, %v3455
        %v3457 = vshll.u32 920167782, %v3442
        %v3458 = vshrl.u32 1326507024, %v3443
        %v3459 = vor.u32 %v3457, %v3458
        %vm3460 = vcmp.lt.s32.totalorder %v3441, 1
        %vm3461 = vcmp.lt.s32.totalorder %v3441, 2
        %vm3462 = vcmp.lt.s32.totalorder %v3441, 3
        %vm3463 = vcmp.lt.s32.totalorder %v3441, 4
        %v3464 = vsel %vm3460, %v3444, %v3447
        %v3465 = vsel %vm3463, %v3453, 2102212464
        %v3466 = vsel %vm3462, %v3450, %v3465
        %v3467 = vsel %vm3461, %v3464, %v3466
        %v3468 = vsel %vm3460, %v3447, %v3450
        %v3469 = vsel %vm3463, %v3456, 920167782
        %v3470 = vsel %vm3462, %v3453, %v3469
        %v3471 = vsel %vm3461, %v3468, %v3470
        %v3472 = vsel %vm3460, %v3450, %v3453
        %v3473 = vsel %vm3463, %v3459, 1326507024
        %v3474 = vsel %vm3462, %v3456, %v3473
        %v3475 = vsel %vm3461, %v3472, %v3474
        %v3476 = vshll.u32 %v3436, 8
        %v3477 = vmul.u32.u64.compose %v3476, %v3475
        %v3478 = vextract.low.u32 %v3477
        %v3479 = vextract.high.u32 %v3477
        %v3480 = vmul.u32.u64.compose %v3476, %v3471
        %v3481 = vextract.low.u32 %v3480
        %v3482 = vextract.high.u32 %v3480
        %v3483 = vmul.u32 %v3476, %v3467
        %v3484 = vadd.s32 %v3479, %v3481
        %vm3485 = vc.u32 %v3479, %v3481
        %v3486 = vadd.s32 %v3482, 1
        %v3487 = vsel %vm3485, %v3486, %v3482
        %v3488 = vadd.s32 %v3483, %v3487
        %v3489 = vadd.s32 %v3488, 536870912
        %v3490 = vshrl.u32 %v3489, 30
        %v3491 = vshll.u32 %v3490, 30
        %v3492 = vsub.s32 %v3488, %v3491
        %vm3493 = vcmp.lt.s32.totalorder %v3492, 0
        %v3494 = vsub.s32 0, %v3492
        %v3495 = vsel %vm3493, %v3494, %v3492
        %v3496 = vclz %v3495
        %v3497 = vsub.s32 %v3496, 2
        %vm3498 = vcmp.gt.s32.totalorder 0, %v3497
        %v3499 = vsel %vm3498, 0, %v3497
        %v3500 = vsub.s32 32, %v3499
        %v3501 = vshll.u32 %v3492, %v3499
        %v3502 = vshrl.u32 %v3484, %v3500
        %v3503 = vor.u32 %v3501, %v3502
        %v3504 = vsub.s32 4294967266, %v3499
        %v3505 = vadd.s32 %v3504, 127
        %v3506 = vshll.u32 %v3505, 23
        %v3507 = vor.u32 4788187, %v3506
        %v3508 = vand.u32 2147483647, %v3507
        %v3510 = vcvt.s32.f32 %v3503
        %v3511 = vmul.f32 %v3510, %v3508
        %v3512 = vxor.u32 %v3511, 2147483648
        %v3513 = vsel %vm3430, %v3512, %v3511
        %v3514 = vsub.s32 4, %v3490
        %v3515 = vsel %vm3430, %v3514, %v3490
        %v3516 = vsel %vm3429, %v3420, %v3513
        %v3517 = vsel %vm3429, 0, %v3515
        %v3518 = vcosq.f32.pop %v3516
        %v3519 = vsinq.f32.pop %v3516
        %vm3520 = vweird.f32 %v3420
        %v3521 = vadd.s32 %v3517, 3
        %v3522 = vand.u32 %v3521, 3
        %vm3523 = vcmp.lt.s32.totalorder %v3522, 2
        %vm3524 = vcmp.eq.s32.totalorder %v3522, 0
        %v3525 = vxor.u32 %v3519, 2147483648
        %v3526 = vsel %vm3524, %v3518, %v3525
        %vm3527 = vcmp.eq.s32.totalorder %v3522, 2
        %v3528 = vxor.u32 %v3518, 2147483648
        %v3529 = vsel %vm3527, %v3528, %v3519
        %v3530 = vsel %vm3523, %v3526, %v3529
        %v3531 = vsel %vm3520, nan, %v3530
        %v3532 = vand.u32 2147483647, %v3421
        %vm3533 = vcmp.le.f32.partialorder %v3532, 0.7853982
        %vm3534 = vcmp.lt.s32.totalorder %v3421, 0
        %v3535 = vand.u32 %v3421, 2139095040
        %v3536 = vshrl.u32 %v3535, 23
        %v3537 = vsub.s32 %v3536, 127
        %v3538 = vand.u32 2147483647, %v3421
        %v3539 = vand.u32 %v3538, 8388607
        %v3540 = vor.u32 %v3539, 8388608
        %v3541 = vsub.s32 0, %v3540
        %v3542 = vadd.s32 %v3537, 1
        %vm3543 = vcmp.gt.s32.totalorder %v3542, 0
        %v3544 = vsel %vm3543, %v3542, 0
        %v3545 = vshrl.u32 %v3544, 5
        %v3546 = vand.u32 %v3544, 31
        %v3547 = vsub.s32 32, %v3546
        %v3548 = vshrl.u32 683565275, %v3547
        %v3549 = vshll.u32 683565275, %v3546
        %v3550 = vshrl.u32 2475754826, %v3547
        %v3551 = vor.u32 %v3549, %v3550
        %v3552 = vshll.u32 2475754826, %v3546
        %v3553 = vshrl.u32 2131351028, %v3547
        %v3554 = vor.u32 %v3552, %v3553
        %v3555 = vshll.u32 2131351028, %v3546
        %v3556 = vshrl.u32 2102212464, %v3547
        %v3557 = vor.u32 %v3555, %v3556
        %v3558 = vshll.u32 2102212464, %v3546
        %v3559 = vshrl.u32 920167782, %v3547
        %v3560 = vor.u32 %v3558, %v3559
        %v3561 = vshll.u32 920167782, %v3546
        %v3562 = vshrl.u32 1326507024, %v3547
        %v3563 = vor.u32 %v3561, %v3562
        %vm3564 = vcmp.lt.s32.totalorder %v3545, 1
        %vm3565 = vcmp.lt.s32.totalorder %v3545, 2
        %vm3566 = vcmp.lt.s32.totalorder %v3545, 3
        %vm3567 = vcmp.lt.s32.totalorder %v3545, 4
        %v3568 = vsel %vm3564, %v3548, %v3551
        %v3569 = vsel %vm3567, %v3557, 2102212464
        %v3570 = vsel %vm3566, %v3554, %v3569
        %v3571 = vsel %vm3565, %v3568, %v3570
        %v3572 = vsel %vm3564, %v3551, %v3554
        %v3573 = vsel %vm3567, %v3560, 920167782
        %v3574 = vsel %vm3566, %v3557, %v3573
        %v3575 = vsel %vm3565, %v3572, %v3574
        %v3576 = vsel %vm3564, %v3554, %v3557
        %v3577 = vsel %vm3567, %v3563, 1326507024
        %v3578 = vsel %vm3566, %v3560, %v3577
        %v3579 = vsel %vm3565, %v3576, %v3578
        %v3580 = vshll.u32 %v3540, 8
        %v3581 = vmul.u32.u64.compose %v3580, %v3579
        %v3582 = vextract.low.u32 %v3581
        %v3583 = vextract.high.u32 %v3581
        %v3584 = vmul.u32.u64.compose %v3580, %v3575
        %v3585 = vextract.low.u32 %v3584
        %v3586 = vextract.high.u32 %v3584
        %v3587 = vmul.u32 %v3580, %v3571
        %v3588 = vadd.s32 %v3583, %v3585
        %vm3589 = vc.u32 %v3583, %v3585
        %v3590 = vadd.s32 %v3586, 1
        %v3591 = vsel %vm3589, %v3590, %v3586
        %v3592 = vadd.s32 %v3587, %v3591
        %v3593 = vadd.s32 %v3592, 536870912
        %v3594 = vshrl.u32 %v3593, 30
        %v3595 = vshll.u32 %v3594, 30
        %v3596 = vsub.s32 %v3592, %v3595
        %vm3597 = vcmp.lt.s32.totalorder %v3596, 0
        %v3598 = vsub.s32 0, %v3596
        %v3599 = vsel %vm3597, %v3598, %v3596
        %v3600 = vclz %v3599
        %v3601 = vsub.s32 %v3600, 2
        %vm3602 = vcmp.gt.s32.totalorder 0, %v3601
        %v3603 = vsel %vm3602, 0, %v3601
        %v3604 = vsub.s32 32, %v3603
        %v3605 = vshll.u32 %v3596, %v3603
        %v3606 = vshrl.u32 %v3588, %v3604
        %v3607 = vor.u32 %v3605, %v3606
        %v3608 = vsub.s32 4294967266, %v3603
        %v3609 = vadd.s32 %v3608, 127
        %v3610 = vshll.u32 %v3609, 23
        %v3611 = vor.u32 4788187, %v3610
        %v3612 = vand.u32 2147483647, %v3611
        %v3614 = vcvt.s32.f32 %v3607
        %v3615 = vmul.f32 %v3614, %v3612
        %v3616 = vxor.u32 %v3615, 2147483648
        %v3617 = vsel %vm3534, %v3616, %v3615
        %v3618 = vsub.s32 4, %v3594
        %v3619 = vsel %vm3534, %v3618, %v3594
        %v3620 = vsel %vm3533, %v3421, %v3617
        %v3621 = vsel %vm3533, 0, %v3619
        %v3622 = vcosq.f32.pop %v3620
        %v3623 = vsinq.f32.pop %v3620
        %vm3624 = vweird.f32 %v3421
        %v3625 = vadd.s32 %v3621, 3
        %v3626 = vand.u32 %v3625, 3
        %vm3627 = vcmp.lt.s32.totalorder %v3626, 2
        %vm3628 = vcmp.eq.s32.totalorder %v3626, 0
        %v3629 = vxor.u32 %v3623, 2147483648
        %v3630 = vsel %vm3628, %v3622, %v3629
        %vm3631 = vcmp.eq.s32.totalorder %v3626, 2
        %v3632 = vxor.u32 %v3622, 2147483648
        %v3633 = vsel %vm3631, %v3632, %v3623
        %v3634 = vsel %vm3627, %v3630, %v3633
        %v3635 = vsel %vm3624, nan, %v3634
        %v3636 = vand.u32 2147483647, %v3422
        %vm3637 = vcmp.le.f32.partialorder %v3636, 0.7853982
        %vm3638 = vcmp.lt.s32.totalorder %v3422, 0
        %v3639 = vand.u32 %v3422, 2139095040
        %v3640 = vshrl.u32 %v3639, 23
        %v3641 = vsub.s32 %v3640, 127
        %v3642 = vand.u32 2147483647, %v3422
        %v3643 = vand.u32 %v3642, 8388607
        %v3644 = vor.u32 %v3643, 8388608
        %v3645 = vsub.s32 0, %v3644
        %v3646 = vadd.s32 %v3641, 1
        %vm3647 = vcmp.gt.s32.totalorder %v3646, 0
        %v3648 = vsel %vm3647, %v3646, 0
        %v3649 = vshrl.u32 %v3648, 5
        %v3650 = vand.u32 %v3648, 31
        %v3651 = vsub.s32 32, %v3650
        %v3652 = vshrl.u32 683565275, %v3651
        %v3653 = vshll.u32 683565275, %v3650
        %v3654 = vshrl.u32 2475754826, %v3651
        %v3655 = vor.u32 %v3653, %v3654
        %v3656 = vshll.u32 2475754826, %v3650
        %v3657 = vshrl.u32 2131351028, %v3651
        %v3658 = vor.u32 %v3656, %v3657
        %v3659 = vshll.u32 2131351028, %v3650
        %v3660 = vshrl.u32 2102212464, %v3651
        %v3661 = vor.u32 %v3659, %v3660
        %v3662 = vshll.u32 2102212464, %v3650
        %v3663 = vshrl.u32 920167782, %v3651
        %v3664 = vor.u32 %v3662, %v3663
        %v3665 = vshll.u32 920167782, %v3650
        %v3666 = vshrl.u32 1326507024, %v3651
        %v3667 = vor.u32 %v3665, %v3666
        %vm3668 = vcmp.lt.s32.totalorder %v3649, 1
        %vm3669 = vcmp.lt.s32.totalorder %v3649, 2
        %vm3670 = vcmp.lt.s32.totalorder %v3649, 3
        %vm3671 = vcmp.lt.s32.totalorder %v3649, 4
        %v3672 = vsel %vm3668, %v3652, %v3655
        %v3673 = vsel %vm3671, %v3661, 2102212464
        %v3674 = vsel %vm3670, %v3658, %v3673
        %v3675 = vsel %vm3669, %v3672, %v3674
        %v3676 = vsel %vm3668, %v3655, %v3658
        %v3677 = vsel %vm3671, %v3664, 920167782
        %v3678 = vsel %vm3670, %v3661, %v3677
        %v3679 = vsel %vm3669, %v3676, %v3678
        %v3680 = vsel %vm3668, %v3658, %v3661
        %v3681 = vsel %vm3671, %v3667, 1326507024
        %v3682 = vsel %vm3670, %v3664, %v3681
        %v3683 = vsel %vm3669, %v3680, %v3682
        %v3684 = vshll.u32 %v3644, 8
        %v3685 = vmul.u32.u64.compose %v3684, %v3683
        %v3686 = vextract.low.u32 %v3685
        %v3687 = vextract.high.u32 %v3685
        %v3688 = vmul.u32.u64.compose %v3684, %v3679
        %v3689 = vextract.low.u32 %v3688
        %v3690 = vextract.high.u32 %v3688
        %v3691 = vmul.u32 %v3684, %v3675
        %v3692 = vadd.s32 %v3687, %v3689
        %vm3693 = vc.u32 %v3687, %v3689
        %v3694 = vadd.s32 %v3690, 1
        %v3695 = vsel %vm3693, %v3694, %v3690
        %v3696 = vadd.s32 %v3691, %v3695
        %v3697 = vadd.s32 %v3696, 536870912
        %v3698 = vshrl.u32 %v3697, 30
        %v3699 = vshll.u32 %v3698, 30
        %v3700 = vsub.s32 %v3696, %v3699
        %vm3701 = vcmp.lt.s32.totalorder %v3700, 0
        %v3702 = vsub.s32 0, %v3700
        %v3703 = vsel %vm3701, %v3702, %v3700
        %v3704 = vclz %v3703
        %v3705 = vsub.s32 %v3704, 2
        %vm3706 = vcmp.gt.s32.totalorder 0, %v3705
        %v3707 = vsel %vm3706, 0, %v3705
        %v3708 = vsub.s32 32, %v3707
        %v3709 = vshll.u32 %v3700, %v3707
        %v3710 = vshrl.u32 %v3692, %v3708
        %v3711 = vor.u32 %v3709, %v3710
        %v3712 = vsub.s32 4294967266, %v3707
        %v3713 = vadd.s32 %v3712, 127
        %v3714 = vshll.u32 %v3713, 23
        %v3715 = vor.u32 4788187, %v3714
        %v3716 = vand.u32 2147483647, %v3715
        %v3718 = vcvt.s32.f32 %v3711
        %v3719 = vmul.f32 %v3718, %v3716
        %v3720 = vxor.u32 %v3719, 2147483648
        %v3721 = vsel %vm3638, %v3720, %v3719
        %v3722 = vsub.s32 4, %v3698
        %v3723 = vsel %vm3638, %v3722, %v3698
        %v3724 = vsel %vm3637, %v3422, %v3721
        %v3725 = vsel %vm3637, 0, %v3723
        %v3726 = vcosq.f32.pop %v3724
        %v3727 = vsinq.f32.pop %v3724
        %vm3728 = vweird.f32 %v3422
        %v3729 = vadd.s32 %v3725, 3
        %v3730 = vand.u32 %v3729, 3
        %vm3731 = vcmp.lt.s32.totalorder %v3730, 2
        %vm3732 = vcmp.eq.s32.totalorder %v3730, 0
        %v3733 = vxor.u32 %v3727, 2147483648
        %v3734 = vsel %vm3732, %v3726, %v3733
        %vm3735 = vcmp.eq.s32.totalorder %v3730, 2
        %v3736 = vxor.u32 %v3726, 2147483648
        %v3737 = vsel %vm3735, %v3736, %v3727
        %v3738 = vsel %vm3731, %v3734, %v3737
        %v3739 = vsel %vm3728, nan, %v3738
        %v3740 = vand.u32 2147483647, %v3423
        %vm3741 = vcmp.le.f32.partialorder %v3740, 0.7853982
        %vm3742 = vcmp.lt.s32.totalorder %v3423, 0
        %v3743 = vand.u32 %v3423, 2139095040
        %v3744 = vshrl.u32 %v3743, 23
        %v3745 = vsub.s32 %v3744, 127
        %v3746 = vand.u32 2147483647, %v3423
        %v3747 = vand.u32 %v3746, 8388607
        %v3748 = vor.u32 %v3747, 8388608
        %v3749 = vsub.s32 0, %v3748
        %v3750 = vadd.s32 %v3745, 1
        %vm3751 = vcmp.gt.s32.totalorder %v3750, 0
        %v3752 = vsel %vm3751, %v3750, 0
        %v3753 = vshrl.u32 %v3752, 5
        %v3754 = vand.u32 %v3752, 31
        %v3755 = vsub.s32 32, %v3754
        %v3756 = vshrl.u32 683565275, %v3755
        %v3757 = vshll.u32 683565275, %v3754
        %v3758 = vshrl.u32 2475754826, %v3755
        %v3759 = vor.u32 %v3757, %v3758
        %v3760 = vshll.u32 2475754826, %v3754
        %v3761 = vshrl.u32 2131351028, %v3755
        %v3762 = vor.u32 %v3760, %v3761
        %v3763 = vshll.u32 2131351028, %v3754
        %v3764 = vshrl.u32 2102212464, %v3755
        %v3765 = vor.u32 %v3763, %v3764
        %v3766 = vshll.u32 2102212464, %v3754
        %v3767 = vshrl.u32 920167782, %v3755
        %v3768 = vor.u32 %v3766, %v3767
        %v3769 = vshll.u32 920167782, %v3754
        %v3770 = vshrl.u32 1326507024, %v3755
        %v3771 = vor.u32 %v3769, %v3770
        %vm3772 = vcmp.lt.s32.totalorder %v3753, 1
        %vm3773 = vcmp.lt.s32.totalorder %v3753, 2
        %vm3774 = vcmp.lt.s32.totalorder %v3753, 3
        %vm3775 = vcmp.lt.s32.totalorder %v3753, 4
        %v3776 = vsel %vm3772, %v3756, %v3759
        %v3777 = vsel %vm3775, %v3765, 2102212464
        %v3778 = vsel %vm3774, %v3762, %v3777
        %v3779 = vsel %vm3773, %v3776, %v3778
        %v3780 = vsel %vm3772, %v3759, %v3762
        %v3781 = vsel %vm3775, %v3768, 920167782
        %v3782 = vsel %vm3774, %v3765, %v3781
        %v3783 = vsel %vm3773, %v3780, %v3782
        %v3784 = vsel %vm3772, %v3762, %v3765
        %v3785 = vsel %vm3775, %v3771, 1326507024
        %v3786 = vsel %vm3774, %v3768, %v3785
        %v3787 = vsel %vm3773, %v3784, %v3786
        %v3788 = vshll.u32 %v3748, 8
        %v3789 = vmul.u32.u64.compose %v3788, %v3787
        %v3790 = vextract.low.u32 %v3789
        %v3791 = vextract.high.u32 %v3789
        %v3792 = vmul.u32.u64.compose %v3788, %v3783
        %v3793 = vextract.low.u32 %v3792
        %v3794 = vextract.high.u32 %v3792
        %v3795 = vmul.u32 %v3788, %v3779
        %v3796 = vadd.s32 %v3791, %v3793
        %vm3797 = vc.u32 %v3791, %v3793
        %v3798 = vadd.s32 %v3794, 1
        %v3799 = vsel %vm3797, %v3798, %v3794
        %v3800 = vadd.s32 %v3795, %v3799
        %v3801 = vadd.s32 %v3800, 536870912
        %v3802 = vshrl.u32 %v3801, 30
        %v3803 = vshll.u32 %v3802, 30
        %v3804 = vsub.s32 %v3800, %v3803
        %vm3805 = vcmp.lt.s32.totalorder %v3804, 0
        %v3806 = vsub.s32 0, %v3804
        %v3807 = vsel %vm3805, %v3806, %v3804
        %v3808 = vclz %v3807
        %v3809 = vsub.s32 %v3808, 2
        %vm3810 = vcmp.gt.s32.totalorder 0, %v3809
        %v3811 = vsel %vm3810, 0, %v3809
        %v3812 = vsub.s32 32, %v3811
        %v3813 = vshll.u32 %v3804, %v3811
        %v3814 = vshrl.u32 %v3796, %v3812
        %v3815 = vor.u32 %v3813, %v3814
        %v3816 = vsub.s32 4294967266, %v3811
        %v3817 = vadd.s32 %v3816, 127
        %v3818 = vshll.u32 %v3817, 23
        %v3819 = vor.u32 4788187, %v3818
        %v3820 = vand.u32 2147483647, %v3819
        %v3822 = vcvt.s32.f32 %v3815
        %v3823 = vmul.f32 %v3822, %v3820
        %v3824 = vxor.u32 %v3823, 2147483648
        %v3825 = vsel %vm3742, %v3824, %v3823
        %v3826 = vsub.s32 4, %v3802
        %v3827 = vsel %vm3742, %v3826, %v3802
        %v3828 = vsel %vm3741, %v3423, %v3825
        %v3829 = vsel %vm3741, 0, %v3827
        %v3830 = vcosq.f32.pop %v3828
        %v3831 = vsinq.f32.pop %v3828
        %vm3832 = vweird.f32 %v3423
        %v3833 = vadd.s32 %v3829, 3
        %v3834 = vand.u32 %v3833, 3
        %vm3835 = vcmp.lt.s32.totalorder %v3834, 2
        %vm3836 = vcmp.eq.s32.totalorder %v3834, 0
        %v3837 = vxor.u32 %v3831, 2147483648
        %v3838 = vsel %vm3836, %v3830, %v3837
        %vm3839 = vcmp.eq.s32.totalorder %v3834, 2
        %v3840 = vxor.u32 %v3830, 2147483648
        %v3841 = vsel %vm3839, %v3840, %v3831
        %v3842 = vsel %vm3835, %v3838, %v3841
        %v3843 = vsel %vm3832, nan, %v3842
        %v3844 = vand.u32 2147483647, %v3424
        %vm3845 = vcmp.le.f32.partialorder %v3844, 0.7853982
        %vm3846 = vcmp.lt.s32.totalorder %v3424, 0
        %v3847 = vand.u32 %v3424, 2139095040
        %v3848 = vshrl.u32 %v3847, 23
        %v3849 = vsub.s32 %v3848, 127
        %v3850 = vand.u32 2147483647, %v3424
        %v3851 = vand.u32 %v3850, 8388607
        %v3852 = vor.u32 %v3851, 8388608
        %v3853 = vsub.s32 0, %v3852
        %v3854 = vadd.s32 %v3849, 1
        %vm3855 = vcmp.gt.s32.totalorder %v3854, 0
        %v3856 = vsel %vm3855, %v3854, 0
        %v3857 = vshrl.u32 %v3856, 5
        %v3858 = vand.u32 %v3856, 31
        %v3859 = vsub.s32 32, %v3858
        %v3860 = vshrl.u32 683565275, %v3859
        %v3861 = vshll.u32 683565275, %v3858
        %v3862 = vshrl.u32 2475754826, %v3859
        %v3863 = vor.u32 %v3861, %v3862
        %v3864 = vshll.u32 2475754826, %v3858
        %v3865 = vshrl.u32 2131351028, %v3859
        %v3866 = vor.u32 %v3864, %v3865
        %v3867 = vshll.u32 2131351028, %v3858
        %v3868 = vshrl.u32 2102212464, %v3859
        %v3869 = vor.u32 %v3867, %v3868
        %v3870 = vshll.u32 2102212464, %v3858
        %v3871 = vshrl.u32 920167782, %v3859
        %v3872 = vor.u32 %v3870, %v3871
        %v3873 = vshll.u32 920167782, %v3858
        %v3874 = vshrl.u32 1326507024, %v3859
        %v3875 = vor.u32 %v3873, %v3874
        %vm3876 = vcmp.lt.s32.totalorder %v3857, 1
        %vm3877 = vcmp.lt.s32.totalorder %v3857, 2
        %vm3878 = vcmp.lt.s32.totalorder %v3857, 3
        %vm3879 = vcmp.lt.s32.totalorder %v3857, 4
        %v3880 = vsel %vm3876, %v3860, %v3863
        %v3881 = vsel %vm3879, %v3869, 2102212464
        %v3882 = vsel %vm3878, %v3866, %v3881
        %v3883 = vsel %vm3877, %v3880, %v3882
        %v3884 = vsel %vm3876, %v3863, %v3866
        %v3885 = vsel %vm3879, %v3872, 920167782
        %v3886 = vsel %vm3878, %v3869, %v3885
        %v3887 = vsel %vm3877, %v3884, %v3886
        %v3888 = vsel %vm3876, %v3866, %v3869
        %v3889 = vsel %vm3879, %v3875, 1326507024
        %v3890 = vsel %vm3878, %v3872, %v3889
        %v3891 = vsel %vm3877, %v3888, %v3890
        %v3892 = vshll.u32 %v3852, 8
        %v3893 = vmul.u32.u64.compose %v3892, %v3891
        %v3894 = vextract.low.u32 %v3893
        %v3895 = vextract.high.u32 %v3893
        %v3896 = vmul.u32.u64.compose %v3892, %v3887
        %v3897 = vextract.low.u32 %v3896
        %v3898 = vextract.high.u32 %v3896
        %v3899 = vmul.u32 %v3892, %v3883
        %v3900 = vadd.s32 %v3895, %v3897
        %vm3901 = vc.u32 %v3895, %v3897
        %v3902 = vadd.s32 %v3898, 1
        %v3903 = vsel %vm3901, %v3902, %v3898
        %v3904 = vadd.s32 %v3899, %v3903
        %v3905 = vadd.s32 %v3904, 536870912
        %v3906 = vshrl.u32 %v3905, 30
        %v3907 = vshll.u32 %v3906, 30
        %v3908 = vsub.s32 %v3904, %v3907
        %vm3909 = vcmp.lt.s32.totalorder %v3908, 0
        %v3910 = vsub.s32 0, %v3908
        %v3911 = vsel %vm3909, %v3910, %v3908
        %v3912 = vclz %v3911
        %v3913 = vsub.s32 %v3912, 2
        %vm3914 = vcmp.gt.s32.totalorder 0, %v3913
        %v3915 = vsel %vm3914, 0, %v3913
        %v3916 = vsub.s32 32, %v3915
        %v3917 = vshll.u32 %v3908, %v3915
        %v3918 = vshrl.u32 %v3900, %v3916
        %v3919 = vor.u32 %v3917, %v3918
        %v3920 = vsub.s32 4294967266, %v3915
        %v3921 = vadd.s32 %v3920, 127
        %v3922 = vshll.u32 %v3921, 23
        %v3923 = vor.u32 4788187, %v3922
        %v3924 = vand.u32 2147483647, %v3923
        %v3926 = vcvt.s32.f32 %v3919
        %v3927 = vmul.f32 %v3926, %v3924
        %v3928 = vxor.u32 %v3927, 2147483648
        %v3929 = vsel %vm3846, %v3928, %v3927
        %v3930 = vsub.s32 4, %v3906
        %v3931 = vsel %vm3846, %v3930, %v3906
        %v3932 = vsel %vm3845, %v3424, %v3929
        %v3933 = vsel %vm3845, 0, %v3931
        %v3934 = vcosq.f32.pop %v3932
        %v3935 = vsinq.f32.pop %v3932
        %vm3936 = vweird.f32 %v3424
        %v3937 = vadd.s32 %v3933, 3
        %v3938 = vand.u32 %v3937, 3
        %vm3939 = vcmp.lt.s32.totalorder %v3938, 2
        %vm3940 = vcmp.eq.s32.totalorder %v3938, 0
        %v3941 = vxor.u32 %v3935, 2147483648
        %v3942 = vsel %vm3940, %v3934, %v3941
        %vm3943 = vcmp.eq.s32.totalorder %v3938, 2
        %v3944 = vxor.u32 %v3934, 2147483648
        %v3945 = vsel %vm3943, %v3944, %v3935
        %v3946 = vsel %vm3939, %v3942, %v3945
        %v3947 = vsel %vm3936, nan, %v3946
        %v3948 = vand.u32 2147483647, %v3425
        %vm3949 = vcmp.le.f32.partialorder %v3948, 0.7853982
        %vm3950 = vcmp.lt.s32.totalorder %v3425, 0
        %v3951 = vand.u32 %v3425, 2139095040
        %v3952 = vshrl.u32 %v3951, 23
        %v3953 = vsub.s32 %v3952, 127
        %v3954 = vand.u32 2147483647, %v3425
        %v3955 = vand.u32 %v3954, 8388607
        %v3956 = vor.u32 %v3955, 8388608
        %v3957 = vsub.s32 0, %v3956
        %v3958 = vadd.s32 %v3953, 1
        %vm3959 = vcmp.gt.s32.totalorder %v3958, 0
        %v3960 = vsel %vm3959, %v3958, 0
        %v3961 = vshrl.u32 %v3960, 5
        %v3962 = vand.u32 %v3960, 31
        %v3963 = vsub.s32 32, %v3962
        %v3964 = vshrl.u32 683565275, %v3963
        %v3965 = vshll.u32 683565275, %v3962
        %v3966 = vshrl.u32 2475754826, %v3963
        %v3967 = vor.u32 %v3965, %v3966
        %v3968 = vshll.u32 2475754826, %v3962
        %v3969 = vshrl.u32 2131351028, %v3963
        %v3970 = vor.u32 %v3968, %v3969
        %v3971 = vshll.u32 2131351028, %v3962
        %v3972 = vshrl.u32 2102212464, %v3963
        %v3973 = vor.u32 %v3971, %v3972
        %v3974 = vshll.u32 2102212464, %v3962
        %v3975 = vshrl.u32 920167782, %v3963
        %v3976 = vor.u32 %v3974, %v3975
        %v3977 = vshll.u32 920167782, %v3962
        %v3978 = vshrl.u32 1326507024, %v3963
        %v3979 = vor.u32 %v3977, %v3978
        %vm3980 = vcmp.lt.s32.totalorder %v3961, 1
        %vm3981 = vcmp.lt.s32.totalorder %v3961, 2
        %vm3982 = vcmp.lt.s32.totalorder %v3961, 3
        %vm3983 = vcmp.lt.s32.totalorder %v3961, 4
        %v3984 = vsel %vm3980, %v3964, %v3967
        %v3985 = vsel %vm3983, %v3973, 2102212464
        %v3986 = vsel %vm3982, %v3970, %v3985
        %v3987 = vsel %vm3981, %v3984, %v3986
        %v3988 = vsel %vm3980, %v3967, %v3970
        %v3989 = vsel %vm3983, %v3976, 920167782
        %v3990 = vsel %vm3982, %v3973, %v3989
        %v3991 = vsel %vm3981, %v3988, %v3990
        %v3992 = vsel %vm3980, %v3970, %v3973
        %v3993 = vsel %vm3983, %v3979, 1326507024
        %v3994 = vsel %vm3982, %v3976, %v3993
        %v3995 = vsel %vm3981, %v3992, %v3994
        %v3996 = vshll.u32 %v3956, 8
        %v3997 = vmul.u32.u64.compose %v3996, %v3995
        %v3998 = vextract.low.u32 %v3997
        %v3999 = vextract.high.u32 %v3997
        %v4000 = vmul.u32.u64.compose %v3996, %v3991
        %v4001 = vextract.low.u32 %v4000
        %v4002 = vextract.high.u32 %v4000
        %v4003 = vmul.u32 %v3996, %v3987
        %v4004 = vadd.s32 %v3999, %v4001
        %vm4005 = vc.u32 %v3999, %v4001
        %v4006 = vadd.s32 %v4002, 1
        %v4007 = vsel %vm4005, %v4006, %v4002
        %v4008 = vadd.s32 %v4003, %v4007
        %v4009 = vadd.s32 %v4008, 536870912
        %v4010 = vshrl.u32 %v4009, 30
        %v4011 = vshll.u32 %v4010, 30
        %v4012 = vsub.s32 %v4008, %v4011
        %vm4013 = vcmp.lt.s32.totalorder %v4012, 0
        %v4014 = vsub.s32 0, %v4012
        %v4015 = vsel %vm4013, %v4014, %v4012
        %v4016 = vclz %v4015
        %v4017 = vsub.s32 %v4016, 2
        %vm4018 = vcmp.gt.s32.totalorder 0, %v4017
        %v4019 = vsel %vm4018, 0, %v4017
        %v4020 = vsub.s32 32, %v4019
        %v4021 = vshll.u32 %v4012, %v4019
        %v4022 = vshrl.u32 %v4004, %v4020
        %v4023 = vor.u32 %v4021, %v4022
        %v4024 = vsub.s32 4294967266, %v4019
        %v4025 = vadd.s32 %v4024, 127
        %v4026 = vshll.u32 %v4025, 23
        %v4027 = vor.u32 4788187, %v4026
        %v4028 = vand.u32 2147483647, %v4027
        %v4030 = vcvt.s32.f32 %v4023
        %v4031 = vmul.f32 %v4030, %v4028
        %v4032 = vxor.u32 %v4031, 2147483648
        %v4033 = vsel %vm3950, %v4032, %v4031
        %v4034 = vsub.s32 4, %v4010
        %v4035 = vsel %vm3950, %v4034, %v4010
        %v4036 = vsel %vm3949, %v3425, %v4033
        %v4037 = vsel %vm3949, 0, %v4035
        %v4038 = vcosq.f32.pop %v4036
        %v4039 = vsinq.f32.pop %v4036
        %vm4040 = vweird.f32 %v3425
        %v4041 = vadd.s32 %v4037, 3
        %v4042 = vand.u32 %v4041, 3
        %vm4043 = vcmp.lt.s32.totalorder %v4042, 2
        %vm4044 = vcmp.eq.s32.totalorder %v4042, 0
        %v4045 = vxor.u32 %v4039, 2147483648
        %v4046 = vsel %vm4044, %v4038, %v4045
        %vm4047 = vcmp.eq.s32.totalorder %v4042, 2
        %v4048 = vxor.u32 %v4038, 2147483648
        %v4049 = vsel %vm4047, %v4048, %v4039
        %v4050 = vsel %vm4043, %v4046, %v4049
        %v4051 = vsel %vm4040, nan, %v4050
        %v4052 = vand.u32 2147483647, %v3426
        %vm4053 = vcmp.le.f32.partialorder %v4052, 0.7853982
        %vm4054 = vcmp.lt.s32.totalorder %v3426, 0
        %v4055 = vand.u32 %v3426, 2139095040
        %v4056 = vshrl.u32 %v4055, 23
        %v4057 = vsub.s32 %v4056, 127
        %v4058 = vand.u32 2147483647, %v3426
        %v4059 = vand.u32 %v4058, 8388607
        %v4060 = vor.u32 %v4059, 8388608
        %v4061 = vsub.s32 0, %v4060
        %v4062 = vadd.s32 %v4057, 1
        %vm4063 = vcmp.gt.s32.totalorder %v4062, 0
        %v4064 = vsel %vm4063, %v4062, 0
        %v4065 = vshrl.u32 %v4064, 5
        %v4066 = vand.u32 %v4064, 31
        %v4067 = vsub.s32 32, %v4066
        %v4068 = vshrl.u32 683565275, %v4067
        %v4069 = vshll.u32 683565275, %v4066
        %v4070 = vshrl.u32 2475754826, %v4067
        %v4071 = vor.u32 %v4069, %v4070
        %v4072 = vshll.u32 2475754826, %v4066
        %v4073 = vshrl.u32 2131351028, %v4067
        %v4074 = vor.u32 %v4072, %v4073
        %v4075 = vshll.u32 2131351028, %v4066
        %v4076 = vshrl.u32 2102212464, %v4067
        %v4077 = vor.u32 %v4075, %v4076
        %v4078 = vshll.u32 2102212464, %v4066
        %v4079 = vshrl.u32 920167782, %v4067
        %v4080 = vor.u32 %v4078, %v4079
        %v4081 = vshll.u32 920167782, %v4066
        %v4082 = vshrl.u32 1326507024, %v4067
        %v4083 = vor.u32 %v4081, %v4082
        %vm4084 = vcmp.lt.s32.totalorder %v4065, 1
        %vm4085 = vcmp.lt.s32.totalorder %v4065, 2
        %vm4086 = vcmp.lt.s32.totalorder %v4065, 3
        %vm4087 = vcmp.lt.s32.totalorder %v4065, 4
        %v4088 = vsel %vm4084, %v4068, %v4071
        %v4089 = vsel %vm4087, %v4077, 2102212464
        %v4090 = vsel %vm4086, %v4074, %v4089
        %v4091 = vsel %vm4085, %v4088, %v4090
        %v4092 = vsel %vm4084, %v4071, %v4074
        %v4093 = vsel %vm4087, %v4080, 920167782
        %v4094 = vsel %vm4086, %v4077, %v4093
        %v4095 = vsel %vm4085, %v4092, %v4094
        %v4096 = vsel %vm4084, %v4074, %v4077
        %v4097 = vsel %vm4087, %v4083, 1326507024
        %v4098 = vsel %vm4086, %v4080, %v4097
        %v4099 = vsel %vm4085, %v4096, %v4098
        %v4100 = vshll.u32 %v4060, 8
        %v4101 = vmul.u32.u64.compose %v4100, %v4099
        %v4102 = vextract.low.u32 %v4101
        %v4103 = vextract.high.u32 %v4101
        %v4104 = vmul.u32.u64.compose %v4100, %v4095
        %v4105 = vextract.low.u32 %v4104
        %v4106 = vextract.high.u32 %v4104
        %v4107 = vmul.u32 %v4100, %v4091
        %v4108 = vadd.s32 %v4103, %v4105
        %vm4109 = vc.u32 %v4103, %v4105
        %v4110 = vadd.s32 %v4106, 1
        %v4111 = vsel %vm4109, %v4110, %v4106
        %v4112 = vadd.s32 %v4107, %v4111
        %v4113 = vadd.s32 %v4112, 536870912
        %v4114 = vshrl.u32 %v4113, 30
        %v4115 = vshll.u32 %v4114, 30
        %v4116 = vsub.s32 %v4112, %v4115
        %vm4117 = vcmp.lt.s32.totalorder %v4116, 0
        %v4118 = vsub.s32 0, %v4116
        %v4119 = vsel %vm4117, %v4118, %v4116
        %v4120 = vclz %v4119
        %v4121 = vsub.s32 %v4120, 2
        %vm4122 = vcmp.gt.s32.totalorder 0, %v4121
        %v4123 = vsel %vm4122, 0, %v4121
        %v4124 = vsub.s32 32, %v4123
        %v4125 = vshll.u32 %v4116, %v4123
        %v4126 = vshrl.u32 %v4108, %v4124
        %v4127 = vor.u32 %v4125, %v4126
        %v4128 = vsub.s32 4294967266, %v4123
        %v4129 = vadd.s32 %v4128, 127
        %v4130 = vshll.u32 %v4129, 23
        %v4131 = vor.u32 4788187, %v4130
        %v4132 = vand.u32 2147483647, %v4131
        %v4134 = vcvt.s32.f32 %v4127
        %v4135 = vmul.f32 %v4134, %v4132
        %v4136 = vxor.u32 %v4135, 2147483648
        %v4137 = vsel %vm4054, %v4136, %v4135
        %v4138 = vsub.s32 4, %v4114
        %v4139 = vsel %vm4054, %v4138, %v4114
        %v4140 = vsel %vm4053, %v3426, %v4137
        %v4141 = vsel %vm4053, 0, %v4139
        %v4142 = vcosq.f32.pop %v4140
        %v4143 = vsinq.f32.pop %v4140
        %vm4144 = vweird.f32 %v3426
        %v4145 = vadd.s32 %v4141, 3
        %v4146 = vand.u32 %v4145, 3
        %vm4147 = vcmp.lt.s32.totalorder %v4146, 2
        %vm4148 = vcmp.eq.s32.totalorder %v4146, 0
        %v4149 = vxor.u32 %v4143, 2147483648
        %v4150 = vsel %vm4148, %v4142, %v4149
        %vm4151 = vcmp.eq.s32.totalorder %v4146, 2
        %v4152 = vxor.u32 %v4142, 2147483648
        %v4153 = vsel %vm4151, %v4152, %v4143
        %v4154 = vsel %vm4147, %v4150, %v4153
        %v4155 = vsel %vm4144, nan, %v4154
        %v4156 = vand.u32 2147483647, %v3427
        %vm4157 = vcmp.le.f32.partialorder %v4156, 0.7853982
        %vm4158 = vcmp.lt.s32.totalorder %v3427, 0
        %v4159 = vand.u32 %v3427, 2139095040
        %v4160 = vshrl.u32 %v4159, 23
        %v4161 = vsub.s32 %v4160, 127
        %v4162 = vand.u32 2147483647, %v3427
        %v4163 = vand.u32 %v4162, 8388607
        %v4164 = vor.u32 %v4163, 8388608
        %v4165 = vsub.s32 0, %v4164
        %v4166 = vadd.s32 %v4161, 1
        %vm4167 = vcmp.gt.s32.totalorder %v4166, 0
        %v4168 = vsel %vm4167, %v4166, 0
        %v4169 = vshrl.u32 %v4168, 5
        %v4170 = vand.u32 %v4168, 31
        %v4171 = vsub.s32 32, %v4170
        %v4172 = vshrl.u32 683565275, %v4171
        %v4173 = vshll.u32 683565275, %v4170
        %v4174 = vshrl.u32 2475754826, %v4171
        %v4175 = vor.u32 %v4173, %v4174
        %v4176 = vshll.u32 2475754826, %v4170
        %v4177 = vshrl.u32 2131351028, %v4171
        %v4178 = vor.u32 %v4176, %v4177
        %v4179 = vshll.u32 2131351028, %v4170
        %v4180 = vshrl.u32 2102212464, %v4171
        %v4181 = vor.u32 %v4179, %v4180
        %v4182 = vshll.u32 2102212464, %v4170
        %v4183 = vshrl.u32 920167782, %v4171
        %v4184 = vor.u32 %v4182, %v4183
        %v4185 = vshll.u32 920167782, %v4170
        %v4186 = vshrl.u32 1326507024, %v4171
        %v4187 = vor.u32 %v4185, %v4186
        %vm4188 = vcmp.lt.s32.totalorder %v4169, 1
        %vm4189 = vcmp.lt.s32.totalorder %v4169, 2
        %vm4190 = vcmp.lt.s32.totalorder %v4169, 3
        %vm4191 = vcmp.lt.s32.totalorder %v4169, 4
        %v4192 = vsel %vm4188, %v4172, %v4175
        %v4193 = vsel %vm4191, %v4181, 2102212464
        %v4194 = vsel %vm4190, %v4178, %v4193
        %v4195 = vsel %vm4189, %v4192, %v4194
        %v4196 = vsel %vm4188, %v4175, %v4178
        %v4197 = vsel %vm4191, %v4184, 920167782
        %v4198 = vsel %vm4190, %v4181, %v4197
        %v4199 = vsel %vm4189, %v4196, %v4198
        %v4200 = vsel %vm4188, %v4178, %v4181
        %v4201 = vsel %vm4191, %v4187, 1326507024
        %v4202 = vsel %vm4190, %v4184, %v4201
        %v4203 = vsel %vm4189, %v4200, %v4202
        %v4204 = vshll.u32 %v4164, 8
        %v4205 = vmul.u32.u64.compose %v4204, %v4203
        %v4206 = vextract.low.u32 %v4205
        %v4207 = vextract.high.u32 %v4205
        %v4208 = vmul.u32.u64.compose %v4204, %v4199
        %v4209 = vextract.low.u32 %v4208
        %v4210 = vextract.high.u32 %v4208
        %v4211 = vmul.u32 %v4204, %v4195
        %v4212 = vadd.s32 %v4207, %v4209
        %vm4213 = vc.u32 %v4207, %v4209
        %v4214 = vadd.s32 %v4210, 1
        %v4215 = vsel %vm4213, %v4214, %v4210
        %v4216 = vadd.s32 %v4211, %v4215
        %v4217 = vadd.s32 %v4216, 536870912
        %v4218 = vshrl.u32 %v4217, 30
        %v4219 = vshll.u32 %v4218, 30
        %v4220 = vsub.s32 %v4216, %v4219
        %vm4221 = vcmp.lt.s32.totalorder %v4220, 0
        %v4222 = vsub.s32 0, %v4220
        %v4223 = vsel %vm4221, %v4222, %v4220
        %v4224 = vclz %v4223
        %v4225 = vsub.s32 %v4224, 2
        %vm4226 = vcmp.gt.s32.totalorder 0, %v4225
        %v4227 = vsel %vm4226, 0, %v4225
        %v4228 = vsub.s32 32, %v4227
        %v4229 = vshll.u32 %v4220, %v4227
        %v4230 = vshrl.u32 %v4212, %v4228
        %v4231 = vor.u32 %v4229, %v4230
        %v4232 = vsub.s32 4294967266, %v4227
        %v4233 = vadd.s32 %v4232, 127
        %v4234 = vshll.u32 %v4233, 23
        %v4235 = vor.u32 4788187, %v4234
        %v4236 = vand.u32 2147483647, %v4235
        %v4238 = vcvt.s32.f32 %v4231
        %v4239 = vmul.f32 %v4238, %v4236
        %v4240 = vxor.u32 %v4239, 2147483648
        %v4241 = vsel %vm4158, %v4240, %v4239
        %v4242 = vsub.s32 4, %v4218
        %v4243 = vsel %vm4158, %v4242, %v4218
        %v4244 = vsel %vm4157, %v3427, %v4241
        %v4245 = vsel %vm4157, 0, %v4243
        %v4246 = vcosq.f32.pop %v4244
        %v4247 = vsinq.f32.pop %v4244
        %vm4248 = vweird.f32 %v3427
        %v4249 = vadd.s32 %v4245, 3
        %v4250 = vand.u32 %v4249, 3
        %vm4251 = vcmp.lt.s32.totalorder %v4250, 2
        %vm4252 = vcmp.eq.s32.totalorder %v4250, 0
        %v4253 = vxor.u32 %v4247, 2147483648
        %v4254 = vsel %vm4252, %v4246, %v4253
        %vm4255 = vcmp.eq.s32.totalorder %v4250, 2
        %v4256 = vxor.u32 %v4246, 2147483648
        %v4257 = vsel %vm4255, %v4256, %v4247
        %v4258 = vsel %vm4251, %v4254, %v4257
        %v4259 = vsel %vm4248, nan, %v4258
        %v4260 = vand.u32 2147483647, %v858
        %vm4261 = vcmp.le.f32.partialorder %v4260, 0.7853982
        %vm4262 = vcmp.lt.s32.totalorder %v858, 0
        %v4263 = vand.u32 %v858, 2139095040
        %v4264 = vshrl.u32 %v4263, 23
        %v4265 = vsub.s32 %v4264, 127
        %v4266 = vand.u32 2147483647, %v858
        %v4267 = vand.u32 %v4266, 8388607
        %v4268 = vor.u32 %v4267, 8388608
        %v4269 = vsub.s32 0, %v4268
        %v4270 = vadd.s32 %v4265, 1
        %vm4271 = vcmp.gt.s32.totalorder %v4270, 0
        %v4272 = vsel %vm4271, %v4270, 0
        %v4273 = vshrl.u32 %v4272, 5
        %v4274 = vand.u32 %v4272, 31
        %v4275 = vsub.s32 32, %v4274
        %v4276 = vshrl.u32 683565275, %v4275
        %v4277 = vshll.u32 683565275, %v4274
        %v4278 = vshrl.u32 2475754826, %v4275
        %v4279 = vor.u32 %v4277, %v4278
        %v4280 = vshll.u32 2475754826, %v4274
        %v4281 = vshrl.u32 2131351028, %v4275
        %v4282 = vor.u32 %v4280, %v4281
        %v4283 = vshll.u32 2131351028, %v4274
        %v4284 = vshrl.u32 2102212464, %v4275
        %v4285 = vor.u32 %v4283, %v4284
        %v4286 = vshll.u32 2102212464, %v4274
        %v4287 = vshrl.u32 920167782, %v4275
        %v4288 = vor.u32 %v4286, %v4287
        %v4289 = vshll.u32 920167782, %v4274
        %v4290 = vshrl.u32 1326507024, %v4275
        %v4291 = vor.u32 %v4289, %v4290
        %vm4292 = vcmp.lt.s32.totalorder %v4273, 1
        %vm4293 = vcmp.lt.s32.totalorder %v4273, 2
        %vm4294 = vcmp.lt.s32.totalorder %v4273, 3
        %vm4295 = vcmp.lt.s32.totalorder %v4273, 4
        %v4296 = vsel %vm4292, %v4276, %v4279
        %v4297 = vsel %vm4295, %v4285, 2102212464
        %v4298 = vsel %vm4294, %v4282, %v4297
        %v4299 = vsel %vm4293, %v4296, %v4298
        %v4300 = vsel %vm4292, %v4279, %v4282
        %v4301 = vsel %vm4295, %v4288, 920167782
        %v4302 = vsel %vm4294, %v4285, %v4301
        %v4303 = vsel %vm4293, %v4300, %v4302
        %v4304 = vsel %vm4292, %v4282, %v4285
        %v4305 = vsel %vm4295, %v4291, 1326507024
        %v4306 = vsel %vm4294, %v4288, %v4305
        %v4307 = vsel %vm4293, %v4304, %v4306
        %v4308 = vshll.u32 %v4268, 8
        %v4309 = vmul.u32.u64.compose %v4308, %v4307
        %v4310 = vextract.low.u32 %v4309
        %v4311 = vextract.high.u32 %v4309
        %v4312 = vmul.u32.u64.compose %v4308, %v4303
        %v4313 = vextract.low.u32 %v4312
        %v4314 = vextract.high.u32 %v4312
        %v4315 = vmul.u32 %v4308, %v4299
        %v4316 = vadd.s32 %v4311, %v4313
        %vm4317 = vc.u32 %v4311, %v4313
        %v4318 = vadd.s32 %v4314, 1
        %v4319 = vsel %vm4317, %v4318, %v4314
        %v4320 = vadd.s32 %v4315, %v4319
        %v4321 = vadd.s32 %v4320, 536870912
        %v4322 = vshrl.u32 %v4321, 30
        %v4323 = vshll.u32 %v4322, 30
        %v4324 = vsub.s32 %v4320, %v4323
        %vm4325 = vcmp.lt.s32.totalorder %v4324, 0
        %v4326 = vsub.s32 0, %v4324
        %v4327 = vsel %vm4325, %v4326, %v4324
        %v4328 = vclz %v4327
        %v4329 = vsub.s32 %v4328, 2
        %vm4330 = vcmp.gt.s32.totalorder 0, %v4329
        %v4331 = vsel %vm4330, 0, %v4329
        %v4332 = vsub.s32 32, %v4331
        %v4333 = vshll.u32 %v4324, %v4331
        %v4334 = vshrl.u32 %v4316, %v4332
        %v4335 = vor.u32 %v4333, %v4334
        %v4336 = vsub.s32 4294967266, %v4331
        %v4337 = vadd.s32 %v4336, 127
        %v4338 = vshll.u32 %v4337, 23
        %v4339 = vor.u32 4788187, %v4338
        %v4340 = vand.u32 2147483647, %v4339
        %v4342 = vcvt.s32.f32 %v4335
        %v4343 = vmul.f32 %v4342, %v4340
        %v4344 = vxor.u32 %v4343, 2147483648
        %v4345 = vsel %vm4262, %v4344, %v4343
        %v4346 = vsub.s32 4, %v4322
        %v4347 = vsel %vm4262, %v4346, %v4322
        %v4348 = vsel %vm4261, %v858, %v4345
        %v4349 = vsel %vm4261, 0, %v4347
        %v4350 = vcosq.f32.pop %v4348
        %v4351 = vsinq.f32.pop %v4348
        %vm4352 = vweird.f32 %v858
        %v4353 = vand.u32 %v4349, 3
        %vm4354 = vcmp.lt.s32.totalorder %v4353, 2
        %vm4355 = vcmp.eq.s32.totalorder %v4353, 0
        %v4356 = vxor.u32 %v4351, 2147483648
        %v4357 = vsel %vm4355, %v4350, %v4356
        %vm4358 = vcmp.eq.s32.totalorder %v4353, 2
        %v4359 = vxor.u32 %v4350, 2147483648
        %v4360 = vsel %vm4358, %v4359, %v4351
        %v4361 = vsel %vm4354, %v4357, %v4360
        %v4362 = vsel %vm4352, nan, %v4361
        %v4363 = vand.u32 2147483647, %v865
        %vm4364 = vcmp.le.f32.partialorder %v4363, 0.7853982
        %vm4365 = vcmp.lt.s32.totalorder %v865, 0
        %v4366 = vand.u32 %v865, 2139095040
        %v4367 = vshrl.u32 %v4366, 23
        %v4368 = vsub.s32 %v4367, 127
        %v4369 = vand.u32 2147483647, %v865
        %v4370 = vand.u32 %v4369, 8388607
        %v4371 = vor.u32 %v4370, 8388608
        %v4372 = vsub.s32 0, %v4371
        %v4373 = vadd.s32 %v4368, 1
        %vm4374 = vcmp.gt.s32.totalorder %v4373, 0
        %v4375 = vsel %vm4374, %v4373, 0
        %v4376 = vshrl.u32 %v4375, 5
        %v4377 = vand.u32 %v4375, 31
        %v4378 = vsub.s32 32, %v4377
        %v4379 = vshrl.u32 683565275, %v4378
        %v4380 = vshll.u32 683565275, %v4377
        %v4381 = vshrl.u32 2475754826, %v4378
        %v4382 = vor.u32 %v4380, %v4381
        %v4383 = vshll.u32 2475754826, %v4377
        %v4384 = vshrl.u32 2131351028, %v4378
        %v4385 = vor.u32 %v4383, %v4384
        %v4386 = vshll.u32 2131351028, %v4377
        %v4387 = vshrl.u32 2102212464, %v4378
        %v4388 = vor.u32 %v4386, %v4387
        %v4389 = vshll.u32 2102212464, %v4377
        %v4390 = vshrl.u32 920167782, %v4378
        %v4391 = vor.u32 %v4389, %v4390
        %v4392 = vshll.u32 920167782, %v4377
        %v4393 = vshrl.u32 1326507024, %v4378
        %v4394 = vor.u32 %v4392, %v4393
        %vm4395 = vcmp.lt.s32.totalorder %v4376, 1
        %vm4396 = vcmp.lt.s32.totalorder %v4376, 2
        %vm4397 = vcmp.lt.s32.totalorder %v4376, 3
        %vm4398 = vcmp.lt.s32.totalorder %v4376, 4
        %v4399 = vsel %vm4395, %v4379, %v4382
        %v4400 = vsel %vm4398, %v4388, 2102212464
        %v4401 = vsel %vm4397, %v4385, %v4400
        %v4402 = vsel %vm4396, %v4399, %v4401
        %v4403 = vsel %vm4395, %v4382, %v4385
        %v4404 = vsel %vm4398, %v4391, 920167782
        %v4405 = vsel %vm4397, %v4388, %v4404
        %v4406 = vsel %vm4396, %v4403, %v4405
        %v4407 = vsel %vm4395, %v4385, %v4388
        %v4408 = vsel %vm4398, %v4394, 1326507024
        %v4409 = vsel %vm4397, %v4391, %v4408
        %v4410 = vsel %vm4396, %v4407, %v4409
        %v4411 = vshll.u32 %v4371, 8
        %v4412 = vmul.u32.u64.compose %v4411, %v4410
        %v4413 = vextract.low.u32 %v4412
        %v4414 = vextract.high.u32 %v4412
        %v4415 = vmul.u32.u64.compose %v4411, %v4406
        %v4416 = vextract.low.u32 %v4415
        %v4417 = vextract.high.u32 %v4415
        %v4418 = vmul.u32 %v4411, %v4402
        %v4419 = vadd.s32 %v4414, %v4416
        %vm4420 = vc.u32 %v4414, %v4416
        %v4421 = vadd.s32 %v4417, 1
        %v4422 = vsel %vm4420, %v4421, %v4417
        %v4423 = vadd.s32 %v4418, %v4422
        %v4424 = vadd.s32 %v4423, 536870912
        %v4425 = vshrl.u32 %v4424, 30
        %v4426 = vshll.u32 %v4425, 30
        %v4427 = vsub.s32 %v4423, %v4426
        %vm4428 = vcmp.lt.s32.totalorder %v4427, 0
        %v4429 = vsub.s32 0, %v4427
        %v4430 = vsel %vm4428, %v4429, %v4427
        %v4431 = vclz %v4430
        %v4432 = vsub.s32 %v4431, 2
        %vm4433 = vcmp.gt.s32.totalorder 0, %v4432
        %v4434 = vsel %vm4433, 0, %v4432
        %v4435 = vsub.s32 32, %v4434
        %v4436 = vshll.u32 %v4427, %v4434
        %v4437 = vshrl.u32 %v4419, %v4435
        %v4438 = vor.u32 %v4436, %v4437
        %v4439 = vsub.s32 4294967266, %v4434
        %v4440 = vadd.s32 %v4439, 127
        %v4441 = vshll.u32 %v4440, 23
        %v4442 = vor.u32 4788187, %v4441
        %v4443 = vand.u32 2147483647, %v4442
        %v4445 = vcvt.s32.f32 %v4438
        %v4446 = vmul.f32 %v4445, %v4443
        %v4447 = vxor.u32 %v4446, 2147483648
        %v4448 = vsel %vm4365, %v4447, %v4446
        %v4449 = vsub.s32 4, %v4425
        %v4450 = vsel %vm4365, %v4449, %v4425
        %v4451 = vsel %vm4364, %v865, %v4448
        %v4452 = vsel %vm4364, 0, %v4450
        %v4453 = vcosq.f32.pop %v4451
        %v4454 = vsinq.f32.pop %v4451
        %vm4455 = vweird.f32 %v865
        %v4456 = vand.u32 %v4452, 3
        %vm4457 = vcmp.lt.s32.totalorder %v4456, 2
        %vm4458 = vcmp.eq.s32.totalorder %v4456, 0
        %v4459 = vxor.u32 %v4454, 2147483648
        %v4460 = vsel %vm4458, %v4453, %v4459
        %vm4461 = vcmp.eq.s32.totalorder %v4456, 2
        %v4462 = vxor.u32 %v4453, 2147483648
        %v4463 = vsel %vm4461, %v4462, %v4454
        %v4464 = vsel %vm4457, %v4460, %v4463
        %v4465 = vsel %vm4455, nan, %v4464
        %v4466 = vand.u32 2147483647, %v872
        %vm4467 = vcmp.le.f32.partialorder %v4466, 0.7853982
        %vm4468 = vcmp.lt.s32.totalorder %v872, 0
        %v4469 = vand.u32 %v872, 2139095040
        %v4470 = vshrl.u32 %v4469, 23
        %v4471 = vsub.s32 %v4470, 127
        %v4472 = vand.u32 2147483647, %v872
        %v4473 = vand.u32 %v4472, 8388607
        %v4474 = vor.u32 %v4473, 8388608
        %v4475 = vsub.s32 0, %v4474
        %v4476 = vadd.s32 %v4471, 1
        %vm4477 = vcmp.gt.s32.totalorder %v4476, 0
        %v4478 = vsel %vm4477, %v4476, 0
        %v4479 = vshrl.u32 %v4478, 5
        %v4480 = vand.u32 %v4478, 31
        %v4481 = vsub.s32 32, %v4480
        %v4482 = vshrl.u32 683565275, %v4481
        %v4483 = vshll.u32 683565275, %v4480
        %v4484 = vshrl.u32 2475754826, %v4481
        %v4485 = vor.u32 %v4483, %v4484
        %v4486 = vshll.u32 2475754826, %v4480
        %v4487 = vshrl.u32 2131351028, %v4481
        %v4488 = vor.u32 %v4486, %v4487
        %v4489 = vshll.u32 2131351028, %v4480
        %v4490 = vshrl.u32 2102212464, %v4481
        %v4491 = vor.u32 %v4489, %v4490
        %v4492 = vshll.u32 2102212464, %v4480
        %v4493 = vshrl.u32 920167782, %v4481
        %v4494 = vor.u32 %v4492, %v4493
        %v4495 = vshll.u32 920167782, %v4480
        %v4496 = vshrl.u32 1326507024, %v4481
        %v4497 = vor.u32 %v4495, %v4496
        %vm4498 = vcmp.lt.s32.totalorder %v4479, 1
        %vm4499 = vcmp.lt.s32.totalorder %v4479, 2
        %vm4500 = vcmp.lt.s32.totalorder %v4479, 3
        %vm4501 = vcmp.lt.s32.totalorder %v4479, 4
        %v4502 = vsel %vm4498, %v4482, %v4485
        %v4503 = vsel %vm4501, %v4491, 2102212464
        %v4504 = vsel %vm4500, %v4488, %v4503
        %v4505 = vsel %vm4499, %v4502, %v4504
        %v4506 = vsel %vm4498, %v4485, %v4488
        %v4507 = vsel %vm4501, %v4494, 920167782
        %v4508 = vsel %vm4500, %v4491, %v4507
        %v4509 = vsel %vm4499, %v4506, %v4508
        %v4510 = vsel %vm4498, %v4488, %v4491
        %v4511 = vsel %vm4501, %v4497, 1326507024
        %v4512 = vsel %vm4500, %v4494, %v4511
        %v4513 = vsel %vm4499, %v4510, %v4512
        %v4514 = vshll.u32 %v4474, 8
        %v4515 = vmul.u32.u64.compose %v4514, %v4513
        %v4516 = vextract.low.u32 %v4515
        %v4517 = vextract.high.u32 %v4515
        %v4518 = vmul.u32.u64.compose %v4514, %v4509
        %v4519 = vextract.low.u32 %v4518
        %v4520 = vextract.high.u32 %v4518
        %v4521 = vmul.u32 %v4514, %v4505
        %v4522 = vadd.s32 %v4517, %v4519
        %vm4523 = vc.u32 %v4517, %v4519
        %v4524 = vadd.s32 %v4520, 1
        %v4525 = vsel %vm4523, %v4524, %v4520
        %v4526 = vadd.s32 %v4521, %v4525
        %v4527 = vadd.s32 %v4526, 536870912
        %v4528 = vshrl.u32 %v4527, 30
        %v4529 = vshll.u32 %v4528, 30
        %v4530 = vsub.s32 %v4526, %v4529
        %vm4531 = vcmp.lt.s32.totalorder %v4530, 0
        %v4532 = vsub.s32 0, %v4530
        %v4533 = vsel %vm4531, %v4532, %v4530
        %v4534 = vclz %v4533
        %v4535 = vsub.s32 %v4534, 2
        %vm4536 = vcmp.gt.s32.totalorder 0, %v4535
        %v4537 = vsel %vm4536, 0, %v4535
        %v4538 = vsub.s32 32, %v4537
        %v4539 = vshll.u32 %v4530, %v4537
        %v4540 = vshrl.u32 %v4522, %v4538
        %v4541 = vor.u32 %v4539, %v4540
        %v4542 = vsub.s32 4294967266, %v4537
        %v4543 = vadd.s32 %v4542, 127
        %v4544 = vshll.u32 %v4543, 23
        %v4545 = vor.u32 4788187, %v4544
        %v4546 = vand.u32 2147483647, %v4545
        %v4548 = vcvt.s32.f32 %v4541
        %v4549 = vmul.f32 %v4548, %v4546
        %v4550 = vxor.u32 %v4549, 2147483648
        %v4551 = vsel %vm4468, %v4550, %v4549
        %v4552 = vsub.s32 4, %v4528
        %v4553 = vsel %vm4468, %v4552, %v4528
        %v4554 = vsel %vm4467, %v872, %v4551
        %v4555 = vsel %vm4467, 0, %v4553
        %v4556 = vcosq.f32.pop %v4554
        %v4557 = vsinq.f32.pop %v4554
        %vm4558 = vweird.f32 %v872
        %v4559 = vand.u32 %v4555, 3
        %vm4560 = vcmp.lt.s32.totalorder %v4559, 2
        %vm4561 = vcmp.eq.s32.totalorder %v4559, 0
        %v4562 = vxor.u32 %v4557, 2147483648
        %v4563 = vsel %vm4561, %v4556, %v4562
        %vm4564 = vcmp.eq.s32.totalorder %v4559, 2
        %v4565 = vxor.u32 %v4556, 2147483648
        %v4566 = vsel %vm4564, %v4565, %v4557
        %v4567 = vsel %vm4560, %v4563, %v4566
        %v4568 = vsel %vm4558, nan, %v4567
        %v4569 = vand.u32 2147483647, %v879
        %vm4570 = vcmp.le.f32.partialorder %v4569, 0.7853982
        %vm4571 = vcmp.lt.s32.totalorder %v879, 0
        %v4572 = vand.u32 %v879, 2139095040
        %v4573 = vshrl.u32 %v4572, 23
        %v4574 = vsub.s32 %v4573, 127
        %v4575 = vand.u32 2147483647, %v879
        %v4576 = vand.u32 %v4575, 8388607
        %v4577 = vor.u32 %v4576, 8388608
        %v4578 = vsub.s32 0, %v4577
        %v4579 = vadd.s32 %v4574, 1
        %vm4580 = vcmp.gt.s32.totalorder %v4579, 0
        %v4581 = vsel %vm4580, %v4579, 0
        %v4582 = vshrl.u32 %v4581, 5
        %v4583 = vand.u32 %v4581, 31
        %v4584 = vsub.s32 32, %v4583
        %v4585 = vshrl.u32 683565275, %v4584
        %v4586 = vshll.u32 683565275, %v4583
        %v4587 = vshrl.u32 2475754826, %v4584
        %v4588 = vor.u32 %v4586, %v4587
        %v4589 = vshll.u32 2475754826, %v4583
        %v4590 = vshrl.u32 2131351028, %v4584
        %v4591 = vor.u32 %v4589, %v4590
        %v4592 = vshll.u32 2131351028, %v4583
        %v4593 = vshrl.u32 2102212464, %v4584
        %v4594 = vor.u32 %v4592, %v4593
        %v4595 = vshll.u32 2102212464, %v4583
        %v4596 = vshrl.u32 920167782, %v4584
        %v4597 = vor.u32 %v4595, %v4596
        %v4598 = vshll.u32 920167782, %v4583
        %v4599 = vshrl.u32 1326507024, %v4584
        %v4600 = vor.u32 %v4598, %v4599
        %vm4601 = vcmp.lt.s32.totalorder %v4582, 1
        %vm4602 = vcmp.lt.s32.totalorder %v4582, 2
        %vm4603 = vcmp.lt.s32.totalorder %v4582, 3
        %vm4604 = vcmp.lt.s32.totalorder %v4582, 4
        %v4605 = vsel %vm4601, %v4585, %v4588
        %v4606 = vsel %vm4604, %v4594, 2102212464
        %v4607 = vsel %vm4603, %v4591, %v4606
        %v4608 = vsel %vm4602, %v4605, %v4607
        %v4609 = vsel %vm4601, %v4588, %v4591
        %v4610 = vsel %vm4604, %v4597, 920167782
        %v4611 = vsel %vm4603, %v4594, %v4610
        %v4612 = vsel %vm4602, %v4609, %v4611
        %v4613 = vsel %vm4601, %v4591, %v4594
        %v4614 = vsel %vm4604, %v4600, 1326507024
        %v4615 = vsel %vm4603, %v4597, %v4614
        %v4616 = vsel %vm4602, %v4613, %v4615
        %v4617 = vshll.u32 %v4577, 8
        %v4618 = vmul.u32.u64.compose %v4617, %v4616
        %v4619 = vextract.low.u32 %v4618
        %v4620 = vextract.high.u32 %v4618
        %v4621 = vmul.u32.u64.compose %v4617, %v4612
        %v4622 = vextract.low.u32 %v4621
        %v4623 = vextract.high.u32 %v4621
        %v4624 = vmul.u32 %v4617, %v4608
        %v4625 = vadd.s32 %v4620, %v4622
        %vm4626 = vc.u32 %v4620, %v4622
        %v4627 = vadd.s32 %v4623, 1
        %v4628 = vsel %vm4626, %v4627, %v4623
        %v4629 = vadd.s32 %v4624, %v4628
        %v4630 = vadd.s32 %v4629, 536870912
        %v4631 = vshrl.u32 %v4630, 30
        %v4632 = vshll.u32 %v4631, 30
        %v4633 = vsub.s32 %v4629, %v4632
        %vm4634 = vcmp.lt.s32.totalorder %v4633, 0
        %v4635 = vsub.s32 0, %v4633
        %v4636 = vsel %vm4634, %v4635, %v4633
        %v4637 = vclz %v4636
        %v4638 = vsub.s32 %v4637, 2
        %vm4639 = vcmp.gt.s32.totalorder 0, %v4638
        %v4640 = vsel %vm4639, 0, %v4638
        %v4641 = vsub.s32 32, %v4640
        %v4642 = vshll.u32 %v4633, %v4640
        %v4643 = vshrl.u32 %v4625, %v4641
        %v4644 = vor.u32 %v4642, %v4643
        %v4645 = vsub.s32 4294967266, %v4640
        %v4646 = vadd.s32 %v4645, 127
        %v4647 = vshll.u32 %v4646, 23
        %v4648 = vor.u32 4788187, %v4647
        %v4649 = vand.u32 2147483647, %v4648
        %v4651 = vcvt.s32.f32 %v4644
        %v4652 = vmul.f32 %v4651, %v4649
        %v4653 = vxor.u32 %v4652, 2147483648
        %v4654 = vsel %vm4571, %v4653, %v4652
        %v4655 = vsub.s32 4, %v4631
        %v4656 = vsel %vm4571, %v4655, %v4631
        %v4657 = vsel %vm4570, %v879, %v4654
        %v4658 = vsel %vm4570, 0, %v4656
        %v4659 = vcosq.f32.pop %v4657
        %v4660 = vsinq.f32.pop %v4657
        %vm4661 = vweird.f32 %v879
        %v4662 = vand.u32 %v4658, 3
        %vm4663 = vcmp.lt.s32.totalorder %v4662, 2
        %vm4664 = vcmp.eq.s32.totalorder %v4662, 0
        %v4665 = vxor.u32 %v4660, 2147483648
        %v4666 = vsel %vm4664, %v4659, %v4665
        %vm4667 = vcmp.eq.s32.totalorder %v4662, 2
        %v4668 = vxor.u32 %v4659, 2147483648
        %v4669 = vsel %vm4667, %v4668, %v4660
        %v4670 = vsel %vm4663, %v4666, %v4669
        %v4671 = vsel %vm4661, nan, %v4670
        %v4672 = vand.u32 2147483647, %v886
        %vm4673 = vcmp.le.f32.partialorder %v4672, 0.7853982
        %vm4674 = vcmp.lt.s32.totalorder %v886, 0
        %v4675 = vand.u32 %v886, 2139095040
        %v4676 = vshrl.u32 %v4675, 23
        %v4677 = vsub.s32 %v4676, 127
        %v4678 = vand.u32 2147483647, %v886
        %v4679 = vand.u32 %v4678, 8388607
        %v4680 = vor.u32 %v4679, 8388608
        %v4681 = vsub.s32 0, %v4680
        %v4682 = vadd.s32 %v4677, 1
        %vm4683 = vcmp.gt.s32.totalorder %v4682, 0
        %v4684 = vsel %vm4683, %v4682, 0
        %v4685 = vshrl.u32 %v4684, 5
        %v4686 = vand.u32 %v4684, 31
        %v4687 = vsub.s32 32, %v4686
        %v4688 = vshrl.u32 683565275, %v4687
        %v4689 = vshll.u32 683565275, %v4686
        %v4690 = vshrl.u32 2475754826, %v4687
        %v4691 = vor.u32 %v4689, %v4690
        %v4692 = vshll.u32 2475754826, %v4686
        %v4693 = vshrl.u32 2131351028, %v4687
        %v4694 = vor.u32 %v4692, %v4693
        %v4695 = vshll.u32 2131351028, %v4686
        %v4696 = vshrl.u32 2102212464, %v4687
        %v4697 = vor.u32 %v4695, %v4696
        %v4698 = vshll.u32 2102212464, %v4686
        %v4699 = vshrl.u32 920167782, %v4687
        %v4700 = vor.u32 %v4698, %v4699
        %v4701 = vshll.u32 920167782, %v4686
        %v4702 = vshrl.u32 1326507024, %v4687
        %v4703 = vor.u32 %v4701, %v4702
        %vm4704 = vcmp.lt.s32.totalorder %v4685, 1
        %vm4705 = vcmp.lt.s32.totalorder %v4685, 2
        %vm4706 = vcmp.lt.s32.totalorder %v4685, 3
        %vm4707 = vcmp.lt.s32.totalorder %v4685, 4
        %v4708 = vsel %vm4704, %v4688, %v4691
        %v4709 = vsel %vm4707, %v4697, 2102212464
        %v4710 = vsel %vm4706, %v4694, %v4709
        %v4711 = vsel %vm4705, %v4708, %v4710
        %v4712 = vsel %vm4704, %v4691, %v4694
        %v4713 = vsel %vm4707, %v4700, 920167782
        %v4714 = vsel %vm4706, %v4697, %v4713
        %v4715 = vsel %vm4705, %v4712, %v4714
        %v4716 = vsel %vm4704, %v4694, %v4697
        %v4717 = vsel %vm4707, %v4703, 1326507024
        %v4718 = vsel %vm4706, %v4700, %v4717
        %v4719 = vsel %vm4705, %v4716, %v4718
        %v4720 = vshll.u32 %v4680, 8
        %v4721 = vmul.u32.u64.compose %v4720, %v4719
        %v4722 = vextract.low.u32 %v4721
        %v4723 = vextract.high.u32 %v4721
        %v4724 = vmul.u32.u64.compose %v4720, %v4715
        %v4725 = vextract.low.u32 %v4724
        %v4726 = vextract.high.u32 %v4724
        %v4727 = vmul.u32 %v4720, %v4711
        %v4728 = vadd.s32 %v4723, %v4725
        %vm4729 = vc.u32 %v4723, %v4725
        %v4730 = vadd.s32 %v4726, 1
        %v4731 = vsel %vm4729, %v4730, %v4726
        %v4732 = vadd.s32 %v4727, %v4731
        %v4733 = vadd.s32 %v4732, 536870912
        %v4734 = vshrl.u32 %v4733, 30
        %v4735 = vshll.u32 %v4734, 30
        %v4736 = vsub.s32 %v4732, %v4735
        %vm4737 = vcmp.lt.s32.totalorder %v4736, 0
        %v4738 = vsub.s32 0, %v4736
        %v4739 = vsel %vm4737, %v4738, %v4736
        %v4740 = vclz %v4739
        %v4741 = vsub.s32 %v4740, 2
        %vm4742 = vcmp.gt.s32.totalorder 0, %v4741
        %v4743 = vsel %vm4742, 0, %v4741
        %v4744 = vsub.s32 32, %v4743
        %v4745 = vshll.u32 %v4736, %v4743
        %v4746 = vshrl.u32 %v4728, %v4744
        %v4747 = vor.u32 %v4745, %v4746
        %v4748 = vsub.s32 4294967266, %v4743
        %v4749 = vadd.s32 %v4748, 127
        %v4750 = vshll.u32 %v4749, 23
        %v4751 = vor.u32 4788187, %v4750
        %v4752 = vand.u32 2147483647, %v4751
        %v4754 = vcvt.s32.f32 %v4747
        %v4755 = vmul.f32 %v4754, %v4752
        %v4756 = vxor.u32 %v4755, 2147483648
        %v4757 = vsel %vm4674, %v4756, %v4755
        %v4758 = vsub.s32 4, %v4734
        %v4759 = vsel %vm4674, %v4758, %v4734
        %v4760 = vsel %vm4673, %v886, %v4757
        %v4761 = vsel %vm4673, 0, %v4759
        %v4762 = vcosq.f32.pop %v4760
        %v4763 = vsinq.f32.pop %v4760
        %vm4764 = vweird.f32 %v886
        %v4765 = vand.u32 %v4761, 3
        %vm4766 = vcmp.lt.s32.totalorder %v4765, 2
        %vm4767 = vcmp.eq.s32.totalorder %v4765, 0
        %v4768 = vxor.u32 %v4763, 2147483648
        %v4769 = vsel %vm4767, %v4762, %v4768
        %vm4770 = vcmp.eq.s32.totalorder %v4765, 2
        %v4771 = vxor.u32 %v4762, 2147483648
        %v4772 = vsel %vm4770, %v4771, %v4763
        %v4773 = vsel %vm4766, %v4769, %v4772
        %v4774 = vsel %vm4764, nan, %v4773
        %v4775 = vand.u32 2147483647, %v893
        %vm4776 = vcmp.le.f32.partialorder %v4775, 0.7853982
        %vm4777 = vcmp.lt.s32.totalorder %v893, 0
        %v4778 = vand.u32 %v893, 2139095040
        %v4779 = vshrl.u32 %v4778, 23
        %v4780 = vsub.s32 %v4779, 127
        %v4781 = vand.u32 2147483647, %v893
        %v4782 = vand.u32 %v4781, 8388607
        %v4783 = vor.u32 %v4782, 8388608
        %v4784 = vsub.s32 0, %v4783
        %v4785 = vadd.s32 %v4780, 1
        %vm4786 = vcmp.gt.s32.totalorder %v4785, 0
        %v4787 = vsel %vm4786, %v4785, 0
        %v4788 = vshrl.u32 %v4787, 5
        %v4789 = vand.u32 %v4787, 31
        %v4790 = vsub.s32 32, %v4789
        %v4791 = vshrl.u32 683565275, %v4790
        %v4792 = vshll.u32 683565275, %v4789
        %v4793 = vshrl.u32 2475754826, %v4790
        %v4794 = vor.u32 %v4792, %v4793
        %v4795 = vshll.u32 2475754826, %v4789
        %v4796 = vshrl.u32 2131351028, %v4790
        %v4797 = vor.u32 %v4795, %v4796
        %v4798 = vshll.u32 2131351028, %v4789
        %v4799 = vshrl.u32 2102212464, %v4790
        %v4800 = vor.u32 %v4798, %v4799
        %v4801 = vshll.u32 2102212464, %v4789
        %v4802 = vshrl.u32 920167782, %v4790
        %v4803 = vor.u32 %v4801, %v4802
        %v4804 = vshll.u32 920167782, %v4789
        %v4805 = vshrl.u32 1326507024, %v4790
        %v4806 = vor.u32 %v4804, %v4805
        %vm4807 = vcmp.lt.s32.totalorder %v4788, 1
        %vm4808 = vcmp.lt.s32.totalorder %v4788, 2
        %vm4809 = vcmp.lt.s32.totalorder %v4788, 3
        %vm4810 = vcmp.lt.s32.totalorder %v4788, 4
        %v4811 = vsel %vm4807, %v4791, %v4794
        %v4812 = vsel %vm4810, %v4800, 2102212464
        %v4813 = vsel %vm4809, %v4797, %v4812
        %v4814 = vsel %vm4808, %v4811, %v4813
        %v4815 = vsel %vm4807, %v4794, %v4797
        %v4816 = vsel %vm4810, %v4803, 920167782
        %v4817 = vsel %vm4809, %v4800, %v4816
        %v4818 = vsel %vm4808, %v4815, %v4817
        %v4819 = vsel %vm4807, %v4797, %v4800
        %v4820 = vsel %vm4810, %v4806, 1326507024
        %v4821 = vsel %vm4809, %v4803, %v4820
        %v4822 = vsel %vm4808, %v4819, %v4821
        %v4823 = vshll.u32 %v4783, 8
        %v4824 = vmul.u32.u64.compose %v4823, %v4822
        %v4825 = vextract.low.u32 %v4824
        %v4826 = vextract.high.u32 %v4824
        %v4827 = vmul.u32.u64.compose %v4823, %v4818
        %v4828 = vextract.low.u32 %v4827
        %v4829 = vextract.high.u32 %v4827
        %v4830 = vmul.u32 %v4823, %v4814
        %v4831 = vadd.s32 %v4826, %v4828
        %vm4832 = vc.u32 %v4826, %v4828
        %v4833 = vadd.s32 %v4829, 1
        %v4834 = vsel %vm4832, %v4833, %v4829
        %v4835 = vadd.s32 %v4830, %v4834
        %v4836 = vadd.s32 %v4835, 536870912
        %v4837 = vshrl.u32 %v4836, 30
        %v4838 = vshll.u32 %v4837, 30
        %v4839 = vsub.s32 %v4835, %v4838
        %vm4840 = vcmp.lt.s32.totalorder %v4839, 0
        %v4841 = vsub.s32 0, %v4839
        %v4842 = vsel %vm4840, %v4841, %v4839
        %v4843 = vclz %v4842
        %v4844 = vsub.s32 %v4843, 2
        %vm4845 = vcmp.gt.s32.totalorder 0, %v4844
        %v4846 = vsel %vm4845, 0, %v4844
        %v4847 = vsub.s32 32, %v4846
        %v4848 = vshll.u32 %v4839, %v4846
        %v4849 = vshrl.u32 %v4831, %v4847
        %v4850 = vor.u32 %v4848, %v4849
        %v4851 = vsub.s32 4294967266, %v4846
        %v4852 = vadd.s32 %v4851, 127
        %v4853 = vshll.u32 %v4852, 23
        %v4854 = vor.u32 4788187, %v4853
        %v4855 = vand.u32 2147483647, %v4854
        %v4857 = vcvt.s32.f32 %v4850
        %v4858 = vmul.f32 %v4857, %v4855
        %v4859 = vxor.u32 %v4858, 2147483648
        %v4860 = vsel %vm4777, %v4859, %v4858
        %v4861 = vsub.s32 4, %v4837
        %v4862 = vsel %vm4777, %v4861, %v4837
        %v4863 = vsel %vm4776, %v893, %v4860
        %v4864 = vsel %vm4776, 0, %v4862
        %v4865 = vcosq.f32.pop %v4863
        %v4866 = vsinq.f32.pop %v4863
        %vm4867 = vweird.f32 %v893
        %v4868 = vand.u32 %v4864, 3
        %vm4869 = vcmp.lt.s32.totalorder %v4868, 2
        %vm4870 = vcmp.eq.s32.totalorder %v4868, 0
        %v4871 = vxor.u32 %v4866, 2147483648
        %v4872 = vsel %vm4870, %v4865, %v4871
        %vm4873 = vcmp.eq.s32.totalorder %v4868, 2
        %v4874 = vxor.u32 %v4865, 2147483648
        %v4875 = vsel %vm4873, %v4874, %v4866
        %v4876 = vsel %vm4869, %v4872, %v4875
        %v4877 = vsel %vm4867, nan, %v4876
        %v4878 = vand.u32 2147483647, %v900
        %vm4879 = vcmp.le.f32.partialorder %v4878, 0.7853982
        %vm4880 = vcmp.lt.s32.totalorder %v900, 0
        %v4881 = vand.u32 %v900, 2139095040
        %v4882 = vshrl.u32 %v4881, 23
        %v4883 = vsub.s32 %v4882, 127
        %v4884 = vand.u32 2147483647, %v900
        %v4885 = vand.u32 %v4884, 8388607
        %v4886 = vor.u32 %v4885, 8388608
        %v4887 = vsub.s32 0, %v4886
        %v4888 = vadd.s32 %v4883, 1
        %vm4889 = vcmp.gt.s32.totalorder %v4888, 0
        %v4890 = vsel %vm4889, %v4888, 0
        %v4891 = vshrl.u32 %v4890, 5
        %v4892 = vand.u32 %v4890, 31
        %v4893 = vsub.s32 32, %v4892
        %v4894 = vshrl.u32 683565275, %v4893
        %v4895 = vshll.u32 683565275, %v4892
        %v4896 = vshrl.u32 2475754826, %v4893
        %v4897 = vor.u32 %v4895, %v4896
        %v4898 = vshll.u32 2475754826, %v4892
        %v4899 = vshrl.u32 2131351028, %v4893
        %v4900 = vor.u32 %v4898, %v4899
        %v4901 = vshll.u32 2131351028, %v4892
        %v4902 = vshrl.u32 2102212464, %v4893
        %v4903 = vor.u32 %v4901, %v4902
        %v4904 = vshll.u32 2102212464, %v4892
        %v4905 = vshrl.u32 920167782, %v4893
        %v4906 = vor.u32 %v4904, %v4905
        %v4907 = vshll.u32 920167782, %v4892
        %v4908 = vshrl.u32 1326507024, %v4893
        %v4909 = vor.u32 %v4907, %v4908
        %vm4910 = vcmp.lt.s32.totalorder %v4891, 1
        %vm4911 = vcmp.lt.s32.totalorder %v4891, 2
        %vm4912 = vcmp.lt.s32.totalorder %v4891, 3
        %vm4913 = vcmp.lt.s32.totalorder %v4891, 4
        %v4914 = vsel %vm4910, %v4894, %v4897
        %v4915 = vsel %vm4913, %v4903, 2102212464
        %v4916 = vsel %vm4912, %v4900, %v4915
        %v4917 = vsel %vm4911, %v4914, %v4916
        %v4918 = vsel %vm4910, %v4897, %v4900
        %v4919 = vsel %vm4913, %v4906, 920167782
        %v4920 = vsel %vm4912, %v4903, %v4919
        %v4921 = vsel %vm4911, %v4918, %v4920
        %v4922 = vsel %vm4910, %v4900, %v4903
        %v4923 = vsel %vm4913, %v4909, 1326507024
        %v4924 = vsel %vm4912, %v4906, %v4923
        %v4925 = vsel %vm4911, %v4922, %v4924
        %v4926 = vshll.u32 %v4886, 8
        %v4927 = vmul.u32.u64.compose %v4926, %v4925
        %v4928 = vextract.low.u32 %v4927
        %v4929 = vextract.high.u32 %v4927
        %v4930 = vmul.u32.u64.compose %v4926, %v4921
        %v4931 = vextract.low.u32 %v4930
        %v4932 = vextract.high.u32 %v4930
        %v4933 = vmul.u32 %v4926, %v4917
        %v4934 = vadd.s32 %v4929, %v4931
        %vm4935 = vc.u32 %v4929, %v4931
        %v4936 = vadd.s32 %v4932, 1
        %v4937 = vsel %vm4935, %v4936, %v4932
        %v4938 = vadd.s32 %v4933, %v4937
        %v4939 = vadd.s32 %v4938, 536870912
        %v4940 = vshrl.u32 %v4939, 30
        %v4941 = vshll.u32 %v4940, 30
        %v4942 = vsub.s32 %v4938, %v4941
        %vm4943 = vcmp.lt.s32.totalorder %v4942, 0
        %v4944 = vsub.s32 0, %v4942
        %v4945 = vsel %vm4943, %v4944, %v4942
        %v4946 = vclz %v4945
        %v4947 = vsub.s32 %v4946, 2
        %vm4948 = vcmp.gt.s32.totalorder 0, %v4947
        %v4949 = vsel %vm4948, 0, %v4947
        %v4950 = vsub.s32 32, %v4949
        %v4951 = vshll.u32 %v4942, %v4949
        %v4952 = vshrl.u32 %v4934, %v4950
        %v4953 = vor.u32 %v4951, %v4952
        %v4954 = vsub.s32 4294967266, %v4949
        %v4955 = vadd.s32 %v4954, 127
        %v4956 = vshll.u32 %v4955, 23
        %v4957 = vor.u32 4788187, %v4956
        %v4958 = vand.u32 2147483647, %v4957
        %v4960 = vcvt.s32.f32 %v4953
        %v4961 = vmul.f32 %v4960, %v4958
        %v4962 = vxor.u32 %v4961, 2147483648
        %v4963 = vsel %vm4880, %v4962, %v4961
        %v4964 = vsub.s32 4, %v4940
        %v4965 = vsel %vm4880, %v4964, %v4940
        %v4966 = vsel %vm4879, %v900, %v4963
        %v4967 = vsel %vm4879, 0, %v4965
        %v4968 = vcosq.f32.pop %v4966
        %v4969 = vsinq.f32.pop %v4966
        %vm4970 = vweird.f32 %v900
        %v4971 = vand.u32 %v4967, 3
        %vm4972 = vcmp.lt.s32.totalorder %v4971, 2
        %vm4973 = vcmp.eq.s32.totalorder %v4971, 0
        %v4974 = vxor.u32 %v4969, 2147483648
        %v4975 = vsel %vm4973, %v4968, %v4974
        %vm4976 = vcmp.eq.s32.totalorder %v4971, 2
        %v4977 = vxor.u32 %v4968, 2147483648
        %v4978 = vsel %vm4976, %v4977, %v4969
        %v4979 = vsel %vm4972, %v4975, %v4978
        %v4980 = vsel %vm4970, nan, %v4979
        %v4981 = vand.u32 2147483647, %v907
        %vm4982 = vcmp.le.f32.partialorder %v4981, 0.7853982
        %vm4983 = vcmp.lt.s32.totalorder %v907, 0
        %v4984 = vand.u32 %v907, 2139095040
        %v4985 = vshrl.u32 %v4984, 23
        %v4986 = vsub.s32 %v4985, 127
        %v4987 = vand.u32 2147483647, %v907
        %v4988 = vand.u32 %v4987, 8388607
        %v4989 = vor.u32 %v4988, 8388608
        %v4990 = vsub.s32 0, %v4989
        %v4991 = vadd.s32 %v4986, 1
        %vm4992 = vcmp.gt.s32.totalorder %v4991, 0
        %v4993 = vsel %vm4992, %v4991, 0
        %v4994 = vshrl.u32 %v4993, 5
        %v4995 = vand.u32 %v4993, 31
        %v4996 = vsub.s32 32, %v4995
        %v4997 = vshrl.u32 683565275, %v4996
        %v4998 = vshll.u32 683565275, %v4995
        %v4999 = vshrl.u32 2475754826, %v4996
        %v5000 = vor.u32 %v4998, %v4999
        %v5001 = vshll.u32 2475754826, %v4995
        %v5002 = vshrl.u32 2131351028, %v4996
        %v5003 = vor.u32 %v5001, %v5002
        %v5004 = vshll.u32 2131351028, %v4995
        %v5005 = vshrl.u32 2102212464, %v4996
        %v5006 = vor.u32 %v5004, %v5005
        %v5007 = vshll.u32 2102212464, %v4995
        %v5008 = vshrl.u32 920167782, %v4996
        %v5009 = vor.u32 %v5007, %v5008
        %v5010 = vshll.u32 920167782, %v4995
        %v5011 = vshrl.u32 1326507024, %v4996
        %v5012 = vor.u32 %v5010, %v5011
        %vm5013 = vcmp.lt.s32.totalorder %v4994, 1
        %vm5014 = vcmp.lt.s32.totalorder %v4994, 2
        %vm5015 = vcmp.lt.s32.totalorder %v4994, 3
        %vm5016 = vcmp.lt.s32.totalorder %v4994, 4
        %v5017 = vsel %vm5013, %v4997, %v5000
        %v5018 = vsel %vm5016, %v5006, 2102212464
        %v5019 = vsel %vm5015, %v5003, %v5018
        %v5020 = vsel %vm5014, %v5017, %v5019
        %v5021 = vsel %vm5013, %v5000, %v5003
        %v5022 = vsel %vm5016, %v5009, 920167782
        %v5023 = vsel %vm5015, %v5006, %v5022
        %v5024 = vsel %vm5014, %v5021, %v5023
        %v5025 = vsel %vm5013, %v5003, %v5006
        %v5026 = vsel %vm5016, %v5012, 1326507024
        %v5027 = vsel %vm5015, %v5009, %v5026
        %v5028 = vsel %vm5014, %v5025, %v5027
        %v5029 = vshll.u32 %v4989, 8
        %v5030 = vmul.u32.u64.compose %v5029, %v5028
        %v5031 = vextract.low.u32 %v5030
        %v5032 = vextract.high.u32 %v5030
        %v5033 = vmul.u32.u64.compose %v5029, %v5024
        %v5034 = vextract.low.u32 %v5033
        %v5035 = vextract.high.u32 %v5033
        %v5036 = vmul.u32 %v5029, %v5020
        %v5037 = vadd.s32 %v5032, %v5034
        %vm5038 = vc.u32 %v5032, %v5034
        %v5039 = vadd.s32 %v5035, 1
        %v5040 = vsel %vm5038, %v5039, %v5035
        %v5041 = vadd.s32 %v5036, %v5040
        %v5042 = vadd.s32 %v5041, 536870912
        %v5043 = vshrl.u32 %v5042, 30
        %v5044 = vshll.u32 %v5043, 30
        %v5045 = vsub.s32 %v5041, %v5044
        %vm5046 = vcmp.lt.s32.totalorder %v5045, 0
        %v5047 = vsub.s32 0, %v5045
        %v5048 = vsel %vm5046, %v5047, %v5045
        %v5049 = vclz %v5048
        %v5050 = vsub.s32 %v5049, 2
        %vm5051 = vcmp.gt.s32.totalorder 0, %v5050
        %v5052 = vsel %vm5051, 0, %v5050
        %v5053 = vsub.s32 32, %v5052
        %v5054 = vshll.u32 %v5045, %v5052
        %v5055 = vshrl.u32 %v5037, %v5053
        %v5056 = vor.u32 %v5054, %v5055
        %v5057 = vsub.s32 4294967266, %v5052
        %v5058 = vadd.s32 %v5057, 127
        %v5059 = vshll.u32 %v5058, 23
        %v5060 = vor.u32 4788187, %v5059
        %v5061 = vand.u32 2147483647, %v5060
        %v5063 = vcvt.s32.f32 %v5056
        %v5064 = vmul.f32 %v5063, %v5061
        %v5065 = vxor.u32 %v5064, 2147483648
        %v5066 = vsel %vm4983, %v5065, %v5064
        %v5067 = vsub.s32 4, %v5043
        %v5068 = vsel %vm4983, %v5067, %v5043
        %v5069 = vsel %vm4982, %v907, %v5066
        %v5070 = vsel %vm4982, 0, %v5068
        %v5071 = vcosq.f32.pop %v5069
        %v5072 = vsinq.f32.pop %v5069
        %vm5073 = vweird.f32 %v907
        %v5074 = vand.u32 %v5070, 3
        %vm5075 = vcmp.lt.s32.totalorder %v5074, 2
        %vm5076 = vcmp.eq.s32.totalorder %v5074, 0
        %v5077 = vxor.u32 %v5072, 2147483648
        %v5078 = vsel %vm5076, %v5071, %v5077
        %vm5079 = vcmp.eq.s32.totalorder %v5074, 2
        %v5080 = vxor.u32 %v5071, 2147483648
        %v5081 = vsel %vm5079, %v5080, %v5072
        %v5082 = vsel %vm5075, %v5078, %v5081
        %v5083 = vsel %vm5073, nan, %v5082
        %v5084 = vand.u32 2147483647, %v1740
        %vm5085 = vcmp.le.f32.partialorder %v5084, 0.7853982
        %vm5086 = vcmp.lt.s32.totalorder %v1740, 0
        %v5087 = vand.u32 %v1740, 2139095040
        %v5088 = vshrl.u32 %v5087, 23
        %v5089 = vsub.s32 %v5088, 127
        %v5090 = vand.u32 2147483647, %v1740
        %v5091 = vand.u32 %v5090, 8388607
        %v5092 = vor.u32 %v5091, 8388608
        %v5093 = vsub.s32 0, %v5092
        %v5094 = vadd.s32 %v5089, 1
        %vm5095 = vcmp.gt.s32.totalorder %v5094, 0
        %v5096 = vsel %vm5095, %v5094, 0
        %v5097 = vshrl.u32 %v5096, 5
        %v5098 = vand.u32 %v5096, 31
        %v5099 = vsub.s32 32, %v5098
        %v5100 = vshrl.u32 683565275, %v5099
        %v5101 = vshll.u32 683565275, %v5098
        %v5102 = vshrl.u32 2475754826, %v5099
        %v5103 = vor.u32 %v5101, %v5102
        %v5104 = vshll.u32 2475754826, %v5098
        %v5105 = vshrl.u32 2131351028, %v5099
        %v5106 = vor.u32 %v5104, %v5105
        %v5107 = vshll.u32 2131351028, %v5098
        %v5108 = vshrl.u32 2102212464, %v5099
        %v5109 = vor.u32 %v5107, %v5108
        %v5110 = vshll.u32 2102212464, %v5098
        %v5111 = vshrl.u32 920167782, %v5099
        %v5112 = vor.u32 %v5110, %v5111
        %v5113 = vshll.u32 920167782, %v5098
        %v5114 = vshrl.u32 1326507024, %v5099
        %v5115 = vor.u32 %v5113, %v5114
        %vm5116 = vcmp.lt.s32.totalorder %v5097, 1
        %vm5117 = vcmp.lt.s32.totalorder %v5097, 2
        %vm5118 = vcmp.lt.s32.totalorder %v5097, 3
        %vm5119 = vcmp.lt.s32.totalorder %v5097, 4
        %v5120 = vsel %vm5116, %v5100, %v5103
        %v5121 = vsel %vm5119, %v5109, 2102212464
        %v5122 = vsel %vm5118, %v5106, %v5121
        %v5123 = vsel %vm5117, %v5120, %v5122
        %v5124 = vsel %vm5116, %v5103, %v5106
        %v5125 = vsel %vm5119, %v5112, 920167782
        %v5126 = vsel %vm5118, %v5109, %v5125
        %v5127 = vsel %vm5117, %v5124, %v5126
        %v5128 = vsel %vm5116, %v5106, %v5109
        %v5129 = vsel %vm5119, %v5115, 1326507024
        %v5130 = vsel %vm5118, %v5112, %v5129
        %v5131 = vsel %vm5117, %v5128, %v5130
        %v5132 = vshll.u32 %v5092, 8
        %v5133 = vmul.u32.u64.compose %v5132, %v5131
        %v5134 = vextract.low.u32 %v5133
        %v5135 = vextract.high.u32 %v5133
        %v5136 = vmul.u32.u64.compose %v5132, %v5127
        %v5137 = vextract.low.u32 %v5136
        %v5138 = vextract.high.u32 %v5136
        %v5139 = vmul.u32 %v5132, %v5123
        %v5140 = vadd.s32 %v5135, %v5137
        %vm5141 = vc.u32 %v5135, %v5137
        %v5142 = vadd.s32 %v5138, 1
        %v5143 = vsel %vm5141, %v5142, %v5138
        %v5144 = vadd.s32 %v5139, %v5143
        %v5145 = vadd.s32 %v5144, 536870912
        %v5146 = vshrl.u32 %v5145, 30
        %v5147 = vshll.u32 %v5146, 30
        %v5148 = vsub.s32 %v5144, %v5147
        %vm5149 = vcmp.lt.s32.totalorder %v5148, 0
        %v5150 = vsub.s32 0, %v5148
        %v5151 = vsel %vm5149, %v5150, %v5148
        %v5152 = vclz %v5151
        %v5153 = vsub.s32 %v5152, 2
        %vm5154 = vcmp.gt.s32.totalorder 0, %v5153
        %v5155 = vsel %vm5154, 0, %v5153
        %v5156 = vsub.s32 32, %v5155
        %v5157 = vshll.u32 %v5148, %v5155
        %v5158 = vshrl.u32 %v5140, %v5156
        %v5159 = vor.u32 %v5157, %v5158
        %v5160 = vsub.s32 4294967266, %v5155
        %v5161 = vadd.s32 %v5160, 127
        %v5162 = vshll.u32 %v5161, 23
        %v5163 = vor.u32 4788187, %v5162
        %v5164 = vand.u32 2147483647, %v5163
        %v5166 = vcvt.s32.f32 %v5159
        %v5167 = vmul.f32 %v5166, %v5164
        %v5168 = vxor.u32 %v5167, 2147483648
        %v5169 = vsel %vm5086, %v5168, %v5167
        %v5170 = vsub.s32 4, %v5146
        %v5171 = vsel %vm5086, %v5170, %v5146
        %v5172 = vsel %vm5085, %v1740, %v5169
        %v5173 = vsel %vm5085, 0, %v5171
        %v5174 = vcosq.f32.pop %v5172
        %v5175 = vsinq.f32.pop %v5172
        %vm5176 = vweird.f32 %v1740
        %v5177 = vand.u32 %v5173, 3
        %vm5178 = vcmp.lt.s32.totalorder %v5177, 2
        %vm5179 = vcmp.eq.s32.totalorder %v5177, 0
        %v5180 = vxor.u32 %v5175, 2147483648
        %v5181 = vsel %vm5179, %v5174, %v5180
        %vm5182 = vcmp.eq.s32.totalorder %v5177, 2
        %v5183 = vxor.u32 %v5174, 2147483648
        %v5184 = vsel %vm5182, %v5183, %v5175
        %v5185 = vsel %vm5178, %v5181, %v5184
        %v5186 = vsel %vm5176, nan, %v5185
        %v5187 = vand.u32 2147483647, %v1741
        %vm5188 = vcmp.le.f32.partialorder %v5187, 0.7853982
        %vm5189 = vcmp.lt.s32.totalorder %v1741, 0
        %v5190 = vand.u32 %v1741, 2139095040
        %v5191 = vshrl.u32 %v5190, 23
        %v5192 = vsub.s32 %v5191, 127
        %v5193 = vand.u32 2147483647, %v1741
        %v5194 = vand.u32 %v5193, 8388607
        %v5195 = vor.u32 %v5194, 8388608
        %v5196 = vsub.s32 0, %v5195
        %v5197 = vadd.s32 %v5192, 1
        %vm5198 = vcmp.gt.s32.totalorder %v5197, 0
        %v5199 = vsel %vm5198, %v5197, 0
        %v5200 = vshrl.u32 %v5199, 5
        %v5201 = vand.u32 %v5199, 31
        %v5202 = vsub.s32 32, %v5201
        %v5203 = vshrl.u32 683565275, %v5202
        %v5204 = vshll.u32 683565275, %v5201
        %v5205 = vshrl.u32 2475754826, %v5202
        %v5206 = vor.u32 %v5204, %v5205
        %v5207 = vshll.u32 2475754826, %v5201
        %v5208 = vshrl.u32 2131351028, %v5202
        %v5209 = vor.u32 %v5207, %v5208
        %v5210 = vshll.u32 2131351028, %v5201
        %v5211 = vshrl.u32 2102212464, %v5202
        %v5212 = vor.u32 %v5210, %v5211
        %v5213 = vshll.u32 2102212464, %v5201
        %v5214 = vshrl.u32 920167782, %v5202
        %v5215 = vor.u32 %v5213, %v5214
        %v5216 = vshll.u32 920167782, %v5201
        %v5217 = vshrl.u32 1326507024, %v5202
        %v5218 = vor.u32 %v5216, %v5217
        %vm5219 = vcmp.lt.s32.totalorder %v5200, 1
        %vm5220 = vcmp.lt.s32.totalorder %v5200, 2
        %vm5221 = vcmp.lt.s32.totalorder %v5200, 3
        %vm5222 = vcmp.lt.s32.totalorder %v5200, 4
        %v5223 = vsel %vm5219, %v5203, %v5206
        %v5224 = vsel %vm5222, %v5212, 2102212464
        %v5225 = vsel %vm5221, %v5209, %v5224
        %v5226 = vsel %vm5220, %v5223, %v5225
        %v5227 = vsel %vm5219, %v5206, %v5209
        %v5228 = vsel %vm5222, %v5215, 920167782
        %v5229 = vsel %vm5221, %v5212, %v5228
        %v5230 = vsel %vm5220, %v5227, %v5229
        %v5231 = vsel %vm5219, %v5209, %v5212
        %v5232 = vsel %vm5222, %v5218, 1326507024
        %v5233 = vsel %vm5221, %v5215, %v5232
        %v5234 = vsel %vm5220, %v5231, %v5233
        %v5235 = vshll.u32 %v5195, 8
        %v5236 = vmul.u32.u64.compose %v5235, %v5234
        %v5237 = vextract.low.u32 %v5236
        %v5238 = vextract.high.u32 %v5236
        %v5239 = vmul.u32.u64.compose %v5235, %v5230
        %v5240 = vextract.low.u32 %v5239
        %v5241 = vextract.high.u32 %v5239
        %v5242 = vmul.u32 %v5235, %v5226
        %v5243 = vadd.s32 %v5238, %v5240
        %vm5244 = vc.u32 %v5238, %v5240
        %v5245 = vadd.s32 %v5241, 1
        %v5246 = vsel %vm5244, %v5245, %v5241
        %v5247 = vadd.s32 %v5242, %v5246
        %v5248 = vadd.s32 %v5247, 536870912
        %v5249 = vshrl.u32 %v5248, 30
        %v5250 = vshll.u32 %v5249, 30
        %v5251 = vsub.s32 %v5247, %v5250
        %vm5252 = vcmp.lt.s32.totalorder %v5251, 0
        %v5253 = vsub.s32 0, %v5251
        %v5254 = vsel %vm5252, %v5253, %v5251
        %v5255 = vclz %v5254
        %v5256 = vsub.s32 %v5255, 2
        %vm5257 = vcmp.gt.s32.totalorder 0, %v5256
        %v5258 = vsel %vm5257, 0, %v5256
        %v5259 = vsub.s32 32, %v5258
        %v5260 = vshll.u32 %v5251, %v5258
        %v5261 = vshrl.u32 %v5243, %v5259
        %v5262 = vor.u32 %v5260, %v5261
        %v5263 = vsub.s32 4294967266, %v5258
        %v5264 = vadd.s32 %v5263, 127
        %v5265 = vshll.u32 %v5264, 23
        %v5266 = vor.u32 4788187, %v5265
        %v5267 = vand.u32 2147483647, %v5266
        %v5269 = vcvt.s32.f32 %v5262
        %v5270 = vmul.f32 %v5269, %v5267
        %v5271 = vxor.u32 %v5270, 2147483648
        %v5272 = vsel %vm5189, %v5271, %v5270
        %v5273 = vsub.s32 4, %v5249
        %v5274 = vsel %vm5189, %v5273, %v5249
        %v5275 = vsel %vm5188, %v1741, %v5272
        %v5276 = vsel %vm5188, 0, %v5274
        %v5277 = vcosq.f32.pop %v5275
        %v5278 = vsinq.f32.pop %v5275
        %vm5279 = vweird.f32 %v1741
        %v5280 = vand.u32 %v5276, 3
        %vm5281 = vcmp.lt.s32.totalorder %v5280, 2
        %vm5282 = vcmp.eq.s32.totalorder %v5280, 0
        %v5283 = vxor.u32 %v5278, 2147483648
        %v5284 = vsel %vm5282, %v5277, %v5283
        %vm5285 = vcmp.eq.s32.totalorder %v5280, 2
        %v5286 = vxor.u32 %v5277, 2147483648
        %v5287 = vsel %vm5285, %v5286, %v5278
        %v5288 = vsel %vm5281, %v5284, %v5287
        %v5289 = vsel %vm5279, nan, %v5288
        %v5290 = vand.u32 2147483647, %v1742
        %vm5291 = vcmp.le.f32.partialorder %v5290, 0.7853982
        %vm5292 = vcmp.lt.s32.totalorder %v1742, 0
        %v5293 = vand.u32 %v1742, 2139095040
        %v5294 = vshrl.u32 %v5293, 23
        %v5295 = vsub.s32 %v5294, 127
        %v5296 = vand.u32 2147483647, %v1742
        %v5297 = vand.u32 %v5296, 8388607
        %v5298 = vor.u32 %v5297, 8388608
        %v5299 = vsub.s32 0, %v5298
        %v5300 = vadd.s32 %v5295, 1
        %vm5301 = vcmp.gt.s32.totalorder %v5300, 0
        %v5302 = vsel %vm5301, %v5300, 0
        %v5303 = vshrl.u32 %v5302, 5
        %v5304 = vand.u32 %v5302, 31
        %v5305 = vsub.s32 32, %v5304
        %v5306 = vshrl.u32 683565275, %v5305
        %v5307 = vshll.u32 683565275, %v5304
        %v5308 = vshrl.u32 2475754826, %v5305
        %v5309 = vor.u32 %v5307, %v5308
        %v5310 = vshll.u32 2475754826, %v5304
        %v5311 = vshrl.u32 2131351028, %v5305
        %v5312 = vor.u32 %v5310, %v5311
        %v5313 = vshll.u32 2131351028, %v5304
        %v5314 = vshrl.u32 2102212464, %v5305
        %v5315 = vor.u32 %v5313, %v5314
        %v5316 = vshll.u32 2102212464, %v5304
        %v5317 = vshrl.u32 920167782, %v5305
        %v5318 = vor.u32 %v5316, %v5317
        %v5319 = vshll.u32 920167782, %v5304
        %v5320 = vshrl.u32 1326507024, %v5305
        %v5321 = vor.u32 %v5319, %v5320
        %vm5322 = vcmp.lt.s32.totalorder %v5303, 1
        %vm5323 = vcmp.lt.s32.totalorder %v5303, 2
        %vm5324 = vcmp.lt.s32.totalorder %v5303, 3
        %vm5325 = vcmp.lt.s32.totalorder %v5303, 4
        %v5326 = vsel %vm5322, %v5306, %v5309
        %v5327 = vsel %vm5325, %v5315, 2102212464
        %v5328 = vsel %vm5324, %v5312, %v5327
        %v5329 = vsel %vm5323, %v5326, %v5328
        %v5330 = vsel %vm5322, %v5309, %v5312
        %v5331 = vsel %vm5325, %v5318, 920167782
        %v5332 = vsel %vm5324, %v5315, %v5331
        %v5333 = vsel %vm5323, %v5330, %v5332
        %v5334 = vsel %vm5322, %v5312, %v5315
        %v5335 = vsel %vm5325, %v5321, 1326507024
        %v5336 = vsel %vm5324, %v5318, %v5335
        %v5337 = vsel %vm5323, %v5334, %v5336
        %v5338 = vshll.u32 %v5298, 8
        %v5339 = vmul.u32.u64.compose %v5338, %v5337
        %v5340 = vextract.low.u32 %v5339
        %v5341 = vextract.high.u32 %v5339
        %v5342 = vmul.u32.u64.compose %v5338, %v5333
        %v5343 = vextract.low.u32 %v5342
        %v5344 = vextract.high.u32 %v5342
        %v5345 = vmul.u32 %v5338, %v5329
        %v5346 = vadd.s32 %v5341, %v5343
        %vm5347 = vc.u32 %v5341, %v5343
        %v5348 = vadd.s32 %v5344, 1
        %v5349 = vsel %vm5347, %v5348, %v5344
        %v5350 = vadd.s32 %v5345, %v5349
        %v5351 = vadd.s32 %v5350, 536870912
        %v5352 = vshrl.u32 %v5351, 30
        %v5353 = vshll.u32 %v5352, 30
        %v5354 = vsub.s32 %v5350, %v5353
        %vm5355 = vcmp.lt.s32.totalorder %v5354, 0
        %v5356 = vsub.s32 0, %v5354
        %v5357 = vsel %vm5355, %v5356, %v5354
        %v5358 = vclz %v5357
        %v5359 = vsub.s32 %v5358, 2
        %vm5360 = vcmp.gt.s32.totalorder 0, %v5359
        %v5361 = vsel %vm5360, 0, %v5359
        %v5362 = vsub.s32 32, %v5361
        %v5363 = vshll.u32 %v5354, %v5361
        %v5364 = vshrl.u32 %v5346, %v5362
        %v5365 = vor.u32 %v5363, %v5364
        %v5366 = vsub.s32 4294967266, %v5361
        %v5367 = vadd.s32 %v5366, 127
        %v5368 = vshll.u32 %v5367, 23
        %v5369 = vor.u32 4788187, %v5368
        %v5370 = vand.u32 2147483647, %v5369
        %v5372 = vcvt.s32.f32 %v5365
        %v5373 = vmul.f32 %v5372, %v5370
        %v5374 = vxor.u32 %v5373, 2147483648
        %v5375 = vsel %vm5292, %v5374, %v5373
        %v5376 = vsub.s32 4, %v5352
        %v5377 = vsel %vm5292, %v5376, %v5352
        %v5378 = vsel %vm5291, %v1742, %v5375
        %v5379 = vsel %vm5291, 0, %v5377
        %v5380 = vcosq.f32.pop %v5378
        %v5381 = vsinq.f32.pop %v5378
        %vm5382 = vweird.f32 %v1742
        %v5383 = vand.u32 %v5379, 3
        %vm5384 = vcmp.lt.s32.totalorder %v5383, 2
        %vm5385 = vcmp.eq.s32.totalorder %v5383, 0
        %v5386 = vxor.u32 %v5381, 2147483648
        %v5387 = vsel %vm5385, %v5380, %v5386
        %vm5388 = vcmp.eq.s32.totalorder %v5383, 2
        %v5389 = vxor.u32 %v5380, 2147483648
        %v5390 = vsel %vm5388, %v5389, %v5381
        %v5391 = vsel %vm5384, %v5387, %v5390
        %v5392 = vsel %vm5382, nan, %v5391
        %v5393 = vand.u32 2147483647, %v1743
        %vm5394 = vcmp.le.f32.partialorder %v5393, 0.7853982
        %vm5395 = vcmp.lt.s32.totalorder %v1743, 0
        %v5396 = vand.u32 %v1743, 2139095040
        %v5397 = vshrl.u32 %v5396, 23
        %v5398 = vsub.s32 %v5397, 127
        %v5399 = vand.u32 2147483647, %v1743
        %v5400 = vand.u32 %v5399, 8388607
        %v5401 = vor.u32 %v5400, 8388608
        %v5402 = vsub.s32 0, %v5401
        %v5403 = vadd.s32 %v5398, 1
        %vm5404 = vcmp.gt.s32.totalorder %v5403, 0
        %v5405 = vsel %vm5404, %v5403, 0
        %v5406 = vshrl.u32 %v5405, 5
        %v5407 = vand.u32 %v5405, 31
        %v5408 = vsub.s32 32, %v5407
        %v5409 = vshrl.u32 683565275, %v5408
        %v5410 = vshll.u32 683565275, %v5407
        %v5411 = vshrl.u32 2475754826, %v5408
        %v5412 = vor.u32 %v5410, %v5411
        %v5413 = vshll.u32 2475754826, %v5407
        %v5414 = vshrl.u32 2131351028, %v5408
        %v5415 = vor.u32 %v5413, %v5414
        %v5416 = vshll.u32 2131351028, %v5407
        %v5417 = vshrl.u32 2102212464, %v5408
        %v5418 = vor.u32 %v5416, %v5417
        %v5419 = vshll.u32 2102212464, %v5407
        %v5420 = vshrl.u32 920167782, %v5408
        %v5421 = vor.u32 %v5419, %v5420
        %v5422 = vshll.u32 920167782, %v5407
        %v5423 = vshrl.u32 1326507024, %v5408
        %v5424 = vor.u32 %v5422, %v5423
        %vm5425 = vcmp.lt.s32.totalorder %v5406, 1
        %vm5426 = vcmp.lt.s32.totalorder %v5406, 2
        %vm5427 = vcmp.lt.s32.totalorder %v5406, 3
        %vm5428 = vcmp.lt.s32.totalorder %v5406, 4
        %v5429 = vsel %vm5425, %v5409, %v5412
        %v5430 = vsel %vm5428, %v5418, 2102212464
        %v5431 = vsel %vm5427, %v5415, %v5430
        %v5432 = vsel %vm5426, %v5429, %v5431
        %v5433 = vsel %vm5425, %v5412, %v5415
        %v5434 = vsel %vm5428, %v5421, 920167782
        %v5435 = vsel %vm5427, %v5418, %v5434
        %v5436 = vsel %vm5426, %v5433, %v5435
        %v5437 = vsel %vm5425, %v5415, %v5418
        %v5438 = vsel %vm5428, %v5424, 1326507024
        %v5439 = vsel %vm5427, %v5421, %v5438
        %v5440 = vsel %vm5426, %v5437, %v5439
        %v5441 = vshll.u32 %v5401, 8
        %v5442 = vmul.u32.u64.compose %v5441, %v5440
        %v5443 = vextract.low.u32 %v5442
        %v5444 = vextract.high.u32 %v5442
        %v5445 = vmul.u32.u64.compose %v5441, %v5436
        %v5446 = vextract.low.u32 %v5445
        %v5447 = vextract.high.u32 %v5445
        %v5448 = vmul.u32 %v5441, %v5432
        %v5449 = vadd.s32 %v5444, %v5446
        %vm5450 = vc.u32 %v5444, %v5446
        %v5451 = vadd.s32 %v5447, 1
        %v5452 = vsel %vm5450, %v5451, %v5447
        %v5453 = vadd.s32 %v5448, %v5452
        %v5454 = vadd.s32 %v5453, 536870912
        %v5455 = vshrl.u32 %v5454, 30
        %v5456 = vshll.u32 %v5455, 30
        %v5457 = vsub.s32 %v5453, %v5456
        %vm5458 = vcmp.lt.s32.totalorder %v5457, 0
        %v5459 = vsub.s32 0, %v5457
        %v5460 = vsel %vm5458, %v5459, %v5457
        %v5461 = vclz %v5460
        %v5462 = vsub.s32 %v5461, 2
        %vm5463 = vcmp.gt.s32.totalorder 0, %v5462
        %v5464 = vsel %vm5463, 0, %v5462
        %v5465 = vsub.s32 32, %v5464
        %v5466 = vshll.u32 %v5457, %v5464
        %v5467 = vshrl.u32 %v5449, %v5465
        %v5468 = vor.u32 %v5466, %v5467
        %v5469 = vsub.s32 4294967266, %v5464
        %v5470 = vadd.s32 %v5469, 127
        %v5471 = vshll.u32 %v5470, 23
        %v5472 = vor.u32 4788187, %v5471
        %v5473 = vand.u32 2147483647, %v5472
        %v5475 = vcvt.s32.f32 %v5468
        %v5476 = vmul.f32 %v5475, %v5473
        %v5477 = vxor.u32 %v5476, 2147483648
        %v5478 = vsel %vm5395, %v5477, %v5476
        %v5479 = vsub.s32 4, %v5455
        %v5480 = vsel %vm5395, %v5479, %v5455
        %v5481 = vsel %vm5394, %v1743, %v5478
        %v5482 = vsel %vm5394, 0, %v5480
        %v5483 = vcosq.f32.pop %v5481
        %v5484 = vsinq.f32.pop %v5481
        %vm5485 = vweird.f32 %v1743
        %v5486 = vand.u32 %v5482, 3
        %vm5487 = vcmp.lt.s32.totalorder %v5486, 2
        %vm5488 = vcmp.eq.s32.totalorder %v5486, 0
        %v5489 = vxor.u32 %v5484, 2147483648
        %v5490 = vsel %vm5488, %v5483, %v5489
        %vm5491 = vcmp.eq.s32.totalorder %v5486, 2
        %v5492 = vxor.u32 %v5483, 2147483648
        %v5493 = vsel %vm5491, %v5492, %v5484
        %v5494 = vsel %vm5487, %v5490, %v5493
        %v5495 = vsel %vm5485, nan, %v5494
        %v5496 = vand.u32 2147483647, %v1744
        %vm5497 = vcmp.le.f32.partialorder %v5496, 0.7853982
        %vm5498 = vcmp.lt.s32.totalorder %v1744, 0
        %v5499 = vand.u32 %v1744, 2139095040
        %v5500 = vshrl.u32 %v5499, 23
        %v5501 = vsub.s32 %v5500, 127
        %v5502 = vand.u32 2147483647, %v1744
        %v5503 = vand.u32 %v5502, 8388607
        %v5504 = vor.u32 %v5503, 8388608
        %v5505 = vsub.s32 0, %v5504
        %v5506 = vadd.s32 %v5501, 1
        %vm5507 = vcmp.gt.s32.totalorder %v5506, 0
        %v5508 = vsel %vm5507, %v5506, 0
        %v5509 = vshrl.u32 %v5508, 5
        %v5510 = vand.u32 %v5508, 31
        %v5511 = vsub.s32 32, %v5510
        %v5512 = vshrl.u32 683565275, %v5511
        %v5513 = vshll.u32 683565275, %v5510
        %v5514 = vshrl.u32 2475754826, %v5511
        %v5515 = vor.u32 %v5513, %v5514
        %v5516 = vshll.u32 2475754826, %v5510
        %v5517 = vshrl.u32 2131351028, %v5511
        %v5518 = vor.u32 %v5516, %v5517
        %v5519 = vshll.u32 2131351028, %v5510
        %v5520 = vshrl.u32 2102212464, %v5511
        %v5521 = vor.u32 %v5519, %v5520
        %v5522 = vshll.u32 2102212464, %v5510
        %v5523 = vshrl.u32 920167782, %v5511
        %v5524 = vor.u32 %v5522, %v5523
        %v5525 = vshll.u32 920167782, %v5510
        %v5526 = vshrl.u32 1326507024, %v5511
        %v5527 = vor.u32 %v5525, %v5526
        %vm5528 = vcmp.lt.s32.totalorder %v5509, 1
        %vm5529 = vcmp.lt.s32.totalorder %v5509, 2
        %vm5530 = vcmp.lt.s32.totalorder %v5509, 3
        %vm5531 = vcmp.lt.s32.totalorder %v5509, 4
        %v5532 = vsel %vm5528, %v5512, %v5515
        %v5533 = vsel %vm5531, %v5521, 2102212464
        %v5534 = vsel %vm5530, %v5518, %v5533
        %v5535 = vsel %vm5529, %v5532, %v5534
        %v5536 = vsel %vm5528, %v5515, %v5518
        %v5537 = vsel %vm5531, %v5524, 920167782
        %v5538 = vsel %vm5530, %v5521, %v5537
        %v5539 = vsel %vm5529, %v5536, %v5538
        %v5540 = vsel %vm5528, %v5518, %v5521
        %v5541 = vsel %vm5531, %v5527, 1326507024
        %v5542 = vsel %vm5530, %v5524, %v5541
        %v5543 = vsel %vm5529, %v5540, %v5542
        %v5544 = vshll.u32 %v5504, 8
        %v5545 = vmul.u32.u64.compose %v5544, %v5543
        %v5546 = vextract.low.u32 %v5545
        %v5547 = vextract.high.u32 %v5545
        %v5548 = vmul.u32.u64.compose %v5544, %v5539
        %v5549 = vextract.low.u32 %v5548
        %v5550 = vextract.high.u32 %v5548
        %v5551 = vmul.u32 %v5544, %v5535
        %v5552 = vadd.s32 %v5547, %v5549
        %vm5553 = vc.u32 %v5547, %v5549
        %v5554 = vadd.s32 %v5550, 1
        %v5555 = vsel %vm5553, %v5554, %v5550
        %v5556 = vadd.s32 %v5551, %v5555
        %v5557 = vadd.s32 %v5556, 536870912
        %v5558 = vshrl.u32 %v5557, 30
        %v5559 = vshll.u32 %v5558, 30
        %v5560 = vsub.s32 %v5556, %v5559
        %vm5561 = vcmp.lt.s32.totalorder %v5560, 0
        %v5562 = vsub.s32 0, %v5560
        %v5563 = vsel %vm5561, %v5562, %v5560
        %v5564 = vclz %v5563
        %v5565 = vsub.s32 %v5564, 2
        %vm5566 = vcmp.gt.s32.totalorder 0, %v5565
        %v5567 = vsel %vm5566, 0, %v5565
        %v5568 = vsub.s32 32, %v5567
        %v5569 = vshll.u32 %v5560, %v5567
        %v5570 = vshrl.u32 %v5552, %v5568
        %v5571 = vor.u32 %v5569, %v5570
        %v5572 = vsub.s32 4294967266, %v5567
        %v5573 = vadd.s32 %v5572, 127
        %v5574 = vshll.u32 %v5573, 23
        %v5575 = vor.u32 4788187, %v5574
        %v5576 = vand.u32 2147483647, %v5575
        %v5578 = vcvt.s32.f32 %v5571
        %v5579 = vmul.f32 %v5578, %v5576
        %v5580 = vxor.u32 %v5579, 2147483648
        %v5581 = vsel %vm5498, %v5580, %v5579
        %v5582 = vsub.s32 4, %v5558
        %v5583 = vsel %vm5498, %v5582, %v5558
        %v5584 = vsel %vm5497, %v1744, %v5581
        %v5585 = vsel %vm5497, 0, %v5583
        %v5586 = vcosq.f32.pop %v5584
        %v5587 = vsinq.f32.pop %v5584
        %vm5588 = vweird.f32 %v1744
        %v5589 = vand.u32 %v5585, 3
        %vm5590 = vcmp.lt.s32.totalorder %v5589, 2
        %vm5591 = vcmp.eq.s32.totalorder %v5589, 0
        %v5592 = vxor.u32 %v5587, 2147483648
        %v5593 = vsel %vm5591, %v5586, %v5592
        %vm5594 = vcmp.eq.s32.totalorder %v5589, 2
        %v5595 = vxor.u32 %v5586, 2147483648
        %v5596 = vsel %vm5594, %v5595, %v5587
        %v5597 = vsel %vm5590, %v5593, %v5596
        %v5598 = vsel %vm5588, nan, %v5597
        %v5599 = vand.u32 2147483647, %v1745
        %vm5600 = vcmp.le.f32.partialorder %v5599, 0.7853982
        %vm5601 = vcmp.lt.s32.totalorder %v1745, 0
        %v5602 = vand.u32 %v1745, 2139095040
        %v5603 = vshrl.u32 %v5602, 23
        %v5604 = vsub.s32 %v5603, 127
        %v5605 = vand.u32 2147483647, %v1745
        %v5606 = vand.u32 %v5605, 8388607
        %v5607 = vor.u32 %v5606, 8388608
        %v5608 = vsub.s32 0, %v5607
        %v5609 = vadd.s32 %v5604, 1
        %vm5610 = vcmp.gt.s32.totalorder %v5609, 0
        %v5611 = vsel %vm5610, %v5609, 0
        %v5612 = vshrl.u32 %v5611, 5
        %v5613 = vand.u32 %v5611, 31
        %v5614 = vsub.s32 32, %v5613
        %v5615 = vshrl.u32 683565275, %v5614
        %v5616 = vshll.u32 683565275, %v5613
        %v5617 = vshrl.u32 2475754826, %v5614
        %v5618 = vor.u32 %v5616, %v5617
        %v5619 = vshll.u32 2475754826, %v5613
        %v5620 = vshrl.u32 2131351028, %v5614
        %v5621 = vor.u32 %v5619, %v5620
        %v5622 = vshll.u32 2131351028, %v5613
        %v5623 = vshrl.u32 2102212464, %v5614
        %v5624 = vor.u32 %v5622, %v5623
        %v5625 = vshll.u32 2102212464, %v5613
        %v5626 = vshrl.u32 920167782, %v5614
        %v5627 = vor.u32 %v5625, %v5626
        %v5628 = vshll.u32 920167782, %v5613
        %v5629 = vshrl.u32 1326507024, %v5614
        %v5630 = vor.u32 %v5628, %v5629
        %vm5631 = vcmp.lt.s32.totalorder %v5612, 1
        %vm5632 = vcmp.lt.s32.totalorder %v5612, 2
        %vm5633 = vcmp.lt.s32.totalorder %v5612, 3
        %vm5634 = vcmp.lt.s32.totalorder %v5612, 4
        %v5635 = vsel %vm5631, %v5615, %v5618
        %v5636 = vsel %vm5634, %v5624, 2102212464
        %v5637 = vsel %vm5633, %v5621, %v5636
        %v5638 = vsel %vm5632, %v5635, %v5637
        %v5639 = vsel %vm5631, %v5618, %v5621
        %v5640 = vsel %vm5634, %v5627, 920167782
        %v5641 = vsel %vm5633, %v5624, %v5640
        %v5642 = vsel %vm5632, %v5639, %v5641
        %v5643 = vsel %vm5631, %v5621, %v5624
        %v5644 = vsel %vm5634, %v5630, 1326507024
        %v5645 = vsel %vm5633, %v5627, %v5644
        %v5646 = vsel %vm5632, %v5643, %v5645
        %v5647 = vshll.u32 %v5607, 8
        %v5648 = vmul.u32.u64.compose %v5647, %v5646
        %v5649 = vextract.low.u32 %v5648
        %v5650 = vextract.high.u32 %v5648
        %v5651 = vmul.u32.u64.compose %v5647, %v5642
        %v5652 = vextract.low.u32 %v5651
        %v5653 = vextract.high.u32 %v5651
        %v5654 = vmul.u32 %v5647, %v5638
        %v5655 = vadd.s32 %v5650, %v5652
        %vm5656 = vc.u32 %v5650, %v5652
        %v5657 = vadd.s32 %v5653, 1
        %v5658 = vsel %vm5656, %v5657, %v5653
        %v5659 = vadd.s32 %v5654, %v5658
        %v5660 = vadd.s32 %v5659, 536870912
        %v5661 = vshrl.u32 %v5660, 30
        %v5662 = vshll.u32 %v5661, 30
        %v5663 = vsub.s32 %v5659, %v5662
        %vm5664 = vcmp.lt.s32.totalorder %v5663, 0
        %v5665 = vsub.s32 0, %v5663
        %v5666 = vsel %vm5664, %v5665, %v5663
        %v5667 = vclz %v5666
        %v5668 = vsub.s32 %v5667, 2
        %vm5669 = vcmp.gt.s32.totalorder 0, %v5668
        %v5670 = vsel %vm5669, 0, %v5668
        %v5671 = vsub.s32 32, %v5670
        %v5672 = vshll.u32 %v5663, %v5670
        %v5673 = vshrl.u32 %v5655, %v5671
        %v5674 = vor.u32 %v5672, %v5673
        %v5675 = vsub.s32 4294967266, %v5670
        %v5676 = vadd.s32 %v5675, 127
        %v5677 = vshll.u32 %v5676, 23
        %v5678 = vor.u32 4788187, %v5677
        %v5679 = vand.u32 2147483647, %v5678
        %v5681 = vcvt.s32.f32 %v5674
        %v5682 = vmul.f32 %v5681, %v5679
        %v5683 = vxor.u32 %v5682, 2147483648
        %v5684 = vsel %vm5601, %v5683, %v5682
        %v5685 = vsub.s32 4, %v5661
        %v5686 = vsel %vm5601, %v5685, %v5661
        %v5687 = vsel %vm5600, %v1745, %v5684
        %v5688 = vsel %vm5600, 0, %v5686
        %v5689 = vcosq.f32.pop %v5687
        %v5690 = vsinq.f32.pop %v5687
        %vm5691 = vweird.f32 %v1745
        %v5692 = vand.u32 %v5688, 3
        %vm5693 = vcmp.lt.s32.totalorder %v5692, 2
        %vm5694 = vcmp.eq.s32.totalorder %v5692, 0
        %v5695 = vxor.u32 %v5690, 2147483648
        %v5696 = vsel %vm5694, %v5689, %v5695
        %vm5697 = vcmp.eq.s32.totalorder %v5692, 2
        %v5698 = vxor.u32 %v5689, 2147483648
        %v5699 = vsel %vm5697, %v5698, %v5690
        %v5700 = vsel %vm5693, %v5696, %v5699
        %v5701 = vsel %vm5691, nan, %v5700
        %v5702 = vand.u32 2147483647, %v1746
        %vm5703 = vcmp.le.f32.partialorder %v5702, 0.7853982
        %vm5704 = vcmp.lt.s32.totalorder %v1746, 0
        %v5705 = vand.u32 %v1746, 2139095040
        %v5706 = vshrl.u32 %v5705, 23
        %v5707 = vsub.s32 %v5706, 127
        %v5708 = vand.u32 2147483647, %v1746
        %v5709 = vand.u32 %v5708, 8388607
        %v5710 = vor.u32 %v5709, 8388608
        %v5711 = vsub.s32 0, %v5710
        %v5712 = vadd.s32 %v5707, 1
        %vm5713 = vcmp.gt.s32.totalorder %v5712, 0
        %v5714 = vsel %vm5713, %v5712, 0
        %v5715 = vshrl.u32 %v5714, 5
        %v5716 = vand.u32 %v5714, 31
        %v5717 = vsub.s32 32, %v5716
        %v5718 = vshrl.u32 683565275, %v5717
        %v5719 = vshll.u32 683565275, %v5716
        %v5720 = vshrl.u32 2475754826, %v5717
        %v5721 = vor.u32 %v5719, %v5720
        %v5722 = vshll.u32 2475754826, %v5716
        %v5723 = vshrl.u32 2131351028, %v5717
        %v5724 = vor.u32 %v5722, %v5723
        %v5725 = vshll.u32 2131351028, %v5716
        %v5726 = vshrl.u32 2102212464, %v5717
        %v5727 = vor.u32 %v5725, %v5726
        %v5728 = vshll.u32 2102212464, %v5716
        %v5729 = vshrl.u32 920167782, %v5717
        %v5730 = vor.u32 %v5728, %v5729
        %v5731 = vshll.u32 920167782, %v5716
        %v5732 = vshrl.u32 1326507024, %v5717
        %v5733 = vor.u32 %v5731, %v5732
        %vm5734 = vcmp.lt.s32.totalorder %v5715, 1
        %vm5735 = vcmp.lt.s32.totalorder %v5715, 2
        %vm5736 = vcmp.lt.s32.totalorder %v5715, 3
        %vm5737 = vcmp.lt.s32.totalorder %v5715, 4
        %v5738 = vsel %vm5734, %v5718, %v5721
        %v5739 = vsel %vm5737, %v5727, 2102212464
        %v5740 = vsel %vm5736, %v5724, %v5739
        %v5741 = vsel %vm5735, %v5738, %v5740
        %v5742 = vsel %vm5734, %v5721, %v5724
        %v5743 = vsel %vm5737, %v5730, 920167782
        %v5744 = vsel %vm5736, %v5727, %v5743
        %v5745 = vsel %vm5735, %v5742, %v5744
        %v5746 = vsel %vm5734, %v5724, %v5727
        %v5747 = vsel %vm5737, %v5733, 1326507024
        %v5748 = vsel %vm5736, %v5730, %v5747
        %v5749 = vsel %vm5735, %v5746, %v5748
        %v5750 = vshll.u32 %v5710, 8
        %v5751 = vmul.u32.u64.compose %v5750, %v5749
        %v5752 = vextract.low.u32 %v5751
        %v5753 = vextract.high.u32 %v5751
        %v5754 = vmul.u32.u64.compose %v5750, %v5745
        %v5755 = vextract.low.u32 %v5754
        %v5756 = vextract.high.u32 %v5754
        %v5757 = vmul.u32 %v5750, %v5741
        %v5758 = vadd.s32 %v5753, %v5755
        %vm5759 = vc.u32 %v5753, %v5755
        %v5760 = vadd.s32 %v5756, 1
        %v5761 = vsel %vm5759, %v5760, %v5756
        %v5762 = vadd.s32 %v5757, %v5761
        %v5763 = vadd.s32 %v5762, 536870912
        %v5764 = vshrl.u32 %v5763, 30
        %v5765 = vshll.u32 %v5764, 30
        %v5766 = vsub.s32 %v5762, %v5765
        %vm5767 = vcmp.lt.s32.totalorder %v5766, 0
        %v5768 = vsub.s32 0, %v5766
        %v5769 = vsel %vm5767, %v5768, %v5766
        %v5770 = vclz %v5769
        %v5771 = vsub.s32 %v5770, 2
        %vm5772 = vcmp.gt.s32.totalorder 0, %v5771
        %v5773 = vsel %vm5772, 0, %v5771
        %v5774 = vsub.s32 32, %v5773
        %v5775 = vshll.u32 %v5766, %v5773
        %v5776 = vshrl.u32 %v5758, %v5774
        %v5777 = vor.u32 %v5775, %v5776
        %v5778 = vsub.s32 4294967266, %v5773
        %v5779 = vadd.s32 %v5778, 127
        %v5780 = vshll.u32 %v5779, 23
        %v5781 = vor.u32 4788187, %v5780
        %v5782 = vand.u32 2147483647, %v5781
        %v5784 = vcvt.s32.f32 %v5777
        %v5785 = vmul.f32 %v5784, %v5782
        %v5786 = vxor.u32 %v5785, 2147483648
        %v5787 = vsel %vm5704, %v5786, %v5785
        %v5788 = vsub.s32 4, %v5764
        %v5789 = vsel %vm5704, %v5788, %v5764
        %v5790 = vsel %vm5703, %v1746, %v5787
        %v5791 = vsel %vm5703, 0, %v5789
        %v5792 = vcosq.f32.pop %v5790
        %v5793 = vsinq.f32.pop %v5790
        %vm5794 = vweird.f32 %v1746
        %v5795 = vand.u32 %v5791, 3
        %vm5796 = vcmp.lt.s32.totalorder %v5795, 2
        %vm5797 = vcmp.eq.s32.totalorder %v5795, 0
        %v5798 = vxor.u32 %v5793, 2147483648
        %v5799 = vsel %vm5797, %v5792, %v5798
        %vm5800 = vcmp.eq.s32.totalorder %v5795, 2
        %v5801 = vxor.u32 %v5792, 2147483648
        %v5802 = vsel %vm5800, %v5801, %v5793
        %v5803 = vsel %vm5796, %v5799, %v5802
        %v5804 = vsel %vm5794, nan, %v5803
        %v5805 = vand.u32 2147483647, %v1747
        %vm5806 = vcmp.le.f32.partialorder %v5805, 0.7853982
        %vm5807 = vcmp.lt.s32.totalorder %v1747, 0
        %v5808 = vand.u32 %v1747, 2139095040
        %v5809 = vshrl.u32 %v5808, 23
        %v5810 = vsub.s32 %v5809, 127
        %v5811 = vand.u32 2147483647, %v1747
        %v5812 = vand.u32 %v5811, 8388607
        %v5813 = vor.u32 %v5812, 8388608
        %v5814 = vsub.s32 0, %v5813
        %v5815 = vadd.s32 %v5810, 1
        %vm5816 = vcmp.gt.s32.totalorder %v5815, 0
        %v5817 = vsel %vm5816, %v5815, 0
        %v5818 = vshrl.u32 %v5817, 5
        %v5819 = vand.u32 %v5817, 31
        %v5820 = vsub.s32 32, %v5819
        %v5821 = vshrl.u32 683565275, %v5820
        %v5822 = vshll.u32 683565275, %v5819
        %v5823 = vshrl.u32 2475754826, %v5820
        %v5824 = vor.u32 %v5822, %v5823
        %v5825 = vshll.u32 2475754826, %v5819
        %v5826 = vshrl.u32 2131351028, %v5820
        %v5827 = vor.u32 %v5825, %v5826
        %v5828 = vshll.u32 2131351028, %v5819
        %v5829 = vshrl.u32 2102212464, %v5820
        %v5830 = vor.u32 %v5828, %v5829
        %v5831 = vshll.u32 2102212464, %v5819
        %v5832 = vshrl.u32 920167782, %v5820
        %v5833 = vor.u32 %v5831, %v5832
        %v5834 = vshll.u32 920167782, %v5819
        %v5835 = vshrl.u32 1326507024, %v5820
        %v5836 = vor.u32 %v5834, %v5835
        %vm5837 = vcmp.lt.s32.totalorder %v5818, 1
        %vm5838 = vcmp.lt.s32.totalorder %v5818, 2
        %vm5839 = vcmp.lt.s32.totalorder %v5818, 3
        %vm5840 = vcmp.lt.s32.totalorder %v5818, 4
        %v5841 = vsel %vm5837, %v5821, %v5824
        %v5842 = vsel %vm5840, %v5830, 2102212464
        %v5843 = vsel %vm5839, %v5827, %v5842
        %v5844 = vsel %vm5838, %v5841, %v5843
        %v5845 = vsel %vm5837, %v5824, %v5827
        %v5846 = vsel %vm5840, %v5833, 920167782
        %v5847 = vsel %vm5839, %v5830, %v5846
        %v5848 = vsel %vm5838, %v5845, %v5847
        %v5849 = vsel %vm5837, %v5827, %v5830
        %v5850 = vsel %vm5840, %v5836, 1326507024
        %v5851 = vsel %vm5839, %v5833, %v5850
        %v5852 = vsel %vm5838, %v5849, %v5851
        %v5853 = vshll.u32 %v5813, 8
        %v5854 = vmul.u32.u64.compose %v5853, %v5852
        %v5855 = vextract.low.u32 %v5854
        %v5856 = vextract.high.u32 %v5854
        %v5857 = vmul.u32.u64.compose %v5853, %v5848
        %v5858 = vextract.low.u32 %v5857
        %v5859 = vextract.high.u32 %v5857
        %v5860 = vmul.u32 %v5853, %v5844
        %v5861 = vadd.s32 %v5856, %v5858
        %vm5862 = vc.u32 %v5856, %v5858
        %v5863 = vadd.s32 %v5859, 1
        %v5864 = vsel %vm5862, %v5863, %v5859
        %v5865 = vadd.s32 %v5860, %v5864
        %v5866 = vadd.s32 %v5865, 536870912
        %v5867 = vshrl.u32 %v5866, 30
        %v5868 = vshll.u32 %v5867, 30
        %v5869 = vsub.s32 %v5865, %v5868
        %vm5870 = vcmp.lt.s32.totalorder %v5869, 0
        %v5871 = vsub.s32 0, %v5869
        %v5872 = vsel %vm5870, %v5871, %v5869
        %v5873 = vclz %v5872
        %v5874 = vsub.s32 %v5873, 2
        %vm5875 = vcmp.gt.s32.totalorder 0, %v5874
        %v5876 = vsel %vm5875, 0, %v5874
        %v5877 = vsub.s32 32, %v5876
        %v5878 = vshll.u32 %v5869, %v5876
        %v5879 = vshrl.u32 %v5861, %v5877
        %v5880 = vor.u32 %v5878, %v5879
        %v5881 = vsub.s32 4294967266, %v5876
        %v5882 = vadd.s32 %v5881, 127
        %v5883 = vshll.u32 %v5882, 23
        %v5884 = vor.u32 4788187, %v5883
        %v5885 = vand.u32 2147483647, %v5884
        %v5887 = vcvt.s32.f32 %v5880
        %v5888 = vmul.f32 %v5887, %v5885
        %v5889 = vxor.u32 %v5888, 2147483648
        %v5890 = vsel %vm5807, %v5889, %v5888
        %v5891 = vsub.s32 4, %v5867
        %v5892 = vsel %vm5807, %v5891, %v5867
        %v5893 = vsel %vm5806, %v1747, %v5890
        %v5894 = vsel %vm5806, 0, %v5892
        %v5895 = vcosq.f32.pop %v5893
        %v5896 = vsinq.f32.pop %v5893
        %vm5897 = vweird.f32 %v1747
        %v5898 = vand.u32 %v5894, 3
        %vm5899 = vcmp.lt.s32.totalorder %v5898, 2
        %vm5900 = vcmp.eq.s32.totalorder %v5898, 0
        %v5901 = vxor.u32 %v5896, 2147483648
        %v5902 = vsel %vm5900, %v5895, %v5901
        %vm5903 = vcmp.eq.s32.totalorder %v5898, 2
        %v5904 = vxor.u32 %v5895, 2147483648
        %v5905 = vsel %vm5903, %v5904, %v5896
        %v5906 = vsel %vm5899, %v5902, %v5905
        %v5907 = vsel %vm5897, nan, %v5906
        %v5908 = vand.u32 2147483647, %v2580
        %vm5909 = vcmp.le.f32.partialorder %v5908, 0.7853982
        %vm5910 = vcmp.lt.s32.totalorder %v2580, 0
        %v5911 = vand.u32 %v2580, 2139095040
        %v5912 = vshrl.u32 %v5911, 23
        %v5913 = vsub.s32 %v5912, 127
        %v5914 = vand.u32 2147483647, %v2580
        %v5915 = vand.u32 %v5914, 8388607
        %v5916 = vor.u32 %v5915, 8388608
        %v5917 = vsub.s32 0, %v5916
        %v5918 = vadd.s32 %v5913, 1
        %vm5919 = vcmp.gt.s32.totalorder %v5918, 0
        %v5920 = vsel %vm5919, %v5918, 0
        %v5921 = vshrl.u32 %v5920, 5
        %v5922 = vand.u32 %v5920, 31
        %v5923 = vsub.s32 32, %v5922
        %v5924 = vshrl.u32 683565275, %v5923
        %v5925 = vshll.u32 683565275, %v5922
        %v5926 = vshrl.u32 2475754826, %v5923
        %v5927 = vor.u32 %v5925, %v5926
        %v5928 = vshll.u32 2475754826, %v5922
        %v5929 = vshrl.u32 2131351028, %v5923
        %v5930 = vor.u32 %v5928, %v5929
        %v5931 = vshll.u32 2131351028, %v5922
        %v5932 = vshrl.u32 2102212464, %v5923
        %v5933 = vor.u32 %v5931, %v5932
        %v5934 = vshll.u32 2102212464, %v5922
        %v5935 = vshrl.u32 920167782, %v5923
        %v5936 = vor.u32 %v5934, %v5935
        %v5937 = vshll.u32 920167782, %v5922
        %v5938 = vshrl.u32 1326507024, %v5923
        %v5939 = vor.u32 %v5937, %v5938
        %vm5940 = vcmp.lt.s32.totalorder %v5921, 1
        %vm5941 = vcmp.lt.s32.totalorder %v5921, 2
        %vm5942 = vcmp.lt.s32.totalorder %v5921, 3
        %vm5943 = vcmp.lt.s32.totalorder %v5921, 4
        %v5944 = vsel %vm5940, %v5924, %v5927
        %v5945 = vsel %vm5943, %v5933, 2102212464
        %v5946 = vsel %vm5942, %v5930, %v5945
        %v5947 = vsel %vm5941, %v5944, %v5946
        %v5948 = vsel %vm5940, %v5927, %v5930
        %v5949 = vsel %vm5943, %v5936, 920167782
        %v5950 = vsel %vm5942, %v5933, %v5949
        %v5951 = vsel %vm5941, %v5948, %v5950
        %v5952 = vsel %vm5940, %v5930, %v5933
        %v5953 = vsel %vm5943, %v5939, 1326507024
        %v5954 = vsel %vm5942, %v5936, %v5953
        %v5955 = vsel %vm5941, %v5952, %v5954
        %v5956 = vshll.u32 %v5916, 8
        %v5957 = vmul.u32.u64.compose %v5956, %v5955
        %v5958 = vextract.low.u32 %v5957
        %v5959 = vextract.high.u32 %v5957
        %v5960 = vmul.u32.u64.compose %v5956, %v5951
        %v5961 = vextract.low.u32 %v5960
        %v5962 = vextract.high.u32 %v5960
        %v5963 = vmul.u32 %v5956, %v5947
        %v5964 = vadd.s32 %v5959, %v5961
        %vm5965 = vc.u32 %v5959, %v5961
        %v5966 = vadd.s32 %v5962, 1
        %v5967 = vsel %vm5965, %v5966, %v5962
        %v5968 = vadd.s32 %v5963, %v5967
        %v5969 = vadd.s32 %v5968, 536870912
        %v5970 = vshrl.u32 %v5969, 30
        %v5971 = vshll.u32 %v5970, 30
        %v5972 = vsub.s32 %v5968, %v5971
        %vm5973 = vcmp.lt.s32.totalorder %v5972, 0
        %v5974 = vsub.s32 0, %v5972
        %v5975 = vsel %vm5973, %v5974, %v5972
        %v5976 = vclz %v5975
        %v5977 = vsub.s32 %v5976, 2
        %vm5978 = vcmp.gt.s32.totalorder 0, %v5977
        %v5979 = vsel %vm5978, 0, %v5977
        %v5980 = vsub.s32 32, %v5979
        %v5981 = vshll.u32 %v5972, %v5979
        %v5982 = vshrl.u32 %v5964, %v5980
        %v5983 = vor.u32 %v5981, %v5982
        %v5984 = vsub.s32 4294967266, %v5979
        %v5985 = vadd.s32 %v5984, 127
        %v5986 = vshll.u32 %v5985, 23
        %v5987 = vor.u32 4788187, %v5986
        %v5988 = vand.u32 2147483647, %v5987
        %v5990 = vcvt.s32.f32 %v5983
        %v5991 = vmul.f32 %v5990, %v5988
        %v5992 = vxor.u32 %v5991, 2147483648
        %v5993 = vsel %vm5910, %v5992, %v5991
        %v5994 = vsub.s32 4, %v5970
        %v5995 = vsel %vm5910, %v5994, %v5970
        %v5996 = vsel %vm5909, %v2580, %v5993
        %v5997 = vsel %vm5909, 0, %v5995
        %v5998 = vcosq.f32.pop %v5996
        %v5999 = vsinq.f32.pop %v5996
        %vm6000 = vweird.f32 %v2580
        %v6001 = vand.u32 %v5997, 3
        %vm6002 = vcmp.lt.s32.totalorder %v6001, 2
        %vm6003 = vcmp.eq.s32.totalorder %v6001, 0
        %v6004 = vxor.u32 %v5999, 2147483648
        %v6005 = vsel %vm6003, %v5998, %v6004
        %vm6006 = vcmp.eq.s32.totalorder %v6001, 2
        %v6007 = vxor.u32 %v5998, 2147483648
        %v6008 = vsel %vm6006, %v6007, %v5999
        %v6009 = vsel %vm6002, %v6005, %v6008
        %v6010 = vsel %vm6000, nan, %v6009
        %v6011 = vand.u32 2147483647, %v2581
        %vm6012 = vcmp.le.f32.partialorder %v6011, 0.7853982
        %vm6013 = vcmp.lt.s32.totalorder %v2581, 0
        %v6014 = vand.u32 %v2581, 2139095040
        %v6015 = vshrl.u32 %v6014, 23
        %v6016 = vsub.s32 %v6015, 127
        %v6017 = vand.u32 2147483647, %v2581
        %v6018 = vand.u32 %v6017, 8388607
        %v6019 = vor.u32 %v6018, 8388608
        %v6020 = vsub.s32 0, %v6019
        %v6021 = vadd.s32 %v6016, 1
        %vm6022 = vcmp.gt.s32.totalorder %v6021, 0
        %v6023 = vsel %vm6022, %v6021, 0
        %v6024 = vshrl.u32 %v6023, 5
        %v6025 = vand.u32 %v6023, 31
        %v6026 = vsub.s32 32, %v6025
        %v6027 = vshrl.u32 683565275, %v6026
        %v6028 = vshll.u32 683565275, %v6025
        %v6029 = vshrl.u32 2475754826, %v6026
        %v6030 = vor.u32 %v6028, %v6029
        %v6031 = vshll.u32 2475754826, %v6025
        %v6032 = vshrl.u32 2131351028, %v6026
        %v6033 = vor.u32 %v6031, %v6032
        %v6034 = vshll.u32 2131351028, %v6025
        %v6035 = vshrl.u32 2102212464, %v6026
        %v6036 = vor.u32 %v6034, %v6035
        %v6037 = vshll.u32 2102212464, %v6025
        %v6038 = vshrl.u32 920167782, %v6026
        %v6039 = vor.u32 %v6037, %v6038
        %v6040 = vshll.u32 920167782, %v6025
        %v6041 = vshrl.u32 1326507024, %v6026
        %v6042 = vor.u32 %v6040, %v6041
        %vm6043 = vcmp.lt.s32.totalorder %v6024, 1
        %vm6044 = vcmp.lt.s32.totalorder %v6024, 2
        %vm6045 = vcmp.lt.s32.totalorder %v6024, 3
        %vm6046 = vcmp.lt.s32.totalorder %v6024, 4
        %v6047 = vsel %vm6043, %v6027, %v6030
        %v6048 = vsel %vm6046, %v6036, 2102212464
        %v6049 = vsel %vm6045, %v6033, %v6048
        %v6050 = vsel %vm6044, %v6047, %v6049
        %v6051 = vsel %vm6043, %v6030, %v6033
        %v6052 = vsel %vm6046, %v6039, 920167782
        %v6053 = vsel %vm6045, %v6036, %v6052
        %v6054 = vsel %vm6044, %v6051, %v6053
        %v6055 = vsel %vm6043, %v6033, %v6036
        %v6056 = vsel %vm6046, %v6042, 1326507024
        %v6057 = vsel %vm6045, %v6039, %v6056
        %v6058 = vsel %vm6044, %v6055, %v6057
        %v6059 = vshll.u32 %v6019, 8
        %v6060 = vmul.u32.u64.compose %v6059, %v6058
        %v6061 = vextract.low.u32 %v6060
        %v6062 = vextract.high.u32 %v6060
        %v6063 = vmul.u32.u64.compose %v6059, %v6054
        %v6064 = vextract.low.u32 %v6063
        %v6065 = vextract.high.u32 %v6063
        %v6066 = vmul.u32 %v6059, %v6050
        %v6067 = vadd.s32 %v6062, %v6064
        %vm6068 = vc.u32 %v6062, %v6064
        %v6069 = vadd.s32 %v6065, 1
        %v6070 = vsel %vm6068, %v6069, %v6065
        %v6071 = vadd.s32 %v6066, %v6070
        %v6072 = vadd.s32 %v6071, 536870912
        %v6073 = vshrl.u32 %v6072, 30
        %v6074 = vshll.u32 %v6073, 30
        %v6075 = vsub.s32 %v6071, %v6074
        %vm6076 = vcmp.lt.s32.totalorder %v6075, 0
        %v6077 = vsub.s32 0, %v6075
        %v6078 = vsel %vm6076, %v6077, %v6075
        %v6079 = vclz %v6078
        %v6080 = vsub.s32 %v6079, 2
        %vm6081 = vcmp.gt.s32.totalorder 0, %v6080
        %v6082 = vsel %vm6081, 0, %v6080
        %v6083 = vsub.s32 32, %v6082
        %v6084 = vshll.u32 %v6075, %v6082
        %v6085 = vshrl.u32 %v6067, %v6083
        %v6086 = vor.u32 %v6084, %v6085
        %v6087 = vsub.s32 4294967266, %v6082
        %v6088 = vadd.s32 %v6087, 127
        %v6089 = vshll.u32 %v6088, 23
        %v6090 = vor.u32 4788187, %v6089
        %v6091 = vand.u32 2147483647, %v6090
        %v6093 = vcvt.s32.f32 %v6086
        %v6094 = vmul.f32 %v6093, %v6091
        %v6095 = vxor.u32 %v6094, 2147483648
        %v6096 = vsel %vm6013, %v6095, %v6094
        %v6097 = vsub.s32 4, %v6073
        %v6098 = vsel %vm6013, %v6097, %v6073
        %v6099 = vsel %vm6012, %v2581, %v6096
        %v6100 = vsel %vm6012, 0, %v6098
        %v6101 = vcosq.f32.pop %v6099
        %v6102 = vsinq.f32.pop %v6099
        %vm6103 = vweird.f32 %v2581
        %v6104 = vand.u32 %v6100, 3
        %vm6105 = vcmp.lt.s32.totalorder %v6104, 2
        %vm6106 = vcmp.eq.s32.totalorder %v6104, 0
        %v6107 = vxor.u32 %v6102, 2147483648
        %v6108 = vsel %vm6106, %v6101, %v6107
        %vm6109 = vcmp.eq.s32.totalorder %v6104, 2
        %v6110 = vxor.u32 %v6101, 2147483648
        %v6111 = vsel %vm6109, %v6110, %v6102
        %v6112 = vsel %vm6105, %v6108, %v6111
        %v6113 = vsel %vm6103, nan, %v6112
        %v6114 = vand.u32 2147483647, %v2582
        %vm6115 = vcmp.le.f32.partialorder %v6114, 0.7853982
        %vm6116 = vcmp.lt.s32.totalorder %v2582, 0
        %v6117 = vand.u32 %v2582, 2139095040
        %v6118 = vshrl.u32 %v6117, 23
        %v6119 = vsub.s32 %v6118, 127
        %v6120 = vand.u32 2147483647, %v2582
        %v6121 = vand.u32 %v6120, 8388607
        %v6122 = vor.u32 %v6121, 8388608
        %v6123 = vsub.s32 0, %v6122
        %v6124 = vadd.s32 %v6119, 1
        %vm6125 = vcmp.gt.s32.totalorder %v6124, 0
        %v6126 = vsel %vm6125, %v6124, 0
        %v6127 = vshrl.u32 %v6126, 5
        %v6128 = vand.u32 %v6126, 31
        %v6129 = vsub.s32 32, %v6128
        %v6130 = vshrl.u32 683565275, %v6129
        %v6131 = vshll.u32 683565275, %v6128
        %v6132 = vshrl.u32 2475754826, %v6129
        %v6133 = vor.u32 %v6131, %v6132
        %v6134 = vshll.u32 2475754826, %v6128
        %v6135 = vshrl.u32 2131351028, %v6129
        %v6136 = vor.u32 %v6134, %v6135
        %v6137 = vshll.u32 2131351028, %v6128
        %v6138 = vshrl.u32 2102212464, %v6129
        %v6139 = vor.u32 %v6137, %v6138
        %v6140 = vshll.u32 2102212464, %v6128
        %v6141 = vshrl.u32 920167782, %v6129
        %v6142 = vor.u32 %v6140, %v6141
        %v6143 = vshll.u32 920167782, %v6128
        %v6144 = vshrl.u32 1326507024, %v6129
        %v6145 = vor.u32 %v6143, %v6144
        %vm6146 = vcmp.lt.s32.totalorder %v6127, 1
        %vm6147 = vcmp.lt.s32.totalorder %v6127, 2
        %vm6148 = vcmp.lt.s32.totalorder %v6127, 3
        %vm6149 = vcmp.lt.s32.totalorder %v6127, 4
        %v6150 = vsel %vm6146, %v6130, %v6133
        %v6151 = vsel %vm6149, %v6139, 2102212464
        %v6152 = vsel %vm6148, %v6136, %v6151
        %v6153 = vsel %vm6147, %v6150, %v6152
        %v6154 = vsel %vm6146, %v6133, %v6136
        %v6155 = vsel %vm6149, %v6142, 920167782
        %v6156 = vsel %vm6148, %v6139, %v6155
        %v6157 = vsel %vm6147, %v6154, %v6156
        %v6158 = vsel %vm6146, %v6136, %v6139
        %v6159 = vsel %vm6149, %v6145, 1326507024
        %v6160 = vsel %vm6148, %v6142, %v6159
        %v6161 = vsel %vm6147, %v6158, %v6160
        %v6162 = vshll.u32 %v6122, 8
        %v6163 = vmul.u32.u64.compose %v6162, %v6161
        %v6164 = vextract.low.u32 %v6163
        %v6165 = vextract.high.u32 %v6163
        %v6166 = vmul.u32.u64.compose %v6162, %v6157
        %v6167 = vextract.low.u32 %v6166
        %v6168 = vextract.high.u32 %v6166
        %v6169 = vmul.u32 %v6162, %v6153
        %v6170 = vadd.s32 %v6165, %v6167
        %vm6171 = vc.u32 %v6165, %v6167
        %v6172 = vadd.s32 %v6168, 1
        %v6173 = vsel %vm6171, %v6172, %v6168
        %v6174 = vadd.s32 %v6169, %v6173
        %v6175 = vadd.s32 %v6174, 536870912
        %v6176 = vshrl.u32 %v6175, 30
        %v6177 = vshll.u32 %v6176, 30
        %v6178 = vsub.s32 %v6174, %v6177
        %vm6179 = vcmp.lt.s32.totalorder %v6178, 0
        %v6180 = vsub.s32 0, %v6178
        %v6181 = vsel %vm6179, %v6180, %v6178
        %v6182 = vclz %v6181
        %v6183 = vsub.s32 %v6182, 2
        %vm6184 = vcmp.gt.s32.totalorder 0, %v6183
        %v6185 = vsel %vm6184, 0, %v6183
        %v6186 = vsub.s32 32, %v6185
        %v6187 = vshll.u32 %v6178, %v6185
        %v6188 = vshrl.u32 %v6170, %v6186
        %v6189 = vor.u32 %v6187, %v6188
        %v6190 = vsub.s32 4294967266, %v6185
        %v6191 = vadd.s32 %v6190, 127
        %v6192 = vshll.u32 %v6191, 23
        %v6193 = vor.u32 4788187, %v6192
        %v6194 = vand.u32 2147483647, %v6193
        %v6196 = vcvt.s32.f32 %v6189
        %v6197 = vmul.f32 %v6196, %v6194
        %v6198 = vxor.u32 %v6197, 2147483648
        %v6199 = vsel %vm6116, %v6198, %v6197
        %v6200 = vsub.s32 4, %v6176
        %v6201 = vsel %vm6116, %v6200, %v6176
        %v6202 = vsel %vm6115, %v2582, %v6199
        %v6203 = vsel %vm6115, 0, %v6201
        %v6204 = vcosq.f32.pop %v6202
        %v6205 = vsinq.f32.pop %v6202
        %vm6206 = vweird.f32 %v2582
        %v6207 = vand.u32 %v6203, 3
        %vm6208 = vcmp.lt.s32.totalorder %v6207, 2
        %vm6209 = vcmp.eq.s32.totalorder %v6207, 0
        %v6210 = vxor.u32 %v6205, 2147483648
        %v6211 = vsel %vm6209, %v6204, %v6210
        %vm6212 = vcmp.eq.s32.totalorder %v6207, 2
        %v6213 = vxor.u32 %v6204, 2147483648
        %v6214 = vsel %vm6212, %v6213, %v6205
        %v6215 = vsel %vm6208, %v6211, %v6214
        %v6216 = vsel %vm6206, nan, %v6215
        %v6217 = vand.u32 2147483647, %v2583
        %vm6218 = vcmp.le.f32.partialorder %v6217, 0.7853982
        %vm6219 = vcmp.lt.s32.totalorder %v2583, 0
        %v6220 = vand.u32 %v2583, 2139095040
        %v6221 = vshrl.u32 %v6220, 23
        %v6222 = vsub.s32 %v6221, 127
        %v6223 = vand.u32 2147483647, %v2583
        %v6224 = vand.u32 %v6223, 8388607
        %v6225 = vor.u32 %v6224, 8388608
        %v6226 = vsub.s32 0, %v6225
        %v6227 = vadd.s32 %v6222, 1
        %vm6228 = vcmp.gt.s32.totalorder %v6227, 0
        %v6229 = vsel %vm6228, %v6227, 0
        %v6230 = vshrl.u32 %v6229, 5
        %v6231 = vand.u32 %v6229, 31
        %v6232 = vsub.s32 32, %v6231
        %v6233 = vshrl.u32 683565275, %v6232
        %v6234 = vshll.u32 683565275, %v6231
        %v6235 = vshrl.u32 2475754826, %v6232
        %v6236 = vor.u32 %v6234, %v6235
        %v6237 = vshll.u32 2475754826, %v6231
        %v6238 = vshrl.u32 2131351028, %v6232
        %v6239 = vor.u32 %v6237, %v6238
        %v6240 = vshll.u32 2131351028, %v6231
        %v6241 = vshrl.u32 2102212464, %v6232
        %v6242 = vor.u32 %v6240, %v6241
        %v6243 = vshll.u32 2102212464, %v6231
        %v6244 = vshrl.u32 920167782, %v6232
        %v6245 = vor.u32 %v6243, %v6244
        %v6246 = vshll.u32 920167782, %v6231
        %v6247 = vshrl.u32 1326507024, %v6232
        %v6248 = vor.u32 %v6246, %v6247
        %vm6249 = vcmp.lt.s32.totalorder %v6230, 1
        %vm6250 = vcmp.lt.s32.totalorder %v6230, 2
        %vm6251 = vcmp.lt.s32.totalorder %v6230, 3
        %vm6252 = vcmp.lt.s32.totalorder %v6230, 4
        %v6253 = vsel %vm6249, %v6233, %v6236
        %v6254 = vsel %vm6252, %v6242, 2102212464
        %v6255 = vsel %vm6251, %v6239, %v6254
        %v6256 = vsel %vm6250, %v6253, %v6255
        %v6257 = vsel %vm6249, %v6236, %v6239
        %v6258 = vsel %vm6252, %v6245, 920167782
        %v6259 = vsel %vm6251, %v6242, %v6258
        %v6260 = vsel %vm6250, %v6257, %v6259
        %v6261 = vsel %vm6249, %v6239, %v6242
        %v6262 = vsel %vm6252, %v6248, 1326507024
        %v6263 = vsel %vm6251, %v6245, %v6262
        %v6264 = vsel %vm6250, %v6261, %v6263
        %v6265 = vshll.u32 %v6225, 8
        %v6266 = vmul.u32.u64.compose %v6265, %v6264
        %v6267 = vextract.low.u32 %v6266
        %v6268 = vextract.high.u32 %v6266
        %v6269 = vmul.u32.u64.compose %v6265, %v6260
        %v6270 = vextract.low.u32 %v6269
        %v6271 = vextract.high.u32 %v6269
        %v6272 = vmul.u32 %v6265, %v6256
        %v6273 = vadd.s32 %v6268, %v6270
        %vm6274 = vc.u32 %v6268, %v6270
        %v6275 = vadd.s32 %v6271, 1
        %v6276 = vsel %vm6274, %v6275, %v6271
        %v6277 = vadd.s32 %v6272, %v6276
        %v6278 = vadd.s32 %v6277, 536870912
        %v6279 = vshrl.u32 %v6278, 30
        %v6280 = vshll.u32 %v6279, 30
        %v6281 = vsub.s32 %v6277, %v6280
        %vm6282 = vcmp.lt.s32.totalorder %v6281, 0
        %v6283 = vsub.s32 0, %v6281
        %v6284 = vsel %vm6282, %v6283, %v6281
        %v6285 = vclz %v6284
        %v6286 = vsub.s32 %v6285, 2
        %vm6287 = vcmp.gt.s32.totalorder 0, %v6286
        %v6288 = vsel %vm6287, 0, %v6286
        %v6289 = vsub.s32 32, %v6288
        %v6290 = vshll.u32 %v6281, %v6288
        %v6291 = vshrl.u32 %v6273, %v6289
        %v6292 = vor.u32 %v6290, %v6291
        %v6293 = vsub.s32 4294967266, %v6288
        %v6294 = vadd.s32 %v6293, 127
        %v6295 = vshll.u32 %v6294, 23
        %v6296 = vor.u32 4788187, %v6295
        %v6297 = vand.u32 2147483647, %v6296
        %v6299 = vcvt.s32.f32 %v6292
        %v6300 = vmul.f32 %v6299, %v6297
        %v6301 = vxor.u32 %v6300, 2147483648
        %v6302 = vsel %vm6219, %v6301, %v6300
        %v6303 = vsub.s32 4, %v6279
        %v6304 = vsel %vm6219, %v6303, %v6279
        %v6305 = vsel %vm6218, %v2583, %v6302
        %v6306 = vsel %vm6218, 0, %v6304
        %v6307 = vcosq.f32.pop %v6305
        %v6308 = vsinq.f32.pop %v6305
        %vm6309 = vweird.f32 %v2583
        %v6310 = vand.u32 %v6306, 3
        %vm6311 = vcmp.lt.s32.totalorder %v6310, 2
        %vm6312 = vcmp.eq.s32.totalorder %v6310, 0
        %v6313 = vxor.u32 %v6308, 2147483648
        %v6314 = vsel %vm6312, %v6307, %v6313
        %vm6315 = vcmp.eq.s32.totalorder %v6310, 2
        %v6316 = vxor.u32 %v6307, 2147483648
        %v6317 = vsel %vm6315, %v6316, %v6308
        %v6318 = vsel %vm6311, %v6314, %v6317
        %v6319 = vsel %vm6309, nan, %v6318
        %v6320 = vand.u32 2147483647, %v2584
        %vm6321 = vcmp.le.f32.partialorder %v6320, 0.7853982
        %vm6322 = vcmp.lt.s32.totalorder %v2584, 0
        %v6323 = vand.u32 %v2584, 2139095040
        %v6324 = vshrl.u32 %v6323, 23
        %v6325 = vsub.s32 %v6324, 127
        %v6326 = vand.u32 2147483647, %v2584
        %v6327 = vand.u32 %v6326, 8388607
        %v6328 = vor.u32 %v6327, 8388608
        %v6329 = vsub.s32 0, %v6328
        %v6330 = vadd.s32 %v6325, 1
        %vm6331 = vcmp.gt.s32.totalorder %v6330, 0
        %v6332 = vsel %vm6331, %v6330, 0
        %v6333 = vshrl.u32 %v6332, 5
        %v6334 = vand.u32 %v6332, 31
        %v6335 = vsub.s32 32, %v6334
        %v6336 = vshrl.u32 683565275, %v6335
        %v6337 = vshll.u32 683565275, %v6334
        %v6338 = vshrl.u32 2475754826, %v6335
        %v6339 = vor.u32 %v6337, %v6338
        %v6340 = vshll.u32 2475754826, %v6334
        %v6341 = vshrl.u32 2131351028, %v6335
        %v6342 = vor.u32 %v6340, %v6341
        %v6343 = vshll.u32 2131351028, %v6334
        %v6344 = vshrl.u32 2102212464, %v6335
        %v6345 = vor.u32 %v6343, %v6344
        %v6346 = vshll.u32 2102212464, %v6334
        %v6347 = vshrl.u32 920167782, %v6335
        %v6348 = vor.u32 %v6346, %v6347
        %v6349 = vshll.u32 920167782, %v6334
        %v6350 = vshrl.u32 1326507024, %v6335
        %v6351 = vor.u32 %v6349, %v6350
        %vm6352 = vcmp.lt.s32.totalorder %v6333, 1
        %vm6353 = vcmp.lt.s32.totalorder %v6333, 2
        %vm6354 = vcmp.lt.s32.totalorder %v6333, 3
        %vm6355 = vcmp.lt.s32.totalorder %v6333, 4
        %v6356 = vsel %vm6352, %v6336, %v6339
        %v6357 = vsel %vm6355, %v6345, 2102212464
        %v6358 = vsel %vm6354, %v6342, %v6357
        %v6359 = vsel %vm6353, %v6356, %v6358
        %v6360 = vsel %vm6352, %v6339, %v6342
        %v6361 = vsel %vm6355, %v6348, 920167782
        %v6362 = vsel %vm6354, %v6345, %v6361
        %v6363 = vsel %vm6353, %v6360, %v6362
        %v6364 = vsel %vm6352, %v6342, %v6345
        %v6365 = vsel %vm6355, %v6351, 1326507024
        %v6366 = vsel %vm6354, %v6348, %v6365
        %v6367 = vsel %vm6353, %v6364, %v6366
        %v6368 = vshll.u32 %v6328, 8
        %v6369 = vmul.u32.u64.compose %v6368, %v6367
        %v6370 = vextract.low.u32 %v6369
        %v6371 = vextract.high.u32 %v6369
        %v6372 = vmul.u32.u64.compose %v6368, %v6363
        %v6373 = vextract.low.u32 %v6372
        %v6374 = vextract.high.u32 %v6372
        %v6375 = vmul.u32 %v6368, %v6359
        %v6376 = vadd.s32 %v6371, %v6373
        %vm6377 = vc.u32 %v6371, %v6373
        %v6378 = vadd.s32 %v6374, 1
        %v6379 = vsel %vm6377, %v6378, %v6374
        %v6380 = vadd.s32 %v6375, %v6379
        %v6381 = vadd.s32 %v6380, 536870912
        %v6382 = vshrl.u32 %v6381, 30
        %v6383 = vshll.u32 %v6382, 30
        %v6384 = vsub.s32 %v6380, %v6383
        %vm6385 = vcmp.lt.s32.totalorder %v6384, 0
        %v6386 = vsub.s32 0, %v6384
        %v6387 = vsel %vm6385, %v6386, %v6384
        %v6388 = vclz %v6387
        %v6389 = vsub.s32 %v6388, 2
        %vm6390 = vcmp.gt.s32.totalorder 0, %v6389
        %v6391 = vsel %vm6390, 0, %v6389
        %v6392 = vsub.s32 32, %v6391
        %v6393 = vshll.u32 %v6384, %v6391
        %v6394 = vshrl.u32 %v6376, %v6392
        %v6395 = vor.u32 %v6393, %v6394
        %v6396 = vsub.s32 4294967266, %v6391
        %v6397 = vadd.s32 %v6396, 127
        %v6398 = vshll.u32 %v6397, 23
        %v6399 = vor.u32 4788187, %v6398
        %v6400 = vand.u32 2147483647, %v6399
        %v6402 = vcvt.s32.f32 %v6395
        %v6403 = vmul.f32 %v6402, %v6400
        %v6404 = vxor.u32 %v6403, 2147483648
        %v6405 = vsel %vm6322, %v6404, %v6403
        %v6406 = vsub.s32 4, %v6382
        %v6407 = vsel %vm6322, %v6406, %v6382
        %v6408 = vsel %vm6321, %v2584, %v6405
        %v6409 = vsel %vm6321, 0, %v6407
        %v6410 = vcosq.f32.pop %v6408
        %v6411 = vsinq.f32.pop %v6408
        %vm6412 = vweird.f32 %v2584
        %v6413 = vand.u32 %v6409, 3
        %vm6414 = vcmp.lt.s32.totalorder %v6413, 2
        %vm6415 = vcmp.eq.s32.totalorder %v6413, 0
        %v6416 = vxor.u32 %v6411, 2147483648
        %v6417 = vsel %vm6415, %v6410, %v6416
        %vm6418 = vcmp.eq.s32.totalorder %v6413, 2
        %v6419 = vxor.u32 %v6410, 2147483648
        %v6420 = vsel %vm6418, %v6419, %v6411
        %v6421 = vsel %vm6414, %v6417, %v6420
        %v6422 = vsel %vm6412, nan, %v6421
        %v6423 = vand.u32 2147483647, %v2585
        %vm6424 = vcmp.le.f32.partialorder %v6423, 0.7853982
        %vm6425 = vcmp.lt.s32.totalorder %v2585, 0
        %v6426 = vand.u32 %v2585, 2139095040
        %v6427 = vshrl.u32 %v6426, 23
        %v6428 = vsub.s32 %v6427, 127
        %v6429 = vand.u32 2147483647, %v2585
        %v6430 = vand.u32 %v6429, 8388607
        %v6431 = vor.u32 %v6430, 8388608
        %v6432 = vsub.s32 0, %v6431
        %v6433 = vadd.s32 %v6428, 1
        %vm6434 = vcmp.gt.s32.totalorder %v6433, 0
        %v6435 = vsel %vm6434, %v6433, 0
        %v6436 = vshrl.u32 %v6435, 5
        %v6437 = vand.u32 %v6435, 31
        %v6438 = vsub.s32 32, %v6437
        %v6439 = vshrl.u32 683565275, %v6438
        %v6440 = vshll.u32 683565275, %v6437
        %v6441 = vshrl.u32 2475754826, %v6438
        %v6442 = vor.u32 %v6440, %v6441
        %v6443 = vshll.u32 2475754826, %v6437
        %v6444 = vshrl.u32 2131351028, %v6438
        %v6445 = vor.u32 %v6443, %v6444
        %v6446 = vshll.u32 2131351028, %v6437
        %v6447 = vshrl.u32 2102212464, %v6438
        %v6448 = vor.u32 %v6446, %v6447
        %v6449 = vshll.u32 2102212464, %v6437
        %v6450 = vshrl.u32 920167782, %v6438
        %v6451 = vor.u32 %v6449, %v6450
        %v6452 = vshll.u32 920167782, %v6437
        %v6453 = vshrl.u32 1326507024, %v6438
        %v6454 = vor.u32 %v6452, %v6453
        %vm6455 = vcmp.lt.s32.totalorder %v6436, 1
        %vm6456 = vcmp.lt.s32.totalorder %v6436, 2
        %vm6457 = vcmp.lt.s32.totalorder %v6436, 3
        %vm6458 = vcmp.lt.s32.totalorder %v6436, 4
        %v6459 = vsel %vm6455, %v6439, %v6442
        %v6460 = vsel %vm6458, %v6448, 2102212464
        %v6461 = vsel %vm6457, %v6445, %v6460
        %v6462 = vsel %vm6456, %v6459, %v6461
        %v6463 = vsel %vm6455, %v6442, %v6445
        %v6464 = vsel %vm6458, %v6451, 920167782
        %v6465 = vsel %vm6457, %v6448, %v6464
        %v6466 = vsel %vm6456, %v6463, %v6465
        %v6467 = vsel %vm6455, %v6445, %v6448
        %v6468 = vsel %vm6458, %v6454, 1326507024
        %v6469 = vsel %vm6457, %v6451, %v6468
        %v6470 = vsel %vm6456, %v6467, %v6469
        %v6471 = vshll.u32 %v6431, 8
        %v6472 = vmul.u32.u64.compose %v6471, %v6470
        %v6473 = vextract.low.u32 %v6472
        %v6474 = vextract.high.u32 %v6472
        %v6475 = vmul.u32.u64.compose %v6471, %v6466
        %v6476 = vextract.low.u32 %v6475
        %v6477 = vextract.high.u32 %v6475
        %v6478 = vmul.u32 %v6471, %v6462
        %v6479 = vadd.s32 %v6474, %v6476
        %vm6480 = vc.u32 %v6474, %v6476
        %v6481 = vadd.s32 %v6477, 1
        %v6482 = vsel %vm6480, %v6481, %v6477
        %v6483 = vadd.s32 %v6478, %v6482
        %v6484 = vadd.s32 %v6483, 536870912
        %v6485 = vshrl.u32 %v6484, 30
        %v6486 = vshll.u32 %v6485, 30
        %v6487 = vsub.s32 %v6483, %v6486
        %vm6488 = vcmp.lt.s32.totalorder %v6487, 0
        %v6489 = vsub.s32 0, %v6487
        %v6490 = vsel %vm6488, %v6489, %v6487
        %v6491 = vclz %v6490
        %v6492 = vsub.s32 %v6491, 2
        %vm6493 = vcmp.gt.s32.totalorder 0, %v6492
        %v6494 = vsel %vm6493, 0, %v6492
        %v6495 = vsub.s32 32, %v6494
        %v6496 = vshll.u32 %v6487, %v6494
        %v6497 = vshrl.u32 %v6479, %v6495
        %v6498 = vor.u32 %v6496, %v6497
        %v6499 = vsub.s32 4294967266, %v6494
        %v6500 = vadd.s32 %v6499, 127
        %v6501 = vshll.u32 %v6500, 23
        %v6502 = vor.u32 4788187, %v6501
        %v6503 = vand.u32 2147483647, %v6502
        %v6505 = vcvt.s32.f32 %v6498
        %v6506 = vmul.f32 %v6505, %v6503
        %v6507 = vxor.u32 %v6506, 2147483648
        %v6508 = vsel %vm6425, %v6507, %v6506
        %v6509 = vsub.s32 4, %v6485
        %v6510 = vsel %vm6425, %v6509, %v6485
        %v6511 = vsel %vm6424, %v2585, %v6508
        %v6512 = vsel %vm6424, 0, %v6510
        %v6513 = vcosq.f32.pop %v6511
        %v6514 = vsinq.f32.pop %v6511
        %vm6515 = vweird.f32 %v2585
        %v6516 = vand.u32 %v6512, 3
        %vm6517 = vcmp.lt.s32.totalorder %v6516, 2
        %vm6518 = vcmp.eq.s32.totalorder %v6516, 0
        %v6519 = vxor.u32 %v6514, 2147483648
        %v6520 = vsel %vm6518, %v6513, %v6519
        %vm6521 = vcmp.eq.s32.totalorder %v6516, 2
        %v6522 = vxor.u32 %v6513, 2147483648
        %v6523 = vsel %vm6521, %v6522, %v6514
        %v6524 = vsel %vm6517, %v6520, %v6523
        %v6525 = vsel %vm6515, nan, %v6524
        %v6526 = vand.u32 2147483647, %v2586
        %vm6527 = vcmp.le.f32.partialorder %v6526, 0.7853982
        %vm6528 = vcmp.lt.s32.totalorder %v2586, 0
        %v6529 = vand.u32 %v2586, 2139095040
        %v6530 = vshrl.u32 %v6529, 23
        %v6531 = vsub.s32 %v6530, 127
        %v6532 = vand.u32 2147483647, %v2586
        %v6533 = vand.u32 %v6532, 8388607
        %v6534 = vor.u32 %v6533, 8388608
        %v6535 = vsub.s32 0, %v6534
        %v6536 = vadd.s32 %v6531, 1
        %vm6537 = vcmp.gt.s32.totalorder %v6536, 0
        %v6538 = vsel %vm6537, %v6536, 0
        %v6539 = vshrl.u32 %v6538, 5
        %v6540 = vand.u32 %v6538, 31
        %v6541 = vsub.s32 32, %v6540
        %v6542 = vshrl.u32 683565275, %v6541
        %v6543 = vshll.u32 683565275, %v6540
        %v6544 = vshrl.u32 2475754826, %v6541
        %v6545 = vor.u32 %v6543, %v6544
        %v6546 = vshll.u32 2475754826, %v6540
        %v6547 = vshrl.u32 2131351028, %v6541
        %v6548 = vor.u32 %v6546, %v6547
        %v6549 = vshll.u32 2131351028, %v6540
        %v6550 = vshrl.u32 2102212464, %v6541
        %v6551 = vor.u32 %v6549, %v6550
        %v6552 = vshll.u32 2102212464, %v6540
        %v6553 = vshrl.u32 920167782, %v6541
        %v6554 = vor.u32 %v6552, %v6553
        %v6555 = vshll.u32 920167782, %v6540
        %v6556 = vshrl.u32 1326507024, %v6541
        %v6557 = vor.u32 %v6555, %v6556
        %vm6558 = vcmp.lt.s32.totalorder %v6539, 1
        %vm6559 = vcmp.lt.s32.totalorder %v6539, 2
        %vm6560 = vcmp.lt.s32.totalorder %v6539, 3
        %vm6561 = vcmp.lt.s32.totalorder %v6539, 4
        %v6562 = vsel %vm6558, %v6542, %v6545
        %v6563 = vsel %vm6561, %v6551, 2102212464
        %v6564 = vsel %vm6560, %v6548, %v6563
        %v6565 = vsel %vm6559, %v6562, %v6564
        %v6566 = vsel %vm6558, %v6545, %v6548
        %v6567 = vsel %vm6561, %v6554, 920167782
        %v6568 = vsel %vm6560, %v6551, %v6567
        %v6569 = vsel %vm6559, %v6566, %v6568
        %v6570 = vsel %vm6558, %v6548, %v6551
        %v6571 = vsel %vm6561, %v6557, 1326507024
        %v6572 = vsel %vm6560, %v6554, %v6571
        %v6573 = vsel %vm6559, %v6570, %v6572
        %v6574 = vshll.u32 %v6534, 8
        %v6575 = vmul.u32.u64.compose %v6574, %v6573
        %v6576 = vextract.low.u32 %v6575
        %v6577 = vextract.high.u32 %v6575
        %v6578 = vmul.u32.u64.compose %v6574, %v6569
        %v6579 = vextract.low.u32 %v6578
        %v6580 = vextract.high.u32 %v6578
        %v6581 = vmul.u32 %v6574, %v6565
        %v6582 = vadd.s32 %v6577, %v6579
        %vm6583 = vc.u32 %v6577, %v6579
        %v6584 = vadd.s32 %v6580, 1
        %v6585 = vsel %vm6583, %v6584, %v6580
        %v6586 = vadd.s32 %v6581, %v6585
        %v6587 = vadd.s32 %v6586, 536870912
        %v6588 = vshrl.u32 %v6587, 30
        %v6589 = vshll.u32 %v6588, 30
        %v6590 = vsub.s32 %v6586, %v6589
        %vm6591 = vcmp.lt.s32.totalorder %v6590, 0
        %v6592 = vsub.s32 0, %v6590
        %v6593 = vsel %vm6591, %v6592, %v6590
        %v6594 = vclz %v6593
        %v6595 = vsub.s32 %v6594, 2
        %vm6596 = vcmp.gt.s32.totalorder 0, %v6595
        %v6597 = vsel %vm6596, 0, %v6595
        %v6598 = vsub.s32 32, %v6597
        %v6599 = vshll.u32 %v6590, %v6597
        %v6600 = vshrl.u32 %v6582, %v6598
        %v6601 = vor.u32 %v6599, %v6600
        %v6602 = vsub.s32 4294967266, %v6597
        %v6603 = vadd.s32 %v6602, 127
        %v6604 = vshll.u32 %v6603, 23
        %v6605 = vor.u32 4788187, %v6604
        %v6606 = vand.u32 2147483647, %v6605
        %v6608 = vcvt.s32.f32 %v6601
        %v6609 = vmul.f32 %v6608, %v6606
        %v6610 = vxor.u32 %v6609, 2147483648
        %v6611 = vsel %vm6528, %v6610, %v6609
        %v6612 = vsub.s32 4, %v6588
        %v6613 = vsel %vm6528, %v6612, %v6588
        %v6614 = vsel %vm6527, %v2586, %v6611
        %v6615 = vsel %vm6527, 0, %v6613
        %v6616 = vcosq.f32.pop %v6614
        %v6617 = vsinq.f32.pop %v6614
        %vm6618 = vweird.f32 %v2586
        %v6619 = vand.u32 %v6615, 3
        %vm6620 = vcmp.lt.s32.totalorder %v6619, 2
        %vm6621 = vcmp.eq.s32.totalorder %v6619, 0
        %v6622 = vxor.u32 %v6617, 2147483648
        %v6623 = vsel %vm6621, %v6616, %v6622
        %vm6624 = vcmp.eq.s32.totalorder %v6619, 2
        %v6625 = vxor.u32 %v6616, 2147483648
        %v6626 = vsel %vm6624, %v6625, %v6617
        %v6627 = vsel %vm6620, %v6623, %v6626
        %v6628 = vsel %vm6618, nan, %v6627
        %v6629 = vand.u32 2147483647, %v2587
        %vm6630 = vcmp.le.f32.partialorder %v6629, 0.7853982
        %vm6631 = vcmp.lt.s32.totalorder %v2587, 0
        %v6632 = vand.u32 %v2587, 2139095040
        %v6633 = vshrl.u32 %v6632, 23
        %v6634 = vsub.s32 %v6633, 127
        %v6635 = vand.u32 2147483647, %v2587
        %v6636 = vand.u32 %v6635, 8388607
        %v6637 = vor.u32 %v6636, 8388608
        %v6638 = vsub.s32 0, %v6637
        %v6639 = vadd.s32 %v6634, 1
        %vm6640 = vcmp.gt.s32.totalorder %v6639, 0
        %v6641 = vsel %vm6640, %v6639, 0
        %v6642 = vshrl.u32 %v6641, 5
        %v6643 = vand.u32 %v6641, 31
        %v6644 = vsub.s32 32, %v6643
        %v6645 = vshrl.u32 683565275, %v6644
        %v6646 = vshll.u32 683565275, %v6643
        %v6647 = vshrl.u32 2475754826, %v6644
        %v6648 = vor.u32 %v6646, %v6647
        %v6649 = vshll.u32 2475754826, %v6643
        %v6650 = vshrl.u32 2131351028, %v6644
        %v6651 = vor.u32 %v6649, %v6650
        %v6652 = vshll.u32 2131351028, %v6643
        %v6653 = vshrl.u32 2102212464, %v6644
        %v6654 = vor.u32 %v6652, %v6653
        %v6655 = vshll.u32 2102212464, %v6643
        %v6656 = vshrl.u32 920167782, %v6644
        %v6657 = vor.u32 %v6655, %v6656
        %v6658 = vshll.u32 920167782, %v6643
        %v6659 = vshrl.u32 1326507024, %v6644
        %v6660 = vor.u32 %v6658, %v6659
        %vm6661 = vcmp.lt.s32.totalorder %v6642, 1
        %vm6662 = vcmp.lt.s32.totalorder %v6642, 2
        %vm6663 = vcmp.lt.s32.totalorder %v6642, 3
        %vm6664 = vcmp.lt.s32.totalorder %v6642, 4
        %v6665 = vsel %vm6661, %v6645, %v6648
        %v6666 = vsel %vm6664, %v6654, 2102212464
        %v6667 = vsel %vm6663, %v6651, %v6666
        %v6668 = vsel %vm6662, %v6665, %v6667
        %v6669 = vsel %vm6661, %v6648, %v6651
        %v6670 = vsel %vm6664, %v6657, 920167782
        %v6671 = vsel %vm6663, %v6654, %v6670
        %v6672 = vsel %vm6662, %v6669, %v6671
        %v6673 = vsel %vm6661, %v6651, %v6654
        %v6674 = vsel %vm6664, %v6660, 1326507024
        %v6675 = vsel %vm6663, %v6657, %v6674
        %v6676 = vsel %vm6662, %v6673, %v6675
        %v6677 = vshll.u32 %v6637, 8
        %v6678 = vmul.u32.u64.compose %v6677, %v6676
        %v6679 = vextract.low.u32 %v6678
        %v6680 = vextract.high.u32 %v6678
        %v6681 = vmul.u32.u64.compose %v6677, %v6672
        %v6682 = vextract.low.u32 %v6681
        %v6683 = vextract.high.u32 %v6681
        %v6684 = vmul.u32 %v6677, %v6668
        %v6685 = vadd.s32 %v6680, %v6682
        %vm6686 = vc.u32 %v6680, %v6682
        %v6687 = vadd.s32 %v6683, 1
        %v6688 = vsel %vm6686, %v6687, %v6683
        %v6689 = vadd.s32 %v6684, %v6688
        %v6690 = vadd.s32 %v6689, 536870912
        %v6691 = vshrl.u32 %v6690, 30
        %v6692 = vshll.u32 %v6691, 30
        %v6693 = vsub.s32 %v6689, %v6692
        %vm6694 = vcmp.lt.s32.totalorder %v6693, 0
        %v6695 = vsub.s32 0, %v6693
        %v6696 = vsel %vm6694, %v6695, %v6693
        %v6697 = vclz %v6696
        %v6698 = vsub.s32 %v6697, 2
        %vm6699 = vcmp.gt.s32.totalorder 0, %v6698
        %v6700 = vsel %vm6699, 0, %v6698
        %v6701 = vsub.s32 32, %v6700
        %v6702 = vshll.u32 %v6693, %v6700
        %v6703 = vshrl.u32 %v6685, %v6701
        %v6704 = vor.u32 %v6702, %v6703
        %v6705 = vsub.s32 4294967266, %v6700
        %v6706 = vadd.s32 %v6705, 127
        %v6707 = vshll.u32 %v6706, 23
        %v6708 = vor.u32 4788187, %v6707
        %v6709 = vand.u32 2147483647, %v6708
        %v6711 = vcvt.s32.f32 %v6704
        %v6712 = vmul.f32 %v6711, %v6709
        %v6713 = vxor.u32 %v6712, 2147483648
        %v6714 = vsel %vm6631, %v6713, %v6712
        %v6715 = vsub.s32 4, %v6691
        %v6716 = vsel %vm6631, %v6715, %v6691
        %v6717 = vsel %vm6630, %v2587, %v6714
        %v6718 = vsel %vm6630, 0, %v6716
        %v6719 = vcosq.f32.pop %v6717
        %v6720 = vsinq.f32.pop %v6717
        %vm6721 = vweird.f32 %v2587
        %v6722 = vand.u32 %v6718, 3
        %vm6723 = vcmp.lt.s32.totalorder %v6722, 2
        %vm6724 = vcmp.eq.s32.totalorder %v6722, 0
        %v6725 = vxor.u32 %v6720, 2147483648
        %v6726 = vsel %vm6724, %v6719, %v6725
        %vm6727 = vcmp.eq.s32.totalorder %v6722, 2
        %v6728 = vxor.u32 %v6719, 2147483648
        %v6729 = vsel %vm6727, %v6728, %v6720
        %v6730 = vsel %vm6723, %v6726, %v6729
        %v6731 = vsel %vm6721, nan, %v6730
        %v6732 = vand.u32 2147483647, %v3420
        %vm6733 = vcmp.le.f32.partialorder %v6732, 0.7853982
        %vm6734 = vcmp.lt.s32.totalorder %v3420, 0
        %v6735 = vand.u32 %v3420, 2139095040
        %v6736 = vshrl.u32 %v6735, 23
        %v6737 = vsub.s32 %v6736, 127
        %v6738 = vand.u32 2147483647, %v3420
        %v6739 = vand.u32 %v6738, 8388607
        %v6740 = vor.u32 %v6739, 8388608
        %v6741 = vsub.s32 0, %v6740
        %v6742 = vadd.s32 %v6737, 1
        %vm6743 = vcmp.gt.s32.totalorder %v6742, 0
        %v6744 = vsel %vm6743, %v6742, 0
        %v6745 = vshrl.u32 %v6744, 5
        %v6746 = vand.u32 %v6744, 31
        %v6747 = vsub.s32 32, %v6746
        %v6748 = vshrl.u32 683565275, %v6747
        %v6749 = vshll.u32 683565275, %v6746
        %v6750 = vshrl.u32 2475754826, %v6747
        %v6751 = vor.u32 %v6749, %v6750
        %v6752 = vshll.u32 2475754826, %v6746
        %v6753 = vshrl.u32 2131351028, %v6747
        %v6754 = vor.u32 %v6752, %v6753
        %v6755 = vshll.u32 2131351028, %v6746
        %v6756 = vshrl.u32 2102212464, %v6747
        %v6757 = vor.u32 %v6755, %v6756
        %v6758 = vshll.u32 2102212464, %v6746
        %v6759 = vshrl.u32 920167782, %v6747
        %v6760 = vor.u32 %v6758, %v6759
        %v6761 = vshll.u32 920167782, %v6746
        %v6762 = vshrl.u32 1326507024, %v6747
        %v6763 = vor.u32 %v6761, %v6762
        %vm6764 = vcmp.lt.s32.totalorder %v6745, 1
        %vm6765 = vcmp.lt.s32.totalorder %v6745, 2
        %vm6766 = vcmp.lt.s32.totalorder %v6745, 3
        %vm6767 = vcmp.lt.s32.totalorder %v6745, 4
        %v6768 = vsel %vm6764, %v6748, %v6751
        %v6769 = vsel %vm6767, %v6757, 2102212464
        %v6770 = vsel %vm6766, %v6754, %v6769
        %v6771 = vsel %vm6765, %v6768, %v6770
        %v6772 = vsel %vm6764, %v6751, %v6754
        %v6773 = vsel %vm6767, %v6760, 920167782
        %v6774 = vsel %vm6766, %v6757, %v6773
        %v6775 = vsel %vm6765, %v6772, %v6774
        %v6776 = vsel %vm6764, %v6754, %v6757
        %v6777 = vsel %vm6767, %v6763, 1326507024
        %v6778 = vsel %vm6766, %v6760, %v6777
        %v6779 = vsel %vm6765, %v6776, %v6778
        %v6780 = vshll.u32 %v6740, 8
        %v6781 = vmul.u32.u64.compose %v6780, %v6779
        %v6782 = vextract.low.u32 %v6781
        %v6783 = vextract.high.u32 %v6781
        %v6784 = vmul.u32.u64.compose %v6780, %v6775
        %v6785 = vextract.low.u32 %v6784
        %v6786 = vextract.high.u32 %v6784
        %v6787 = vmul.u32 %v6780, %v6771
        %v6788 = vadd.s32 %v6783, %v6785
        %vm6789 = vc.u32 %v6783, %v6785
        %v6790 = vadd.s32 %v6786, 1
        %v6791 = vsel %vm6789, %v6790, %v6786
        %v6792 = vadd.s32 %v6787, %v6791
        %v6793 = vadd.s32 %v6792, 536870912
        %v6794 = vshrl.u32 %v6793, 30
        %v6795 = vshll.u32 %v6794, 30
        %v6796 = vsub.s32 %v6792, %v6795
        %vm6797 = vcmp.lt.s32.totalorder %v6796, 0
        %v6798 = vsub.s32 0, %v6796
        %v6799 = vsel %vm6797, %v6798, %v6796
        %v6800 = vclz %v6799
        %v6801 = vsub.s32 %v6800, 2
        %vm6802 = vcmp.gt.s32.totalorder 0, %v6801
        %v6803 = vsel %vm6802, 0, %v6801
        %v6804 = vsub.s32 32, %v6803
        %v6805 = vshll.u32 %v6796, %v6803
        %v6806 = vshrl.u32 %v6788, %v6804
        %v6807 = vor.u32 %v6805, %v6806
        %v6808 = vsub.s32 4294967266, %v6803
        %v6809 = vadd.s32 %v6808, 127
        %v6810 = vshll.u32 %v6809, 23
        %v6811 = vor.u32 4788187, %v6810
        %v6812 = vand.u32 2147483647, %v6811
        %v6814 = vcvt.s32.f32 %v6807
        %v6815 = vmul.f32 %v6814, %v6812
        %v6816 = vxor.u32 %v6815, 2147483648
        %v6817 = vsel %vm6734, %v6816, %v6815
        %v6818 = vsub.s32 4, %v6794
        %v6819 = vsel %vm6734, %v6818, %v6794
        %v6820 = vsel %vm6733, %v3420, %v6817
        %v6821 = vsel %vm6733, 0, %v6819
        %v6822 = vcosq.f32.pop %v6820
        %v6823 = vsinq.f32.pop %v6820
        %vm6824 = vweird.f32 %v3420
        %v6825 = vand.u32 %v6821, 3
        %vm6826 = vcmp.lt.s32.totalorder %v6825, 2
        %vm6827 = vcmp.eq.s32.totalorder %v6825, 0
        %v6828 = vxor.u32 %v6823, 2147483648
        %v6829 = vsel %vm6827, %v6822, %v6828
        %vm6830 = vcmp.eq.s32.totalorder %v6825, 2
        %v6831 = vxor.u32 %v6822, 2147483648
        %v6832 = vsel %vm6830, %v6831, %v6823
        %v6833 = vsel %vm6826, %v6829, %v6832
        %v6834 = vsel %vm6824, nan, %v6833
        %v6835 = vand.u32 2147483647, %v3421
        %vm6836 = vcmp.le.f32.partialorder %v6835, 0.7853982
        %vm6837 = vcmp.lt.s32.totalorder %v3421, 0
        %v6838 = vand.u32 %v3421, 2139095040
        %v6839 = vshrl.u32 %v6838, 23
        %v6840 = vsub.s32 %v6839, 127
        %v6841 = vand.u32 2147483647, %v3421
        %v6842 = vand.u32 %v6841, 8388607
        %v6843 = vor.u32 %v6842, 8388608
        %v6844 = vsub.s32 0, %v6843
        %v6845 = vadd.s32 %v6840, 1
        %vm6846 = vcmp.gt.s32.totalorder %v6845, 0
        %v6847 = vsel %vm6846, %v6845, 0
        %v6848 = vshrl.u32 %v6847, 5
        %v6849 = vand.u32 %v6847, 31
        %v6850 = vsub.s32 32, %v6849
        %v6851 = vshrl.u32 683565275, %v6850
        %v6852 = vshll.u32 683565275, %v6849
        %v6853 = vshrl.u32 2475754826, %v6850
        %v6854 = vor.u32 %v6852, %v6853
        %v6855 = vshll.u32 2475754826, %v6849
        %v6856 = vshrl.u32 2131351028, %v6850
        %v6857 = vor.u32 %v6855, %v6856
        %v6858 = vshll.u32 2131351028, %v6849
        %v6859 = vshrl.u32 2102212464, %v6850
        %v6860 = vor.u32 %v6858, %v6859
        %v6861 = vshll.u32 2102212464, %v6849
        %v6862 = vshrl.u32 920167782, %v6850
        %v6863 = vor.u32 %v6861, %v6862
        %v6864 = vshll.u32 920167782, %v6849
        %v6865 = vshrl.u32 1326507024, %v6850
        %v6866 = vor.u32 %v6864, %v6865
        %vm6867 = vcmp.lt.s32.totalorder %v6848, 1
        %vm6868 = vcmp.lt.s32.totalorder %v6848, 2
        %vm6869 = vcmp.lt.s32.totalorder %v6848, 3
        %vm6870 = vcmp.lt.s32.totalorder %v6848, 4
        %v6871 = vsel %vm6867, %v6851, %v6854
        %v6872 = vsel %vm6870, %v6860, 2102212464
        %v6873 = vsel %vm6869, %v6857, %v6872
        %v6874 = vsel %vm6868, %v6871, %v6873
        %v6875 = vsel %vm6867, %v6854, %v6857
        %v6876 = vsel %vm6870, %v6863, 920167782
        %v6877 = vsel %vm6869, %v6860, %v6876
        %v6878 = vsel %vm6868, %v6875, %v6877
        %v6879 = vsel %vm6867, %v6857, %v6860
        %v6880 = vsel %vm6870, %v6866, 1326507024
        %v6881 = vsel %vm6869, %v6863, %v6880
        %v6882 = vsel %vm6868, %v6879, %v6881
        %v6883 = vshll.u32 %v6843, 8
        %v6884 = vmul.u32.u64.compose %v6883, %v6882
        %v6885 = vextract.low.u32 %v6884
        %v6886 = vextract.high.u32 %v6884
        %v6887 = vmul.u32.u64.compose %v6883, %v6878
        %v6888 = vextract.low.u32 %v6887
        %v6889 = vextract.high.u32 %v6887
        %v6890 = vmul.u32 %v6883, %v6874
        %v6891 = vadd.s32 %v6886, %v6888
        %vm6892 = vc.u32 %v6886, %v6888
        %v6893 = vadd.s32 %v6889, 1
        %v6894 = vsel %vm6892, %v6893, %v6889
        %v6895 = vadd.s32 %v6890, %v6894
        %v6896 = vadd.s32 %v6895, 536870912
        %v6897 = vshrl.u32 %v6896, 30
        %v6898 = vshll.u32 %v6897, 30
        %v6899 = vsub.s32 %v6895, %v6898
        %vm6900 = vcmp.lt.s32.totalorder %v6899, 0
        %v6901 = vsub.s32 0, %v6899
        %v6902 = vsel %vm6900, %v6901, %v6899
        %v6903 = vclz %v6902
        %v6904 = vsub.s32 %v6903, 2
        %vm6905 = vcmp.gt.s32.totalorder 0, %v6904
        %v6906 = vsel %vm6905, 0, %v6904
        %v6907 = vsub.s32 32, %v6906
        %v6908 = vshll.u32 %v6899, %v6906
        %v6909 = vshrl.u32 %v6891, %v6907
        %v6910 = vor.u32 %v6908, %v6909
        %v6911 = vsub.s32 4294967266, %v6906
        %v6912 = vadd.s32 %v6911, 127
        %v6913 = vshll.u32 %v6912, 23
        %v6914 = vor.u32 4788187, %v6913
        %v6915 = vand.u32 2147483647, %v6914
        %v6917 = vcvt.s32.f32 %v6910
        %v6918 = vmul.f32 %v6917, %v6915
        %v6919 = vxor.u32 %v6918, 2147483648
        %v6920 = vsel %vm6837, %v6919, %v6918
        %v6921 = vsub.s32 4, %v6897
        %v6922 = vsel %vm6837, %v6921, %v6897
        %v6923 = vsel %vm6836, %v3421, %v6920
        %v6924 = vsel %vm6836, 0, %v6922
        %v6925 = vcosq.f32.pop %v6923
        %v6926 = vsinq.f32.pop %v6923
        %vm6927 = vweird.f32 %v3421
        %v6928 = vand.u32 %v6924, 3
        %vm6929 = vcmp.lt.s32.totalorder %v6928, 2
        %vm6930 = vcmp.eq.s32.totalorder %v6928, 0
        %v6931 = vxor.u32 %v6926, 2147483648
        %v6932 = vsel %vm6930, %v6925, %v6931
        %vm6933 = vcmp.eq.s32.totalorder %v6928, 2
        %v6934 = vxor.u32 %v6925, 2147483648
        %v6935 = vsel %vm6933, %v6934, %v6926
        %v6936 = vsel %vm6929, %v6932, %v6935
        %v6937 = vsel %vm6927, nan, %v6936
        %v6938 = vand.u32 2147483647, %v3422
        %vm6939 = vcmp.le.f32.partialorder %v6938, 0.7853982
        %vm6940 = vcmp.lt.s32.totalorder %v3422, 0
        %v6941 = vand.u32 %v3422, 2139095040
        %v6942 = vshrl.u32 %v6941, 23
        %v6943 = vsub.s32 %v6942, 127
        %v6944 = vand.u32 2147483647, %v3422
        %v6945 = vand.u32 %v6944, 8388607
        %v6946 = vor.u32 %v6945, 8388608
        %v6947 = vsub.s32 0, %v6946
        %v6948 = vadd.s32 %v6943, 1
        %vm6949 = vcmp.gt.s32.totalorder %v6948, 0
        %v6950 = vsel %vm6949, %v6948, 0
        %v6951 = vshrl.u32 %v6950, 5
        %v6952 = vand.u32 %v6950, 31
        %v6953 = vsub.s32 32, %v6952
        %v6954 = vshrl.u32 683565275, %v6953
        %v6955 = vshll.u32 683565275, %v6952
        %v6956 = vshrl.u32 2475754826, %v6953
        %v6957 = vor.u32 %v6955, %v6956
        %v6958 = vshll.u32 2475754826, %v6952
        %v6959 = vshrl.u32 2131351028, %v6953
        %v6960 = vor.u32 %v6958, %v6959
        %v6961 = vshll.u32 2131351028, %v6952
        %v6962 = vshrl.u32 2102212464, %v6953
        %v6963 = vor.u32 %v6961, %v6962
        %v6964 = vshll.u32 2102212464, %v6952
        %v6965 = vshrl.u32 920167782, %v6953
        %v6966 = vor.u32 %v6964, %v6965
        %v6967 = vshll.u32 920167782, %v6952
        %v6968 = vshrl.u32 1326507024, %v6953
        %v6969 = vor.u32 %v6967, %v6968
        %vm6970 = vcmp.lt.s32.totalorder %v6951, 1
        %vm6971 = vcmp.lt.s32.totalorder %v6951, 2
        %vm6972 = vcmp.lt.s32.totalorder %v6951, 3
        %vm6973 = vcmp.lt.s32.totalorder %v6951, 4
        %v6974 = vsel %vm6970, %v6954, %v6957
        %v6975 = vsel %vm6973, %v6963, 2102212464
        %v6976 = vsel %vm6972, %v6960, %v6975
        %v6977 = vsel %vm6971, %v6974, %v6976
        %v6978 = vsel %vm6970, %v6957, %v6960
        %v6979 = vsel %vm6973, %v6966, 920167782
        %v6980 = vsel %vm6972, %v6963, %v6979
        %v6981 = vsel %vm6971, %v6978, %v6980
        %v6982 = vsel %vm6970, %v6960, %v6963
        %v6983 = vsel %vm6973, %v6969, 1326507024
        %v6984 = vsel %vm6972, %v6966, %v6983
        %v6985 = vsel %vm6971, %v6982, %v6984
        %v6986 = vshll.u32 %v6946, 8
        %v6987 = vmul.u32.u64.compose %v6986, %v6985
        %v6988 = vextract.low.u32 %v6987
        %v6989 = vextract.high.u32 %v6987
        %v6990 = vmul.u32.u64.compose %v6986, %v6981
        %v6991 = vextract.low.u32 %v6990
        %v6992 = vextract.high.u32 %v6990
        %v6993 = vmul.u32 %v6986, %v6977
        %v6994 = vadd.s32 %v6989, %v6991
        %vm6995 = vc.u32 %v6989, %v6991
        %v6996 = vadd.s32 %v6992, 1
        %v6997 = vsel %vm6995, %v6996, %v6992
        %v6998 = vadd.s32 %v6993, %v6997
        %v6999 = vadd.s32 %v6998, 536870912
        %v7000 = vshrl.u32 %v6999, 30
        %v7001 = vshll.u32 %v7000, 30
        %v7002 = vsub.s32 %v6998, %v7001
        %vm7003 = vcmp.lt.s32.totalorder %v7002, 0
        %v7004 = vsub.s32 0, %v7002
        %v7005 = vsel %vm7003, %v7004, %v7002
        %v7006 = vclz %v7005
        %v7007 = vsub.s32 %v7006, 2
        %vm7008 = vcmp.gt.s32.totalorder 0, %v7007
        %v7009 = vsel %vm7008, 0, %v7007
        %v7010 = vsub.s32 32, %v7009
        %v7011 = vshll.u32 %v7002, %v7009
        %v7012 = vshrl.u32 %v6994, %v7010
        %v7013 = vor.u32 %v7011, %v7012
        %v7014 = vsub.s32 4294967266, %v7009
        %v7015 = vadd.s32 %v7014, 127
        %v7016 = vshll.u32 %v7015, 23
        %v7017 = vor.u32 4788187, %v7016
        %v7018 = vand.u32 2147483647, %v7017
        %v7020 = vcvt.s32.f32 %v7013
        %v7021 = vmul.f32 %v7020, %v7018
        %v7022 = vxor.u32 %v7021, 2147483648
        %v7023 = vsel %vm6940, %v7022, %v7021
        %v7024 = vsub.s32 4, %v7000
        %v7025 = vsel %vm6940, %v7024, %v7000
        %v7026 = vsel %vm6939, %v3422, %v7023
        %v7027 = vsel %vm6939, 0, %v7025
        %v7028 = vcosq.f32.pop %v7026
        %v7029 = vsinq.f32.pop %v7026
        %vm7030 = vweird.f32 %v3422
        %v7031 = vand.u32 %v7027, 3
        %vm7032 = vcmp.lt.s32.totalorder %v7031, 2
        %vm7033 = vcmp.eq.s32.totalorder %v7031, 0
        %v7034 = vxor.u32 %v7029, 2147483648
        %v7035 = vsel %vm7033, %v7028, %v7034
        %vm7036 = vcmp.eq.s32.totalorder %v7031, 2
        %v7037 = vxor.u32 %v7028, 2147483648
        %v7038 = vsel %vm7036, %v7037, %v7029
        %v7039 = vsel %vm7032, %v7035, %v7038
        %v7040 = vsel %vm7030, nan, %v7039
        %v7041 = vand.u32 2147483647, %v3423
        %vm7042 = vcmp.le.f32.partialorder %v7041, 0.7853982
        %vm7043 = vcmp.lt.s32.totalorder %v3423, 0
        %v7044 = vand.u32 %v3423, 2139095040
        %v7045 = vshrl.u32 %v7044, 23
        %v7046 = vsub.s32 %v7045, 127
        %v7047 = vand.u32 2147483647, %v3423
        %v7048 = vand.u32 %v7047, 8388607
        %v7049 = vor.u32 %v7048, 8388608
        %v7050 = vsub.s32 0, %v7049
        %v7051 = vadd.s32 %v7046, 1
        %vm7052 = vcmp.gt.s32.totalorder %v7051, 0
        %v7053 = vsel %vm7052, %v7051, 0
        %v7054 = vshrl.u32 %v7053, 5
        %v7055 = vand.u32 %v7053, 31
        %v7056 = vsub.s32 32, %v7055
        %v7057 = vshrl.u32 683565275, %v7056
        %v7058 = vshll.u32 683565275, %v7055
        %v7059 = vshrl.u32 2475754826, %v7056
        %v7060 = vor.u32 %v7058, %v7059
        %v7061 = vshll.u32 2475754826, %v7055
        %v7062 = vshrl.u32 2131351028, %v7056
        %v7063 = vor.u32 %v7061, %v7062
        %v7064 = vshll.u32 2131351028, %v7055
        %v7065 = vshrl.u32 2102212464, %v7056
        %v7066 = vor.u32 %v7064, %v7065
        %v7067 = vshll.u32 2102212464, %v7055
        %v7068 = vshrl.u32 920167782, %v7056
        %v7069 = vor.u32 %v7067, %v7068
        %v7070 = vshll.u32 920167782, %v7055
        %v7071 = vshrl.u32 1326507024, %v7056
        %v7072 = vor.u32 %v7070, %v7071
        %vm7073 = vcmp.lt.s32.totalorder %v7054, 1
        %vm7074 = vcmp.lt.s32.totalorder %v7054, 2
        %vm7075 = vcmp.lt.s32.totalorder %v7054, 3
        %vm7076 = vcmp.lt.s32.totalorder %v7054, 4
        %v7077 = vsel %vm7073, %v7057, %v7060
        %v7078 = vsel %vm7076, %v7066, 2102212464
        %v7079 = vsel %vm7075, %v7063, %v7078
        %v7080 = vsel %vm7074, %v7077, %v7079
        %v7081 = vsel %vm7073, %v7060, %v7063
        %v7082 = vsel %vm7076, %v7069, 920167782
        %v7083 = vsel %vm7075, %v7066, %v7082
        %v7084 = vsel %vm7074, %v7081, %v7083
        %v7085 = vsel %vm7073, %v7063, %v7066
        %v7086 = vsel %vm7076, %v7072, 1326507024
        %v7087 = vsel %vm7075, %v7069, %v7086
        %v7088 = vsel %vm7074, %v7085, %v7087
        %v7089 = vshll.u32 %v7049, 8
        %v7090 = vmul.u32.u64.compose %v7089, %v7088
        %v7091 = vextract.low.u32 %v7090
        %v7092 = vextract.high.u32 %v7090
        %v7093 = vmul.u32.u64.compose %v7089, %v7084
        %v7094 = vextract.low.u32 %v7093
        %v7095 = vextract.high.u32 %v7093
        %v7096 = vmul.u32 %v7089, %v7080
        %v7097 = vadd.s32 %v7092, %v7094
        %vm7098 = vc.u32 %v7092, %v7094
        %v7099 = vadd.s32 %v7095, 1
        %v7100 = vsel %vm7098, %v7099, %v7095
        %v7101 = vadd.s32 %v7096, %v7100
        %v7102 = vadd.s32 %v7101, 536870912
        %v7103 = vshrl.u32 %v7102, 30
        %v7104 = vshll.u32 %v7103, 30
        %v7105 = vsub.s32 %v7101, %v7104
        %vm7106 = vcmp.lt.s32.totalorder %v7105, 0
        %v7107 = vsub.s32 0, %v7105
        %v7108 = vsel %vm7106, %v7107, %v7105
        %v7109 = vclz %v7108
        %v7110 = vsub.s32 %v7109, 2
        %vm7111 = vcmp.gt.s32.totalorder 0, %v7110
        %v7112 = vsel %vm7111, 0, %v7110
        %v7113 = vsub.s32 32, %v7112
        %v7114 = vshll.u32 %v7105, %v7112
        %v7115 = vshrl.u32 %v7097, %v7113
        %v7116 = vor.u32 %v7114, %v7115
        %v7117 = vsub.s32 4294967266, %v7112
        %v7118 = vadd.s32 %v7117, 127
        %v7119 = vshll.u32 %v7118, 23
        %v7120 = vor.u32 4788187, %v7119
        %v7121 = vand.u32 2147483647, %v7120
        %v7123 = vcvt.s32.f32 %v7116
        %v7124 = vmul.f32 %v7123, %v7121
        %v7125 = vxor.u32 %v7124, 2147483648
        %v7126 = vsel %vm7043, %v7125, %v7124
        %v7127 = vsub.s32 4, %v7103
        %v7128 = vsel %vm7043, %v7127, %v7103
        %v7129 = vsel %vm7042, %v3423, %v7126
        %v7130 = vsel %vm7042, 0, %v7128
        %v7131 = vcosq.f32.pop %v7129
        %v7132 = vsinq.f32.pop %v7129
        %vm7133 = vweird.f32 %v3423
        %v7134 = vand.u32 %v7130, 3
        %vm7135 = vcmp.lt.s32.totalorder %v7134, 2
        %vm7136 = vcmp.eq.s32.totalorder %v7134, 0
        %v7137 = vxor.u32 %v7132, 2147483648
        %v7138 = vsel %vm7136, %v7131, %v7137
        %vm7139 = vcmp.eq.s32.totalorder %v7134, 2
        %v7140 = vxor.u32 %v7131, 2147483648
        %v7141 = vsel %vm7139, %v7140, %v7132
        %v7142 = vsel %vm7135, %v7138, %v7141
        %v7143 = vsel %vm7133, nan, %v7142
        %v7144 = vand.u32 2147483647, %v3424
        %vm7145 = vcmp.le.f32.partialorder %v7144, 0.7853982
        %vm7146 = vcmp.lt.s32.totalorder %v3424, 0
        %v7147 = vand.u32 %v3424, 2139095040
        %v7148 = vshrl.u32 %v7147, 23
        %v7149 = vsub.s32 %v7148, 127
        %v7150 = vand.u32 2147483647, %v3424
        %v7151 = vand.u32 %v7150, 8388607
        %v7152 = vor.u32 %v7151, 8388608
        %v7153 = vsub.s32 0, %v7152
        %v7154 = vadd.s32 %v7149, 1
        %vm7155 = vcmp.gt.s32.totalorder %v7154, 0
        %v7156 = vsel %vm7155, %v7154, 0
        %v7157 = vshrl.u32 %v7156, 5
        %v7158 = vand.u32 %v7156, 31
        %v7159 = vsub.s32 32, %v7158
        %v7160 = vshrl.u32 683565275, %v7159
        %v7161 = vshll.u32 683565275, %v7158
        %v7162 = vshrl.u32 2475754826, %v7159
        %v7163 = vor.u32 %v7161, %v7162
        %v7164 = vshll.u32 2475754826, %v7158
        %v7165 = vshrl.u32 2131351028, %v7159
        %v7166 = vor.u32 %v7164, %v7165
        %v7167 = vshll.u32 2131351028, %v7158
        %v7168 = vshrl.u32 2102212464, %v7159
        %v7169 = vor.u32 %v7167, %v7168
        %v7170 = vshll.u32 2102212464, %v7158
        %v7171 = vshrl.u32 920167782, %v7159
        %v7172 = vor.u32 %v7170, %v7171
        %v7173 = vshll.u32 920167782, %v7158
        %v7174 = vshrl.u32 1326507024, %v7159
        %v7175 = vor.u32 %v7173, %v7174
        %vm7176 = vcmp.lt.s32.totalorder %v7157, 1
        %vm7177 = vcmp.lt.s32.totalorder %v7157, 2
        %vm7178 = vcmp.lt.s32.totalorder %v7157, 3
        %vm7179 = vcmp.lt.s32.totalorder %v7157, 4
        %v7180 = vsel %vm7176, %v7160, %v7163
        %v7181 = vsel %vm7179, %v7169, 2102212464
        %v7182 = vsel %vm7178, %v7166, %v7181
        %v7183 = vsel %vm7177, %v7180, %v7182
        %v7184 = vsel %vm7176, %v7163, %v7166
        %v7185 = vsel %vm7179, %v7172, 920167782
        %v7186 = vsel %vm7178, %v7169, %v7185
        %v7187 = vsel %vm7177, %v7184, %v7186
        %v7188 = vsel %vm7176, %v7166, %v7169
        %v7189 = vsel %vm7179, %v7175, 1326507024
        %v7190 = vsel %vm7178, %v7172, %v7189
        %v7191 = vsel %vm7177, %v7188, %v7190
        %v7192 = vshll.u32 %v7152, 8
        %v7193 = vmul.u32.u64.compose %v7192, %v7191
        %v7194 = vextract.low.u32 %v7193
        %v7195 = vextract.high.u32 %v7193
        %v7196 = vmul.u32.u64.compose %v7192, %v7187
        %v7197 = vextract.low.u32 %v7196
        %v7198 = vextract.high.u32 %v7196
        %v7199 = vmul.u32 %v7192, %v7183
        %v7200 = vadd.s32 %v7195, %v7197
        %vm7201 = vc.u32 %v7195, %v7197
        %v7202 = vadd.s32 %v7198, 1
        %v7203 = vsel %vm7201, %v7202, %v7198
        %v7204 = vadd.s32 %v7199, %v7203
        %v7205 = vadd.s32 %v7204, 536870912
        %v7206 = vshrl.u32 %v7205, 30
        %v7207 = vshll.u32 %v7206, 30
        %v7208 = vsub.s32 %v7204, %v7207
        %vm7209 = vcmp.lt.s32.totalorder %v7208, 0
        %v7210 = vsub.s32 0, %v7208
        %v7211 = vsel %vm7209, %v7210, %v7208
        %v7212 = vclz %v7211
        %v7213 = vsub.s32 %v7212, 2
        %vm7214 = vcmp.gt.s32.totalorder 0, %v7213
        %v7215 = vsel %vm7214, 0, %v7213
        %v7216 = vsub.s32 32, %v7215
        %v7217 = vshll.u32 %v7208, %v7215
        %v7218 = vshrl.u32 %v7200, %v7216
        %v7219 = vor.u32 %v7217, %v7218
        %v7220 = vsub.s32 4294967266, %v7215
        %v7221 = vadd.s32 %v7220, 127
        %v7222 = vshll.u32 %v7221, 23
        %v7223 = vor.u32 4788187, %v7222
        %v7224 = vand.u32 2147483647, %v7223
        %v7226 = vcvt.s32.f32 %v7219
        %v7227 = vmul.f32 %v7226, %v7224
        %v7228 = vxor.u32 %v7227, 2147483648
        %v7229 = vsel %vm7146, %v7228, %v7227
        %v7230 = vsub.s32 4, %v7206
        %v7231 = vsel %vm7146, %v7230, %v7206
        %v7232 = vsel %vm7145, %v3424, %v7229
        %v7233 = vsel %vm7145, 0, %v7231
        %v7234 = vcosq.f32.pop %v7232
        %v7235 = vsinq.f32.pop %v7232
        %vm7236 = vweird.f32 %v3424
        %v7237 = vand.u32 %v7233, 3
        %vm7238 = vcmp.lt.s32.totalorder %v7237, 2
        %vm7239 = vcmp.eq.s32.totalorder %v7237, 0
        %v7240 = vxor.u32 %v7235, 2147483648
        %v7241 = vsel %vm7239, %v7234, %v7240
        %vm7242 = vcmp.eq.s32.totalorder %v7237, 2
        %v7243 = vxor.u32 %v7234, 2147483648
        %v7244 = vsel %vm7242, %v7243, %v7235
        %v7245 = vsel %vm7238, %v7241, %v7244
        %v7246 = vsel %vm7236, nan, %v7245
        %v7247 = vand.u32 2147483647, %v3425
        %vm7248 = vcmp.le.f32.partialorder %v7247, 0.7853982
        %vm7249 = vcmp.lt.s32.totalorder %v3425, 0
        %v7250 = vand.u32 %v3425, 2139095040
        %v7251 = vshrl.u32 %v7250, 23
        %v7252 = vsub.s32 %v7251, 127
        %v7253 = vand.u32 2147483647, %v3425
        %v7254 = vand.u32 %v7253, 8388607
        %v7255 = vor.u32 %v7254, 8388608
        %v7256 = vsub.s32 0, %v7255
        %v7257 = vadd.s32 %v7252, 1
        %vm7258 = vcmp.gt.s32.totalorder %v7257, 0
        %v7259 = vsel %vm7258, %v7257, 0
        %v7260 = vshrl.u32 %v7259, 5
        %v7261 = vand.u32 %v7259, 31
        %v7262 = vsub.s32 32, %v7261
        %v7263 = vshrl.u32 683565275, %v7262
        %v7264 = vshll.u32 683565275, %v7261
        %v7265 = vshrl.u32 2475754826, %v7262
        %v7266 = vor.u32 %v7264, %v7265
        %v7267 = vshll.u32 2475754826, %v7261
        %v7268 = vshrl.u32 2131351028, %v7262
        %v7269 = vor.u32 %v7267, %v7268
        %v7270 = vshll.u32 2131351028, %v7261
        %v7271 = vshrl.u32 2102212464, %v7262
        %v7272 = vor.u32 %v7270, %v7271
        %v7273 = vshll.u32 2102212464, %v7261
        %v7274 = vshrl.u32 920167782, %v7262
        %v7275 = vor.u32 %v7273, %v7274
        %v7276 = vshll.u32 920167782, %v7261
        %v7277 = vshrl.u32 1326507024, %v7262
        %v7278 = vor.u32 %v7276, %v7277
        %vm7279 = vcmp.lt.s32.totalorder %v7260, 1
        %vm7280 = vcmp.lt.s32.totalorder %v7260, 2
        %vm7281 = vcmp.lt.s32.totalorder %v7260, 3
        %vm7282 = vcmp.lt.s32.totalorder %v7260, 4
        %v7283 = vsel %vm7279, %v7263, %v7266
        %v7284 = vsel %vm7282, %v7272, 2102212464
        %v7285 = vsel %vm7281, %v7269, %v7284
        %v7286 = vsel %vm7280, %v7283, %v7285
        %v7287 = vsel %vm7279, %v7266, %v7269
        %v7288 = vsel %vm7282, %v7275, 920167782
        %v7289 = vsel %vm7281, %v7272, %v7288
        %v7290 = vsel %vm7280, %v7287, %v7289
        %v7291 = vsel %vm7279, %v7269, %v7272
        %v7292 = vsel %vm7282, %v7278, 1326507024
        %v7293 = vsel %vm7281, %v7275, %v7292
        %v7294 = vsel %vm7280, %v7291, %v7293
        %v7295 = vshll.u32 %v7255, 8
        %v7296 = vmul.u32.u64.compose %v7295, %v7294
        %v7297 = vextract.low.u32 %v7296
        %v7298 = vextract.high.u32 %v7296
        %v7299 = vmul.u32.u64.compose %v7295, %v7290
        %v7300 = vextract.low.u32 %v7299
        %v7301 = vextract.high.u32 %v7299
        %v7302 = vmul.u32 %v7295, %v7286
        %v7303 = vadd.s32 %v7298, %v7300
        %vm7304 = vc.u32 %v7298, %v7300
        %v7305 = vadd.s32 %v7301, 1
        %v7306 = vsel %vm7304, %v7305, %v7301
        %v7307 = vadd.s32 %v7302, %v7306
        %v7308 = vadd.s32 %v7307, 536870912
        %v7309 = vshrl.u32 %v7308, 30
        %v7310 = vshll.u32 %v7309, 30
        %v7311 = vsub.s32 %v7307, %v7310
        %vm7312 = vcmp.lt.s32.totalorder %v7311, 0
        %v7313 = vsub.s32 0, %v7311
        %v7314 = vsel %vm7312, %v7313, %v7311
        %v7315 = vclz %v7314
        %v7316 = vsub.s32 %v7315, 2
        %vm7317 = vcmp.gt.s32.totalorder 0, %v7316
        %v7318 = vsel %vm7317, 0, %v7316
        %v7319 = vsub.s32 32, %v7318
        %v7320 = vshll.u32 %v7311, %v7318
        %v7321 = vshrl.u32 %v7303, %v7319
        %v7322 = vor.u32 %v7320, %v7321
        %v7323 = vsub.s32 4294967266, %v7318
        %v7324 = vadd.s32 %v7323, 127
        %v7325 = vshll.u32 %v7324, 23
        %v7326 = vor.u32 4788187, %v7325
        %v7327 = vand.u32 2147483647, %v7326
        %v7329 = vcvt.s32.f32 %v7322
        %v7330 = vmul.f32 %v7329, %v7327
        %v7331 = vxor.u32 %v7330, 2147483648
        %v7332 = vsel %vm7249, %v7331, %v7330
        %v7333 = vsub.s32 4, %v7309
        %v7334 = vsel %vm7249, %v7333, %v7309
        %v7335 = vsel %vm7248, %v3425, %v7332
        %v7336 = vsel %vm7248, 0, %v7334
        %v7337 = vcosq.f32.pop %v7335
        %v7338 = vsinq.f32.pop %v7335
        %vm7339 = vweird.f32 %v3425
        %v7340 = vand.u32 %v7336, 3
        %vm7341 = vcmp.lt.s32.totalorder %v7340, 2
        %vm7342 = vcmp.eq.s32.totalorder %v7340, 0
        %v7343 = vxor.u32 %v7338, 2147483648
        %v7344 = vsel %vm7342, %v7337, %v7343
        %vm7345 = vcmp.eq.s32.totalorder %v7340, 2
        %v7346 = vxor.u32 %v7337, 2147483648
        %v7347 = vsel %vm7345, %v7346, %v7338
        %v7348 = vsel %vm7341, %v7344, %v7347
        %v7349 = vsel %vm7339, nan, %v7348
        %v7350 = vand.u32 2147483647, %v3426
        %vm7351 = vcmp.le.f32.partialorder %v7350, 0.7853982
        %vm7352 = vcmp.lt.s32.totalorder %v3426, 0
        %v7353 = vand.u32 %v3426, 2139095040
        %v7354 = vshrl.u32 %v7353, 23
        %v7355 = vsub.s32 %v7354, 127
        %v7356 = vand.u32 2147483647, %v3426
        %v7357 = vand.u32 %v7356, 8388607
        %v7358 = vor.u32 %v7357, 8388608
        %v7359 = vsub.s32 0, %v7358
        %v7360 = vadd.s32 %v7355, 1
        %vm7361 = vcmp.gt.s32.totalorder %v7360, 0
        %v7362 = vsel %vm7361, %v7360, 0
        %v7363 = vshrl.u32 %v7362, 5
        %v7364 = vand.u32 %v7362, 31
        %v7365 = vsub.s32 32, %v7364
        %v7366 = vshrl.u32 683565275, %v7365
        %v7367 = vshll.u32 683565275, %v7364
        %v7368 = vshrl.u32 2475754826, %v7365
        %v7369 = vor.u32 %v7367, %v7368
        %v7370 = vshll.u32 2475754826, %v7364
        %v7371 = vshrl.u32 2131351028, %v7365
        %v7372 = vor.u32 %v7370, %v7371
        %v7373 = vshll.u32 2131351028, %v7364
        %v7374 = vshrl.u32 2102212464, %v7365
        %v7375 = vor.u32 %v7373, %v7374
        %v7376 = vshll.u32 2102212464, %v7364
        %v7377 = vshrl.u32 920167782, %v7365
        %v7378 = vor.u32 %v7376, %v7377
        %v7379 = vshll.u32 920167782, %v7364
        %v7380 = vshrl.u32 1326507024, %v7365
        %v7381 = vor.u32 %v7379, %v7380
        %vm7382 = vcmp.lt.s32.totalorder %v7363, 1
        %vm7383 = vcmp.lt.s32.totalorder %v7363, 2
        %vm7384 = vcmp.lt.s32.totalorder %v7363, 3
        %vm7385 = vcmp.lt.s32.totalorder %v7363, 4
        %v7386 = vsel %vm7382, %v7366, %v7369
        %v7387 = vsel %vm7385, %v7375, 2102212464
        %v7388 = vsel %vm7384, %v7372, %v7387
        %v7389 = vsel %vm7383, %v7386, %v7388
        %v7390 = vsel %vm7382, %v7369, %v7372
        %v7391 = vsel %vm7385, %v7378, 920167782
        %v7392 = vsel %vm7384, %v7375, %v7391
        %v7393 = vsel %vm7383, %v7390, %v7392
        %v7394 = vsel %vm7382, %v7372, %v7375
        %v7395 = vsel %vm7385, %v7381, 1326507024
        %v7396 = vsel %vm7384, %v7378, %v7395
        %v7397 = vsel %vm7383, %v7394, %v7396
        %v7398 = vshll.u32 %v7358, 8
        %v7399 = vmul.u32.u64.compose %v7398, %v7397
        %v7400 = vextract.low.u32 %v7399
        %v7401 = vextract.high.u32 %v7399
        %v7402 = vmul.u32.u64.compose %v7398, %v7393
        %v7403 = vextract.low.u32 %v7402
        %v7404 = vextract.high.u32 %v7402
        %v7405 = vmul.u32 %v7398, %v7389
        %v7406 = vadd.s32 %v7401, %v7403
        %vm7407 = vc.u32 %v7401, %v7403
        %v7408 = vadd.s32 %v7404, 1
        %v7409 = vsel %vm7407, %v7408, %v7404
        %v7410 = vadd.s32 %v7405, %v7409
        %v7411 = vadd.s32 %v7410, 536870912
        %v7412 = vshrl.u32 %v7411, 30
        %v7413 = vshll.u32 %v7412, 30
        %v7414 = vsub.s32 %v7410, %v7413
        %vm7415 = vcmp.lt.s32.totalorder %v7414, 0
        %v7416 = vsub.s32 0, %v7414
        %v7417 = vsel %vm7415, %v7416, %v7414
        %v7418 = vclz %v7417
        %v7419 = vsub.s32 %v7418, 2
        %vm7420 = vcmp.gt.s32.totalorder 0, %v7419
        %v7421 = vsel %vm7420, 0, %v7419
        %v7422 = vsub.s32 32, %v7421
        %v7423 = vshll.u32 %v7414, %v7421
        %v7424 = vshrl.u32 %v7406, %v7422
        %v7425 = vor.u32 %v7423, %v7424
        %v7426 = vsub.s32 4294967266, %v7421
        %v7427 = vadd.s32 %v7426, 127
        %v7428 = vshll.u32 %v7427, 23
        %v7429 = vor.u32 4788187, %v7428
        %v7430 = vand.u32 2147483647, %v7429
        %v7432 = vcvt.s32.f32 %v7425
        %v7433 = vmul.f32 %v7432, %v7430
        %v7434 = vxor.u32 %v7433, 2147483648
        %v7435 = vsel %vm7352, %v7434, %v7433
        %v7436 = vsub.s32 4, %v7412
        %v7437 = vsel %vm7352, %v7436, %v7412
        %v7438 = vsel %vm7351, %v3426, %v7435
        %v7439 = vsel %vm7351, 0, %v7437
        %v7440 = vcosq.f32.pop %v7438
        %v7441 = vsinq.f32.pop %v7438
        %vm7442 = vweird.f32 %v3426
        %v7443 = vand.u32 %v7439, 3
        %vm7444 = vcmp.lt.s32.totalorder %v7443, 2
        %vm7445 = vcmp.eq.s32.totalorder %v7443, 0
        %v7446 = vxor.u32 %v7441, 2147483648
        %v7447 = vsel %vm7445, %v7440, %v7446
        %vm7448 = vcmp.eq.s32.totalorder %v7443, 2
        %v7449 = vxor.u32 %v7440, 2147483648
        %v7450 = vsel %vm7448, %v7449, %v7441
        %v7451 = vsel %vm7444, %v7447, %v7450
        %v7452 = vsel %vm7442, nan, %v7451
        %v7453 = vand.u32 2147483647, %v3427
        %vm7454 = vcmp.le.f32.partialorder %v7453, 0.7853982
        %vm7455 = vcmp.lt.s32.totalorder %v3427, 0
        %v7456 = vand.u32 %v3427, 2139095040
        %v7457 = vshrl.u32 %v7456, 23
        %v7458 = vsub.s32 %v7457, 127
        %v7459 = vand.u32 2147483647, %v3427
        %v7460 = vand.u32 %v7459, 8388607
        %v7461 = vor.u32 %v7460, 8388608
        %v7462 = vsub.s32 0, %v7461
        %v7463 = vadd.s32 %v7458, 1
        %vm7464 = vcmp.gt.s32.totalorder %v7463, 0
        %v7465 = vsel %vm7464, %v7463, 0
        %v7466 = vshrl.u32 %v7465, 5
        %v7467 = vand.u32 %v7465, 31
        %v7468 = vsub.s32 32, %v7467
        %v7469 = vshrl.u32 683565275, %v7468
        %v7470 = vshll.u32 683565275, %v7467
        %v7471 = vshrl.u32 2475754826, %v7468
        %v7472 = vor.u32 %v7470, %v7471
        %v7473 = vshll.u32 2475754826, %v7467
        %v7474 = vshrl.u32 2131351028, %v7468
        %v7475 = vor.u32 %v7473, %v7474
        %v7476 = vshll.u32 2131351028, %v7467
        %v7477 = vshrl.u32 2102212464, %v7468
        %v7478 = vor.u32 %v7476, %v7477
        %v7479 = vshll.u32 2102212464, %v7467
        %v7480 = vshrl.u32 920167782, %v7468
        %v7481 = vor.u32 %v7479, %v7480
        %v7482 = vshll.u32 920167782, %v7467
        %v7483 = vshrl.u32 1326507024, %v7468
        %v7484 = vor.u32 %v7482, %v7483
        %vm7485 = vcmp.lt.s32.totalorder %v7466, 1
        %vm7486 = vcmp.lt.s32.totalorder %v7466, 2
        %vm7487 = vcmp.lt.s32.totalorder %v7466, 3
        %vm7488 = vcmp.lt.s32.totalorder %v7466, 4
        %v7489 = vsel %vm7485, %v7469, %v7472
        %v7490 = vsel %vm7488, %v7478, 2102212464
        %v7491 = vsel %vm7487, %v7475, %v7490
        %v7492 = vsel %vm7486, %v7489, %v7491
        %v7493 = vsel %vm7485, %v7472, %v7475
        %v7494 = vsel %vm7488, %v7481, 920167782
        %v7495 = vsel %vm7487, %v7478, %v7494
        %v7496 = vsel %vm7486, %v7493, %v7495
        %v7497 = vsel %vm7485, %v7475, %v7478
        %v7498 = vsel %vm7488, %v7484, 1326507024
        %v7499 = vsel %vm7487, %v7481, %v7498
        %v7500 = vsel %vm7486, %v7497, %v7499
        %v7501 = vshll.u32 %v7461, 8
        %v7502 = vmul.u32.u64.compose %v7501, %v7500
        %v7503 = vextract.low.u32 %v7502
        %v7504 = vextract.high.u32 %v7502
        %v7505 = vmul.u32.u64.compose %v7501, %v7496
        %v7506 = vextract.low.u32 %v7505
        %v7507 = vextract.high.u32 %v7505
        %v7508 = vmul.u32 %v7501, %v7492
        %v7509 = vadd.s32 %v7504, %v7506
        %vm7510 = vc.u32 %v7504, %v7506
        %v7511 = vadd.s32 %v7507, 1
        %v7512 = vsel %vm7510, %v7511, %v7507
        %v7513 = vadd.s32 %v7508, %v7512
        %v7514 = vadd.s32 %v7513, 536870912
        %v7515 = vshrl.u32 %v7514, 30
        %v7516 = vshll.u32 %v7515, 30
        %v7517 = vsub.s32 %v7513, %v7516
        %vm7518 = vcmp.lt.s32.totalorder %v7517, 0
        %v7519 = vsub.s32 0, %v7517
        %v7520 = vsel %vm7518, %v7519, %v7517
        %v7521 = vclz %v7520
        %v7522 = vsub.s32 %v7521, 2
        %vm7523 = vcmp.gt.s32.totalorder 0, %v7522
        %v7524 = vsel %vm7523, 0, %v7522
        %v7525 = vsub.s32 32, %v7524
        %v7526 = vshll.u32 %v7517, %v7524
        %v7527 = vshrl.u32 %v7509, %v7525
        %v7528 = vor.u32 %v7526, %v7527
        %v7529 = vsub.s32 4294967266, %v7524
        %v7530 = vadd.s32 %v7529, 127
        %v7531 = vshll.u32 %v7530, 23
        %v7532 = vor.u32 4788187, %v7531
        %v7533 = vand.u32 2147483647, %v7532
        %v7535 = vcvt.s32.f32 %v7528
        %v7536 = vmul.f32 %v7535, %v7533
        %v7537 = vxor.u32 %v7536, 2147483648
        %v7538 = vsel %vm7455, %v7537, %v7536
        %v7539 = vsub.s32 4, %v7515
        %v7540 = vsel %vm7455, %v7539, %v7515
        %v7541 = vsel %vm7454, %v3427, %v7538
        %v7542 = vsel %vm7454, 0, %v7540
        %v7543 = vcosq.f32.pop %v7541
        %v7544 = vsinq.f32.pop %v7541
        %vm7545 = vweird.f32 %v3427
        %v7546 = vand.u32 %v7542, 3
        %vm7547 = vcmp.lt.s32.totalorder %v7546, 2
        %vm7548 = vcmp.eq.s32.totalorder %v7546, 0
        %v7549 = vxor.u32 %v7544, 2147483648
        %v7550 = vsel %vm7548, %v7543, %v7549
        %vm7551 = vcmp.eq.s32.totalorder %v7546, 2
        %v7552 = vxor.u32 %v7543, 2147483648
        %v7553 = vsel %vm7551, %v7552, %v7544
        %v7554 = vsel %vm7547, %v7550, %v7553
        %v7555 = vsel %vm7545, nan, %v7554
        %vm7556 = vcmask 7168
        %v7557 = vsel %vm7556, %v1011, %v1851
        %v7558 = vsel %vm7556, %v1115, %v1955
        %v7559 = vsel %vm7556, %v1219, %v2059
        %v7560 = vsel %vm7556, %v1323, %v2163
        %v7561 = vsel %vm7556, %v1427, %v2267
        %v7562 = vsel %vm7556, %v1531, %v2371
        %v7563 = vsel %vm7556, %v1635, %v2475
        %v7564 = vsel %vm7556, %v1739, %v2579
        %vm7565 = vcmask 15360
        %v7566 = vsel %vm7565, %v7557, %v2691
        %v7567 = vsel %vm7565, %v7558, %v2795
        %v7568 = vsel %vm7565, %v7559, %v2899
        %v7569 = vsel %vm7565, %v7560, %v3003
        %v7570 = vsel %vm7565, %v7561, %v3107
        %v7571 = vsel %vm7565, %v7562, %v3211
        %v7572 = vsel %vm7565, %v7563, %v3315
        %v7573 = vsel %vm7565, %v7564, %v3419
        %v7574 = vsel %vm827, %v7566, %v3531
        %v7575 = vsel %vm827, %v7567, %v3635
        %v7576 = vsel %vm827, %v7568, %v3739
        %v7577 = vsel %vm827, %v7569, %v3843
        %v7578 = vsel %vm827, %v7570, %v3947
        %v7579 = vsel %vm827, %v7571, %v4051
        %v7580 = vsel %vm827, %v7572, %v4155
        %v7581 = vsel %vm827, %v7573, %v4259
        %vm7582 = vcmask 31744
        %v7583 = vsel %vm7582, %v7574, %v4362
        %v7584 = vsel %vm7582, %v7575, %v4465
        %v7585 = vsel %vm7582, %v7576, %v4568
        %v7586 = vsel %vm7582, %v7577, %v4671
        %v7587 = vsel %vm7582, %v7578, %v4774
        %v7588 = vsel %vm7582, %v7579, %v4877
        %v7589 = vsel %vm7582, %v7580, %v4980
        %v7590 = vsel %vm7582, %v7581, %v5083
        %vm7591 = vcmask 39936
        %v7592 = vsel %vm7591, %v7583, %v5186
        %v7593 = vsel %vm7591, %v7584, %v5289
        %v7594 = vsel %vm7591, %v7585, %v5392
        %v7595 = vsel %vm7591, %v7586, %v5495
        %v7596 = vsel %vm7591, %v7587, %v5598
        %v7597 = vsel %vm7591, %v7588, %v5701
        %v7598 = vsel %vm7591, %v7589, %v5804
        %v7599 = vsel %vm7591, %v7590, %v5907
        %vm7600 = vcmask 48128
        %v7601 = vsel %vm7600, %v7592, %v6010
        %v7602 = vsel %vm7600, %v7593, %v6113
        %v7603 = vsel %vm7600, %v7594, %v6216
        %v7604 = vsel %vm7600, %v7595, %v6319
        %v7605 = vsel %vm7600, %v7596, %v6422
        %v7606 = vsel %vm7600, %v7597, %v6525
        %v7607 = vsel %vm7600, %v7598, %v6628
        %v7608 = vsel %vm7600, %v7599, %v6731
        %vm7609 = vcmask 56320
        %v7610 = vsel %vm7609, %v7601, %v6834
        %v7611 = vsel %vm7609, %v7602, %v6937
        %v7612 = vsel %vm7609, %v7603, %v7040
        %v7613 = vsel %vm7609, %v7604, %v7143
        %v7614 = vsel %vm7609, %v7605, %v7246
        %v7615 = vsel %vm7609, %v7606, %v7349
        %v7616 = vsel %vm7609, %v7607, %v7452
        %v7617 = vsel %vm7609, %v7608, %v7555
        %vm7618 = vcmask 64512
        %v7619 = vsel %vm7618, %v7610, %v858
        %v7620 = vsel %vm7618, %v7611, %v865
        %v7621 = vsel %vm7618, %v7612, %v872
        %v7622 = vsel %vm7618, %v7613, %v879
        %v7623 = vsel %vm7618, %v7614, %v886
        %v7624 = vsel %vm7618, %v7615, %v893
        %v7625 = vsel %vm7618, %v7616, %v900
        %v7626 = vsel %vm7618, %v7617, %v907
        %v7627 = vpack.c.bf16 %v7620, %v7619
        %v7628 = vpack.c.bf16 %v7622, %v7621
        %v7629 = vpack.c.bf16 %v7624, %v7623
        %v7630 = vpack.c.bf16 %v7626, %v7625
        %v7631 = vld [vmem:[%s5] sm:$0xf]
        %v7632 = vld [vmem:[%s5 + $0x4] sm:$0x1]
        %v7633 = vld [vmem:[%s6] sm:$0x1]
        %v7635 = vlaneseq
        %v7636 = vshrl.u32 %v7635, 7
        %v7637 = vsub.s32 0, %v7636
        %v7638 = vrot.slane %v7633, %v7637
        %v7642 = vunpack.c.l.b16 %v7631
        %v7643 = vunpack.c.l.b16 %v7632
        %v7644 = vpack.c.b16 %v7643, %v7642
        %vm7645 = vcmask 72704
        %v7647 = vsel %vm7645, %v7627, 0
        %v7650 = vsel %vm7645, %v7628, 0
        %v7653 = vsel %vm7645, %v7629, 0
        %v7656 = vsel %vm7645, %v7630, 0
        %vm7658 = vcmask 1043456
        %vm7659 = vcmask 1044480
        %v7660 = vsel %vm7658, 4294967295, 65535
        %v7661 = vsel %vm7659, %v7660, 0
        %v7663 = vand.u32 %v7644, %v7661
        %7665 = vmatprep.subr.bf16.mxu0 0
        %7666 = vmatpush1.bf16.msra.mxu0 0
        %7667 = vmatprep.subr.bf16.mxu0 0
        %7668 = vmatpush1.bf16.msra.mxu0 0
        %7669 = vmatprep.subr.bf16.mxu0 0
        %7670 = vmatpush1.bf16.msra.mxu0 0
        %7671 = vmatprep.subr.bf16.mxu0 0
        %7672 = vmatpush1.bf16.msra.mxu0 0
        %7673 = vmatprep.subr.bf16.mxu0 0
        %7674 = vmatpush1.bf16.msra.mxu0 0
        %7675 = vmatprep.subr.bf16.mxu0 0
        %7676 = vmatpush1.bf16.msra.mxu0 0
        %7677 = vmatprep.subr.bf16.mxu0 0
        %7678 = vmatpush1.bf16.msra.mxu0 0
        %7679 = vmatprep.subr.bf16.mxu0 0
        %7680 = vmatpush1.bf16.msra.mxu0 %v7663
        %7681 = vmatprep.subr.bf16.mxu0 0
        %7682 = vmatpush2.bf16.msra.mxu0 0
        %7683 = vmatprep.subr.bf16.mxu0 0
        %7684 = vmatpush2.bf16.msra.mxu0 0
        %7685 = vmatprep.subr.bf16.mxu0 0
        %7686 = vmatpush2.bf16.msra.mxu0 0
        %7687 = vmatprep.subr.bf16.mxu0 0
        %7688 = vmatpush2.bf16.msra.mxu0 0
        %7689 = vmatprep.subr.bf16.mxu0 0
        %7690 = vmatpush2.bf16.msra.mxu0 0
        %7691 = vmatprep.subr.bf16.mxu0 0
        %7692 = vmatpush2.bf16.msra.mxu0 0
        %7693 = vmatprep.subr.bf16.mxu0 0
        %7694 = vmatpush2.bf16.msra.mxu0 0
        %7695 = vmatprep.subr.bf16.mxu0 0
        %7696 = vmatpush2.bf16.msra.mxu0 0
        %7697 = vmatprep.mubr.bf16.mxu0 0
        %7698 = vmatmul.mubr.bf16.gmra.mxu0 %v7647
        %v7699 = vpop.f32.mrf.mxu0
        %v7700 = vadd.f32 %v7638, %v7699
        %v7701 = vpop.f32.mrf.mxu0
        %v7702 = vpop.f32.mrf.mxu0
        %v7703 = vadd.f32 %v7638, %v7702
        %v7704 = vpop.f32.mrf.mxu0
        %7705 = vmatprep.mubr.bf16.mxu0 0
        %7706 = vmatmul.mubr.bf16.gmra.mxu0 %v7650
        %v7707 = vpop.f32.mrf.mxu0
        %v7708 = vadd.f32 %v7638, %v7707
        %v7709 = vpop.f32.mrf.mxu0
        %v7710 = vpop.f32.mrf.mxu0
        %v7711 = vadd.f32 %v7638, %v7710
        %v7712 = vpop.f32.mrf.mxu0
        %7713 = vmatprep.mubr.bf16.mxu0 0
        %7714 = vmatmul.mubr.bf16.gmra.mxu0 %v7653
        %v7715 = vpop.f32.mrf.mxu0
        %v7716 = vadd.f32 %v7638, %v7715
        %v7717 = vpop.f32.mrf.mxu0
        %v7718 = vpop.f32.mrf.mxu0
        %v7719 = vadd.f32 %v7638, %v7718
        %v7720 = vpop.f32.mrf.mxu0
        %7721 = vmatprep.mubr.bf16.mxu0 0
        %7722 = vmatmul.mubr.bf16.gmra.mxu0 %v7656
        %v7723 = vpop.f32.mrf.mxu0
        %v7724 = vadd.f32 %v7638, %v7723
        %v7725 = vpop.f32.mrf.mxu0
        %v7726 = vpop.f32.mrf.mxu0
        %v7727 = vadd.f32 %v7638, %v7726
        %v7728 = vpop.f32.mrf.mxu0
        %7729 = vdwg.mxu0
        %v7730 = vmax.f32 %v7700, 0.0
        %v7731 = vmax.f32 %v7703, 0.0
        %v7732 = vmax.f32 %v7708, 0.0
        %v7733 = vmax.f32 %v7711, 0.0
        %v7734 = vmax.f32 %v7716, 0.0
        %v7735 = vmax.f32 %v7719, 0.0
        %v7736 = vmax.f32 %v7724, 0.0
        %v7737 = vmax.f32 %v7727, 0.0
        %v7738 = vpack.c.bf16 %v7731, %v7730
        %v7739 = vpack.c.bf16 %v7733, %v7732
        %v7740 = vpack.c.bf16 %v7735, %v7734
        %v7741 = vpack.c.bf16 %v7737, %v7736
        %v7742 = vld [vmem:[%s7] sm:$0xf]
        %v7743 = vld [vmem:[%s7 + $0x4] sm:$0xf]
        %v7744 = vld [vmem:[%s7 + $0x8] sm:$0xf]
        %v7745 = vld [vmem:[%s7 + $0xc] sm:$0xf]
        %v7746 = vld [vmem:[%s7 + $0x10] sm:$0xf]
        %v7747 = vld [vmem:[%s7 + $0x14] sm:$0xf]
        %v7748 = vld [vmem:[%s7 + $0x18] sm:$0xf]
        %v7749 = vld [vmem:[%s7 + $0x1c] sm:$0xf]
        %v7750 = vld [vmem:[%s7 + $0x20] sm:$0xf]
        %v7751 = vld [vmem:[%s7 + $0x24] sm:$0xf]
        %v7752 = vld [vmem:[%s7 + $0x28] sm:$0xf]
        %v7753 = vld [vmem:[%s7 + $0x2c] sm:$0xf]
        %v7754 = vld [vmem:[%s7 + $0x30] sm:$0xf]
        %v7755 = vld [vmem:[%s7 + $0x34] sm:$0xf]
        %v7756 = vld [vmem:[%s7 + $0x38] sm:$0xf]
        %v7757 = vld [vmem:[%s7 + $0x3c] sm:$0xf]
        %v7758 = vld [vmem:[%s8] sm:$0x1]
        %v7760 = vlaneseq
        %v7761 = vshrl.u32 %v7760, 7
        %v7762 = vsub.s32 0, %v7761
        %v7763 = vrot.slane %v7758, %v7762
        %v7781 = vunpack.c.l.b16 %v7742
        %v7782 = vunpack.c.l.b16 %v7743
        %v7783 = vunpack.c.l.b16 %v7744
        %v7784 = vunpack.c.l.b16 %v7745
        %v7785 = vunpack.c.l.b16 %v7746
        %v7786 = vunpack.c.l.b16 %v7747
        %v7787 = vunpack.c.l.b16 %v7748
        %v7788 = vunpack.c.l.b16 %v7749
        %v7789 = vunpack.c.l.b16 %v7750
        %v7790 = vunpack.c.l.b16 %v7751
        %v7791 = vunpack.c.l.b16 %v7752
        %v7792 = vunpack.c.l.b16 %v7753
        %v7793 = vunpack.c.l.b16 %v7754
        %v7794 = vunpack.c.l.b16 %v7755
        %v7795 = vunpack.c.l.b16 %v7756
        %v7796 = vunpack.c.l.b16 %v7757
        %v7797 = vpack.c.b16 %v7782, %v7781
        %v7798 = vpack.c.b16 %v7784, %v7783
        %v7799 = vpack.c.b16 %v7786, %v7785
        %v7800 = vpack.c.b16 %v7788, %v7787
        %v7801 = vpack.c.b16 %v7790, %v7789
        %v7802 = vpack.c.b16 %v7792, %v7791
        %v7803 = vpack.c.b16 %v7794, %v7793
        %v7804 = vpack.c.b16 %v7796, %v7795
        %7813 = vmatprep.subr.bf16.mxu0 0
        %7814 = vmatpush1.bf16.msra.mxu0 %v7804
        %7815 = vmatprep.subr.bf16.mxu0 0
        %7816 = vmatpush1.bf16.msra.mxu0 %v7803
        %7817 = vmatprep.subr.bf16.mxu0 0
        %7818 = vmatpush1.bf16.msra.mxu0 %v7802
        %7819 = vmatprep.subr.bf16.mxu0 0
        %7820 = vmatpush1.bf16.msra.mxu0 %v7801
        %7821 = vmatprep.subr.bf16.mxu0 0
        %7822 = vmatpush1.bf16.msra.mxu0 %v7800
        %7823 = vmatprep.subr.bf16.mxu0 0
        %7824 = vmatpush1.bf16.msra.mxu0 %v7799
        %7825 = vmatprep.subr.bf16.mxu0 0
        %7826 = vmatpush1.bf16.msra.mxu0 %v7798
        %7827 = vmatprep.subr.bf16.mxu0 0
        %7828 = vmatpush1.bf16.msra.mxu0 %v7797
        %7829 = vmatprep.subr.bf16.mxu0 0
        %7830 = vmatpush2.bf16.msra.mxu0 0
        %7831 = vmatprep.subr.bf16.mxu0 0
        %7832 = vmatpush2.bf16.msra.mxu0 0
        %7833 = vmatprep.subr.bf16.mxu0 0
        %7834 = vmatpush2.bf16.msra.mxu0 0
        %7835 = vmatprep.subr.bf16.mxu0 0
        %7836 = vmatpush2.bf16.msra.mxu0 0
        %7837 = vmatprep.subr.bf16.mxu0 0
        %7838 = vmatpush2.bf16.msra.mxu0 0
        %7839 = vmatprep.subr.bf16.mxu0 0
        %7840 = vmatpush2.bf16.msra.mxu0 0
        %7841 = vmatprep.subr.bf16.mxu0 0
        %7842 = vmatpush2.bf16.msra.mxu0 0
        %7843 = vmatprep.subr.bf16.mxu0 0
        %7844 = vmatpush2.bf16.msra.mxu0 0
        %7845 = vmatprep.mubr.bf16.mxu0 0
        %7846 = vmatmul.mubr.bf16.gmra.mxu0 %v7738
        %v7847 = vpop.f32.mrf.mxu0
        %v7848 = vadd.f32 %v7763, %v7847
        %v7849 = vpop.f32.mrf.mxu0
        %v7850 = vpop.f32.mrf.mxu0
        %v7851 = vadd.f32 %v7763, %v7850
        %v7852 = vpop.f32.mrf.mxu0
        %7853 = vmatprep.mubr.bf16.mxu0 0
        %7854 = vmatmul.mubr.bf16.gmra.mxu0 %v7739
        %v7855 = vpop.f32.mrf.mxu0
        %v7856 = vadd.f32 %v7763, %v7855
        %v7857 = vpop.f32.mrf.mxu0
        %v7858 = vpop.f32.mrf.mxu0
        %v7859 = vadd.f32 %v7763, %v7858
        %v7860 = vpop.f32.mrf.mxu0
        %7861 = vmatprep.mubr.bf16.mxu0 0
        %7862 = vmatmul.mubr.bf16.gmra.mxu0 %v7740
        %v7863 = vpop.f32.mrf.mxu0
        %v7864 = vadd.f32 %v7763, %v7863
        %v7865 = vpop.f32.mrf.mxu0
        %v7866 = vpop.f32.mrf.mxu0
        %v7867 = vadd.f32 %v7763, %v7866
        %v7868 = vpop.f32.mrf.mxu0
        %7869 = vmatprep.mubr.bf16.mxu0 0
        %7870 = vmatmul.mubr.bf16.gmra.mxu0 %v7741
        %v7871 = vpop.f32.mrf.mxu0
        %v7872 = vadd.f32 %v7763, %v7871
        %v7873 = vpop.f32.mrf.mxu0
        %v7874 = vpop.f32.mrf.mxu0
        %v7875 = vadd.f32 %v7763, %v7874
        %v7876 = vpop.f32.mrf.mxu0
        %7877 = vdwg.mxu0
        %v7878 = vpack.c.bf16 %v7851, %v7848
        %v7879 = vpack.c.bf16 %v7859, %v7856
        %v7880 = vpack.c.bf16 %v7867, %v7864
        %v7881 = vpack.c.bf16 %v7875, %v7872
        %v7886 = vunpack.c.l.b16 %v7878
        %v7887 = vunpack.c.h.b16 %v7878
        %v7888 = vunpack.c.l.b16 %v7879
        %v7889 = vunpack.c.h.b16 %v7879
        %v7890 = vunpack.c.l.b16 %v7880
        %v7891 = vunpack.c.h.b16 %v7880
        %v7892 = vunpack.c.l.b16 %v7881
        %v7893 = vunpack.c.h.b16 %v7881
        %v7894 = vpack.c.b16 %v7886, %v7886
        %v7895 = vpack.c.b16 %v7887, %v7887
        %v7896 = vpack.c.b16 %v7888, %v7888
        %v7897 = vpack.c.b16 %v7889, %v7889
        %v7898 = vpack.c.b16 %v7890, %v7890
        %v7899 = vpack.c.b16 %v7891, %v7891
        %v7900 = vpack.c.b16 %v7892, %v7892
        %v7901 = vpack.c.b16 %v7893, %v7893
        %vm7910 = vcmask 519168
        %7911 = vst.msk [vmem:[#allocation2] sm:$0xf] %vm7910, %v7894
        %7912 = vst.msk [vmem:[#allocation2 + $0x4] sm:$0xf] %vm7910, %v7895
        %7913 = vst.msk [vmem:[#allocation2 + $0x8] sm:$0xf] %vm7910, %v7896
        %7914 = vst.msk [vmem:[#allocation2 + $0xc] sm:$0xf] %vm7910, %v7897
        %7915 = vst.msk [vmem:[#allocation2 + $0x10] sm:$0xf] %vm7910, %v7898
        %7916 = vst.msk [vmem:[#allocation2 + $0x14] sm:$0xf] %vm7910, %v7899
        %7917 = vst.msk [vmem:[#allocation2 + $0x18] sm:$0xf] %vm7910, %v7900
        %7918 = vst.msk [vmem:[#allocation2 + $0x1c] sm:$0xf] %vm7910, %v7901
      $region92: #{equivariant_attention_pallas.1} parent=87 // pred_fallthru
        _
      %v7919 = vld [vmem:[%s686] sm:$0xf]
      %v7920 = vld [vmem:[%s694] sm:$0xf]
      %v7921 = vld [vmem:[%s702] sm:$0xf]
      %v7924 = vunpack.c.l.s4 1966171168
      %v7925 = vunpack.c.0.s8 %v7924
      %v7926 = vlaneseq
      %v7927 = vshrl.u32 %v7926, 7
      %v7928 = vsub.s32 %v7925, %v7927
      %v7929 = vrot.slane %v7919, %v7928
      %v7930 = vcombine.high %v7929, %v7929
      %v7932 = vunpack.c.l.s4 1966171168
      %v7933 = vunpack.c.0.s8 %v7932
      %v7934 = vlaneseq
      %v7935 = vshrl.u32 %v7934, 7
      %v7936 = vsub.s32 %v7933, %v7935
      %v7937 = vrot.slane %v7929, %v7936
      %v7939 = vunpack.c.l.s4 1966171168
      %v7940 = vunpack.c.0.s8 %v7939
      %v7941 = vlaneseq
      %v7942 = vshrl.u32 %v7941, 7
      %v7943 = vsub.s32 %v7940, %v7942
      %v7944 = vrot.slane %v7930, %v7943
      %v7945 = vcombine.high %v7937, %v7937
      %v7946 = vcombine.high %v7944, %v7944
      %v7947 = vunpack.i.l.s16 %v7937
      %v7948 = vunpack.i.h.s16 %v7937
      %v7949 = vunpack.i.l.s16 %v7944
      %v7950 = vunpack.i.h.s16 %v7944
      %v7951 = vunpack.i.l.s16 %v7945
      %v7952 = vunpack.i.h.s16 %v7945
      %v7953 = vunpack.i.l.s16 %v7946
      %v7954 = vunpack.i.h.s16 %v7946
      %v7955 = vpack.i.b16 %v7947, %v7947
      %v7956 = vpack.i.b16 %v7948, %v7948
      %v7957 = vpack.i.b16 %v7949, %v7949
      %v7958 = vpack.i.b16 %v7950, %v7950
      %v7959 = vpack.i.b16 %v7951, %v7951
      %v7960 = vpack.i.b16 %v7952, %v7952
      %v7961 = vpack.i.b16 %v7953, %v7953
      %v7962 = vpack.i.b16 %v7954, %v7954
      %v7963 = vlaneseq
      %v7964 = vshrl.u32 %v7963, 7
      %v7965 = vsub.s32 0, %v7964
      %v7966 = vrot.slane %v7955, %v7965
      %v7967 = vlaneseq
      %v7968 = vshrl.u32 %v7967, 7
      %v7969 = vsub.s32 0, %v7968
      %v7970 = vrot.slane %v7956, %v7969
      %v7971 = vlaneseq
      %v7972 = vshrl.u32 %v7971, 7
      %v7973 = vsub.s32 0, %v7972
      %v7974 = vrot.slane %v7957, %v7973
      %v7975 = vlaneseq
      %v7976 = vshrl.u32 %v7975, 7
      %v7977 = vsub.s32 0, %v7976
      %v7978 = vrot.slane %v7958, %v7977
      %v7979 = vlaneseq
      %v7980 = vshrl.u32 %v7979, 7
      %v7981 = vsub.s32 0, %v7980
      %v7982 = vrot.slane %v7959, %v7981
      %v7983 = vlaneseq
      %v7984 = vshrl.u32 %v7983, 7
      %v7985 = vsub.s32 0, %v7984
      %v7986 = vrot.slane %v7960, %v7985
      %v7987 = vlaneseq
      %v7988 = vshrl.u32 %v7987, 7
      %v7989 = vsub.s32 0, %v7988
      %v7990 = vrot.slane %v7961, %v7989
      %v7991 = vlaneseq
      %v7992 = vshrl.u32 %v7991, 7
      %v7993 = vsub.s32 0, %v7992
      %v7994 = vrot.slane %v7962, %v7993
      %v7996 = vpack.i.b16 %v7966, %v7966
      %v7998 = vlaneseq
      %v7999 = vshrl.u32 %v7998, 7
      %v8000 = vsub.s32 0, %v7999
      %v8001 = vrot.slane %v7996, %v8000
      %v8003 = vpack.i.b16 %v7970, %v7970
      %v8005 = vlaneseq
      %v8006 = vshrl.u32 %v8005, 7
      %v8007 = vsub.s32 0, %v8006
      %v8008 = vrot.slane %v8003, %v8007
      %v8010 = vpack.i.b16 %v7974, %v7974
      %v8012 = vlaneseq
      %v8013 = vshrl.u32 %v8012, 7
      %v8014 = vsub.s32 0, %v8013
      %v8015 = vrot.slane %v8010, %v8014
      %v8017 = vpack.i.b16 %v7978, %v7978
      %v8019 = vlaneseq
      %v8020 = vshrl.u32 %v8019, 7
      %v8021 = vsub.s32 0, %v8020
      %v8022 = vrot.slane %v8017, %v8021
      %v8024 = vpack.i.b16 %v7982, %v7982
      %v8026 = vlaneseq
      %v8027 = vshrl.u32 %v8026, 7
      %v8028 = vsub.s32 0, %v8027
      %v8029 = vrot.slane %v8024, %v8028
      %v8031 = vpack.i.b16 %v7986, %v7986
      %v8033 = vlaneseq
      %v8034 = vshrl.u32 %v8033, 7
      %v8035 = vsub.s32 0, %v8034
      %v8036 = vrot.slane %v8031, %v8035
      %v8038 = vpack.i.b16 %v7990, %v7990
      %v8040 = vlaneseq
      %v8041 = vshrl.u32 %v8040, 7
      %v8042 = vsub.s32 0, %v8041
      %v8043 = vrot.slane %v8038, %v8042
      %v8045 = vpack.i.b16 %v7994, %v7994
      %v8047 = vlaneseq
      %v8048 = vshrl.u32 %v8047, 7
      %v8049 = vsub.s32 0, %v8048
      %v8050 = vrot.slane %v8045, %v8049
      %v8051 = vmul.bf16 %v8001, %v7920
      %v8052 = vmul.bf16 %v8008, %v7920
      %v8053 = vmul.bf16 %v8015, %v7920
      %v8054 = vmul.bf16 %v8022, %v7920
      %v8055 = vmul.bf16 %v8029, %v7920
      %v8056 = vmul.bf16 %v8036, %v7920
      %v8057 = vmul.bf16 %v8043, %v7920
      %v8058 = vmul.bf16 %v8050, %v7920
      %v8059 = vld [vmem:[#allocation2] sm:$0xf]
      %v8060 = vld [vmem:[#allocation2 + $0x4] sm:$0xf]
      %v8061 = vld [vmem:[#allocation2 + $0x8] sm:$0xf]
      %v8062 = vld [vmem:[#allocation2 + $0xc] sm:$0xf]
      %v8063 = vld [vmem:[#allocation2 + $0x10] sm:$0xf]
      %v8064 = vld [vmem:[#allocation2 + $0x14] sm:$0xf]
      %v8065 = vld [vmem:[#allocation2 + $0x18] sm:$0xf]
      %v8066 = vld [vmem:[#allocation2 + $0x1c] sm:$0xf]
      %v8075 = vunpack.c.l.b16 %v8051
      %v8076 = vunpack.c.l.b16 %v8052
      %v8077 = vunpack.c.l.b16 %v8053
      %v8078 = vunpack.c.l.b16 %v8054
      %v8079 = vunpack.c.l.b16 %v8055
      %v8080 = vunpack.c.l.b16 %v8056
      %v8081 = vunpack.c.l.b16 %v8057
      %v8082 = vunpack.c.l.b16 %v8058
      %v8083 = vpack.c.b16 %v8076, %v8075
      %v8084 = vpack.c.b16 %v8078, %v8077
      %v8085 = vpack.c.b16 %v8080, %v8079
      %v8086 = vpack.c.b16 %v8082, %v8081
      %v8095 = vunpack.c.l.b16 %v8059
      %v8096 = vunpack.c.l.b16 %v8060
      %v8097 = vunpack.c.l.b16 %v8061
      %v8098 = vunpack.c.l.b16 %v8062
      %v8099 = vunpack.c.l.b16 %v8063
      %v8100 = vunpack.c.l.b16 %v8064
      %v8101 = vunpack.c.l.b16 %v8065
      %v8102 = vunpack.c.l.b16 %v8066
      %v8103 = vpack.c.b16 %v8096, %v8095
      %v8104 = vpack.c.b16 %v8098, %v8097
      %v8105 = vpack.c.b16 %v8100, %v8099
      %v8106 = vpack.c.b16 %v8102, %v8101
      %8107 = vrot.lane.b32.xlu0 %v8103, 64
      %v8108 = vpop.permute.xlu0 %8107
      %8109 = vrot.lane.b32.xlu0 %v8104, 64
      %v8110 = vpop.permute.xlu0 %8109
      %8111 = vrot.lane.b32.xlu0 %v8105, 64
      %v8112 = vpop.permute.xlu0 %8111
      %8113 = vrot.lane.b32.xlu0 %v8106, 64
      %v8114 = vpop.permute.xlu0 %8113
      %vm8115 = vcmask 523264
      %v8118 = vsel %vm8115, %v8083, %v8108
      %v8122 = vsel %vm8115, %v8084, %v8110
      %v8126 = vsel %vm8115, %v8085, %v8112
      %v8130 = vsel %vm8115, %v8086, %v8114
      %v8132 = vld [vmem:[%s9] sm:$0xff]
      %v8133 = vld [vmem:[%s9 + $0x8] sm:$0xff]
      %v8134 = vld [vmem:[%s9 + $0x10] sm:$0xff]
      %v8135 = vld [vmem:[%s9 + $0x18] sm:$0xff]
      %v8136 = vld [vmem:[%s9 + $0x20] sm:$0xff]
      %v8137 = vld [vmem:[%s9 + $0x28] sm:$0xff]
      %v8138 = vld [vmem:[%s9 + $0x30] sm:$0xff]
      %v8139 = vld [vmem:[%s9 + $0x38] sm:$0xff]
      %v8140 = vld [vmem:[%s9 + $0x40] sm:$0xff]
      %v8141 = vld [vmem:[%s9 + $0x48] sm:$0xff]
      %v8142 = vld [vmem:[%s9 + $0x50] sm:$0xff]
      %v8143 = vld [vmem:[%s9 + $0x58] sm:$0xff]
      %v8144 = vld [vmem:[%s9 + $0x60] sm:$0xff]
      %v8145 = vld [vmem:[%s9 + $0x68] sm:$0xff]
      %v8146 = vld [vmem:[%s9 + $0x70] sm:$0xff]
      %v8147 = vld [vmem:[%s9 + $0x78] sm:$0xff]
      %v8148 = vld [vmem:[%s10] sm:$0x3]
      %v8150 = vlaneseq
      %v8151 = vshrl.u32 %v8150, 7
      %v8152 = vsub.s32 0, %v8151
      %v8153 = vrot.slane %v8148, %v8152
      %v8154 = vlaneseq
      %v8155 = vshrl.u32 %v8154, 7
      %v8156 = vsub.s32 1, %v8155
      %v8157 = vrot.slane %v8148, %v8156
      %v8176 = vunpack.c.l.b16 %v8132
      %v8177 = vunpack.c.h.b16 %v8132
      %v8178 = vunpack.c.l.b16 %v8133
      %v8179 = vunpack.c.h.b16 %v8133
      %v8180 = vunpack.c.l.b16 %v8134
      %v8181 = vunpack.c.h.b16 %v8134
      %v8182 = vunpack.c.l.b16 %v8135
      %v8183 = vunpack.c.h.b16 %v8135
      %v8184 = vunpack.c.l.b16 %v8136
      %v8185 = vunpack.c.h.b16 %v8136
      %v8186 = vunpack.c.l.b16 %v8137
      %v8187 = vunpack.c.h.b16 %v8137
      %v8188 = vunpack.c.l.b16 %v8138
      %v8189 = vunpack.c.h.b16 %v8138
      %v8190 = vunpack.c.l.b16 %v8139
      %v8191 = vunpack.c.h.b16 %v8139
      %v8192 = vunpack.c.l.b16 %v8140
      %v8193 = vunpack.c.h.b16 %v8140
      %v8194 = vunpack.c.l.b16 %v8141
      %v8195 = vunpack.c.h.b16 %v8141
      %v8196 = vunpack.c.l.b16 %v8142
      %v8197 = vunpack.c.h.b16 %v8142
      %v8198 = vunpack.c.l.b16 %v8143
      %v8199 = vunpack.c.h.b16 %v8143
      %v8200 = vunpack.c.l.b16 %v8144
      %v8201 = vunpack.c.h.b16 %v8144
      %v8202 = vunpack.c.l.b16 %v8145
      %v8203 = vunpack.c.h.b16 %v8145
      %v8204 = vunpack.c.l.b16 %v8146
      %v8205 = vunpack.c.h.b16 %v8146
      %v8206 = vunpack.c.l.b16 %v8147
      %v8207 = vunpack.c.h.b16 %v8147
      %v8208 = vpack.c.b16 %v8178, %v8176
      %v8209 = vpack.c.b16 %v8179, %v8177
      %v8210 = vpack.c.b16 %v8182, %v8180
      %v8211 = vpack.c.b16 %v8183, %v8181
      %v8212 = vpack.c.b16 %v8186, %v8184
      %v8213 = vpack.c.b16 %v8187, %v8185
      %v8214 = vpack.c.b16 %v8190, %v8188
      %v8215 = vpack.c.b16 %v8191, %v8189
      %v8216 = vpack.c.b16 %v8194, %v8192
      %v8217 = vpack.c.b16 %v8195, %v8193
      %v8218 = vpack.c.b16 %v8198, %v8196
      %v8219 = vpack.c.b16 %v8199, %v8197
      %v8220 = vpack.c.b16 %v8202, %v8200
      %v8221 = vpack.c.b16 %v8203, %v8201
      %v8222 = vpack.c.b16 %v8206, %v8204
      %v8223 = vpack.c.b16 %v8207, %v8205
      %8240 = vmatprep.subr.bf16.mxu0 %v8223
      %8241 = vmatpush1.bf16.msra.mxu0 %v8222
      %8242 = vmatprep.subr.bf16.mxu0 %v8221
      %8243 = vmatpush1.bf16.msra.mxu0 %v8220
      %8244 = vmatprep.subr.bf16.mxu0 %v8219
      %8245 = vmatpush1.bf16.msra.mxu0 %v8218
      %8246 = vmatprep.subr.bf16.mxu0 %v8217
      %8247 = vmatpush1.bf16.msra.mxu0 %v8216
      %8248 = vmatprep.subr.bf16.mxu0 %v8215
      %8249 = vmatpush1.bf16.msra.mxu0 %v8214
      %8250 = vmatprep.subr.bf16.mxu0 %v8213
      %8251 = vmatpush1.bf16.msra.mxu0 %v8212
      %8252 = vmatprep.subr.bf16.mxu0 %v8211
      %8253 = vmatpush1.bf16.msra.mxu0 %v8210
      %8254 = vmatprep.subr.bf16.mxu0 %v8209
      %8255 = vmatpush1.bf16.msra.mxu0 %v8208
      %8256 = vmatprep.subr.bf16.mxu0 0
      %8257 = vmatpush2.bf16.msra.mxu0 0
      %8258 = vmatprep.subr.bf16.mxu0 0
      %8259 = vmatpush2.bf16.msra.mxu0 0
      %8260 = vmatprep.subr.bf16.mxu0 0
      %8261 = vmatpush2.bf16.msra.mxu0 0
      %8262 = vmatprep.subr.bf16.mxu0 0
      %8263 = vmatpush2.bf16.msra.mxu0 0
      %8264 = vmatprep.subr.bf16.mxu0 0
      %8265 = vmatpush2.bf16.msra.mxu0 0
      %8266 = vmatprep.subr.bf16.mxu0 0
      %8267 = vmatpush2.bf16.msra.mxu0 0
      %8268 = vmatprep.subr.bf16.mxu0 0
      %8269 = vmatpush2.bf16.msra.mxu0 0
      %8270 = vmatprep.subr.bf16.mxu0 0
      %8271 = vmatpush2.bf16.msra.mxu0 0
      %8272 = vmatprep.mubr.bf16.mxu0 0
      %8273 = vmatmul.mubr.bf16.gmra.mxu0 %v8118
      %v8274 = vpop.f32.mrf.mxu0
      %v8275 = vadd.f32 %v8153, %v8274
      %v8276 = vpop.f32.mrf.mxu0
      %v8277 = vadd.f32 %v8157, %v8276
      %v8278 = vpop.f32.mrf.mxu0
      %v8279 = vadd.f32 %v8153, %v8278
      %v8280 = vpop.f32.mrf.mxu0
      %v8281 = vadd.f32 %v8157, %v8280
      %8282 = vmatprep.mubr.bf16.mxu0 0
      %8283 = vmatmul.mubr.bf16.gmra.mxu0 %v8122
      %v8284 = vpop.f32.mrf.mxu0
      %v8285 = vadd.f32 %v8153, %v8284
      %v8286 = vpop.f32.mrf.mxu0
      %v8287 = vadd.f32 %v8157, %v8286
      %v8288 = vpop.f32.mrf.mxu0
      %v8289 = vadd.f32 %v8153, %v8288
      %v8290 = vpop.f32.mrf.mxu0
      %v8291 = vadd.f32 %v8157, %v8290
      %8292 = vmatprep.mubr.bf16.mxu0 0
      %8293 = vmatmul.mubr.bf16.gmra.mxu0 %v8126
      %v8294 = vpop.f32.mrf.mxu0
      %v8295 = vadd.f32 %v8153, %v8294
      %v8296 = vpop.f32.mrf.mxu0
      %v8297 = vadd.f32 %v8157, %v8296
      %v8298 = vpop.f32.mrf.mxu0
      %v8299 = vadd.f32 %v8153, %v8298
      %v8300 = vpop.f32.mrf.mxu0
      %v8301 = vadd.f32 %v8157, %v8300
      %8302 = vmatprep.mubr.bf16.mxu0 0
      %8303 = vmatmul.mubr.bf16.gmra.mxu0 %v8130
      %v8304 = vpop.f32.mrf.mxu0
      %v8305 = vadd.f32 %v8153, %v8304
      %v8306 = vpop.f32.mrf.mxu0
      %v8307 = vadd.f32 %v8157, %v8306
      %v8308 = vpop.f32.mrf.mxu0
      %v8309 = vadd.f32 %v8153, %v8308
      %v8310 = vpop.f32.mrf.mxu0
      %v8311 = vadd.f32 %v8157, %v8310
      %8312 = vdwg.mxu0
      %v8313 = vmax.f32 %v8275, 0.0
      %v8314 = vmax.f32 %v8277, 0.0
      %v8315 = vmax.f32 %v8279, 0.0
      %v8316 = vmax.f32 %v8281, 0.0
      %v8317 = vmax.f32 %v8285, 0.0
      %v8318 = vmax.f32 %v8287, 0.0
      %v8319 = vmax.f32 %v8289, 0.0
      %v8320 = vmax.f32 %v8291, 0.0
      %v8321 = vmax.f32 %v8295, 0.0
      %v8322 = vmax.f32 %v8297, 0.0
      %v8323 = vmax.f32 %v8299, 0.0
      %v8324 = vmax.f32 %v8301, 0.0
      %v8325 = vmax.f32 %v8305, 0.0
      %v8326 = vmax.f32 %v8307, 0.0
      %v8327 = vmax.f32 %v8309, 0.0
      %v8328 = vmax.f32 %v8311, 0.0
      %v8329 = vpack.c.bf16 %v8315, %v8313
      %v8330 = vpack.c.bf16 %v8316, %v8314
      %v8331 = vpack.c.bf16 %v8319, %v8317
      %v8332 = vpack.c.bf16 %v8320, %v8318
      %v8333 = vpack.c.bf16 %v8323, %v8321
      %v8334 = vpack.c.bf16 %v8324, %v8322
      %v8335 = vpack.c.bf16 %v8327, %v8325
      %v8336 = vpack.c.bf16 %v8328, %v8326
      %v8337 = vld [vmem:[%s11] sm:$0xf]
      %v8338 = vld [vmem:[%s11 + $0x4] sm:$0xf]
      %v8339 = vld [vmem:[%s11 + $0x8] sm:$0xf]
      %v8340 = vld [vmem:[%s11 + $0xc] sm:$0xf]
      %v8341 = vld [vmem:[%s11 + $0x10] sm:$0xf]
      %v8342 = vld [vmem:[%s11 + $0x14] sm:$0xf]
      %v8343 = vld [vmem:[%s11 + $0x18] sm:$0xf]
      %v8344 = vld [vmem:[%s11 + $0x1c] sm:$0xf]
      %v8345 = vld [vmem:[%s11 + $0x20] sm:$0xf]
      %v8346 = vld [vmem:[%s11 + $0x24] sm:$0xf]
      %v8347 = vld [vmem:[%s11 + $0x28] sm:$0xf]
      %v8348 = vld [vmem:[%s11 + $0x2c] sm:$0xf]
      %v8349 = vld [vmem:[%s11 + $0x30] sm:$0xf]
      %v8350 = vld [vmem:[%s11 + $0x34] sm:$0xf]
      %v8351 = vld [vmem:[%s11 + $0x38] sm:$0xf]
      %v8352 = vld [vmem:[%s11 + $0x3c] sm:$0xf]
      %v8353 = vld [vmem:[%s11 + $0x40] sm:$0xf]
      %v8354 = vld [vmem:[%s11 + $0x44] sm:$0xf]
      %v8355 = vld [vmem:[%s11 + $0x48] sm:$0xf]
      %v8356 = vld [vmem:[%s11 + $0x4c] sm:$0xf]
      %v8357 = vld [vmem:[%s11 + $0x50] sm:$0xf]
      %v8358 = vld [vmem:[%s11 + $0x54] sm:$0xf]
      %v8359 = vld [vmem:[%s11 + $0x58] sm:$0xf]
      %v8360 = vld [vmem:[%s11 + $0x5c] sm:$0xf]
      %v8361 = vld [vmem:[%s11 + $0x60] sm:$0xf]
      %v8362 = vld [vmem:[%s11 + $0x64] sm:$0xf]
      %v8363 = vld [vmem:[%s11 + $0x68] sm:$0xf]
      %v8364 = vld [vmem:[%s11 + $0x6c] sm:$0xf]
      %v8365 = vld [vmem:[%s11 + $0x70] sm:$0xf]
      %v8366 = vld [vmem:[%s11 + $0x74] sm:$0xf]
      %v8367 = vld [vmem:[%s11 + $0x78] sm:$0xf]
      %v8368 = vld [vmem:[%s11 + $0x7c] sm:$0xf]
      %v8369 = vld [vmem:[%s12] sm:$0x1]
      %v8371 = vlaneseq
      %v8372 = vshrl.u32 %v8371, 7
      %v8373 = vsub.s32 0, %v8372
      %v8374 = vrot.slane %v8369, %v8373
      %v8408 = vunpack.c.l.b16 %v8337
      %v8409 = vunpack.c.l.b16 %v8338
      %v8410 = vunpack.c.l.b16 %v8339
      %v8411 = vunpack.c.l.b16 %v8340
      %v8412 = vunpack.c.l.b16 %v8341
      %v8413 = vunpack.c.l.b16 %v8342
      %v8414 = vunpack.c.l.b16 %v8343
      %v8415 = vunpack.c.l.b16 %v8344
      %v8416 = vunpack.c.l.b16 %v8345
      %v8417 = vunpack.c.l.b16 %v8346
      %v8418 = vunpack.c.l.b16 %v8347
      %v8419 = vunpack.c.l.b16 %v8348
      %v8420 = vunpack.c.l.b16 %v8349
      %v8421 = vunpack.c.l.b16 %v8350
      %v8422 = vunpack.c.l.b16 %v8351
      %v8423 = vunpack.c.l.b16 %v8352
      %v8424 = vunpack.c.l.b16 %v8353
      %v8425 = vunpack.c.l.b16 %v8354
      %v8426 = vunpack.c.l.b16 %v8355
      %v8427 = vunpack.c.l.b16 %v8356
      %v8428 = vunpack.c.l.b16 %v8357
      %v8429 = vunpack.c.l.b16 %v8358
      %v8430 = vunpack.c.l.b16 %v8359
      %v8431 = vunpack.c.l.b16 %v8360
      %v8432 = vunpack.c.l.b16 %v8361
      %v8433 = vunpack.c.l.b16 %v8362
      %v8434 = vunpack.c.l.b16 %v8363
      %v8435 = vunpack.c.l.b16 %v8364
      %v8436 = vunpack.c.l.b16 %v8365
      %v8437 = vunpack.c.l.b16 %v8366
      %v8438 = vunpack.c.l.b16 %v8367
      %v8439 = vunpack.c.l.b16 %v8368
      %v8440 = vpack.c.b16 %v8409, %v8408
      %v8441 = vpack.c.b16 %v8411, %v8410
      %v8442 = vpack.c.b16 %v8413, %v8412
      %v8443 = vpack.c.b16 %v8415, %v8414
      %v8444 = vpack.c.b16 %v8417, %v8416
      %v8445 = vpack.c.b16 %v8419, %v8418
      %v8446 = vpack.c.b16 %v8421, %v8420
      %v8447 = vpack.c.b16 %v8423, %v8422
      %v8448 = vpack.c.b16 %v8425, %v8424
      %v8449 = vpack.c.b16 %v8427, %v8426
      %v8450 = vpack.c.b16 %v8429, %v8428
      %v8451 = vpack.c.b16 %v8431, %v8430
      %v8452 = vpack.c.b16 %v8433, %v8432
      %v8453 = vpack.c.b16 %v8435, %v8434
      %v8454 = vpack.c.b16 %v8437, %v8436
      %v8455 = vpack.c.b16 %v8439, %v8438
      %8472 = vmatprep.subr.bf16.mxu0 0
      %8473 = vmatpush1.bf16.msra.mxu0 %v8447
      %8474 = vmatprep.subr.bf16.mxu0 0
      %8475 = vmatpush1.bf16.msra.mxu0 %v8446
      %8476 = vmatprep.subr.bf16.mxu0 0
      %8477 = vmatpush1.bf16.msra.mxu0 %v8445
      %8478 = vmatprep.subr.bf16.mxu0 0
      %8479 = vmatpush1.bf16.msra.mxu0 %v8444
      %8480 = vmatprep.subr.bf16.mxu0 0
      %8481 = vmatpush1.bf16.msra.mxu0 %v8443
      %8482 = vmatprep.subr.bf16.mxu0 0
      %8483 = vmatpush1.bf16.msra.mxu0 %v8442
      %8484 = vmatprep.subr.bf16.mxu0 0
      %8485 = vmatpush1.bf16.msra.mxu0 %v8441
      %8486 = vmatprep.subr.bf16.mxu0 0
      %8487 = vmatpush1.bf16.msra.mxu0 %v8440
      %8488 = vmatprep.subr.bf16.mxu0 0
      %8489 = vmatpush2.bf16.msra.mxu0 %v8455
      %8490 = vmatprep.subr.bf16.mxu0 0
      %8491 = vmatpush2.bf16.msra.mxu0 %v8454
      %8492 = vmatprep.subr.bf16.mxu0 0
      %8493 = vmatpush2.bf16.msra.mxu0 %v8453
      %8494 = vmatprep.subr.bf16.mxu0 0
      %8495 = vmatpush2.bf16.msra.mxu0 %v8452
      %8496 = vmatprep.subr.bf16.mxu0 0
      %8497 = vmatpush2.bf16.msra.mxu0 %v8451
      %8498 = vmatprep.subr.bf16.mxu0 0
      %8499 = vmatpush2.bf16.msra.mxu0 %v8450
      %8500 = vmatprep.subr.bf16.mxu0 0
      %8501 = vmatpush2.bf16.msra.mxu0 %v8449
      %8502 = vmatprep.subr.bf16.mxu0 0
      %8503 = vmatpush2.bf16.msra.mxu0 %v8448
      %8504 = vmatprep.mubr.bf16.mxu0 %v8330
      %8505 = vmatmul.mubr.bf16.gmra.mxu0 %v8329
      %v8506 = vpop.f32.mrf.mxu0
      %v8507 = vadd.f32 %v8374, %v8506
      %v8508 = vpop.f32.mrf.mxu0
      %v8509 = vpop.f32.mrf.mxu0
      %v8510 = vadd.f32 %v8374, %v8509
      %v8511 = vpop.f32.mrf.mxu0
      %8512 = vmatprep.mubr.bf16.mxu0 %v8332
      %8513 = vmatmul.mubr.bf16.gmra.mxu0 %v8331
      %v8514 = vpop.f32.mrf.mxu0
      %v8515 = vadd.f32 %v8374, %v8514
      %v8516 = vpop.f32.mrf.mxu0
      %v8517 = vpop.f32.mrf.mxu0
      %v8518 = vadd.f32 %v8374, %v8517
      %v8519 = vpop.f32.mrf.mxu0
      %8520 = vmatprep.mubr.bf16.mxu0 %v8334
      %8521 = vmatmul.mubr.bf16.gmra.mxu0 %v8333
      %v8522 = vpop.f32.mrf.mxu0
      %v8523 = vadd.f32 %v8374, %v8522
      %v8524 = vpop.f32.mrf.mxu0
      %v8525 = vpop.f32.mrf.mxu0
      %v8526 = vadd.f32 %v8374, %v8525
      %v8527 = vpop.f32.mrf.mxu0
      %8528 = vmatprep.mubr.bf16.mxu0 %v8336
      %8529 = vmatmul.mubr.bf16.gmra.mxu0 %v8335
      %v8530 = vpop.f32.mrf.mxu0
      %v8531 = vadd.f32 %v8374, %v8530
      %v8532 = vpop.f32.mrf.mxu0
      %v8533 = vpop.f32.mrf.mxu0
      %v8534 = vadd.f32 %v8374, %v8533
      %v8535 = vpop.f32.mrf.mxu0
      %8536 = vdwg.mxu0
      %v8537 = vmax.f32 %v8507, 0.0
      %v8538 = vmax.f32 %v8510, 0.0
      %v8539 = vmax.f32 %v8515, 0.0
      %v8540 = vmax.f32 %v8518, 0.0
      %v8541 = vmax.f32 %v8523, 0.0
      %v8542 = vmax.f32 %v8526, 0.0
      %v8543 = vmax.f32 %v8531, 0.0
      %v8544 = vmax.f32 %v8534, 0.0
      %v8545 = vpack.c.bf16 %v8538, %v8537
      %v8546 = vpack.c.bf16 %v8540, %v8539
      %v8547 = vpack.c.bf16 %v8542, %v8541
      %v8548 = vpack.c.bf16 %v8544, %v8543
      %v8549 = vld [vmem:[%s13] sm:$0xf]
      %v8550 = vld [vmem:[%s13 + $0x4] sm:$0xf]
      %v8551 = vld [vmem:[%s14] sm:$0x1]
      %v8553 = vlaneseq
      %v8554 = vshrl.u32 %v8553, 7
      %v8555 = vsub.s32 0, %v8554
      %v8556 = vrot.slane %v8551, %v8555
      %v8560 = vunpack.c.l.b16 %v8549
      %v8561 = vunpack.c.l.b16 %v8550
      %v8562 = vpack.c.b16 %v8561, %v8560
      %vm8564 = vcmask 130048
      %v8566 = vsel %vm8564, %v8545, 0
      %v8569 = vsel %vm8564, %v8546, 0
      %v8572 = vsel %vm8564, %v8547, 0
      %v8575 = vsel %vm8564, %v8548, 0
      %8577 = vmatprep.subr.bf16.mxu0 0
      %8578 = vmatpush1.bf16.msra.mxu0 0
      %8579 = vmatprep.subr.bf16.mxu0 0
      %8580 = vmatpush1.bf16.msra.mxu0 0
      %8581 = vmatprep.subr.bf16.mxu0 0
      %8582 = vmatpush1.bf16.msra.mxu0 0
      %8583 = vmatprep.subr.bf16.mxu0 0
      %8584 = vmatpush1.bf16.msra.mxu0 0
      %8585 = vmatprep.subr.bf16.mxu0 0
      %8586 = vmatpush1.bf16.msra.mxu0 0
      %8587 = vmatprep.subr.bf16.mxu0 0
      %8588 = vmatpush1.bf16.msra.mxu0 0
      %8589 = vmatprep.subr.bf16.mxu0 0
      %8590 = vmatpush1.bf16.msra.mxu0 0
      %8591 = vmatprep.subr.bf16.mxu0 0
      %8592 = vmatpush1.bf16.msra.mxu0 %v8562
      %8593 = vmatprep.subr.bf16.mxu0 0
      %8594 = vmatpush2.bf16.msra.mxu0 0
      %8595 = vmatprep.subr.bf16.mxu0 0
      %8596 = vmatpush2.bf16.msra.mxu0 0
      %8597 = vmatprep.subr.bf16.mxu0 0
      %8598 = vmatpush2.bf16.msra.mxu0 0
      %8599 = vmatprep.subr.bf16.mxu0 0
      %8600 = vmatpush2.bf16.msra.mxu0 0
      %8601 = vmatprep.subr.bf16.mxu0 0
      %8602 = vmatpush2.bf16.msra.mxu0 0
      %8603 = vmatprep.subr.bf16.mxu0 0
      %8604 = vmatpush2.bf16.msra.mxu0 0
      %8605 = vmatprep.subr.bf16.mxu0 0
      %8606 = vmatpush2.bf16.msra.mxu0 0
      %8607 = vmatprep.subr.bf16.mxu0 0
      %8608 = vmatpush2.bf16.msra.mxu0 0
      %8609 = vmatprep.mubr.bf16.mxu0 0
      %8610 = vmatmul.mubr.bf16.gmra.mxu0 %v8566
      %v8611 = vpop.f32.mrf.mxu0
      %v8612 = vadd.f32 %v8556, %v8611
      %v8613 = vpop.f32.mrf.mxu0
      %v8614 = vpop.f32.mrf.mxu0
      %v8615 = vadd.f32 %v8556, %v8614
      %v8616 = vpop.f32.mrf.mxu0
      %8617 = vmatprep.mubr.bf16.mxu0 0
      %8618 = vmatmul.mubr.bf16.gmra.mxu0 %v8569
      %v8619 = vpop.f32.mrf.mxu0
      %v8620 = vadd.f32 %v8556, %v8619
      %v8621 = vpop.f32.mrf.mxu0
      %v8622 = vpop.f32.mrf.mxu0
      %v8623 = vadd.f32 %v8556, %v8622
      %v8624 = vpop.f32.mrf.mxu0
      %8625 = vmatprep.mubr.bf16.mxu0 0
      %8626 = vmatmul.mubr.bf16.gmra.mxu0 %v8572
      %v8627 = vpop.f32.mrf.mxu0
      %v8628 = vadd.f32 %v8556, %v8627
      %v8629 = vpop.f32.mrf.mxu0
      %v8630 = vpop.f32.mrf.mxu0
      %v8631 = vadd.f32 %v8556, %v8630
      %v8632 = vpop.f32.mrf.mxu0
      %8633 = vmatprep.mubr.bf16.mxu0 0
      %8634 = vmatmul.mubr.bf16.gmra.mxu0 %v8575
      %v8635 = vpop.f32.mrf.mxu0
      %v8636 = vadd.f32 %v8556, %v8635
      %v8637 = vpop.f32.mrf.mxu0
      %v8638 = vpop.f32.mrf.mxu0
      %v8639 = vadd.f32 %v8556, %v8638
      %v8640 = vpop.f32.mrf.mxu0
      %8641 = vdwg.mxu0
      %v8642 = vmax.f32 %v8612, 0.0
      %v8643 = vmax.f32 %v8615, 0.0
      %v8644 = vmax.f32 %v8620, 0.0
      %v8645 = vmax.f32 %v8623, 0.0
      %v8646 = vmax.f32 %v8628, 0.0
      %v8647 = vmax.f32 %v8631, 0.0
      %v8648 = vmax.f32 %v8636, 0.0
      %v8649 = vmax.f32 %v8639, 0.0
      %v8650 = vld [vmem:[%s15] sm:$0x1]
      %v8652 = vlaneseq
      %v8653 = vshrl.u32 %v8652, 7
      %v8654 = vsub.s32 0, %v8653
      %v8655 = vrot.slane %v8650, %v8654
      %v8657 = vmul.f32 %v8642, %v8655
      %v8658 = vmul.f32 %v8643, %v8655
      %v8659 = vmul.f32 %v8644, %v8655
      %v8660 = vmul.f32 %v8645, %v8655
      %v8661 = vmul.f32 %v8646, %v8655
      %v8662 = vmul.f32 %v8647, %v8655
      %v8663 = vmul.f32 %v8648, %v8655
      %v8664 = vmul.f32 %v8649, %v8655
      %v8665 = vsel %vm8115, %v8657, 0.0
      %8666 = vadd.xlane.f32.xlu0 %v8665
      %v8667 = vpop.xlane.xlu0 %8666
      %v8668 = vsel %vm8115, %v8658, 0.0
      %8669 = vadd.xlane.f32.xlu0 %v8668
      %v8670 = vpop.xlane.xlu0 %8669
      %v8671 = vsel %vm8115, %v8659, 0.0
      %8672 = vadd.xlane.f32.xlu0 %v8671
      %v8673 = vpop.xlane.xlu0 %8672
      %v8674 = vsel %vm8115, %v8660, 0.0
      %8675 = vadd.xlane.f32.xlu0 %v8674
      %v8676 = vpop.xlane.xlu0 %8675
      %v8677 = vsel %vm8115, %v8661, 0.0
      %8678 = vadd.xlane.f32.xlu0 %v8677
      %v8679 = vpop.xlane.xlu0 %8678
      %v8680 = vsel %vm8115, %v8662, 0.0
      %8681 = vadd.xlane.f32.xlu0 %v8680
      %v8682 = vpop.xlane.xlu0 %8681
      %v8683 = vsel %vm8115, %v8663, 0.0
      %8684 = vadd.xlane.f32.xlu0 %v8683
      %v8685 = vpop.xlane.xlu0 %8684
      %v8686 = vsel %vm8115, %v8664, 0.0
      %8687 = vadd.xlane.f32.xlu0 %v8686
      %v8688 = vpop.xlane.xlu0 %8687
      %8697 = vrot.lane.b32.xlu0 %v8657, 64
      %v8698 = vpop.permute.xlu0 %8697
      %8699 = vrot.lane.b32.xlu0 %v8658, 64
      %v8700 = vpop.permute.xlu0 %8699
      %8701 = vrot.lane.b32.xlu0 %v8659, 64
      %v8702 = vpop.permute.xlu0 %8701
      %8703 = vrot.lane.b32.xlu0 %v8660, 64
      %v8704 = vpop.permute.xlu0 %8703
      %8705 = vrot.lane.b32.xlu0 %v8661, 64
      %v8706 = vpop.permute.xlu0 %8705
      %8707 = vrot.lane.b32.xlu0 %v8662, 64
      %v8708 = vpop.permute.xlu0 %8707
      %8709 = vrot.lane.b32.xlu0 %v8663, 64
      %v8710 = vpop.permute.xlu0 %8709
      %8711 = vrot.lane.b32.xlu0 %v8664, 64
      %v8712 = vpop.permute.xlu0 %8711
      %v8721 = vsel %vm8115, %v8698, 0.0
      %8722 = vadd.xlane.f32.xlu0 %v8721
      %v8723 = vpop.xlane.xlu0 %8722
      %v8724 = vsel %vm8115, %v8700, 0.0
      %8725 = vadd.xlane.f32.xlu0 %v8724
      %v8726 = vpop.xlane.xlu0 %8725
      %v8727 = vsel %vm8115, %v8702, 0.0
      %8728 = vadd.xlane.f32.xlu0 %v8727
      %v8729 = vpop.xlane.xlu0 %8728
      %v8730 = vsel %vm8115, %v8704, 0.0
      %8731 = vadd.xlane.f32.xlu0 %v8730
      %v8732 = vpop.xlane.xlu0 %8731
      %v8733 = vsel %vm8115, %v8706, 0.0
      %8734 = vadd.xlane.f32.xlu0 %v8733
      %v8735 = vpop.xlane.xlu0 %8734
      %v8736 = vsel %vm8115, %v8708, 0.0
      %8737 = vadd.xlane.f32.xlu0 %v8736
      %v8738 = vpop.xlane.xlu0 %8737
      %v8739 = vsel %vm8115, %v8710, 0.0
      %8740 = vadd.xlane.f32.xlu0 %v8739
      %v8741 = vpop.xlane.xlu0 %8740
      %v8742 = vsel %vm8115, %v8712, 0.0
      %8743 = vadd.xlane.f32.xlu0 %v8742
      %v8744 = vpop.xlane.xlu0 %8743
      %s8745 = sld [smem:[#allocation3]]
      %v8746 = vstv %s8745
      %v8747 = vadd.f32 %v8723, %v8746
      %v8748 = vadd.f32 %v8726, %v8746
      %v8749 = vadd.f32 %v8729, %v8746
      %v8750 = vadd.f32 %v8732, %v8746
      %v8751 = vadd.f32 %v8735, %v8746
      %v8752 = vadd.f32 %v8738, %v8746
      %v8753 = vadd.f32 %v8741, %v8746
      %v8754 = vadd.f32 %v8744, %v8746
      %v8763 = vlaneseq
      %v8764 = vand.u32 %v8763, 127
      %v8765 = vlaneseq
      %v8766 = vshrl.u32 %v8765, 7
      %v8767 = vsub.s32 %v8764, %v8766
      %v8768 = vrot.slane %v8667, %v8767
      %v8769 = vlaneseq
      %v8770 = vshrl.u32 %v8769, 7
      %v8771 = vsub.s32 %v8764, %v8770
      %v8772 = vrot.slane %v8670, %v8771
      %v8773 = vlaneseq
      %v8774 = vshrl.u32 %v8773, 7
      %v8775 = vsub.s32 %v8764, %v8774
      %v8776 = vrot.slane %v8673, %v8775
      %v8777 = vlaneseq
      %v8778 = vshrl.u32 %v8777, 7
      %v8779 = vsub.s32 %v8764, %v8778
      %v8780 = vrot.slane %v8676, %v8779
      %v8781 = vlaneseq
      %v8782 = vshrl.u32 %v8781, 7
      %v8783 = vsub.s32 %v8764, %v8782
      %v8784 = vrot.slane %v8679, %v8783
      %v8785 = vlaneseq
      %v8786 = vshrl.u32 %v8785, 7
      %v8787 = vsub.s32 %v8764, %v8786
      %v8788 = vrot.slane %v8682, %v8787
      %v8789 = vlaneseq
      %v8790 = vshrl.u32 %v8789, 7
      %v8791 = vsub.s32 %v8764, %v8790
      %v8792 = vrot.slane %v8685, %v8791
      %v8793 = vlaneseq
      %v8794 = vshrl.u32 %v8793, 7
      %v8795 = vsub.s32 %v8764, %v8794
      %v8796 = vrot.slane %v8688, %v8795
      %vm8797 = vcmask 1041409
      %v8798 = vsel %vm8797, %v8772, %v8768
      %vm8799 = vcmask 1042434
      %v8800 = vsel %vm8799, %v8776, %v8798
      %vm8801 = vcmask 1043459
      %v8802 = vsel %vm8801, %v8780, %v8800
      %vm8803 = vcmask 1044484
      %v8804 = vsel %vm8803, %v8784, %v8802
      %vm8805 = vcmask 1045509
      %v8806 = vsel %vm8805, %v8788, %v8804
      %vm8807 = vcmask 1046534
      %v8808 = vsel %vm8807, %v8792, %v8806
      %vm8809 = vcmask 1047559
      %v8810 = vsel %vm8809, %v8796, %v8808
      %vm8812 = vcmask 64512
      %v8813 = vsel %vm8812, %v8810, -inf
      %8814 = vmax.xlane.f32.xlu0 %v8813
      %v8815 = vpop.xlane.xlu0 %8814
      %v8817 = vlaneseq
      %v8818 = vshrl.u32 %v8817, 7
      %v8819 = vsub.s32 0, %v8818
      %v8820 = vrot.slane %v8815, %v8819
      %v8821 = vlaneseq
      %v8822 = vshrl.u32 %v8821, 7
      %v8823 = vsub.s32 1, %v8822
      %v8824 = vrot.slane %v8815, %v8823
      %v8825 = vlaneseq
      %v8826 = vshrl.u32 %v8825, 7
      %v8827 = vsub.s32 2, %v8826
      %v8828 = vrot.slane %v8815, %v8827
      %v8829 = vlaneseq
      %v8830 = vshrl.u32 %v8829, 7
      %v8831 = vsub.s32 3, %v8830
      %v8832 = vrot.slane %v8815, %v8831
      %v8833 = vlaneseq
      %v8834 = vshrl.u32 %v8833, 7
      %v8835 = vsub.s32 4, %v8834
      %v8836 = vrot.slane %v8815, %v8835
      %v8837 = vlaneseq
      %v8838 = vshrl.u32 %v8837, 7
      %v8839 = vsub.s32 5, %v8838
      %v8840 = vrot.slane %v8815, %v8839
      %v8841 = vlaneseq
      %v8842 = vshrl.u32 %v8841, 7
      %v8843 = vsub.s32 6, %v8842
      %v8844 = vrot.slane %v8815, %v8843
      %v8845 = vlaneseq
      %v8846 = vshrl.u32 %v8845, 7
      %v8847 = vsub.s32 7, %v8846
      %v8848 = vrot.slane %v8815, %v8847
      %v8857 = vsub.f32 %v8667, %v8820
      %v8858 = vsub.f32 %v8670, %v8824
      %v8859 = vsub.f32 %v8673, %v8828
      %v8860 = vsub.f32 %v8676, %v8832
      %v8861 = vsub.f32 %v8679, %v8836
      %v8862 = vsub.f32 %v8682, %v8840
      %v8863 = vsub.f32 %v8685, %v8844
      %v8864 = vsub.f32 %v8688, %v8848
      %v8865 = vmul.f32 %v8857, 1.442695
      %v8866 = vpow.pop %v8865
      %v8867 = vmul.f32 %v8858, 1.442695
      %v8868 = vpow.pop %v8867
      %v8869 = vmul.f32 %v8859, 1.442695
      %v8870 = vpow.pop %v8869
      %v8871 = vmul.f32 %v8860, 1.442695
      %v8872 = vpow.pop %v8871
      %v8873 = vmul.f32 %v8861, 1.442695
      %v8874 = vpow.pop %v8873
      %v8875 = vmul.f32 %v8862, 1.442695
      %v8876 = vpow.pop %v8875
      %v8877 = vmul.f32 %v8863, 1.442695
      %v8878 = vpow.pop %v8877
      %v8879 = vmul.f32 %v8864, 1.442695
      %v8880 = vpow.pop %v8879
      %8889 = vset.pattern.permute.xlu0 0
      %8890 = vperm.xlu0 %8889, %v8866
      %v8891 = vpop.permute.xlu0 %8890
      %8892 = vset.pattern.permute.xlu0 0
      %8893 = vperm.xlu0 %8892, %v8868
      %v8894 = vpop.permute.xlu0 %8893
      %8895 = vset.pattern.permute.xlu0 0
      %8896 = vperm.xlu0 %8895, %v8870
      %v8897 = vpop.permute.xlu0 %8896
      %8898 = vset.pattern.permute.xlu0 0
      %8899 = vperm.xlu0 %8898, %v8872
      %v8900 = vpop.permute.xlu0 %8899
      %8901 = vset.pattern.permute.xlu0 0
      %8902 = vperm.xlu0 %8901, %v8874
      %v8903 = vpop.permute.xlu0 %8902
      %8904 = vset.pattern.permute.xlu0 0
      %8905 = vperm.xlu0 %8904, %v8876
      %v8906 = vpop.permute.xlu0 %8905
      %8907 = vset.pattern.permute.xlu0 0
      %8908 = vperm.xlu0 %8907, %v8878
      %v8909 = vpop.permute.xlu0 %8908
      %8910 = vset.pattern.permute.xlu0 0
      %8911 = vperm.xlu0 %8910, %v8880
      %v8912 = vpop.permute.xlu0 %8911
      %v8913 = vlaneseq
      %v8914 = vshrl.u32 %v8913, 7
      %v8915 = vsub.s32 %v8764, %v8914
      %v8916 = vrot.slane %v8891, %v8915
      %v8917 = vlaneseq
      %v8918 = vshrl.u32 %v8917, 7
      %v8919 = vsub.s32 %v8764, %v8918
      %v8920 = vrot.slane %v8894, %v8919
      %v8921 = vlaneseq
      %v8922 = vshrl.u32 %v8921, 7
      %v8923 = vsub.s32 %v8764, %v8922
      %v8924 = vrot.slane %v8897, %v8923
      %v8925 = vlaneseq
      %v8926 = vshrl.u32 %v8925, 7
      %v8927 = vsub.s32 %v8764, %v8926
      %v8928 = vrot.slane %v8900, %v8927
      %v8929 = vlaneseq
      %v8930 = vshrl.u32 %v8929, 7
      %v8931 = vsub.s32 %v8764, %v8930
      %v8932 = vrot.slane %v8903, %v8931
      %v8933 = vlaneseq
      %v8934 = vshrl.u32 %v8933, 7
      %v8935 = vsub.s32 %v8764, %v8934
      %v8936 = vrot.slane %v8906, %v8935
      %v8937 = vlaneseq
      %v8938 = vshrl.u32 %v8937, 7
      %v8939 = vsub.s32 %v8764, %v8938
      %v8940 = vrot.slane %v8909, %v8939
      %v8941 = vlaneseq
      %v8942 = vshrl.u32 %v8941, 7
      %v8943 = vsub.s32 %v8764, %v8942
      %v8944 = vrot.slane %v8912, %v8943
      %v8945 = vsel %vm8797, %v8920, %v8916
      %v8946 = vsel %vm8799, %v8924, %v8945
      %v8947 = vsel %vm8801, %v8928, %v8946
      %v8948 = vsel %vm8803, %v8932, %v8947
      %v8949 = vsel %vm8805, %v8936, %v8948
      %v8950 = vsel %vm8807, %v8940, %v8949
      %v8951 = vsel %vm8809, %v8944, %v8950
      %v8953 = vsel %vm8812, %v8951, 0.0
      %8954 = vadd.xlane.f32.xlu0 %v8953
      %v8955 = vpop.xlane.xlu0 %8954
      %v8956 = vrcp.pop %v8955
      %v8958 = vlaneseq
      %v8959 = vshrl.u32 %v8958, 7
      %v8960 = vsub.s32 0, %v8959
      %v8961 = vrot.slane %v8956, %v8960
      %v8962 = vlaneseq
      %v8963 = vshrl.u32 %v8962, 7
      %v8964 = vsub.s32 1, %v8963
      %v8965 = vrot.slane %v8956, %v8964
      %v8966 = vlaneseq
      %v8967 = vshrl.u32 %v8966, 7
      %v8968 = vsub.s32 2, %v8967
      %v8969 = vrot.slane %v8956, %v8968
      %v8970 = vlaneseq
      %v8971 = vshrl.u32 %v8970, 7
      %v8972 = vsub.s32 3, %v8971
      %v8973 = vrot.slane %v8956, %v8972
      %v8974 = vlaneseq
      %v8975 = vshrl.u32 %v8974, 7
      %v8976 = vsub.s32 4, %v8975
      %v8977 = vrot.slane %v8956, %v8976
      %v8978 = vlaneseq
      %v8979 = vshrl.u32 %v8978, 7
      %v8980 = vsub.s32 5, %v8979
      %v8981 = vrot.slane %v8956, %v8980
      %v8982 = vlaneseq
      %v8983 = vshrl.u32 %v8982, 7
      %v8984 = vsub.s32 6, %v8983
      %v8985 = vrot.slane %v8956, %v8984
      %v8986 = vlaneseq
      %v8987 = vshrl.u32 %v8986, 7
      %v8988 = vsub.s32 7, %v8987
      %v8989 = vrot.slane %v8956, %v8988
      %v8998 = vmul.f32 %v8866, %v8961
      %v8999 = vmul.f32 %v8868, %v8965
      %v9000 = vmul.f32 %v8870, %v8969
      %v9001 = vmul.f32 %v8872, %v8973
      %v9002 = vmul.f32 %v8874, %v8977
      %v9003 = vmul.f32 %v8876, %v8981
      %v9004 = vmul.f32 %v8878, %v8985
      %v9005 = vmul.f32 %v8880, %v8989
      %v9006 = vpack.c.bf16 %v8998, %v8998
      %v9007 = vpack.c.bf16 %v8999, %v8999
      %v9008 = vpack.c.bf16 %v9000, %v9000
      %v9009 = vpack.c.bf16 %v9001, %v9001
      %v9010 = vpack.c.bf16 %v9002, %v9002
      %v9011 = vpack.c.bf16 %v9003, %v9003
      %v9012 = vpack.c.bf16 %v9004, %v9004
      %v9013 = vpack.c.bf16 %v9005, %v9005
      %v9014 = vunpack.c.l.bf16 %v8059
      %v9015 = vunpack.c.l.bf16 %v8060
      %v9016 = vunpack.c.l.bf16 %v8061
      %v9017 = vunpack.c.l.bf16 %v8062
      %v9018 = vunpack.c.l.bf16 %v8063
      %v9019 = vunpack.c.l.bf16 %v8064
      %v9020 = vunpack.c.l.bf16 %v8065
      %v9021 = vunpack.c.l.bf16 %v8066
      %9023 = vset.pattern.permute.xlu0 0
      %9024 = vperm.xlu0 %9023, %v8998
      %v9025 = vpop.permute.xlu0 %9024
      %9028 = vset.pattern.permute.xlu0 0
      %9029 = vperm.xlu0 %9028, %v8999
      %v9030 = vpop.permute.xlu0 %9029
      %9033 = vset.pattern.permute.xlu0 0
      %9034 = vperm.xlu0 %9033, %v9000
      %v9035 = vpop.permute.xlu0 %9034
      %9038 = vset.pattern.permute.xlu0 0
      %9039 = vperm.xlu0 %9038, %v9001
      %v9040 = vpop.permute.xlu0 %9039
      %9043 = vset.pattern.permute.xlu0 0
      %9044 = vperm.xlu0 %9043, %v9002
      %v9045 = vpop.permute.xlu0 %9044
      %9048 = vset.pattern.permute.xlu0 0
      %9049 = vperm.xlu0 %9048, %v9003
      %v9050 = vpop.permute.xlu0 %9049
      %9053 = vset.pattern.permute.xlu0 0
      %9054 = vperm.xlu0 %9053, %v9004
      %v9055 = vpop.permute.xlu0 %9054
      %9058 = vset.pattern.permute.xlu0 0
      %9059 = vperm.xlu0 %9058, %v9005
      %v9060 = vpop.permute.xlu0 %9059
      %v9062 = vmul.f32 %v9025, %v9014
      %v9063 = vmul.f32 %v9030, %v9015
      %v9064 = vmul.f32 %v9035, %v9016
      %v9065 = vmul.f32 %v9040, %v9017
      %v9066 = vmul.f32 %v9045, %v9018
      %v9067 = vmul.f32 %v9050, %v9019
      %v9068 = vmul.f32 %v9055, %v9020
      %v9069 = vmul.f32 %v9060, %v9021
      %v9070 = vsel %vm8115, %v9062, 0.0
      %v9071 = vrot.slane %v9070, 4
      %v9072 = vadd.f32 %v9070, %v9071
      %v9073 = vrot.slane %v9072, 2
      %v9074 = vadd.f32 %v9072, %v9073
      %v9075 = vrot.slane %v9074, 1
      %v9076 = vadd.f32 %v9074, %v9075
      %v9077 = vsel %vm8115, %v9063, 0.0
      %v9078 = vrot.slane %v9077, 4
      %v9079 = vadd.f32 %v9077, %v9078
      %v9080 = vrot.slane %v9079, 2
      %v9081 = vadd.f32 %v9079, %v9080
      %v9082 = vrot.slane %v9081, 1
      %v9083 = vadd.f32 %v9081, %v9082
      %v9084 = vsel %vm8115, %v9064, 0.0
      %v9085 = vrot.slane %v9084, 4
      %v9086 = vadd.f32 %v9084, %v9085
      %v9087 = vrot.slane %v9086, 2
      %v9088 = vadd.f32 %v9086, %v9087
      %v9089 = vrot.slane %v9088, 1
      %v9090 = vadd.f32 %v9088, %v9089
      %v9091 = vsel %vm8115, %v9065, 0.0
      %v9092 = vrot.slane %v9091, 4
      %v9093 = vadd.f32 %v9091, %v9092
      %v9094 = vrot.slane %v9093, 2
      %v9095 = vadd.f32 %v9093, %v9094
      %v9096 = vrot.slane %v9095, 1
      %v9097 = vadd.f32 %v9095, %v9096
      %v9098 = vsel %vm8115, %v9066, 0.0
      %v9099 = vrot.slane %v9098, 4
      %v9100 = vadd.f32 %v9098, %v9099
      %v9101 = vrot.slane %v9100, 2
      %v9102 = vadd.f32 %v9100, %v9101
      %v9103 = vrot.slane %v9102, 1
      %v9104 = vadd.f32 %v9102, %v9103
      %v9105 = vsel %vm8115, %v9067, 0.0
      %v9106 = vrot.slane %v9105, 4
      %v9107 = vadd.f32 %v9105, %v9106
      %v9108 = vrot.slane %v9107, 2
      %v9109 = vadd.f32 %v9107, %v9108
      %v9110 = vrot.slane %v9109, 1
      %v9111 = vadd.f32 %v9109, %v9110
      %v9112 = vsel %vm8115, %v9068, 0.0
      %v9113 = vrot.slane %v9112, 4
      %v9114 = vadd.f32 %v9112, %v9113
      %v9115 = vrot.slane %v9114, 2
      %v9116 = vadd.f32 %v9114, %v9115
      %v9117 = vrot.slane %v9116, 1
      %v9118 = vadd.f32 %v9116, %v9117
      %v9119 = vsel %vm8115, %v9069, 0.0
      %v9120 = vrot.slane %v9119, 4
      %v9121 = vadd.f32 %v9119, %v9120
      %v9122 = vrot.slane %v9121, 2
      %v9123 = vadd.f32 %v9121, %v9122
      %v9124 = vrot.slane %v9123, 1
      %v9125 = vadd.f32 %v9123, %v9124
      %v9134 = vunpack.c.l.b16 %v9006
      %v9135 = vunpack.c.l.b16 %v9007
      %v9136 = vunpack.c.l.b16 %v9008
      %v9137 = vunpack.c.l.b16 %v9009
      %v9138 = vunpack.c.l.b16 %v9010
      %v9139 = vunpack.c.l.b16 %v9011
      %v9140 = vunpack.c.l.b16 %v9012
      %v9141 = vunpack.c.l.b16 %v9013
      %9142 = vset.pattern.permute.xlu0 0
      %9143 = vperm.xlu0 %9142, %v9134
      %v9144 = vpop.permute.xlu0 %9143
      %9145 = vset.pattern.permute.xlu0 0
      %9146 = vperm.xlu0 %9145, %v9135
      %v9147 = vpop.permute.xlu0 %9146
      %9148 = vset.pattern.permute.xlu0 0
      %9149 = vperm.xlu0 %9148, %v9136
      %v9150 = vpop.permute.xlu0 %9149
      %9151 = vset.pattern.permute.xlu0 0
      %9152 = vperm.xlu0 %9151, %v9137
      %v9153 = vpop.permute.xlu0 %9152
      %9154 = vset.pattern.permute.xlu0 0
      %9155 = vperm.xlu0 %9154, %v9138
      %v9156 = vpop.permute.xlu0 %9155
      %9157 = vset.pattern.permute.xlu0 0
      %9158 = vperm.xlu0 %9157, %v9139
      %v9159 = vpop.permute.xlu0 %9158
      %9160 = vset.pattern.permute.xlu0 0
      %9161 = vperm.xlu0 %9160, %v9140
      %v9162 = vpop.permute.xlu0 %9161
      %9163 = vset.pattern.permute.xlu0 0
      %9164 = vperm.xlu0 %9163, %v9141
      %v9165 = vpop.permute.xlu0 %9164
      %v9166 = vlaneseq
      %v9167 = vshrl.u32 %v9166, 7
      %v9168 = vsub.s32 %v8764, %v9167
      %v9169 = vrot.slane %v9144, %v9168
      %v9170 = vlaneseq
      %v9171 = vshrl.u32 %v9170, 7
      %v9172 = vsub.s32 %v8764, %v9171
      %v9173 = vrot.slane %v9147, %v9172
      %v9174 = vlaneseq
      %v9175 = vshrl.u32 %v9174, 7
      %v9176 = vsub.s32 %v8764, %v9175
      %v9177 = vrot.slane %v9150, %v9176
      %v9178 = vlaneseq
      %v9179 = vshrl.u32 %v9178, 7
      %v9180 = vsub.s32 %v8764, %v9179
      %v9181 = vrot.slane %v9153, %v9180
      %v9182 = vlaneseq
      %v9183 = vshrl.u32 %v9182, 7
      %v9184 = vsub.s32 %v8764, %v9183
      %v9185 = vrot.slane %v9156, %v9184
      %v9186 = vlaneseq
      %v9187 = vshrl.u32 %v9186, 7
      %v9188 = vsub.s32 %v8764, %v9187
      %v9189 = vrot.slane %v9159, %v9188
      %v9190 = vlaneseq
      %v9191 = vshrl.u32 %v9190, 7
      %v9192 = vsub.s32 %v8764, %v9191
      %v9193 = vrot.slane %v9162, %v9192
      %v9194 = vlaneseq
      %v9195 = vshrl.u32 %v9194, 7
      %v9196 = vsub.s32 %v8764, %v9195
      %v9197 = vrot.slane %v9165, %v9196
      %v9198 = vsel %vm8797, %v9173, %v9169
      %v9199 = vsel %vm8799, %v9177, %v9198
      %v9200 = vsel %vm8801, %v9181, %v9199
      %v9201 = vsel %vm8803, %v9185, %v9200
      %v9202 = vsel %vm8805, %v9189, %v9201
      %v9203 = vsel %vm8807, %v9193, %v9202
      %v9204 = vsel %vm8809, %v9197, %v9203
      %v9205 = vpack.c.b16 %v9204, %v9204
      %v9214 = vsel %vm8797, %v9083, %v9076
      %v9215 = vsel %vm8799, %v9090, %v9214
      %v9216 = vsel %vm8801, %v9097, %v9215
      %v9217 = vsel %vm8803, %v9104, %v9216
      %v9218 = vsel %vm8805, %v9111, %v9217
      %v9219 = vsel %vm8807, %v9118, %v9218
      %v9220 = vsel %vm8809, %v9125, %v9219
      %v9223 = vsel %vm8812, %v9205, 0
      %vm9225 = vcmask 1043456
      %v9227 = vsel %vm9225, %v7921, 0
      %9229 = vmatprep.subr.bf16.mxu0 0
      %9230 = vmatpush1.bf16.msra.mxu0 0
      %9231 = vmatprep.subr.bf16.mxu0 0
      %9232 = vmatpush1.bf16.msra.mxu0 0
      %9233 = vmatprep.subr.bf16.mxu0 0
      %9234 = vmatpush1.bf16.msra.mxu0 0
      %9235 = vmatprep.subr.bf16.mxu0 0
      %9236 = vmatpush1.bf16.msra.mxu0 0
      %9237 = vmatprep.subr.bf16.mxu0 0
      %9238 = vmatpush1.bf16.msra.mxu0 0
      %9239 = vmatprep.subr.bf16.mxu0 0
      %9240 = vmatpush1.bf16.msra.mxu0 0
      %9241 = vmatprep.subr.bf16.mxu0 0
      %9242 = vmatpush1.bf16.msra.mxu0 0
      %9243 = vmatprep.subr.bf16.mxu0 0
      %9244 = vmatpush1.bf16.msra.mxu0 %v9227
      %9245 = vmatprep.subr.bf16.mxu0 0
      %9246 = vmatpush2.bf16.msra.mxu0 0
      %9247 = vmatprep.subr.bf16.mxu0 0
      %9248 = vmatpush2.bf16.msra.mxu0 0
      %9249 = vmatprep.subr.bf16.mxu0 0
      %9250 = vmatpush2.bf16.msra.mxu0 0
      %9251 = vmatprep.subr.bf16.mxu0 0
      %9252 = vmatpush2.bf16.msra.mxu0 0
      %9253 = vmatprep.subr.bf16.mxu0 0
      %9254 = vmatpush2.bf16.msra.mxu0 0
      %9255 = vmatprep.subr.bf16.mxu0 0
      %9256 = vmatpush2.bf16.msra.mxu0 0
      %9257 = vmatprep.subr.bf16.mxu0 0
      %9258 = vmatpush2.bf16.msra.mxu0 0
      %9259 = vmatprep.subr.bf16.mxu0 0
      %9260 = vmatpush2.bf16.msra.mxu0 0
      %9261 = vmatprep.mubr.bf16.mxu0 0
      %9262 = vmatmul.mubr.bf16.gmra.mxu0 %v9223
      %v9263 = vpop.f32.mrf.mxu0
      %v9264 = vadd.f32 %v9220, %v9263
      %v9265 = vpop.f32.mrf.mxu0
      %v9266 = vpop.f32.mrf.mxu0
      %v9267 = vpop.f32.mrf.mxu0
      %9268 = vdwg.mxu0
      %v9277 = vlaneseq
      %v9278 = vshrl.u32 %v9277, 7
      %v9279 = vsub.s32 %v8764, %v9278
      %v9280 = vrot.slane %v8747, %v9279
      %v9281 = vlaneseq
      %v9282 = vshrl.u32 %v9281, 7
      %v9283 = vsub.s32 %v8764, %v9282
      %v9284 = vrot.slane %v8748, %v9283
      %v9285 = vlaneseq
      %v9286 = vshrl.u32 %v9285, 7
      %v9287 = vsub.s32 %v8764, %v9286
      %v9288 = vrot.slane %v8749, %v9287
      %v9289 = vlaneseq
      %v9290 = vshrl.u32 %v9289, 7
      %v9291 = vsub.s32 %v8764, %v9290
      %v9292 = vrot.slane %v8750, %v9291
      %v9293 = vlaneseq
      %v9294 = vshrl.u32 %v9293, 7
      %v9295 = vsub.s32 %v8764, %v9294
      %v9296 = vrot.slane %v8751, %v9295
      %v9297 = vlaneseq
      %v9298 = vshrl.u32 %v9297, 7
      %v9299 = vsub.s32 %v8764, %v9298
      %v9300 = vrot.slane %v8752, %v9299
      %v9301 = vlaneseq
      %v9302 = vshrl.u32 %v9301, 7
      %v9303 = vsub.s32 %v8764, %v9302
      %v9304 = vrot.slane %v8753, %v9303
      %v9305 = vlaneseq
      %v9306 = vshrl.u32 %v9305, 7
      %v9307 = vsub.s32 %v8764, %v9306
      %v9308 = vrot.slane %v8754, %v9307
      %v9309 = vsel %vm8797, %v9284, %v9280
      %v9310 = vsel %vm8799, %v9288, %v9309
      %v9311 = vsel %vm8801, %v9292, %v9310
      %v9312 = vsel %vm8803, %v9296, %v9311
      %v9313 = vsel %vm8805, %v9300, %v9312
      %v9314 = vsel %vm8807, %v9304, %v9313
      %v9315 = vsel %vm8809, %v9308, %v9314
      %v9317 = vsel %vm8812, %v9315, 0.0
      %9318 = vadd.xlane.f32.xlu0 %v9317
      %v9319 = vpop.xlane.xlu0 %9318
      %v9320 = vmul.f32 %v9319, %v715
      %v9321 = vsel %vm8812, %v9315, 0
      %9323 = vmatprep.subr.mxu0 0.0
      %9324 = vmatpush1.msra.mxu0 0.0
      %9325 = vmatprep.subr.mxu0 0.0
      %9326 = vmatpush1.msra.mxu0 0.0
      %9327 = vmatprep.subr.mxu0 0.0
      %9328 = vmatpush1.msra.mxu0 0.0
      %9329 = vmatprep.subr.mxu0 0.0
      %9330 = vmatpush1.msra.mxu0 0.0
      %9331 = vmatprep.subr.mxu0 0.0
      %9332 = vmatpush1.msra.mxu0 0.0
      %9333 = vmatprep.subr.mxu0 0.0
      %9334 = vmatpush1.msra.mxu0 0.0
      %9335 = vmatprep.subr.mxu0 0.0
      %9336 = vmatpush1.msra.mxu0 0.0
      %9337 = vmatprep.subr.mxu0 0.0
      %9338 = vmatpush1.msra.mxu0 0.0
      %9339 = vmatprep.subr.mxu0 0.0
      %9340 = vmatpush1.msra.mxu0 0.0
      %9341 = vmatprep.subr.mxu0 0.0
      %9342 = vmatpush1.msra.mxu0 0.0
      %9343 = vmatprep.subr.mxu0 0.0
      %9344 = vmatpush1.msra.mxu0 0.0
      %9345 = vmatprep.subr.mxu0 0.0
      %9346 = vmatpush1.msra.mxu0 0.0
      %9347 = vmatprep.subr.mxu0 0.0
      %9348 = vmatpush1.msra.mxu0 0.0
      %9349 = vmatprep.subr.mxu0 0.0
      %9350 = vmatpush1.msra.mxu0 0.0
      %9351 = vmatprep.subr.mxu0 0.0
      %9352 = vmatpush1.msra.mxu0 0.0
      %9353 = vmatprep.subr.mxu0 0.0
      %9354 = vmatpush1.msra.mxu0 %v716
      %9355 = vmatprep.subr.mxu0 0.0
      %9356 = vmatpush2.msra.mxu0 0.0
      %9357 = vmatprep.subr.mxu0 0.0
      %9358 = vmatpush2.msra.mxu0 0.0
      %9359 = vmatprep.subr.mxu0 0.0
      %9360 = vmatpush2.msra.mxu0 0.0
      %9361 = vmatprep.subr.mxu0 0.0
      %9362 = vmatpush2.msra.mxu0 0.0
      %9363 = vmatprep.subr.mxu0 0.0
      %9364 = vmatpush2.msra.mxu0 0.0
      %9365 = vmatprep.subr.mxu0 0.0
      %9366 = vmatpush2.msra.mxu0 0.0
      %9367 = vmatprep.subr.mxu0 0.0
      %9368 = vmatpush2.msra.mxu0 0.0
      %9369 = vmatprep.subr.mxu0 0.0
      %9370 = vmatpush2.msra.mxu0 0.0
      %9371 = vmatprep.subr.mxu0 0.0
      %9372 = vmatpush2.msra.mxu0 0.0
      %9373 = vmatprep.subr.mxu0 0.0
      %9374 = vmatpush2.msra.mxu0 0.0
      %9375 = vmatprep.subr.mxu0 0.0
      %9376 = vmatpush2.msra.mxu0 0.0
      %9377 = vmatprep.subr.mxu0 0.0
      %9378 = vmatpush2.msra.mxu0 0.0
      %9379 = vmatprep.subr.mxu0 0.0
      %9380 = vmatpush2.msra.mxu0 0.0
      %9381 = vmatprep.subr.mxu0 0.0
      %9382 = vmatpush2.msra.mxu0 0.0
      %9383 = vmatprep.subr.mxu0 0.0
      %9384 = vmatpush2.msra.mxu0 0.0
      %9385 = vmatprep.subr.mxu0 0.0
      %9386 = vmatpush2.msra.mxu0 0.0
      %9387 = vmatprep.mubr.f32.mxu0 0.0
      %9388 = vmatmul.mubr.f32.gmra.mxu0 %v9321
      %v9389 = vpop.f32.mrf.mxu0
      %v9390 = vadd.f32 0.0, %v9389
      %v9391 = vpop.f32.mrf.mxu0
      %9392 = vdwg.mxu0
      %v9393 = vsub.f32 %v9320, %v9390
      %9395 = vrot.lane.b32.xlu0 %v9393, 64
      %v9396 = vpop.permute.xlu0 %9395
      %v9398 = vsel %vm8115, %v9264, %v9396
      %vm9399 = vcmask 547840
      %v9400 = vsel %vm9399, %v9398, 0.0
      %9401 = vst [vmem:[%s713] sm:$0xff] %v9400
      %p9402 = scmp.lt.s32.totalorder %s34, 1
      %s9403 = scalar_select %p9402, %s34, 1
      %p9404 = scmp.lt.s32.totalorder %s36, 3
      %s9405 = scalar_select %p9404, %s36, 3
      %p9406 = scmp.lt.s32.totalorder %s35, 0
      %s9407 = scalar_select %p9406, %s35, 0
      %s9408 = sadd.s32 %s9407, %s9405
      %s9409 = smul.addr %s9403, 4
      %s9410 = sadd.s32 %s9408, %s9409
      %s9411 = smul.addr %s9410, 8
      %s9412 = scalar_lea.vmem %s17, %s9411
      // Predicated region
      $region93: #{equivariant_attention_pallas.1} parent=87 // pred_check
        %p9413 = pneg %p462
      $region94: #{equivariant_attention_pallas.1} parent=87 // pred_check_branch
        %9415 = sbr.rel (%p9413) target = $region96
      $region95: #{equivariant_attention_pallas.1} parent=87 // pred_region
        _
      $region96: #{equivariant_attention_pallas.1} parent=87 // pred_fallthru
        _
    $region88: #{equivariant_attention_pallas.1} parent=5 // pred_fallthru
      _
    %p9416 = scmp.le.s32.totalorder 2, %s24
    // Predicated region
    $region97: #{equivariant_attention_pallas.1} parent=5 // pred_check
      %p9417 = pneg %p9416
    $region98: #{equivariant_attention_pallas.1} parent=5 // pred_check_branch
      %9419 = sbr.rel (%p9417) target = $region100
    $region99: #{equivariant_attention_pallas.1} parent=5 // pred_region
      %s9420 = ssub.s32 %s24, 2
      // Predicated region
      $region101: #{equivariant_attention_pallas.1} parent=99 // pred_check
        %p9421 = pneg %p468
      $region102: #{equivariant_attention_pallas.1} parent=99 // pred_check_branch
        %9423 = sbr.rel (%p9421) target = $region104
      $region103: #{equivariant_attention_pallas.1} parent=99 // pred_region
        %p9424 = scmp.lt.s32.totalorder %s37, 1
        %s9425 = scalar_select %p9424, %s37, 1
        %p9426 = scmp.lt.s32.totalorder %s39, 3
        %s9427 = scalar_select %p9426, %s39, 3
        %p9428 = scmp.lt.s32.totalorder %s38, 0
        %s9429 = scalar_select %p9428, %s38, 0
        %s9430 = sadd.s32 %s9429, %s9427
        %s9431 = smul.addr %s9425, 4
        %s9432 = sadd.s32 %s9430, %s9431
        %s9433 = smul.addr %s9432, 8
        %s9434 = scalar_lea.vmem %s17, %s9433
      $region104: #{equivariant_attention_pallas.1} parent=99 // pred_fallthru
        _
    $region100: #{equivariant_attention_pallas.1} parent=5 // pred_fallthru
      _
  $region6: #{equivariant_attention_pallas.1} parent=0 // loop_footer
    %s28 = sadd.s32 1, %s24
  $region7: #{equivariant_attention_pallas.1} parent=0 // loop_footer_branch
    %23 = sbr.rel target = $region3
  $region8: #{equivariant_attention_pallas.1} parent=0 // loop_exit
    _

</llo_original>
